<compile_context>
chip_gen: v7x
topology: tpu7x:2x2x1
jax: 0.10.0
libtpu: 0.0.40
codegen_flags: <defaults>
</compile_context>

<pallas_src>
import jax
import jax.numpy as jnp
from jax.experimental import pallas as pl
from jax.experimental.pallas import tpu as pltpu

CIN = 384
COUT = 1024
KH = KW = 3
BN_EPS = 1e-5


# ---------------------------------------------------------------------------
# Fused kernel: full-K im2col matmul + ReLU + BatchNorm (batch statistics over
# the M = N*H*W rows of each channel tile), single pass, no accumulator.
# ---------------------------------------------------------------------------
def _conv_relu_bn_kernel(a_ref, b_ref, gamma_ref, beta_ref, o_ref):
    # bf16 x bf16 -> f32 on the MXU; whole K contraction in one shot.
    y = jnp.dot(a_ref[...], b_ref[...], preferred_element_type=jnp.float32)
    y = jnp.maximum(y, 0.0)                                   # ReLU

    m_rows = y.shape[0]                                       # static (tm == M)
    s1 = jnp.sum(y, axis=0, keepdims=True)                    # per-channel sum
    s2 = jnp.sum(y * y, axis=0, keepdims=True)                # per-channel sumsq
    mean = s1 / m_rows
    var = jnp.maximum(s2 / m_rows - mean * mean, 0.0)         # biased, clamped
    inv = jax.lax.rsqrt(var + BN_EPS)

    o_ref[...] = (
        (y - mean) * inv * gamma_ref[...] + beta_ref[...]
    ).astype(o_ref.dtype)


def conv_relu_bn(a, b, gamma2, beta2, *, tn):
    m, kdim = a.shape
    _, n = b.shape
    tm = m       # BN fusion requires every row of the batch resident in one tile.
    tk = kdim    # full-K: no reduction axis, A resident in VMEM across the grid.
    assert tm == m, (tm, m)
    assert m % 8 == 0, m
    assert kdim % 128 == 0, kdim
    assert n % tn == 0 and tn % 128 == 0, (n, tn)

    out_dtype = jnp.bfloat16
    cost = pl.CostEstimate(
        flops=2 * m * kdim * n,
        transcendentals=0,
        bytes_accessed=(
            a.size * a.dtype.itemsize          # A read once (resident)
            + b.size * b.dtype.itemsize        # B read once
            + m * n * 2                        # bf16 output write
            + gamma2.size * 4
            + beta2.size * 4
        ),
    )

    return pl.pallas_call(
        _conv_relu_bn_kernel,
        out_shape=jax.ShapeDtypeStruct((m, n), out_dtype),
        grid=(m // tm, n // tn),
        in_specs=[
            pl.BlockSpec((tm, tk), lambda i, j: (i, 0)),   # constant in j -> resident
            pl.BlockSpec((tk, tn), lambda i, j: (0, j)),
            pl.BlockSpec((1, tn), lambda i, j: (0, j)),
            pl.BlockSpec((1, tn), lambda i, j: (0, j)),
        ],
        out_specs=pl.BlockSpec((tm, tn), lambda i, j: (i, j)),
        compiler_params=pltpu.CompilerParams(
            dimension_semantics=("parallel", "parallel")
        ),
        cost_estimate=cost,
    )(a, b, gamma2, beta2)


# ---------------------------------------------------------------------------
# Wrapper: layer12 forward (NCHW in / NCHW out).
# ---------------------------------------------------------------------------
@jax.jit
def layer12_forward(x_nchw, w_oihw, gamma, beta):
    n, cin, h, wdt = x_nchw.shape
    assert cin == CIN

    # --- glue: NCHW -> NHWC in bf16, pad, im2col ((kh,kw) outer, cin inner) ---
    x_nhwc = jnp.transpose(x_nchw, (0, 2, 3, 1)).astype(jnp.bfloat16)
    xp = jnp.pad(x_nhwc, ((0, 0), (1, 1), (1, 1), (0, 0)))
    cols = []
    for kh in range(KH):
        for kw in range(KW):
            cols.append(xp[:, kh:kh + h, kw:kw + wdt, :])
    patches = jnp.concatenate(cols, axis=-1)                    # (N, H, W, 9*Cin) bf16
    a = patches.reshape(n * h * wdt, KH * KW * CIN)

    # weight (Cout, Cin, kh, kw) -> (kh, kw, Cin, Cout) -> (K, Cout), bf16
    b = (
        jnp.transpose(w_oihw, (2, 3, 1, 0))
        .reshape(KH * KW * CIN, COUT)
        .astype(jnp.bfloat16)
    )

    gamma2 = gamma.reshape(1, COUT).astype(jnp.float32)
    beta2 = beta.reshape(1, COUT).astype(jnp.float32)

    # Tiles: tm = M (fused BN), tk = K = 3456 (A resident), tn = 256 -> 4 steps.
    y_bn = conv_relu_bn(a, b, gamma2, beta2, tn=256)            # (M, Cout) bf16

    # --- glue: back to NCHW ---
    # TODO(synk): return NHWC directly if the downstream layer accepts it.
    out = y_bn.reshape(n, h, wdt, COUT)
    return jnp.transpose(out, (0, 3, 1, 2))


# ---------------------------------------------------------------------------
# Pure-JAX f32 reference (for correctness check).
# ---------------------------------------------------------------------------
def layer12_reference(x_nchw, w_oihw, gamma, beta):
    y = jax.lax.conv_general_dilated(
        x_nchw, w_oihw, window_strides=(1, 1), padding=((1, 1), (1, 1)),
        dimension_numbers=("NCHW", "OIHW", "NCHW"),
    )
    y = jax.nn.relu(y)
    mean = y.mean(axis=(0, 2, 3), keepdims=True)
    var = ((y - mean) ** 2).mean(axis=(0, 2, 3), keepdims=True)
    return (y - mean) * jax.lax.rsqrt(var + BN_EPS) * gamma.reshape(1, -1, 1, 1) \
        + beta.reshape(1, -1, 1, 1)


if __name__ == "__main__":
    key = jax.random.PRNGKey(0)
    k_x, k_w = jax.random.split(key)

    # Small spatial/batch; channel counts fixed by the module definition.
    N, H, W = 2, 8, 8
    x = jax.random.normal(k_x, (N, CIN, H, W), dtype=jnp.float32)
    w = jax.random.normal(k_w, (COUT, CIN, KH, KW), dtype=jnp.float32) * 0.05
    gamma = jnp.ones((COUT,), dtype=jnp.float32)   # BatchNorm2d default affine init
    beta = jnp.zeros((COUT,), dtype=jnp.float32)

    out = layer12_forward(x, w, gamma, beta)
    out = jax.block_until_ready(out)

    ref = jax.block_until_ready(layer12_reference(x, w, gamma, beta))
    assert out.shape == (N, COUT, H, W), out.shape
    # bf16 inputs + bf16 output with f32 accumulation: expect ~1e-2 abs error post-BN.
    assert jnp.allclose(out.astype(jnp.float32), ref, rtol=3e-2, atol=5e-2), float(
        jnp.max(jnp.abs(out.astype(jnp.float32) - ref))
    )

    print("KERNEL_OK")
</pallas_src>

<mosaic_0001>
module attributes {stable_mosaic.version = 11 : i64} {
  func.func @_conv_relu_bn_kernel(%arg0: i32, %arg1: i32, %arg2: memref<128x3456xbf16, #tpu.memory_space<vmem>>, %arg3: memref<3456x256xbf16, #tpu.memory_space<vmem>>, %arg4: memref<1x256xf32, #tpu.memory_space<vmem>>, %arg5: memref<1x256xf32, #tpu.memory_space<vmem>>, %arg6: memref<128x256xbf16, #tpu.memory_space<vmem>>) attributes {dimension_semantics = [#tpu.dimension_semantics<parallel>, #tpu.dimension_semantics<parallel>], iteration_bounds = array<i64: 1, 4>, scalar_prefetch = 0 : i64, scratch_operands = 0 : i64, tpu.core_type = #tpu.core_type<tc>, window_params = [{transform_indices = @transform_0, window_bounds = array<i64: 128, 3456>}, {transform_indices = @transform_1, window_bounds = array<i64: 3456, 256>}, {transform_indices = @transform_2, window_bounds = array<i64: 1, 256>}, {transform_indices = @transform_3, window_bounds = array<i64: 1, 256>}, {transform_indices = @transform_4, window_bounds = array<i64: 128, 256>}]} {
    %c0 = arith.constant 0 : index
    %c0_0 = arith.constant 0 : index
    %0 = vector.load %arg2[%c0, %c0_0] : memref<128x3456xbf16, #tpu.memory_space<vmem>>, vector<128x3456xbf16>
    %c0_1 = arith.constant 0 : index
    %c0_2 = arith.constant 0 : index
    %1 = vector.load %arg3[%c0_1, %c0_2] : memref<3456x256xbf16, #tpu.memory_space<vmem>>, vector<3456x256xbf16>
    %cst = arith.constant dense<0.000000e+00> : vector<128x256xf32>
    %2 = tpu.matmul %0, %1, %cst {dimension_numbers = #tpu.dot_dimension_numbers<[1], [0], [0], [1], [0, 0, 1, 1], [], []>} : vector<128x3456xbf16>, vector<3456x256xbf16>, vector<128x256xf32> -> vector<128x256xf32>
    %cst_3 = arith.constant 0.000000e+00 : f32
    %3 = vector.broadcast %cst_3 : f32 to vector<128x256xf32>
    %4 = arith.maximumf %2, %3 : vector<128x256xf32>
    %cst_4 = arith.constant dense<0.000000e+00> : vector<256xf32>
    %5 = vector.multi_reduction <add>, %4, %cst_4 [0] : vector<128x256xf32> to vector<256xf32>
    %6 = vector.shape_cast %5 : vector<256xf32> to vector<1x256xf32>
    %7 = arith.mulf %4, %4 : vector<128x256xf32>
    %cst_5 = arith.constant dense<0.000000e+00> : vector<256xf32>
    %8 = vector.multi_reduction <add>, %7, %cst_5 [0] : vector<128x256xf32> to vector<256xf32>
    %9 = vector.shape_cast %8 : vector<256xf32> to vector<1x256xf32>
    %cst_6 = arith.constant 1.280000e+02 : f32
    %10 = vector.broadcast %cst_6 : f32 to vector<1x256xf32>
    %11 = arith.divf %6, %10 : vector<1x256xf32>
    %cst_7 = arith.constant 1.280000e+02 : f32
    %12 = vector.broadcast %cst_7 : f32 to vector<1x256xf32>
    %13 = arith.divf %9, %12 : vector<1x256xf32>
    %14 = arith.mulf %11, %11 : vector<1x256xf32>
    %15 = arith.subf %13, %14 : vector<1x256xf32>
    %cst_8 = arith.constant 0.000000e+00 : f32
    %16 = vector.broadcast %cst_8 : f32 to vector<1x256xf32>
    %17 = arith.maximumf %15, %16 : vector<1x256xf32>
    %cst_9 = arith.constant 9.99999974E-6 : f32
    %18 = vector.broadcast %cst_9 : f32 to vector<1x256xf32>
    %19 = arith.addf %17, %18 : vector<1x256xf32>
    %20 = math.rsqrt %19 : vector<1x256xf32>
    %21 = vector.broadcast %11 : vector<1x256xf32> to vector<128x256xf32>
    %22 = arith.subf %4, %21 : vector<128x256xf32>
    %23 = vector.broadcast %20 : vector<1x256xf32> to vector<128x256xf32>
    %24 = arith.mulf %22, %23 : vector<128x256xf32>
    %c0_10 = arith.constant 0 : index
    %c0_11 = arith.constant 0 : index
    %25 = vector.load %arg4[%c0_10, %c0_11] : memref<1x256xf32, #tpu.memory_space<vmem>>, vector<1x256xf32>
    %26 = vector.broadcast %25 : vector<1x256xf32> to vector<128x256xf32>
    %27 = arith.mulf %24, %26 : vector<128x256xf32>
    %c0_12 = arith.constant 0 : index
    %c0_13 = arith.constant 0 : index
    %28 = vector.load %arg5[%c0_12, %c0_13] : memref<1x256xf32, #tpu.memory_space<vmem>>, vector<1x256xf32>
    %29 = vector.broadcast %28 : vector<1x256xf32> to vector<128x256xf32>
    %30 = arith.addf %27, %29 : vector<128x256xf32>
    %31 = arith.truncf %30 : vector<128x256xf32> to vector<128x256xbf16>
    %c0_14 = arith.constant 0 : index
    %c0_15 = arith.constant 0 : index
    %32 = vector.load %arg6[%c0_14, %c0_15] : memref<128x256xbf16, #tpu.memory_space<vmem>>, vector<128x256xbf16>
    tpu.vector_store %arg6[%c0_14, %c0_15], %31 {strides = array<i32>} : memref<128x256xbf16, #tpu.memory_space<vmem>>, vector<128x256xbf16>,
    return
  }
  func.func @transform_0(%arg0: i32, %arg1: i32) -> (i32, i32) {
    %c0_i32 = arith.constant 0 : i32
    %c0_i32_0 = arith.constant 0 : i32
    return %arg0, %c0_i32 : i32, i32
  }
  func.func @transform_1(%arg0: i32, %arg1: i32) -> (i32, i32) {
    %c0_i32 = arith.constant 0 : i32
    %c0_i32_0 = arith.constant 0 : i32
    return %c0_i32, %arg1 : i32, i32
  }
  func.func @transform_2(%arg0: i32, %arg1: i32) -> (i32, i32) {
    %c0_i32 = arith.constant 0 : i32
    %c0_i32_0 = arith.constant 0 : i32
    return %c0_i32, %arg1 : i32, i32
  }
  func.func @transform_3(%arg0: i32, %arg1: i32) -> (i32, i32) {
    %c0_i32 = arith.constant 0 : i32
    %c0_i32_0 = arith.constant 0 : i32
    return %c0_i32, %arg1 : i32, i32
  }
  func.func @transform_4(%arg0: i32, %arg1: i32) -> (i32, i32) {
    %c0_i32 = arith.constant 0 : i32
    return %arg0, %arg1 : i32, i32
  }
}

</mosaic_0001>

<llo_original>
// kernel: layer12_forward.1
$region0: #{layer12_forward.1}
  #allocation0 [shape = 'u32[]', space=smem, size = 0x4, offset = 0x4, fixed_abs, tag = 'smem constant byte address 0x4 - core index']
  #allocation1 [shape = 'u32[144,128]{1,0:T(1,128)}', space=vmem, size = 0x12000, scoped, tag = 'internal scratch']
  %s0 = inlined_call_operand.vmem [shape: bf16[128,3456], index: 0, kind: input, shape index: {}]
  %s1 = inlined_call_operand.vmem [shape: bf16[3456,1024], index: 1, kind: input, shape index: {}]
  %s2 = inlined_call_operand.vmem [shape: f32[1,1024], index: 2, kind: input, shape index: {}]
  %s3 = inlined_call_operand.vmem [shape: f32[1,1024], index: 3, kind: input, shape index: {}]
  %s4 = inlined_call_operand.hbm [shape: bf16[128,1024], index: 4, kind: output, shape index: {}]
  %s5 = sld [smem:[#allocation0]]
  $region87: #{layer12_forward.1} parent=0
    _
  %s7 = ssub.s32 1, %s5
  %s8 = scalar_select 0, %s7, %s5
  $region1: #{layer12_forward.1} parent=0
    #allocation2 [shape = 'u8[3538944]{0}', space=vmem, size = 0x360000, scoped, tag = 'input window, operand 1']
    #allocation3 [shape = 'u8[131072]{0}', space=vmem, size = 0x20000, scoped, tag = 'output window, operand 0']
    #allocation4 [shape = 's32[2]{0}', space=sflag, size = 0x8, scoped, tag = 'scoped memory for layer12_forward.1']
    %9 = vsyncpa [#allocation4], 0
    %s10 = scalar_lea.sflag [#allocation4], 1
    %11 = vsyncpa %s10, 0
    loop: start=0, step=1, limit=6
    $region2: #{layer12_forward.1} parent=1 // loop_pre_header
      _
    $region3: #{layer12_forward.1} parent=1 // loop_header
      %s13 = sphi 0, %s17
      %p14 = scmp.ge.s32.totalorder %s13, 6
      %s20 = sphi 0, %s32
      %s21 = sphi 0, %s28
      %s22 = sphi 0, %s20
      %s23 = sphi 0, %s21
      %s24 = sphi 0, %s22
      %s25 = sphi 0, %s23
      %s35 = sphi 0, %s37
      %s38 = sphi 0, %s35
      %s39 = sphi 0, %s38
      %s55 = sphi 0, %s39
      %s61 = sphi 0, %s63
      %s64 = sphi 0, %s61
      %s65 = sphi 0, %s64
      %s81 = sphi 0, %s65
      %s87 = sphi 0, %s89
      %s90 = sphi 0, %s87
      %s91 = sphi 0, %s90
      %s107 = sphi 0, %s91
      %s113 = sphi 0, %s115
      %s116 = sphi 0, %s113
      %s117 = sphi 0, %s116
      %s133 = sphi 0, %s117
      %s141 = sphi 0, %s143
      %s144 = sphi 0, %s141
      %s145 = sphi 0, %s144
      %s161 = sphi 0, %s145
    $region4: #{layer12_forward.1} parent=1 // loop_header_branch
      %16 = sbr.rel (%p14) target = $region8
    $region5: #{layer12_forward.1} parent=1 // loop_body
      %s18 = ssub.s32 %s13, 1
      %s19 = ssub.s32 %s13, 2
      %s26 = sadd.s32 1, %s21
      %p27 = scmp.ge.s32.totalorder %s26, 4
      %s28 = scalar_select %p27, 0, %s26
      %s29 = sadd.s32 1, %s20
      %s30 = scalar_select %p27, %s29, %s20
      %p31 = scmp.ge.s32.totalorder %s30, 1
      %s32 = scalar_select %p31, 0, %s30
      %s33 = ssub.s32 %s20, %s32
      %p34 = scmp.eq.s32.totalorder %s33, 0
      %s36 = sadd.s32 %s35, 1
      %s37 = scalar_select %p34, %s35, %s36
      %p40 = pneg %p34
      %p41 = scmp.eq.s32.totalorder %s13, 3
      %p42 = por %p40, %p41
      %p43 = scmp.ne.s32.totalorder %s35, %s38
      %p44 = scmp.eq.s32.totalorder %s13, 0
      %p45 = por %p43, %p44
      %p46 = scmp.ne.s32.totalorder %s35, %s38
      %p47 = scmp.eq.s32.totalorder %s18, 3
      %p48 = por %p46, %p47
      %p49 = scmp.ne.s32.totalorder %s38, %s39
      %p50 = scmp.eq.s32.totalorder %s18, 0
      %p51 = por %p49, %p50
      %p52 = scmp.ne.s32.totalorder %s38, %s39
      %p53 = scmp.eq.s32.totalorder %s19, 3
      %p54 = por %p52, %p53
      %p56 = scmp.ne.s32.totalorder %s39, %s55
      %p57 = scmp.eq.s32.totalorder %s19, 0
      %p58 = por %p56, %p57
      %s59 = ssub.s32 %s21, %s28
      %p60 = scmp.eq.s32.totalorder %s59, 0
      %s62 = sadd.s32 %s61, 1
      %s63 = scalar_select %p60, %s61, %s62
      %p66 = pneg %p60
      %p67 = scmp.eq.s32.totalorder %s13, 3
      %p68 = por %p66, %p67
      %p69 = scmp.ne.s32.totalorder %s61, %s64
      %p70 = scmp.eq.s32.totalorder %s13, 0
      %p71 = por %p69, %p70
      %p72 = scmp.ne.s32.totalorder %s61, %s64
      %p73 = scmp.eq.s32.totalorder %s18, 3
      %p74 = por %p72, %p73
      %p75 = scmp.ne.s32.totalorder %s64, %s65
      %p76 = scmp.eq.s32.totalorder %s18, 0
      %p77 = por %p75, %p76
      %p78 = scmp.ne.s32.totalorder %s64, %s65
      %p79 = scmp.eq.s32.totalorder %s19, 3
      %p80 = por %p78, %p79
      %p82 = scmp.ne.s32.totalorder %s65, %s81
      %p83 = scmp.eq.s32.totalorder %s19, 0
      %p84 = por %p82, %p83
      %s85 = ssub.s32 %s21, %s28
      %p86 = scmp.eq.s32.totalorder %s85, 0
      %s88 = sadd.s32 %s87, 1
      %s89 = scalar_select %p86, %s87, %s88
      %p92 = pneg %p86
      %p93 = scmp.eq.s32.totalorder %s13, 3
      %p94 = por %p92, %p93
      %p95 = scmp.ne.s32.totalorder %s87, %s90
      %p96 = scmp.eq.s32.totalorder %s13, 0
      %p97 = por %p95, %p96
      %p98 = scmp.ne.s32.totalorder %s87, %s90
      %p99 = scmp.eq.s32.totalorder %s18, 3
      %p100 = por %p98, %p99
      %p101 = scmp.ne.s32.totalorder %s90, %s91
      %p102 = scmp.eq.s32.totalorder %s18, 0
      %p103 = por %p101, %p102
      %p104 = scmp.ne.s32.totalorder %s90, %s91
      %p105 = scmp.eq.s32.totalorder %s19, 3
      %p106 = por %p104, %p105
      %p108 = scmp.ne.s32.totalorder %s91, %s107
      %p109 = scmp.eq.s32.totalorder %s19, 0
      %p110 = por %p108, %p109
      %s111 = ssub.s32 %s21, %s28
      %p112 = scmp.eq.s32.totalorder %s111, 0
      %s114 = sadd.s32 %s113, 1
      %s115 = scalar_select %p112, %s113, %s114
      %p118 = pneg %p112
      %p119 = scmp.eq.s32.totalorder %s13, 3
      %p120 = por %p118, %p119
      %p121 = scmp.ne.s32.totalorder %s113, %s116
      %p122 = scmp.eq.s32.totalorder %s13, 0
      %p123 = por %p121, %p122
      %p124 = scmp.ne.s32.totalorder %s113, %s116
      %p125 = scmp.eq.s32.totalorder %s18, 3
      %p126 = por %p124, %p125
      %p127 = scmp.ne.s32.totalorder %s116, %s117
      %p128 = scmp.eq.s32.totalorder %s18, 0
      %p129 = por %p127, %p128
      %p130 = scmp.ne.s32.totalorder %s116, %s117
      %p131 = scmp.eq.s32.totalorder %s19, 3
      %p132 = por %p130, %p131
      %p134 = scmp.ne.s32.totalorder %s117, %s133
      %p135 = scmp.eq.s32.totalorder %s19, 0
      %p136 = por %p134, %p135
      %s137 = ssub.s32 %s20, %s32
      %s138 = ssub.s32 %s21, %s28
      %s139 = sor.u32 %s137, %s138
      %p140 = scmp.eq.s32.totalorder %s139, 0
      %s142 = sadd.s32 %s141, 1
      %s143 = scalar_select %p140, %s141, %s142
      %p146 = pneg %p140
      %p147 = scmp.eq.s32.totalorder %s13, 3
      %p148 = por %p146, %p147
      %p149 = scmp.ne.s32.totalorder %s141, %s144
      %p150 = scmp.eq.s32.totalorder %s13, 0
      %p151 = por %p149, %p150
      %p152 = scmp.ne.s32.totalorder %s141, %s144
      %p153 = scmp.eq.s32.totalorder %s18, 3
      %p154 = por %p152, %p153
      %p155 = scmp.ne.s32.totalorder %s144, %s145
      %p156 = scmp.eq.s32.totalorder %s18, 0
      %p157 = por %p155, %p156
      %p158 = scmp.ne.s32.totalorder %s144, %s145
      %p159 = scmp.eq.s32.totalorder %s19, 3
      %p160 = por %p158, %p159
      %p162 = scmp.ne.s32.totalorder %s145, %s161
      %p163 = scmp.eq.s32.totalorder %s19, 0
      %p164 = por %p162, %p163
      %p165 = scmp.le.s32.totalorder 1, %s13
      %p166 = scmp.lt.s32.totalorder %s13, 5
      %p167 = pnand %p165, %p166
      %p168 = pneg %p167
      // Predicated region
      $region9: #{layer12_forward.1} parent=5 // pred_check
        _
      $region10: #{layer12_forward.1} parent=5 // pred_check_branch
        %170 = sbr.rel (%p167) target = $region12
      $region11: #{layer12_forward.1} parent=5 // pred_region
        %s171 = ssub.s32 %s13, 1
        // Predicated region
        $region13: #{layer12_forward.1} parent=11 // pred_check
          %p172 = pneg %p51
        $region14: #{layer12_forward.1} parent=11 // pred_check_branch
          %174 = sbr.rel (%p172) target = $region16
        $region15: #{layer12_forward.1} parent=11 // pred_region
          %s175 = smul.u32 16, %s22
          %p176 = scmp.lt.s32.totalorder %s175, 15
          %s177 = scalar_select %p176, %s175, 15
          %s178 = smul.addr %s177, 27
          %s179 = smul.addr %s178, 4
          %s180 = scalar_lea.vmem %s0, %s179
          %s181 = smul.u32 16, %s22
        $region16: #{layer12_forward.1} parent=11 // pred_fallthru
          _
      $region12: #{layer12_forward.1} parent=5 // pred_fallthru
        _
      %p182 = scmp.lt.s32.totalorder %s13, 4
      // Predicated region
      $region17: #{layer12_forward.1} parent=5 // pred_check
        %p183 = pneg %p182
      $region18: #{layer12_forward.1} parent=5 // pred_check_branch
        %185 = sbr.rel (%p183) target = $region20
      $region19: #{layer12_forward.1} parent=5 // pred_region
        // Predicated region
        $region21: #{layer12_forward.1} parent=19 // pred_check
          %p186 = pneg %p71
        $region22: #{layer12_forward.1} parent=19 // pred_check_branch
          %188 = sbr.rel (%p186) target = $region24
        $region23: #{layer12_forward.1} parent=19 // pred_region
          %s189 = sand.u32 %s61, 1
          %s190 = sand.u32 %s61, 1
          %s191 = smul.addr %s190, 3456
          %s192 = scalar_lea.vmem [#allocation2], %s191
          %s193 = smul.u32 2, %s21
          %s194 = smul.addr %s193, 4
          %s195 = scalar_lea.vmem %s1, %s194
          // Predicated region
          $region25: #{layer12_forward.1} parent=23 // pred_check
            _
          $region26: #{layer12_forward.1} parent=23 // pred_check_branch
            %197 = sbr.rel (0) target = $region28
          $region27: #{layer12_forward.1} parent=23 // pred_region
            // Predicated region
            $region29: #{layer12_forward.1} parent=27 // pred_check
              _
            $region30: #{layer12_forward.1} parent=27 // pred_check_branch
              %199 = sbr.rel (0) target = $region32
            $region31: #{layer12_forward.1} parent=27 // pred_region
              // Predicated region
              $region44: #{layer12_forward.1} parent=31 // pred_check
                _
              $region45: #{layer12_forward.1} parent=31 // pred_check_branch
                %1076 = sbr.rel (0) target = $region47
              $region46: #{layer12_forward.1} parent=31 // pred_region
                loop: start=0, step=1, limit=1
                $region48: #{layer12_forward.1} parent=46 // loop_pre_header
                  _
                $region49: #{layer12_forward.1} parent=46 // loop_header
                  %s1078 = sphi 0, %s1082
                  %p1079 = scmp.ge.s32.totalorder %s1078, 1
                  %s1083 = sphi %s195, %s195
                  %s1084 = sphi %s192, %s192
                $region50: #{layer12_forward.1} parent=46 // loop_header_branch
                  %1081 = sbr.rel (%p1079) target = $region54
                $region51: #{layer12_forward.1} parent=46 // loop_body
                  %v1085 = vld [vmem:[%s1083] sm:$0xff]
                  %1086 = vst [vmem:[%s1084] sm:$0xff] %v1085
                  %v1087 = vld [vmem:[%s1083 + $0x20] sm:$0xff]
                  %1088 = vst [vmem:[%s1084 + $0x8] sm:$0xff] %v1087
                  %v1089 = vld [vmem:[%s1083 + $0x40] sm:$0xff]
                  %1090 = vst [vmem:[%s1084 + $0x10] sm:$0xff] %v1089
                  %v1091 = vld [vmem:[%s1083 + $0x60] sm:$0xff]
                  %1092 = vst [vmem:[%s1084 + $0x18] sm:$0xff] %v1091
                  %v1093 = vld [vmem:[%s1083 + $0x80] sm:$0xff]
                  %1094 = vst [vmem:[%s1084 + $0x20] sm:$0xff] %v1093
                  %v1095 = vld [vmem:[%s1083 + $0xa0] sm:$0xff]
                  %1096 = vst [vmem:[%s1084 + $0x28] sm:$0xff] %v1095
                  %v1097 = vld [vmem:[%s1083 + $0xc0] sm:$0xff]
                  %1098 = vst [vmem:[%s1084 + $0x30] sm:$0xff] %v1097
                  %v1099 = vld [vmem:[%s1083 + $0xe0] sm:$0xff]
                  %1100 = vst [vmem:[%s1084 + $0x38] sm:$0xff] %v1099
                  %v1101 = vld [vmem:[%s1083 + $0x100] sm:$0xff]
                  %1102 = vst [vmem:[%s1084 + $0x40] sm:$0xff] %v1101
                  %v1103 = vld [vmem:[%s1083 + $0x120] sm:$0xff]
                  %1104 = vst [vmem:[%s1084 + $0x48] sm:$0xff] %v1103
                  %v1105 = vld [vmem:[%s1083 + $0x140] sm:$0xff]
                  %1106 = vst [vmem:[%s1084 + $0x50] sm:$0xff] %v1105
                  %v1107 = vld [vmem:[%s1083 + $0x160] sm:$0xff]
                  %1108 = vst [vmem:[%s1084 + $0x58] sm:$0xff] %v1107
                  %v1109 = vld [vmem:[%s1083 + $0x180] sm:$0xff]
                  %1110 = vst [vmem:[%s1084 + $0x60] sm:$0xff] %v1109
                  %v1111 = vld [vmem:[%s1083 + $0x1a0] sm:$0xff]
                  %1112 = vst [vmem:[%s1084 + $0x68] sm:$0xff] %v1111
                  %v1113 = vld [vmem:[%s1083 + $0x1c0] sm:$0xff]
                  %1114 = vst [vmem:[%s1084 + $0x70] sm:$0xff] %v1113
                  %v1115 = vld [vmem:[%s1083 + $0x1e0] sm:$0xff]
                  %1116 = vst [vmem:[%s1084 + $0x78] sm:$0xff] %v1115
                  %v1117 = vld [vmem:[%s1083 + $0x200] sm:$0xff]
                  %1118 = vst [vmem:[%s1084 + $0x80] sm:$0xff] %v1117
                  %v1119 = vld [vmem:[%s1083 + $0x220] sm:$0xff]
                  %1120 = vst [vmem:[%s1084 + $0x88] sm:$0xff] %v1119
                  %v1121 = vld [vmem:[%s1083 + $0x240] sm:$0xff]
                  %1122 = vst [vmem:[%s1084 + $0x90] sm:$0xff] %v1121
                  %v1123 = vld [vmem:[%s1083 + $0x260] sm:$0xff]
                  %1124 = vst [vmem:[%s1084 + $0x98] sm:$0xff] %v1123
                  %v1125 = vld [vmem:[%s1083 + $0x280] sm:$0xff]
                  %1126 = vst [vmem:[%s1084 + $0xa0] sm:$0xff] %v1125
                  %v1127 = vld [vmem:[%s1083 + $0x2a0] sm:$0xff]
                  %1128 = vst [vmem:[%s1084 + $0xa8] sm:$0xff] %v1127
                  %v1129 = vld [vmem:[%s1083 + $0x2c0] sm:$0xff]
                  %1130 = vst [vmem:[%s1084 + $0xb0] sm:$0xff] %v1129
                  %v1131 = vld [vmem:[%s1083 + $0x2e0] sm:$0xff]
                  %1132 = vst [vmem:[%s1084 + $0xb8] sm:$0xff] %v1131
                  %v1133 = vld [vmem:[%s1083 + $0x300] sm:$0xff]
                  %1134 = vst [vmem:[%s1084 + $0xc0] sm:$0xff] %v1133
                  %v1135 = vld [vmem:[%s1083 + $0x320] sm:$0xff]
                  %1136 = vst [vmem:[%s1084 + $0xc8] sm:$0xff] %v1135
                  %v1137 = vld [vmem:[%s1083 + $0x340] sm:$0xff]
                  %1138 = vst [vmem:[%s1084 + $0xd0] sm:$0xff] %v1137
                  %v1139 = vld [vmem:[%s1083 + $0x360] sm:$0xff]
                  %1140 = vst [vmem:[%s1084 + $0xd8] sm:$0xff] %v1139
                  %v1141 = vld [vmem:[%s1083 + $0x380] sm:$0xff]
                  %1142 = vst [vmem:[%s1084 + $0xe0] sm:$0xff] %v1141
                  %v1143 = vld [vmem:[%s1083 + $0x3a0] sm:$0xff]
                  %1144 = vst [vmem:[%s1084 + $0xe8] sm:$0xff] %v1143
                  %v1145 = vld [vmem:[%s1083 + $0x3c0] sm:$0xff]
                  %1146 = vst [vmem:[%s1084 + $0xf0] sm:$0xff] %v1145
                  %v1147 = vld [vmem:[%s1083 + $0x3e0] sm:$0xff]
                  %1148 = vst [vmem:[%s1084 + $0xf8] sm:$0xff] %v1147
                  %v1149 = vld [vmem:[%s1083 + $0x400] sm:$0xff]
                  %1150 = vst [vmem:[%s1084 + $0x100] sm:$0xff] %v1149
                  %v1151 = vld [vmem:[%s1083 + $0x420] sm:$0xff]
                  %1152 = vst [vmem:[%s1084 + $0x108] sm:$0xff] %v1151
                  %v1153 = vld [vmem:[%s1083 + $0x440] sm:$0xff]
                  %1154 = vst [vmem:[%s1084 + $0x110] sm:$0xff] %v1153
                  %v1155 = vld [vmem:[%s1083 + $0x460] sm:$0xff]
                  %1156 = vst [vmem:[%s1084 + $0x118] sm:$0xff] %v1155
                  %v1157 = vld [vmem:[%s1083 + $0x480] sm:$0xff]
                  %1158 = vst [vmem:[%s1084 + $0x120] sm:$0xff] %v1157
                  %v1159 = vld [vmem:[%s1083 + $0x4a0] sm:$0xff]
                  %1160 = vst [vmem:[%s1084 + $0x128] sm:$0xff] %v1159
                  %v1161 = vld [vmem:[%s1083 + $0x4c0] sm:$0xff]
                  %1162 = vst [vmem:[%s1084 + $0x130] sm:$0xff] %v1161
                  %v1163 = vld [vmem:[%s1083 + $0x4e0] sm:$0xff]
                  %1164 = vst [vmem:[%s1084 + $0x138] sm:$0xff] %v1163
                  %v1165 = vld [vmem:[%s1083 + $0x500] sm:$0xff]
                  %1166 = vst [vmem:[%s1084 + $0x140] sm:$0xff] %v1165
                  %v1167 = vld [vmem:[%s1083 + $0x520] sm:$0xff]
                  %1168 = vst [vmem:[%s1084 + $0x148] sm:$0xff] %v1167
                  %v1169 = vld [vmem:[%s1083 + $0x540] sm:$0xff]
                  %1170 = vst [vmem:[%s1084 + $0x150] sm:$0xff] %v1169
                  %v1171 = vld [vmem:[%s1083 + $0x560] sm:$0xff]
                  %1172 = vst [vmem:[%s1084 + $0x158] sm:$0xff] %v1171
                  %v1173 = vld [vmem:[%s1083 + $0x580] sm:$0xff]
                  %1174 = vst [vmem:[%s1084 + $0x160] sm:$0xff] %v1173
                  %v1175 = vld [vmem:[%s1083 + $0x5a0] sm:$0xff]
                  %1176 = vst [vmem:[%s1084 + $0x168] sm:$0xff] %v1175
                  %v1177 = vld [vmem:[%s1083 + $0x5c0] sm:$0xff]
                  %1178 = vst [vmem:[%s1084 + $0x170] sm:$0xff] %v1177
                  %v1179 = vld [vmem:[%s1083 + $0x5e0] sm:$0xff]
                  %1180 = vst [vmem:[%s1084 + $0x178] sm:$0xff] %v1179
                  %v1181 = vld [vmem:[%s1083 + $0x600] sm:$0xff]
                  %1182 = vst [vmem:[%s1084 + $0x180] sm:$0xff] %v1181
                  %v1183 = vld [vmem:[%s1083 + $0x620] sm:$0xff]
                  %1184 = vst [vmem:[%s1084 + $0x188] sm:$0xff] %v1183
                  %v1185 = vld [vmem:[%s1083 + $0x640] sm:$0xff]
                  %1186 = vst [vmem:[%s1084 + $0x190] sm:$0xff] %v1185
                  %v1187 = vld [vmem:[%s1083 + $0x660] sm:$0xff]
                  %1188 = vst [vmem:[%s1084 + $0x198] sm:$0xff] %v1187
                  %v1189 = vld [vmem:[%s1083 + $0x680] sm:$0xff]
                  %1190 = vst [vmem:[%s1084 + $0x1a0] sm:$0xff] %v1189
                  %v1191 = vld [vmem:[%s1083 + $0x6a0] sm:$0xff]
                  %1192 = vst [vmem:[%s1084 + $0x1a8] sm:$0xff] %v1191
                  %v1193 = vld [vmem:[%s1083 + $0x6c0] sm:$0xff]
                  %1194 = vst [vmem:[%s1084 + $0x1b0] sm:$0xff] %v1193
                  %v1195 = vld [vmem:[%s1083 + $0x6e0] sm:$0xff]
                  %1196 = vst [vmem:[%s1084 + $0x1b8] sm:$0xff] %v1195
                  %v1197 = vld [vmem:[%s1083 + $0x700] sm:$0xff]
                  %1198 = vst [vmem:[%s1084 + $0x1c0] sm:$0xff] %v1197
                  %v1199 = vld [vmem:[%s1083 + $0x720] sm:$0xff]
                  %1200 = vst [vmem:[%s1084 + $0x1c8] sm:$0xff] %v1199
                  %v1201 = vld [vmem:[%s1083 + $0x740] sm:$0xff]
                  %1202 = vst [vmem:[%s1084 + $0x1d0] sm:$0xff] %v1201
                  %v1203 = vld [vmem:[%s1083 + $0x760] sm:$0xff]
                  %1204 = vst [vmem:[%s1084 + $0x1d8] sm:$0xff] %v1203
                  %v1205 = vld [vmem:[%s1083 + $0x780] sm:$0xff]
                  %1206 = vst [vmem:[%s1084 + $0x1e0] sm:$0xff] %v1205
                  %v1207 = vld [vmem:[%s1083 + $0x7a0] sm:$0xff]
                  %1208 = vst [vmem:[%s1084 + $0x1e8] sm:$0xff] %v1207
                  %v1209 = vld [vmem:[%s1083 + $0x7c0] sm:$0xff]
                  %1210 = vst [vmem:[%s1084 + $0x1f0] sm:$0xff] %v1209
                  %v1211 = vld [vmem:[%s1083 + $0x7e0] sm:$0xff]
                  %1212 = vst [vmem:[%s1084 + $0x1f8] sm:$0xff] %v1211
                  %v1213 = vld [vmem:[%s1083 + $0x800] sm:$0xff]
                  %1214 = vst [vmem:[%s1084 + $0x200] sm:$0xff] %v1213
                  %v1215 = vld [vmem:[%s1083 + $0x820] sm:$0xff]
                  %1216 = vst [vmem:[%s1084 + $0x208] sm:$0xff] %v1215
                  %v1217 = vld [vmem:[%s1083 + $0x840] sm:$0xff]
                  %1218 = vst [vmem:[%s1084 + $0x210] sm:$0xff] %v1217
                  %v1219 = vld [vmem:[%s1083 + $0x860] sm:$0xff]
                  %1220 = vst [vmem:[%s1084 + $0x218] sm:$0xff] %v1219
                  %v1221 = vld [vmem:[%s1083 + $0x880] sm:$0xff]
                  %1222 = vst [vmem:[%s1084 + $0x220] sm:$0xff] %v1221
                  %v1223 = vld [vmem:[%s1083 + $0x8a0] sm:$0xff]
                  %1224 = vst [vmem:[%s1084 + $0x228] sm:$0xff] %v1223
                  %v1225 = vld [vmem:[%s1083 + $0x8c0] sm:$0xff]
                  %1226 = vst [vmem:[%s1084 + $0x230] sm:$0xff] %v1225
                  %v1227 = vld [vmem:[%s1083 + $0x8e0] sm:$0xff]
                  %1228 = vst [vmem:[%s1084 + $0x238] sm:$0xff] %v1227
                  %v1229 = vld [vmem:[%s1083 + $0x900] sm:$0xff]
                  %1230 = vst [vmem:[%s1084 + $0x240] sm:$0xff] %v1229
                  %v1231 = vld [vmem:[%s1083 + $0x920] sm:$0xff]
                  %1232 = vst [vmem:[%s1084 + $0x248] sm:$0xff] %v1231
                  %v1233 = vld [vmem:[%s1083 + $0x940] sm:$0xff]
                  %1234 = vst [vmem:[%s1084 + $0x250] sm:$0xff] %v1233
                  %v1235 = vld [vmem:[%s1083 + $0x960] sm:$0xff]
                  %1236 = vst [vmem:[%s1084 + $0x258] sm:$0xff] %v1235
                  %v1237 = vld [vmem:[%s1083 + $0x980] sm:$0xff]
                  %1238 = vst [vmem:[%s1084 + $0x260] sm:$0xff] %v1237
                  %v1239 = vld [vmem:[%s1083 + $0x9a0] sm:$0xff]
                  %1240 = vst [vmem:[%s1084 + $0x268] sm:$0xff] %v1239
                  %v1241 = vld [vmem:[%s1083 + $0x9c0] sm:$0xff]
                  %1242 = vst [vmem:[%s1084 + $0x270] sm:$0xff] %v1241
                  %v1243 = vld [vmem:[%s1083 + $0x9e0] sm:$0xff]
                  %1244 = vst [vmem:[%s1084 + $0x278] sm:$0xff] %v1243
                  %v1245 = vld [vmem:[%s1083 + $0xa00] sm:$0xff]
                  %1246 = vst [vmem:[%s1084 + $0x280] sm:$0xff] %v1245
                  %v1247 = vld [vmem:[%s1083 + $0xa20] sm:$0xff]
                  %1248 = vst [vmem:[%s1084 + $0x288] sm:$0xff] %v1247
                  %v1249 = vld [vmem:[%s1083 + $0xa40] sm:$0xff]
                  %1250 = vst [vmem:[%s1084 + $0x290] sm:$0xff] %v1249
                  %v1251 = vld [vmem:[%s1083 + $0xa60] sm:$0xff]
                  %1252 = vst [vmem:[%s1084 + $0x298] sm:$0xff] %v1251
                  %v1253 = vld [vmem:[%s1083 + $0xa80] sm:$0xff]
                  %1254 = vst [vmem:[%s1084 + $0x2a0] sm:$0xff] %v1253
                  %v1255 = vld [vmem:[%s1083 + $0xaa0] sm:$0xff]
                  %1256 = vst [vmem:[%s1084 + $0x2a8] sm:$0xff] %v1255
                  %v1257 = vld [vmem:[%s1083 + $0xac0] sm:$0xff]
                  %1258 = vst [vmem:[%s1084 + $0x2b0] sm:$0xff] %v1257
                  %v1259 = vld [vmem:[%s1083 + $0xae0] sm:$0xff]
                  %1260 = vst [vmem:[%s1084 + $0x2b8] sm:$0xff] %v1259
                  %v1261 = vld [vmem:[%s1083 + $0xb00] sm:$0xff]
                  %1262 = vst [vmem:[%s1084 + $0x2c0] sm:$0xff] %v1261
                  %v1263 = vld [vmem:[%s1083 + $0xb20] sm:$0xff]
                  %1264 = vst [vmem:[%s1084 + $0x2c8] sm:$0xff] %v1263
                  %v1265 = vld [vmem:[%s1083 + $0xb40] sm:$0xff]
                  %1266 = vst [vmem:[%s1084 + $0x2d0] sm:$0xff] %v1265
                  %v1267 = vld [vmem:[%s1083 + $0xb60] sm:$0xff]
                  %1268 = vst [vmem:[%s1084 + $0x2d8] sm:$0xff] %v1267
                  %v1269 = vld [vmem:[%s1083 + $0xb80] sm:$0xff]
                  %1270 = vst [vmem:[%s1084 + $0x2e0] sm:$0xff] %v1269
                  %v1271 = vld [vmem:[%s1083 + $0xba0] sm:$0xff]
                  %1272 = vst [vmem:[%s1084 + $0x2e8] sm:$0xff] %v1271
                  %v1273 = vld [vmem:[%s1083 + $0xbc0] sm:$0xff]
                  %1274 = vst [vmem:[%s1084 + $0x2f0] sm:$0xff] %v1273
                  %v1275 = vld [vmem:[%s1083 + $0xbe0] sm:$0xff]
                  %1276 = vst [vmem:[%s1084 + $0x2f8] sm:$0xff] %v1275
                  %v1277 = vld [vmem:[%s1083 + $0xc00] sm:$0xff]
                  %1278 = vst [vmem:[%s1084 + $0x300] sm:$0xff] %v1277
                  %v1279 = vld [vmem:[%s1083 + $0xc20] sm:$0xff]
                  %1280 = vst [vmem:[%s1084 + $0x308] sm:$0xff] %v1279
                  %v1281 = vld [vmem:[%s1083 + $0xc40] sm:$0xff]
                  %1282 = vst [vmem:[%s1084 + $0x310] sm:$0xff] %v1281
                  %v1283 = vld [vmem:[%s1083 + $0xc60] sm:$0xff]
                  %1284 = vst [vmem:[%s1084 + $0x318] sm:$0xff] %v1283
                  %v1285 = vld [vmem:[%s1083 + $0xc80] sm:$0xff]
                  %1286 = vst [vmem:[%s1084 + $0x320] sm:$0xff] %v1285
                  %v1287 = vld [vmem:[%s1083 + $0xca0] sm:$0xff]
                  %1288 = vst [vmem:[%s1084 + $0x328] sm:$0xff] %v1287
                  %v1289 = vld [vmem:[%s1083 + $0xcc0] sm:$0xff]
                  %1290 = vst [vmem:[%s1084 + $0x330] sm:$0xff] %v1289
                  %v1291 = vld [vmem:[%s1083 + $0xce0] sm:$0xff]
                  %1292 = vst [vmem:[%s1084 + $0x338] sm:$0xff] %v1291
                  %v1293 = vld [vmem:[%s1083 + $0xd00] sm:$0xff]
                  %1294 = vst [vmem:[%s1084 + $0x340] sm:$0xff] %v1293
                  %v1295 = vld [vmem:[%s1083 + $0xd20] sm:$0xff]
                  %1296 = vst [vmem:[%s1084 + $0x348] sm:$0xff] %v1295
                  %v1297 = vld [vmem:[%s1083 + $0xd40] sm:$0xff]
                  %1298 = vst [vmem:[%s1084 + $0x350] sm:$0xff] %v1297
                  %v1299 = vld [vmem:[%s1083 + $0xd60] sm:$0xff]
                  %1300 = vst [vmem:[%s1084 + $0x358] sm:$0xff] %v1299
                  %v1301 = vld [vmem:[%s1083 + $0xd80] sm:$0xff]
                  %1302 = vst [vmem:[%s1084 + $0x360] sm:$0xff] %v1301
                  %v1303 = vld [vmem:[%s1083 + $0xda0] sm:$0xff]
                  %1304 = vst [vmem:[%s1084 + $0x368] sm:$0xff] %v1303
                  %v1305 = vld [vmem:[%s1083 + $0xdc0] sm:$0xff]
                  %1306 = vst [vmem:[%s1084 + $0x370] sm:$0xff] %v1305
                  %v1307 = vld [vmem:[%s1083 + $0xde0] sm:$0xff]
                  %1308 = vst [vmem:[%s1084 + $0x378] sm:$0xff] %v1307
                  %v1309 = vld [vmem:[%s1083 + $0xe00] sm:$0xff]
                  %1310 = vst [vmem:[%s1084 + $0x380] sm:$0xff] %v1309
                  %v1311 = vld [vmem:[%s1083 + $0xe20] sm:$0xff]
                  %1312 = vst [vmem:[%s1084 + $0x388] sm:$0xff] %v1311
                  %v1313 = vld [vmem:[%s1083 + $0xe40] sm:$0xff]
                  %1314 = vst [vmem:[%s1084 + $0x390] sm:$0xff] %v1313
                  %v1315 = vld [vmem:[%s1083 + $0xe60] sm:$0xff]
                  %1316 = vst [vmem:[%s1084 + $0x398] sm:$0xff] %v1315
                  %v1317 = vld [vmem:[%s1083 + $0xe80] sm:$0xff]
                  %1318 = vst [vmem:[%s1084 + $0x3a0] sm:$0xff] %v1317
                  %v1319 = vld [vmem:[%s1083 + $0xea0] sm:$0xff]
                  %1320 = vst [vmem:[%s1084 + $0x3a8] sm:$0xff] %v1319
                  %v1321 = vld [vmem:[%s1083 + $0xec0] sm:$0xff]
                  %1322 = vst [vmem:[%s1084 + $0x3b0] sm:$0xff] %v1321
                  %v1323 = vld [vmem:[%s1083 + $0xee0] sm:$0xff]
                  %1324 = vst [vmem:[%s1084 + $0x3b8] sm:$0xff] %v1323
                  %v1325 = vld [vmem:[%s1083 + $0xf00] sm:$0xff]
                  %1326 = vst [vmem:[%s1084 + $0x3c0] sm:$0xff] %v1325
                  %v1327 = vld [vmem:[%s1083 + $0xf20] sm:$0xff]
                  %1328 = vst [vmem:[%s1084 + $0x3c8] sm:$0xff] %v1327
                  %v1329 = vld [vmem:[%s1083 + $0xf40] sm:$0xff]
                  %1330 = vst [vmem:[%s1084 + $0x3d0] sm:$0xff] %v1329
                  %v1331 = vld [vmem:[%s1083 + $0xf60] sm:$0xff]
                  %1332 = vst [vmem:[%s1084 + $0x3d8] sm:$0xff] %v1331
                  %v1333 = vld [vmem:[%s1083 + $0xf80] sm:$0xff]
                  %1334 = vst [vmem:[%s1084 + $0x3e0] sm:$0xff] %v1333
                  %v1335 = vld [vmem:[%s1083 + $0xfa0] sm:$0xff]
                  %1336 = vst [vmem:[%s1084 + $0x3e8] sm:$0xff] %v1335
                  %v1337 = vld [vmem:[%s1083 + $0xfc0] sm:$0xff]
                  %1338 = vst [vmem:[%s1084 + $0x3f0] sm:$0xff] %v1337
                  %v1339 = vld [vmem:[%s1083 + $0xfe0] sm:$0xff]
                  %1340 = vst [vmem:[%s1084 + $0x3f8] sm:$0xff] %v1339
                  %v1341 = vld [vmem:[%s1083 + $0x1000] sm:$0xff]
                  %1342 = vst [vmem:[%s1084 + $0x400] sm:$0xff] %v1341
                  %v1343 = vld [vmem:[%s1083 + $0x1020] sm:$0xff]
                  %1344 = vst [vmem:[%s1084 + $0x408] sm:$0xff] %v1343
                  %v1345 = vld [vmem:[%s1083 + $0x1040] sm:$0xff]
                  %1346 = vst [vmem:[%s1084 + $0x410] sm:$0xff] %v1345
                  %v1347 = vld [vmem:[%s1083 + $0x1060] sm:$0xff]
                  %1348 = vst [vmem:[%s1084 + $0x418] sm:$0xff] %v1347
                  %v1349 = vld [vmem:[%s1083 + $0x1080] sm:$0xff]
                  %1350 = vst [vmem:[%s1084 + $0x420] sm:$0xff] %v1349
                  %v1351 = vld [vmem:[%s1083 + $0x10a0] sm:$0xff]
                  %1352 = vst [vmem:[%s1084 + $0x428] sm:$0xff] %v1351
                  %v1353 = vld [vmem:[%s1083 + $0x10c0] sm:$0xff]
                  %1354 = vst [vmem:[%s1084 + $0x430] sm:$0xff] %v1353
                  %v1355 = vld [vmem:[%s1083 + $0x10e0] sm:$0xff]
                  %1356 = vst [vmem:[%s1084 + $0x438] sm:$0xff] %v1355
                  %v1357 = vld [vmem:[%s1083 + $0x1100] sm:$0xff]
                  %1358 = vst [vmem:[%s1084 + $0x440] sm:$0xff] %v1357
                  %v1359 = vld [vmem:[%s1083 + $0x1120] sm:$0xff]
                  %1360 = vst [vmem:[%s1084 + $0x448] sm:$0xff] %v1359
                  %v1361 = vld [vmem:[%s1083 + $0x1140] sm:$0xff]
                  %1362 = vst [vmem:[%s1084 + $0x450] sm:$0xff] %v1361
                  %v1363 = vld [vmem:[%s1083 + $0x1160] sm:$0xff]
                  %1364 = vst [vmem:[%s1084 + $0x458] sm:$0xff] %v1363
                  %v1365 = vld [vmem:[%s1083 + $0x1180] sm:$0xff]
                  %1366 = vst [vmem:[%s1084 + $0x460] sm:$0xff] %v1365
                  %v1367 = vld [vmem:[%s1083 + $0x11a0] sm:$0xff]
                  %1368 = vst [vmem:[%s1084 + $0x468] sm:$0xff] %v1367
                  %v1369 = vld [vmem:[%s1083 + $0x11c0] sm:$0xff]
                  %1370 = vst [vmem:[%s1084 + $0x470] sm:$0xff] %v1369
                  %v1371 = vld [vmem:[%s1083 + $0x11e0] sm:$0xff]
                  %1372 = vst [vmem:[%s1084 + $0x478] sm:$0xff] %v1371
                  %v1373 = vld [vmem:[%s1083 + $0x1200] sm:$0xff]
                  %1374 = vst [vmem:[%s1084 + $0x480] sm:$0xff] %v1373
                  %v1375 = vld [vmem:[%s1083 + $0x1220] sm:$0xff]
                  %1376 = vst [vmem:[%s1084 + $0x488] sm:$0xff] %v1375
                  %v1377 = vld [vmem:[%s1083 + $0x1240] sm:$0xff]
                  %1378 = vst [vmem:[%s1084 + $0x490] sm:$0xff] %v1377
                  %v1379 = vld [vmem:[%s1083 + $0x1260] sm:$0xff]
                  %1380 = vst [vmem:[%s1084 + $0x498] sm:$0xff] %v1379
                  %v1381 = vld [vmem:[%s1083 + $0x1280] sm:$0xff]
                  %1382 = vst [vmem:[%s1084 + $0x4a0] sm:$0xff] %v1381
                  %v1383 = vld [vmem:[%s1083 + $0x12a0] sm:$0xff]
                  %1384 = vst [vmem:[%s1084 + $0x4a8] sm:$0xff] %v1383
                  %v1385 = vld [vmem:[%s1083 + $0x12c0] sm:$0xff]
                  %1386 = vst [vmem:[%s1084 + $0x4b0] sm:$0xff] %v1385
                  %v1387 = vld [vmem:[%s1083 + $0x12e0] sm:$0xff]
                  %1388 = vst [vmem:[%s1084 + $0x4b8] sm:$0xff] %v1387
                  %v1389 = vld [vmem:[%s1083 + $0x1300] sm:$0xff]
                  %1390 = vst [vmem:[%s1084 + $0x4c0] sm:$0xff] %v1389
                  %v1391 = vld [vmem:[%s1083 + $0x1320] sm:$0xff]
                  %1392 = vst [vmem:[%s1084 + $0x4c8] sm:$0xff] %v1391
                  %v1393 = vld [vmem:[%s1083 + $0x1340] sm:$0xff]
                  %1394 = vst [vmem:[%s1084 + $0x4d0] sm:$0xff] %v1393
                  %v1395 = vld [vmem:[%s1083 + $0x1360] sm:$0xff]
                  %1396 = vst [vmem:[%s1084 + $0x4d8] sm:$0xff] %v1395
                  %v1397 = vld [vmem:[%s1083 + $0x1380] sm:$0xff]
                  %1398 = vst [vmem:[%s1084 + $0x4e0] sm:$0xff] %v1397
                  %v1399 = vld [vmem:[%s1083 + $0x13a0] sm:$0xff]
                  %1400 = vst [vmem:[%s1084 + $0x4e8] sm:$0xff] %v1399
                  %v1401 = vld [vmem:[%s1083 + $0x13c0] sm:$0xff]
                  %1402 = vst [vmem:[%s1084 + $0x4f0] sm:$0xff] %v1401
                  %v1403 = vld [vmem:[%s1083 + $0x13e0] sm:$0xff]
                  %1404 = vst [vmem:[%s1084 + $0x4f8] sm:$0xff] %v1403
                  %v1405 = vld [vmem:[%s1083 + $0x1400] sm:$0xff]
                  %1406 = vst [vmem:[%s1084 + $0x500] sm:$0xff] %v1405
                  %v1407 = vld [vmem:[%s1083 + $0x1420] sm:$0xff]
                  %1408 = vst [vmem:[%s1084 + $0x508] sm:$0xff] %v1407
                  %v1409 = vld [vmem:[%s1083 + $0x1440] sm:$0xff]
                  %1410 = vst [vmem:[%s1084 + $0x510] sm:$0xff] %v1409
                  %v1411 = vld [vmem:[%s1083 + $0x1460] sm:$0xff]
                  %1412 = vst [vmem:[%s1084 + $0x518] sm:$0xff] %v1411
                  %v1413 = vld [vmem:[%s1083 + $0x1480] sm:$0xff]
                  %1414 = vst [vmem:[%s1084 + $0x520] sm:$0xff] %v1413
                  %v1415 = vld [vmem:[%s1083 + $0x14a0] sm:$0xff]
                  %1416 = vst [vmem:[%s1084 + $0x528] sm:$0xff] %v1415
                  %v1417 = vld [vmem:[%s1083 + $0x14c0] sm:$0xff]
                  %1418 = vst [vmem:[%s1084 + $0x530] sm:$0xff] %v1417
                  %v1419 = vld [vmem:[%s1083 + $0x14e0] sm:$0xff]
                  %1420 = vst [vmem:[%s1084 + $0x538] sm:$0xff] %v1419
                  %v1421 = vld [vmem:[%s1083 + $0x1500] sm:$0xff]
                  %1422 = vst [vmem:[%s1084 + $0x540] sm:$0xff] %v1421
                  %v1423 = vld [vmem:[%s1083 + $0x1520] sm:$0xff]
                  %1424 = vst [vmem:[%s1084 + $0x548] sm:$0xff] %v1423
                  %v1425 = vld [vmem:[%s1083 + $0x1540] sm:$0xff]
                  %1426 = vst [vmem:[%s1084 + $0x550] sm:$0xff] %v1425
                  %v1427 = vld [vmem:[%s1083 + $0x1560] sm:$0xff]
                  %1428 = vst [vmem:[%s1084 + $0x558] sm:$0xff] %v1427
                  %v1429 = vld [vmem:[%s1083 + $0x1580] sm:$0xff]
                  %1430 = vst [vmem:[%s1084 + $0x560] sm:$0xff] %v1429
                  %v1431 = vld [vmem:[%s1083 + $0x15a0] sm:$0xff]
                  %1432 = vst [vmem:[%s1084 + $0x568] sm:$0xff] %v1431
                  %v1433 = vld [vmem:[%s1083 + $0x15c0] sm:$0xff]
                  %1434 = vst [vmem:[%s1084 + $0x570] sm:$0xff] %v1433
                  %v1435 = vld [vmem:[%s1083 + $0x15e0] sm:$0xff]
                  %1436 = vst [vmem:[%s1084 + $0x578] sm:$0xff] %v1435
                  %v1437 = vld [vmem:[%s1083 + $0x1600] sm:$0xff]
                  %1438 = vst [vmem:[%s1084 + $0x580] sm:$0xff] %v1437
                  %v1439 = vld [vmem:[%s1083 + $0x1620] sm:$0xff]
                  %1440 = vst [vmem:[%s1084 + $0x588] sm:$0xff] %v1439
                  %v1441 = vld [vmem:[%s1083 + $0x1640] sm:$0xff]
                  %1442 = vst [vmem:[%s1084 + $0x590] sm:$0xff] %v1441
                  %v1443 = vld [vmem:[%s1083 + $0x1660] sm:$0xff]
                  %1444 = vst [vmem:[%s1084 + $0x598] sm:$0xff] %v1443
                  %v1445 = vld [vmem:[%s1083 + $0x1680] sm:$0xff]
                  %1446 = vst [vmem:[%s1084 + $0x5a0] sm:$0xff] %v1445
                  %v1447 = vld [vmem:[%s1083 + $0x16a0] sm:$0xff]
                  %1448 = vst [vmem:[%s1084 + $0x5a8] sm:$0xff] %v1447
                  %v1449 = vld [vmem:[%s1083 + $0x16c0] sm:$0xff]
                  %1450 = vst [vmem:[%s1084 + $0x5b0] sm:$0xff] %v1449
                  %v1451 = vld [vmem:[%s1083 + $0x16e0] sm:$0xff]
                  %1452 = vst [vmem:[%s1084 + $0x5b8] sm:$0xff] %v1451
                  %v1453 = vld [vmem:[%s1083 + $0x1700] sm:$0xff]
                  %1454 = vst [vmem:[%s1084 + $0x5c0] sm:$0xff] %v1453
                  %v1455 = vld [vmem:[%s1083 + $0x1720] sm:$0xff]
                  %1456 = vst [vmem:[%s1084 + $0x5c8] sm:$0xff] %v1455
                  %v1457 = vld [vmem:[%s1083 + $0x1740] sm:$0xff]
                  %1458 = vst [vmem:[%s1084 + $0x5d0] sm:$0xff] %v1457
                  %v1459 = vld [vmem:[%s1083 + $0x1760] sm:$0xff]
                  %1460 = vst [vmem:[%s1084 + $0x5d8] sm:$0xff] %v1459
                  %v1461 = vld [vmem:[%s1083 + $0x1780] sm:$0xff]
                  %1462 = vst [vmem:[%s1084 + $0x5e0] sm:$0xff] %v1461
                  %v1463 = vld [vmem:[%s1083 + $0x17a0] sm:$0xff]
                  %1464 = vst [vmem:[%s1084 + $0x5e8] sm:$0xff] %v1463
                  %v1465 = vld [vmem:[%s1083 + $0x17c0] sm:$0xff]
                  %1466 = vst [vmem:[%s1084 + $0x5f0] sm:$0xff] %v1465
                  %v1467 = vld [vmem:[%s1083 + $0x17e0] sm:$0xff]
                  %1468 = vst [vmem:[%s1084 + $0x5f8] sm:$0xff] %v1467
                  %v1469 = vld [vmem:[%s1083 + $0x1800] sm:$0xff]
                  %1470 = vst [vmem:[%s1084 + $0x600] sm:$0xff] %v1469
                  %v1471 = vld [vmem:[%s1083 + $0x1820] sm:$0xff]
                  %1472 = vst [vmem:[%s1084 + $0x608] sm:$0xff] %v1471
                  %v1473 = vld [vmem:[%s1083 + $0x1840] sm:$0xff]
                  %1474 = vst [vmem:[%s1084 + $0x610] sm:$0xff] %v1473
                  %v1475 = vld [vmem:[%s1083 + $0x1860] sm:$0xff]
                  %1476 = vst [vmem:[%s1084 + $0x618] sm:$0xff] %v1475
                  %v1477 = vld [vmem:[%s1083 + $0x1880] sm:$0xff]
                  %1478 = vst [vmem:[%s1084 + $0x620] sm:$0xff] %v1477
                  %v1479 = vld [vmem:[%s1083 + $0x18a0] sm:$0xff]
                  %1480 = vst [vmem:[%s1084 + $0x628] sm:$0xff] %v1479
                  %v1481 = vld [vmem:[%s1083 + $0x18c0] sm:$0xff]
                  %1482 = vst [vmem:[%s1084 + $0x630] sm:$0xff] %v1481
                  %v1483 = vld [vmem:[%s1083 + $0x18e0] sm:$0xff]
                  %1484 = vst [vmem:[%s1084 + $0x638] sm:$0xff] %v1483
                  %v1485 = vld [vmem:[%s1083 + $0x1900] sm:$0xff]
                  %1486 = vst [vmem:[%s1084 + $0x640] sm:$0xff] %v1485
                  %v1487 = vld [vmem:[%s1083 + $0x1920] sm:$0xff]
                  %1488 = vst [vmem:[%s1084 + $0x648] sm:$0xff] %v1487
                  %v1489 = vld [vmem:[%s1083 + $0x1940] sm:$0xff]
                  %1490 = vst [vmem:[%s1084 + $0x650] sm:$0xff] %v1489
                  %v1491 = vld [vmem:[%s1083 + $0x1960] sm:$0xff]
                  %1492 = vst [vmem:[%s1084 + $0x658] sm:$0xff] %v1491
                  %v1493 = vld [vmem:[%s1083 + $0x1980] sm:$0xff]
                  %1494 = vst [vmem:[%s1084 + $0x660] sm:$0xff] %v1493
                  %v1495 = vld [vmem:[%s1083 + $0x19a0] sm:$0xff]
                  %1496 = vst [vmem:[%s1084 + $0x668] sm:$0xff] %v1495
                  %v1497 = vld [vmem:[%s1083 + $0x19c0] sm:$0xff]
                  %1498 = vst [vmem:[%s1084 + $0x670] sm:$0xff] %v1497
                  %v1499 = vld [vmem:[%s1083 + $0x19e0] sm:$0xff]
                  %1500 = vst [vmem:[%s1084 + $0x678] sm:$0xff] %v1499
                  %v1501 = vld [vmem:[%s1083 + $0x1a00] sm:$0xff]
                  %1502 = vst [vmem:[%s1084 + $0x680] sm:$0xff] %v1501
                  %v1503 = vld [vmem:[%s1083 + $0x1a20] sm:$0xff]
                  %1504 = vst [vmem:[%s1084 + $0x688] sm:$0xff] %v1503
                  %v1505 = vld [vmem:[%s1083 + $0x1a40] sm:$0xff]
                  %1506 = vst [vmem:[%s1084 + $0x690] sm:$0xff] %v1505
                  %v1507 = vld [vmem:[%s1083 + $0x1a60] sm:$0xff]
                  %1508 = vst [vmem:[%s1084 + $0x698] sm:$0xff] %v1507
                  %v1509 = vld [vmem:[%s1083 + $0x1a80] sm:$0xff]
                  %1510 = vst [vmem:[%s1084 + $0x6a0] sm:$0xff] %v1509
                  %v1511 = vld [vmem:[%s1083 + $0x1aa0] sm:$0xff]
                  %1512 = vst [vmem:[%s1084 + $0x6a8] sm:$0xff] %v1511
                  %v1513 = vld [vmem:[%s1083 + $0x1ac0] sm:$0xff]
                  %1514 = vst [vmem:[%s1084 + $0x6b0] sm:$0xff] %v1513
                  %v1515 = vld [vmem:[%s1083 + $0x1ae0] sm:$0xff]
                  %1516 = vst [vmem:[%s1084 + $0x6b8] sm:$0xff] %v1515
                  %v1517 = vld [vmem:[%s1083 + $0x1b00] sm:$0xff]
                  %1518 = vst [vmem:[%s1084 + $0x6c0] sm:$0xff] %v1517
                  %v1519 = vld [vmem:[%s1083 + $0x1b20] sm:$0xff]
                  %1520 = vst [vmem:[%s1084 + $0x6c8] sm:$0xff] %v1519
                  %v1521 = vld [vmem:[%s1083 + $0x1b40] sm:$0xff]
                  %1522 = vst [vmem:[%s1084 + $0x6d0] sm:$0xff] %v1521
                  %v1523 = vld [vmem:[%s1083 + $0x1b60] sm:$0xff]
                  %1524 = vst [vmem:[%s1084 + $0x6d8] sm:$0xff] %v1523
                  %v1525 = vld [vmem:[%s1083 + $0x1b80] sm:$0xff]
                  %1526 = vst [vmem:[%s1084 + $0x6e0] sm:$0xff] %v1525
                  %v1527 = vld [vmem:[%s1083 + $0x1ba0] sm:$0xff]
                  %1528 = vst [vmem:[%s1084 + $0x6e8] sm:$0xff] %v1527
                  %v1529 = vld [vmem:[%s1083 + $0x1bc0] sm:$0xff]
                  %1530 = vst [vmem:[%s1084 + $0x6f0] sm:$0xff] %v1529
                  %v1531 = vld [vmem:[%s1083 + $0x1be0] sm:$0xff]
                  %1532 = vst [vmem:[%s1084 + $0x6f8] sm:$0xff] %v1531
                  %v1533 = vld [vmem:[%s1083 + $0x1c00] sm:$0xff]
                  %1534 = vst [vmem:[%s1084 + $0x700] sm:$0xff] %v1533
                  %v1535 = vld [vmem:[%s1083 + $0x1c20] sm:$0xff]
                  %1536 = vst [vmem:[%s1084 + $0x708] sm:$0xff] %v1535
                  %v1537 = vld [vmem:[%s1083 + $0x1c40] sm:$0xff]
                  %1538 = vst [vmem:[%s1084 + $0x710] sm:$0xff] %v1537
                  %v1539 = vld [vmem:[%s1083 + $0x1c60] sm:$0xff]
                  %1540 = vst [vmem:[%s1084 + $0x718] sm:$0xff] %v1539
                  %v1541 = vld [vmem:[%s1083 + $0x1c80] sm:$0xff]
                  %1542 = vst [vmem:[%s1084 + $0x720] sm:$0xff] %v1541
                  %v1543 = vld [vmem:[%s1083 + $0x1ca0] sm:$0xff]
                  %1544 = vst [vmem:[%s1084 + $0x728] sm:$0xff] %v1543
                  %v1545 = vld [vmem:[%s1083 + $0x1cc0] sm:$0xff]
                  %1546 = vst [vmem:[%s1084 + $0x730] sm:$0xff] %v1545
                  %v1547 = vld [vmem:[%s1083 + $0x1ce0] sm:$0xff]
                  %1548 = vst [vmem:[%s1084 + $0x738] sm:$0xff] %v1547
                  %v1549 = vld [vmem:[%s1083 + $0x1d00] sm:$0xff]
                  %1550 = vst [vmem:[%s1084 + $0x740] sm:$0xff] %v1549
                  %v1551 = vld [vmem:[%s1083 + $0x1d20] sm:$0xff]
                  %1552 = vst [vmem:[%s1084 + $0x748] sm:$0xff] %v1551
                  %v1553 = vld [vmem:[%s1083 + $0x1d40] sm:$0xff]
                  %1554 = vst [vmem:[%s1084 + $0x750] sm:$0xff] %v1553
                  %v1555 = vld [vmem:[%s1083 + $0x1d60] sm:$0xff]
                  %1556 = vst [vmem:[%s1084 + $0x758] sm:$0xff] %v1555
                  %v1557 = vld [vmem:[%s1083 + $0x1d80] sm:$0xff]
                  %1558 = vst [vmem:[%s1084 + $0x760] sm:$0xff] %v1557
                  %v1559 = vld [vmem:[%s1083 + $0x1da0] sm:$0xff]
                  %1560 = vst [vmem:[%s1084 + $0x768] sm:$0xff] %v1559
                  %v1561 = vld [vmem:[%s1083 + $0x1dc0] sm:$0xff]
                  %1562 = vst [vmem:[%s1084 + $0x770] sm:$0xff] %v1561
                  %v1563 = vld [vmem:[%s1083 + $0x1de0] sm:$0xff]
                  %1564 = vst [vmem:[%s1084 + $0x778] sm:$0xff] %v1563
                  %v1565 = vld [vmem:[%s1083 + $0x1e00] sm:$0xff]
                  %1566 = vst [vmem:[%s1084 + $0x780] sm:$0xff] %v1565
                  %v1567 = vld [vmem:[%s1083 + $0x1e20] sm:$0xff]
                  %1568 = vst [vmem:[%s1084 + $0x788] sm:$0xff] %v1567
                  %v1569 = vld [vmem:[%s1083 + $0x1e40] sm:$0xff]
                  %1570 = vst [vmem:[%s1084 + $0x790] sm:$0xff] %v1569
                  %v1571 = vld [vmem:[%s1083 + $0x1e60] sm:$0xff]
                  %1572 = vst [vmem:[%s1084 + $0x798] sm:$0xff] %v1571
                  %v1573 = vld [vmem:[%s1083 + $0x1e80] sm:$0xff]
                  %1574 = vst [vmem:[%s1084 + $0x7a0] sm:$0xff] %v1573
                  %v1575 = vld [vmem:[%s1083 + $0x1ea0] sm:$0xff]
                  %1576 = vst [vmem:[%s1084 + $0x7a8] sm:$0xff] %v1575
                  %v1577 = vld [vmem:[%s1083 + $0x1ec0] sm:$0xff]
                  %1578 = vst [vmem:[%s1084 + $0x7b0] sm:$0xff] %v1577
                  %v1579 = vld [vmem:[%s1083 + $0x1ee0] sm:$0xff]
                  %1580 = vst [vmem:[%s1084 + $0x7b8] sm:$0xff] %v1579
                  %v1581 = vld [vmem:[%s1083 + $0x1f00] sm:$0xff]
                  %1582 = vst [vmem:[%s1084 + $0x7c0] sm:$0xff] %v1581
                  %v1583 = vld [vmem:[%s1083 + $0x1f20] sm:$0xff]
                  %1584 = vst [vmem:[%s1084 + $0x7c8] sm:$0xff] %v1583
                  %v1585 = vld [vmem:[%s1083 + $0x1f40] sm:$0xff]
                  %1586 = vst [vmem:[%s1084 + $0x7d0] sm:$0xff] %v1585
                  %v1587 = vld [vmem:[%s1083 + $0x1f60] sm:$0xff]
                  %1588 = vst [vmem:[%s1084 + $0x7d8] sm:$0xff] %v1587
                  %v1589 = vld [vmem:[%s1083 + $0x1f80] sm:$0xff]
                  %1590 = vst [vmem:[%s1084 + $0x7e0] sm:$0xff] %v1589
                  %v1591 = vld [vmem:[%s1083 + $0x1fa0] sm:$0xff]
                  %1592 = vst [vmem:[%s1084 + $0x7e8] sm:$0xff] %v1591
                  %v1593 = vld [vmem:[%s1083 + $0x1fc0] sm:$0xff]
                  %1594 = vst [vmem:[%s1084 + $0x7f0] sm:$0xff] %v1593
                  %v1595 = vld [vmem:[%s1083 + $0x1fe0] sm:$0xff]
                  %1596 = vst [vmem:[%s1084 + $0x7f8] sm:$0xff] %v1595
                  %v1597 = vld [vmem:[%s1083 + $0x2000] sm:$0xff]
                  %1598 = vst [vmem:[%s1084 + $0x800] sm:$0xff] %v1597
                  %v1599 = vld [vmem:[%s1083 + $0x2020] sm:$0xff]
                  %1600 = vst [vmem:[%s1084 + $0x808] sm:$0xff] %v1599
                  %v1601 = vld [vmem:[%s1083 + $0x2040] sm:$0xff]
                  %1602 = vst [vmem:[%s1084 + $0x810] sm:$0xff] %v1601
                  %v1603 = vld [vmem:[%s1083 + $0x2060] sm:$0xff]
                  %1604 = vst [vmem:[%s1084 + $0x818] sm:$0xff] %v1603
                  %v1605 = vld [vmem:[%s1083 + $0x2080] sm:$0xff]
                  %1606 = vst [vmem:[%s1084 + $0x820] sm:$0xff] %v1605
                  %v1607 = vld [vmem:[%s1083 + $0x20a0] sm:$0xff]
                  %1608 = vst [vmem:[%s1084 + $0x828] sm:$0xff] %v1607
                  %v1609 = vld [vmem:[%s1083 + $0x20c0] sm:$0xff]
                  %1610 = vst [vmem:[%s1084 + $0x830] sm:$0xff] %v1609
                  %v1611 = vld [vmem:[%s1083 + $0x20e0] sm:$0xff]
                  %1612 = vst [vmem:[%s1084 + $0x838] sm:$0xff] %v1611
                  %v1613 = vld [vmem:[%s1083 + $0x2100] sm:$0xff]
                  %1614 = vst [vmem:[%s1084 + $0x840] sm:$0xff] %v1613
                  %v1615 = vld [vmem:[%s1083 + $0x2120] sm:$0xff]
                  %1616 = vst [vmem:[%s1084 + $0x848] sm:$0xff] %v1615
                  %v1617 = vld [vmem:[%s1083 + $0x2140] sm:$0xff]
                  %1618 = vst [vmem:[%s1084 + $0x850] sm:$0xff] %v1617
                  %v1619 = vld [vmem:[%s1083 + $0x2160] sm:$0xff]
                  %1620 = vst [vmem:[%s1084 + $0x858] sm:$0xff] %v1619
                  %v1621 = vld [vmem:[%s1083 + $0x2180] sm:$0xff]
                  %1622 = vst [vmem:[%s1084 + $0x860] sm:$0xff] %v1621
                  %v1623 = vld [vmem:[%s1083 + $0x21a0] sm:$0xff]
                  %1624 = vst [vmem:[%s1084 + $0x868] sm:$0xff] %v1623
                  %v1625 = vld [vmem:[%s1083 + $0x21c0] sm:$0xff]
                  %1626 = vst [vmem:[%s1084 + $0x870] sm:$0xff] %v1625
                  %v1627 = vld [vmem:[%s1083 + $0x21e0] sm:$0xff]
                  %1628 = vst [vmem:[%s1084 + $0x878] sm:$0xff] %v1627
                  %v1629 = vld [vmem:[%s1083 + $0x2200] sm:$0xff]
                  %1630 = vst [vmem:[%s1084 + $0x880] sm:$0xff] %v1629
                  %v1631 = vld [vmem:[%s1083 + $0x2220] sm:$0xff]
                  %1632 = vst [vmem:[%s1084 + $0x888] sm:$0xff] %v1631
                  %v1633 = vld [vmem:[%s1083 + $0x2240] sm:$0xff]
                  %1634 = vst [vmem:[%s1084 + $0x890] sm:$0xff] %v1633
                  %v1635 = vld [vmem:[%s1083 + $0x2260] sm:$0xff]
                  %1636 = vst [vmem:[%s1084 + $0x898] sm:$0xff] %v1635
                  %v1637 = vld [vmem:[%s1083 + $0x2280] sm:$0xff]
                  %1638 = vst [vmem:[%s1084 + $0x8a0] sm:$0xff] %v1637
                  %v1639 = vld [vmem:[%s1083 + $0x22a0] sm:$0xff]
                  %1640 = vst [vmem:[%s1084 + $0x8a8] sm:$0xff] %v1639
                  %v1641 = vld [vmem:[%s1083 + $0x22c0] sm:$0xff]
                  %1642 = vst [vmem:[%s1084 + $0x8b0] sm:$0xff] %v1641
                  %v1643 = vld [vmem:[%s1083 + $0x22e0] sm:$0xff]
                  %1644 = vst [vmem:[%s1084 + $0x8b8] sm:$0xff] %v1643
                  %v1645 = vld [vmem:[%s1083 + $0x2300] sm:$0xff]
                  %1646 = vst [vmem:[%s1084 + $0x8c0] sm:$0xff] %v1645
                  %v1647 = vld [vmem:[%s1083 + $0x2320] sm:$0xff]
                  %1648 = vst [vmem:[%s1084 + $0x8c8] sm:$0xff] %v1647
                  %v1649 = vld [vmem:[%s1083 + $0x2340] sm:$0xff]
                  %1650 = vst [vmem:[%s1084 + $0x8d0] sm:$0xff] %v1649
                  %v1651 = vld [vmem:[%s1083 + $0x2360] sm:$0xff]
                  %1652 = vst [vmem:[%s1084 + $0x8d8] sm:$0xff] %v1651
                  %v1653 = vld [vmem:[%s1083 + $0x2380] sm:$0xff]
                  %1654 = vst [vmem:[%s1084 + $0x8e0] sm:$0xff] %v1653
                  %v1655 = vld [vmem:[%s1083 + $0x23a0] sm:$0xff]
                  %1656 = vst [vmem:[%s1084 + $0x8e8] sm:$0xff] %v1655
                  %v1657 = vld [vmem:[%s1083 + $0x23c0] sm:$0xff]
                  %1658 = vst [vmem:[%s1084 + $0x8f0] sm:$0xff] %v1657
                  %v1659 = vld [vmem:[%s1083 + $0x23e0] sm:$0xff]
                  %1660 = vst [vmem:[%s1084 + $0x8f8] sm:$0xff] %v1659
                  %v1661 = vld [vmem:[%s1083 + $0x2400] sm:$0xff]
                  %1662 = vst [vmem:[%s1084 + $0x900] sm:$0xff] %v1661
                  %v1663 = vld [vmem:[%s1083 + $0x2420] sm:$0xff]
                  %1664 = vst [vmem:[%s1084 + $0x908] sm:$0xff] %v1663
                  %v1665 = vld [vmem:[%s1083 + $0x2440] sm:$0xff]
                  %1666 = vst [vmem:[%s1084 + $0x910] sm:$0xff] %v1665
                  %v1667 = vld [vmem:[%s1083 + $0x2460] sm:$0xff]
                  %1668 = vst [vmem:[%s1084 + $0x918] sm:$0xff] %v1667
                  %v1669 = vld [vmem:[%s1083 + $0x2480] sm:$0xff]
                  %1670 = vst [vmem:[%s1084 + $0x920] sm:$0xff] %v1669
                  %v1671 = vld [vmem:[%s1083 + $0x24a0] sm:$0xff]
                  %1672 = vst [vmem:[%s1084 + $0x928] sm:$0xff] %v1671
                  %v1673 = vld [vmem:[%s1083 + $0x24c0] sm:$0xff]
                  %1674 = vst [vmem:[%s1084 + $0x930] sm:$0xff] %v1673
                  %v1675 = vld [vmem:[%s1083 + $0x24e0] sm:$0xff]
                  %1676 = vst [vmem:[%s1084 + $0x938] sm:$0xff] %v1675
                  %v1677 = vld [vmem:[%s1083 + $0x2500] sm:$0xff]
                  %1678 = vst [vmem:[%s1084 + $0x940] sm:$0xff] %v1677
                  %v1679 = vld [vmem:[%s1083 + $0x2520] sm:$0xff]
                  %1680 = vst [vmem:[%s1084 + $0x948] sm:$0xff] %v1679
                  %v1681 = vld [vmem:[%s1083 + $0x2540] sm:$0xff]
                  %1682 = vst [vmem:[%s1084 + $0x950] sm:$0xff] %v1681
                  %v1683 = vld [vmem:[%s1083 + $0x2560] sm:$0xff]
                  %1684 = vst [vmem:[%s1084 + $0x958] sm:$0xff] %v1683
                  %v1685 = vld [vmem:[%s1083 + $0x2580] sm:$0xff]
                  %1686 = vst [vmem:[%s1084 + $0x960] sm:$0xff] %v1685
                  %v1687 = vld [vmem:[%s1083 + $0x25a0] sm:$0xff]
                  %1688 = vst [vmem:[%s1084 + $0x968] sm:$0xff] %v1687
                  %v1689 = vld [vmem:[%s1083 + $0x25c0] sm:$0xff]
                  %1690 = vst [vmem:[%s1084 + $0x970] sm:$0xff] %v1689
                  %v1691 = vld [vmem:[%s1083 + $0x25e0] sm:$0xff]
                  %1692 = vst [vmem:[%s1084 + $0x978] sm:$0xff] %v1691
                  %v1693 = vld [vmem:[%s1083 + $0x2600] sm:$0xff]
                  %1694 = vst [vmem:[%s1084 + $0x980] sm:$0xff] %v1693
                  %v1695 = vld [vmem:[%s1083 + $0x2620] sm:$0xff]
                  %1696 = vst [vmem:[%s1084 + $0x988] sm:$0xff] %v1695
                  %v1697 = vld [vmem:[%s1083 + $0x2640] sm:$0xff]
                  %1698 = vst [vmem:[%s1084 + $0x990] sm:$0xff] %v1697
                  %v1699 = vld [vmem:[%s1083 + $0x2660] sm:$0xff]
                  %1700 = vst [vmem:[%s1084 + $0x998] sm:$0xff] %v1699
                  %v1701 = vld [vmem:[%s1083 + $0x2680] sm:$0xff]
                  %1702 = vst [vmem:[%s1084 + $0x9a0] sm:$0xff] %v1701
                  %v1703 = vld [vmem:[%s1083 + $0x26a0] sm:$0xff]
                  %1704 = vst [vmem:[%s1084 + $0x9a8] sm:$0xff] %v1703
                  %v1705 = vld [vmem:[%s1083 + $0x26c0] sm:$0xff]
                  %1706 = vst [vmem:[%s1084 + $0x9b0] sm:$0xff] %v1705
                  %v1707 = vld [vmem:[%s1083 + $0x26e0] sm:$0xff]
                  %1708 = vst [vmem:[%s1084 + $0x9b8] sm:$0xff] %v1707
                  %v1709 = vld [vmem:[%s1083 + $0x2700] sm:$0xff]
                  %1710 = vst [vmem:[%s1084 + $0x9c0] sm:$0xff] %v1709
                  %v1711 = vld [vmem:[%s1083 + $0x2720] sm:$0xff]
                  %1712 = vst [vmem:[%s1084 + $0x9c8] sm:$0xff] %v1711
                  %v1713 = vld [vmem:[%s1083 + $0x2740] sm:$0xff]
                  %1714 = vst [vmem:[%s1084 + $0x9d0] sm:$0xff] %v1713
                  %v1715 = vld [vmem:[%s1083 + $0x2760] sm:$0xff]
                  %1716 = vst [vmem:[%s1084 + $0x9d8] sm:$0xff] %v1715
                  %v1717 = vld [vmem:[%s1083 + $0x2780] sm:$0xff]
                  %1718 = vst [vmem:[%s1084 + $0x9e0] sm:$0xff] %v1717
                  %v1719 = vld [vmem:[%s1083 + $0x27a0] sm:$0xff]
                  %1720 = vst [vmem:[%s1084 + $0x9e8] sm:$0xff] %v1719
                  %v1721 = vld [vmem:[%s1083 + $0x27c0] sm:$0xff]
                  %1722 = vst [vmem:[%s1084 + $0x9f0] sm:$0xff] %v1721
                  %v1723 = vld [vmem:[%s1083 + $0x27e0] sm:$0xff]
                  %1724 = vst [vmem:[%s1084 + $0x9f8] sm:$0xff] %v1723
                  %v1725 = vld [vmem:[%s1083 + $0x2800] sm:$0xff]
                  %1726 = vst [vmem:[%s1084 + $0xa00] sm:$0xff] %v1725
                  %v1727 = vld [vmem:[%s1083 + $0x2820] sm:$0xff]
                  %1728 = vst [vmem:[%s1084 + $0xa08] sm:$0xff] %v1727
                  %v1729 = vld [vmem:[%s1083 + $0x2840] sm:$0xff]
                  %1730 = vst [vmem:[%s1084 + $0xa10] sm:$0xff] %v1729
                  %v1731 = vld [vmem:[%s1083 + $0x2860] sm:$0xff]
                  %1732 = vst [vmem:[%s1084 + $0xa18] sm:$0xff] %v1731
                  %v1733 = vld [vmem:[%s1083 + $0x2880] sm:$0xff]
                  %1734 = vst [vmem:[%s1084 + $0xa20] sm:$0xff] %v1733
                  %v1735 = vld [vmem:[%s1083 + $0x28a0] sm:$0xff]
                  %1736 = vst [vmem:[%s1084 + $0xa28] sm:$0xff] %v1735
                  %v1737 = vld [vmem:[%s1083 + $0x28c0] sm:$0xff]
                  %1738 = vst [vmem:[%s1084 + $0xa30] sm:$0xff] %v1737
                  %v1739 = vld [vmem:[%s1083 + $0x28e0] sm:$0xff]
                  %1740 = vst [vmem:[%s1084 + $0xa38] sm:$0xff] %v1739
                  %v1741 = vld [vmem:[%s1083 + $0x2900] sm:$0xff]
                  %1742 = vst [vmem:[%s1084 + $0xa40] sm:$0xff] %v1741
                  %v1743 = vld [vmem:[%s1083 + $0x2920] sm:$0xff]
                  %1744 = vst [vmem:[%s1084 + $0xa48] sm:$0xff] %v1743
                  %v1745 = vld [vmem:[%s1083 + $0x2940] sm:$0xff]
                  %1746 = vst [vmem:[%s1084 + $0xa50] sm:$0xff] %v1745
                  %v1747 = vld [vmem:[%s1083 + $0x2960] sm:$0xff]
                  %1748 = vst [vmem:[%s1084 + $0xa58] sm:$0xff] %v1747
                  %v1749 = vld [vmem:[%s1083 + $0x2980] sm:$0xff]
                  %1750 = vst [vmem:[%s1084 + $0xa60] sm:$0xff] %v1749
                  %v1751 = vld [vmem:[%s1083 + $0x29a0] sm:$0xff]
                  %1752 = vst [vmem:[%s1084 + $0xa68] sm:$0xff] %v1751
                  %v1753 = vld [vmem:[%s1083 + $0x29c0] sm:$0xff]
                  %1754 = vst [vmem:[%s1084 + $0xa70] sm:$0xff] %v1753
                  %v1755 = vld [vmem:[%s1083 + $0x29e0] sm:$0xff]
                  %1756 = vst [vmem:[%s1084 + $0xa78] sm:$0xff] %v1755
                  %v1757 = vld [vmem:[%s1083 + $0x2a00] sm:$0xff]
                  %1758 = vst [vmem:[%s1084 + $0xa80] sm:$0xff] %v1757
                  %v1759 = vld [vmem:[%s1083 + $0x2a20] sm:$0xff]
                  %1760 = vst [vmem:[%s1084 + $0xa88] sm:$0xff] %v1759
                  %v1761 = vld [vmem:[%s1083 + $0x2a40] sm:$0xff]
                  %1762 = vst [vmem:[%s1084 + $0xa90] sm:$0xff] %v1761
                  %v1763 = vld [vmem:[%s1083 + $0x2a60] sm:$0xff]
                  %1764 = vst [vmem:[%s1084 + $0xa98] sm:$0xff] %v1763
                  %v1765 = vld [vmem:[%s1083 + $0x2a80] sm:$0xff]
                  %1766 = vst [vmem:[%s1084 + $0xaa0] sm:$0xff] %v1765
                  %v1767 = vld [vmem:[%s1083 + $0x2aa0] sm:$0xff]
                  %1768 = vst [vmem:[%s1084 + $0xaa8] sm:$0xff] %v1767
                  %v1769 = vld [vmem:[%s1083 + $0x2ac0] sm:$0xff]
                  %1770 = vst [vmem:[%s1084 + $0xab0] sm:$0xff] %v1769
                  %v1771 = vld [vmem:[%s1083 + $0x2ae0] sm:$0xff]
                  %1772 = vst [vmem:[%s1084 + $0xab8] sm:$0xff] %v1771
                  %v1773 = vld [vmem:[%s1083 + $0x2b00] sm:$0xff]
                  %1774 = vst [vmem:[%s1084 + $0xac0] sm:$0xff] %v1773
                  %v1775 = vld [vmem:[%s1083 + $0x2b20] sm:$0xff]
                  %1776 = vst [vmem:[%s1084 + $0xac8] sm:$0xff] %v1775
                  %v1777 = vld [vmem:[%s1083 + $0x2b40] sm:$0xff]
                  %1778 = vst [vmem:[%s1084 + $0xad0] sm:$0xff] %v1777
                  %v1779 = vld [vmem:[%s1083 + $0x2b60] sm:$0xff]
                  %1780 = vst [vmem:[%s1084 + $0xad8] sm:$0xff] %v1779
                  %v1781 = vld [vmem:[%s1083 + $0x2b80] sm:$0xff]
                  %1782 = vst [vmem:[%s1084 + $0xae0] sm:$0xff] %v1781
                  %v1783 = vld [vmem:[%s1083 + $0x2ba0] sm:$0xff]
                  %1784 = vst [vmem:[%s1084 + $0xae8] sm:$0xff] %v1783
                  %v1785 = vld [vmem:[%s1083 + $0x2bc0] sm:$0xff]
                  %1786 = vst [vmem:[%s1084 + $0xaf0] sm:$0xff] %v1785
                  %v1787 = vld [vmem:[%s1083 + $0x2be0] sm:$0xff]
                  %1788 = vst [vmem:[%s1084 + $0xaf8] sm:$0xff] %v1787
                  %v1789 = vld [vmem:[%s1083 + $0x2c00] sm:$0xff]
                  %1790 = vst [vmem:[%s1084 + $0xb00] sm:$0xff] %v1789
                  %v1791 = vld [vmem:[%s1083 + $0x2c20] sm:$0xff]
                  %1792 = vst [vmem:[%s1084 + $0xb08] sm:$0xff] %v1791
                  %v1793 = vld [vmem:[%s1083 + $0x2c40] sm:$0xff]
                  %1794 = vst [vmem:[%s1084 + $0xb10] sm:$0xff] %v1793
                  %v1795 = vld [vmem:[%s1083 + $0x2c60] sm:$0xff]
                  %1796 = vst [vmem:[%s1084 + $0xb18] sm:$0xff] %v1795
                  %v1797 = vld [vmem:[%s1083 + $0x2c80] sm:$0xff]
                  %1798 = vst [vmem:[%s1084 + $0xb20] sm:$0xff] %v1797
                  %v1799 = vld [vmem:[%s1083 + $0x2ca0] sm:$0xff]
                  %1800 = vst [vmem:[%s1084 + $0xb28] sm:$0xff] %v1799
                  %v1801 = vld [vmem:[%s1083 + $0x2cc0] sm:$0xff]
                  %1802 = vst [vmem:[%s1084 + $0xb30] sm:$0xff] %v1801
                  %v1803 = vld [vmem:[%s1083 + $0x2ce0] sm:$0xff]
                  %1804 = vst [vmem:[%s1084 + $0xb38] sm:$0xff] %v1803
                  %v1805 = vld [vmem:[%s1083 + $0x2d00] sm:$0xff]
                  %1806 = vst [vmem:[%s1084 + $0xb40] sm:$0xff] %v1805
                  %v1807 = vld [vmem:[%s1083 + $0x2d20] sm:$0xff]
                  %1808 = vst [vmem:[%s1084 + $0xb48] sm:$0xff] %v1807
                  %v1809 = vld [vmem:[%s1083 + $0x2d40] sm:$0xff]
                  %1810 = vst [vmem:[%s1084 + $0xb50] sm:$0xff] %v1809
                  %v1811 = vld [vmem:[%s1083 + $0x2d60] sm:$0xff]
                  %1812 = vst [vmem:[%s1084 + $0xb58] sm:$0xff] %v1811
                  %v1813 = vld [vmem:[%s1083 + $0x2d80] sm:$0xff]
                  %1814 = vst [vmem:[%s1084 + $0xb60] sm:$0xff] %v1813
                  %v1815 = vld [vmem:[%s1083 + $0x2da0] sm:$0xff]
                  %1816 = vst [vmem:[%s1084 + $0xb68] sm:$0xff] %v1815
                  %v1817 = vld [vmem:[%s1083 + $0x2dc0] sm:$0xff]
                  %1818 = vst [vmem:[%s1084 + $0xb70] sm:$0xff] %v1817
                  %v1819 = vld [vmem:[%s1083 + $0x2de0] sm:$0xff]
                  %1820 = vst [vmem:[%s1084 + $0xb78] sm:$0xff] %v1819
                  %v1821 = vld [vmem:[%s1083 + $0x2e00] sm:$0xff]
                  %1822 = vst [vmem:[%s1084 + $0xb80] sm:$0xff] %v1821
                  %v1823 = vld [vmem:[%s1083 + $0x2e20] sm:$0xff]
                  %1824 = vst [vmem:[%s1084 + $0xb88] sm:$0xff] %v1823
                  %v1825 = vld [vmem:[%s1083 + $0x2e40] sm:$0xff]
                  %1826 = vst [vmem:[%s1084 + $0xb90] sm:$0xff] %v1825
                  %v1827 = vld [vmem:[%s1083 + $0x2e60] sm:$0xff]
                  %1828 = vst [vmem:[%s1084 + $0xb98] sm:$0xff] %v1827
                  %v1829 = vld [vmem:[%s1083 + $0x2e80] sm:$0xff]
                  %1830 = vst [vmem:[%s1084 + $0xba0] sm:$0xff] %v1829
                  %v1831 = vld [vmem:[%s1083 + $0x2ea0] sm:$0xff]
                  %1832 = vst [vmem:[%s1084 + $0xba8] sm:$0xff] %v1831
                  %v1833 = vld [vmem:[%s1083 + $0x2ec0] sm:$0xff]
                  %1834 = vst [vmem:[%s1084 + $0xbb0] sm:$0xff] %v1833
                  %v1835 = vld [vmem:[%s1083 + $0x2ee0] sm:$0xff]
                  %1836 = vst [vmem:[%s1084 + $0xbb8] sm:$0xff] %v1835
                  %v1837 = vld [vmem:[%s1083 + $0x2f00] sm:$0xff]
                  %1838 = vst [vmem:[%s1084 + $0xbc0] sm:$0xff] %v1837
                  %v1839 = vld [vmem:[%s1083 + $0x2f20] sm:$0xff]
                  %1840 = vst [vmem:[%s1084 + $0xbc8] sm:$0xff] %v1839
                  %v1841 = vld [vmem:[%s1083 + $0x2f40] sm:$0xff]
                  %1842 = vst [vmem:[%s1084 + $0xbd0] sm:$0xff] %v1841
                  %v1843 = vld [vmem:[%s1083 + $0x2f60] sm:$0xff]
                  %1844 = vst [vmem:[%s1084 + $0xbd8] sm:$0xff] %v1843
                  %v1845 = vld [vmem:[%s1083 + $0x2f80] sm:$0xff]
                  %1846 = vst [vmem:[%s1084 + $0xbe0] sm:$0xff] %v1845
                  %v1847 = vld [vmem:[%s1083 + $0x2fa0] sm:$0xff]
                  %1848 = vst [vmem:[%s1084 + $0xbe8] sm:$0xff] %v1847
                  %v1849 = vld [vmem:[%s1083 + $0x2fc0] sm:$0xff]
                  %1850 = vst [vmem:[%s1084 + $0xbf0] sm:$0xff] %v1849
                  %v1851 = vld [vmem:[%s1083 + $0x2fe0] sm:$0xff]
                  %1852 = vst [vmem:[%s1084 + $0xbf8] sm:$0xff] %v1851
                  %v1853 = vld [vmem:[%s1083 + $0x3000] sm:$0xff]
                  %1854 = vst [vmem:[%s1084 + $0xc00] sm:$0xff] %v1853
                  %v1855 = vld [vmem:[%s1083 + $0x3020] sm:$0xff]
                  %1856 = vst [vmem:[%s1084 + $0xc08] sm:$0xff] %v1855
                  %v1857 = vld [vmem:[%s1083 + $0x3040] sm:$0xff]
                  %1858 = vst [vmem:[%s1084 + $0xc10] sm:$0xff] %v1857
                  %v1859 = vld [vmem:[%s1083 + $0x3060] sm:$0xff]
                  %1860 = vst [vmem:[%s1084 + $0xc18] sm:$0xff] %v1859
                  %v1861 = vld [vmem:[%s1083 + $0x3080] sm:$0xff]
                  %1862 = vst [vmem:[%s1084 + $0xc20] sm:$0xff] %v1861
                  %v1863 = vld [vmem:[%s1083 + $0x30a0] sm:$0xff]
                  %1864 = vst [vmem:[%s1084 + $0xc28] sm:$0xff] %v1863
                  %v1865 = vld [vmem:[%s1083 + $0x30c0] sm:$0xff]
                  %1866 = vst [vmem:[%s1084 + $0xc30] sm:$0xff] %v1865
                  %v1867 = vld [vmem:[%s1083 + $0x30e0] sm:$0xff]
                  %1868 = vst [vmem:[%s1084 + $0xc38] sm:$0xff] %v1867
                  %v1869 = vld [vmem:[%s1083 + $0x3100] sm:$0xff]
                  %1870 = vst [vmem:[%s1084 + $0xc40] sm:$0xff] %v1869
                  %v1871 = vld [vmem:[%s1083 + $0x3120] sm:$0xff]
                  %1872 = vst [vmem:[%s1084 + $0xc48] sm:$0xff] %v1871
                  %v1873 = vld [vmem:[%s1083 + $0x3140] sm:$0xff]
                  %1874 = vst [vmem:[%s1084 + $0xc50] sm:$0xff] %v1873
                  %v1875 = vld [vmem:[%s1083 + $0x3160] sm:$0xff]
                  %1876 = vst [vmem:[%s1084 + $0xc58] sm:$0xff] %v1875
                  %v1877 = vld [vmem:[%s1083 + $0x3180] sm:$0xff]
                  %1878 = vst [vmem:[%s1084 + $0xc60] sm:$0xff] %v1877
                  %v1879 = vld [vmem:[%s1083 + $0x31a0] sm:$0xff]
                  %1880 = vst [vmem:[%s1084 + $0xc68] sm:$0xff] %v1879
                  %v1881 = vld [vmem:[%s1083 + $0x31c0] sm:$0xff]
                  %1882 = vst [vmem:[%s1084 + $0xc70] sm:$0xff] %v1881
                  %v1883 = vld [vmem:[%s1083 + $0x31e0] sm:$0xff]
                  %1884 = vst [vmem:[%s1084 + $0xc78] sm:$0xff] %v1883
                  %v1885 = vld [vmem:[%s1083 + $0x3200] sm:$0xff]
                  %1886 = vst [vmem:[%s1084 + $0xc80] sm:$0xff] %v1885
                  %v1887 = vld [vmem:[%s1083 + $0x3220] sm:$0xff]
                  %1888 = vst [vmem:[%s1084 + $0xc88] sm:$0xff] %v1887
                  %v1889 = vld [vmem:[%s1083 + $0x3240] sm:$0xff]
                  %1890 = vst [vmem:[%s1084 + $0xc90] sm:$0xff] %v1889
                  %v1891 = vld [vmem:[%s1083 + $0x3260] sm:$0xff]
                  %1892 = vst [vmem:[%s1084 + $0xc98] sm:$0xff] %v1891
                  %v1893 = vld [vmem:[%s1083 + $0x3280] sm:$0xff]
                  %1894 = vst [vmem:[%s1084 + $0xca0] sm:$0xff] %v1893
                  %v1895 = vld [vmem:[%s1083 + $0x32a0] sm:$0xff]
                  %1896 = vst [vmem:[%s1084 + $0xca8] sm:$0xff] %v1895
                  %v1897 = vld [vmem:[%s1083 + $0x32c0] sm:$0xff]
                  %1898 = vst [vmem:[%s1084 + $0xcb0] sm:$0xff] %v1897
                  %v1899 = vld [vmem:[%s1083 + $0x32e0] sm:$0xff]
                  %1900 = vst [vmem:[%s1084 + $0xcb8] sm:$0xff] %v1899
                  %v1901 = vld [vmem:[%s1083 + $0x3300] sm:$0xff]
                  %1902 = vst [vmem:[%s1084 + $0xcc0] sm:$0xff] %v1901
                  %v1903 = vld [vmem:[%s1083 + $0x3320] sm:$0xff]
                  %1904 = vst [vmem:[%s1084 + $0xcc8] sm:$0xff] %v1903
                  %v1905 = vld [vmem:[%s1083 + $0x3340] sm:$0xff]
                  %1906 = vst [vmem:[%s1084 + $0xcd0] sm:$0xff] %v1905
                  %v1907 = vld [vmem:[%s1083 + $0x3360] sm:$0xff]
                  %1908 = vst [vmem:[%s1084 + $0xcd8] sm:$0xff] %v1907
                  %v1909 = vld [vmem:[%s1083 + $0x3380] sm:$0xff]
                  %1910 = vst [vmem:[%s1084 + $0xce0] sm:$0xff] %v1909
                  %v1911 = vld [vmem:[%s1083 + $0x33a0] sm:$0xff]
                  %1912 = vst [vmem:[%s1084 + $0xce8] sm:$0xff] %v1911
                  %v1913 = vld [vmem:[%s1083 + $0x33c0] sm:$0xff]
                  %1914 = vst [vmem:[%s1084 + $0xcf0] sm:$0xff] %v1913
                  %v1915 = vld [vmem:[%s1083 + $0x33e0] sm:$0xff]
                  %1916 = vst [vmem:[%s1084 + $0xcf8] sm:$0xff] %v1915
                  %v1917 = vld [vmem:[%s1083 + $0x3400] sm:$0xff]
                  %1918 = vst [vmem:[%s1084 + $0xd00] sm:$0xff] %v1917
                  %v1919 = vld [vmem:[%s1083 + $0x3420] sm:$0xff]
                  %1920 = vst [vmem:[%s1084 + $0xd08] sm:$0xff] %v1919
                  %v1921 = vld [vmem:[%s1083 + $0x3440] sm:$0xff]
                  %1922 = vst [vmem:[%s1084 + $0xd10] sm:$0xff] %v1921
                  %v1923 = vld [vmem:[%s1083 + $0x3460] sm:$0xff]
                  %1924 = vst [vmem:[%s1084 + $0xd18] sm:$0xff] %v1923
                  %v1925 = vld [vmem:[%s1083 + $0x3480] sm:$0xff]
                  %1926 = vst [vmem:[%s1084 + $0xd20] sm:$0xff] %v1925
                  %v1927 = vld [vmem:[%s1083 + $0x34a0] sm:$0xff]
                  %1928 = vst [vmem:[%s1084 + $0xd28] sm:$0xff] %v1927
                  %v1929 = vld [vmem:[%s1083 + $0x34c0] sm:$0xff]
                  %1930 = vst [vmem:[%s1084 + $0xd30] sm:$0xff] %v1929
                  %v1931 = vld [vmem:[%s1083 + $0x34e0] sm:$0xff]
                  %1932 = vst [vmem:[%s1084 + $0xd38] sm:$0xff] %v1931
                  %v1933 = vld [vmem:[%s1083 + $0x3500] sm:$0xff]
                  %1934 = vst [vmem:[%s1084 + $0xd40] sm:$0xff] %v1933
                  %v1935 = vld [vmem:[%s1083 + $0x3520] sm:$0xff]
                  %1936 = vst [vmem:[%s1084 + $0xd48] sm:$0xff] %v1935
                  %v1937 = vld [vmem:[%s1083 + $0x3540] sm:$0xff]
                  %1938 = vst [vmem:[%s1084 + $0xd50] sm:$0xff] %v1937
                  %v1939 = vld [vmem:[%s1083 + $0x3560] sm:$0xff]
                  %1940 = vst [vmem:[%s1084 + $0xd58] sm:$0xff] %v1939
                  %v1941 = vld [vmem:[%s1083 + $0x3580] sm:$0xff]
                  %1942 = vst [vmem:[%s1084 + $0xd60] sm:$0xff] %v1941
                  %v1943 = vld [vmem:[%s1083 + $0x35a0] sm:$0xff]
                  %1944 = vst [vmem:[%s1084 + $0xd68] sm:$0xff] %v1943
                  %v1945 = vld [vmem:[%s1083 + $0x35c0] sm:$0xff]
                  %1946 = vst [vmem:[%s1084 + $0xd70] sm:$0xff] %v1945
                  %v1947 = vld [vmem:[%s1083 + $0x35e0] sm:$0xff]
                  %1948 = vst [vmem:[%s1084 + $0xd78] sm:$0xff] %v1947
                $region52: #{layer12_forward.1} parent=46 // loop_footer
                  %s1082 = sadd.s32 1, %s1078
                $region53: #{layer12_forward.1} parent=46 // loop_footer_branch
                  %1077 = sbr.rel target = $region49
                $region54: #{layer12_forward.1} parent=46 // loop_exit
                  _
              $region47: #{layer12_forward.1} parent=31 // pred_fallthru
                _
              // Predicated region
              $region55: #{layer12_forward.1} parent=31 // pred_check
                _
              $region56: #{layer12_forward.1} parent=31 // pred_check_branch
                %1950 = sbr.rel target = $region58
              $region57: #{layer12_forward.1} parent=31 // pred_region
                _
              $region58: #{layer12_forward.1} parent=31 // pred_fallthru
                _
            $region32: #{layer12_forward.1} parent=27 // pred_fallthru
              _
            // Predicated region
            $region33: #{layer12_forward.1} parent=27 // pred_check
              _
            $region34: #{layer12_forward.1} parent=27 // pred_check_branch
              %201 = sbr.rel target = $region36
            $region35: #{layer12_forward.1} parent=27 // pred_region
              loop: start=0, step=1, limit=1
              $region37: #{layer12_forward.1} parent=35 // loop_pre_header
                _
              $region38: #{layer12_forward.1} parent=35 // loop_header
                %s204 = sphi 0, %s208
                %p205 = scmp.ge.s32.totalorder %s204, 1
                %s209 = sphi %s195, %s195
                %s210 = sphi %s192, %s192
              $region39: #{layer12_forward.1} parent=35 // loop_header_branch
                %207 = sbr.rel (%p205) target = $region43
              $region40: #{layer12_forward.1} parent=35 // loop_body
                %v211 = vld [vmem:[%s209] sm:$0xff]
                %212 = vst [vmem:[%s210] sm:$0xff] %v211
                %v213 = vld [vmem:[%s209 + $0x20] sm:$0xff]
                %214 = vst [vmem:[%s210 + $0x8] sm:$0xff] %v213
                %v215 = vld [vmem:[%s209 + $0x40] sm:$0xff]
                %216 = vst [vmem:[%s210 + $0x10] sm:$0xff] %v215
                %v217 = vld [vmem:[%s209 + $0x60] sm:$0xff]
                %218 = vst [vmem:[%s210 + $0x18] sm:$0xff] %v217
                %v219 = vld [vmem:[%s209 + $0x80] sm:$0xff]
                %220 = vst [vmem:[%s210 + $0x20] sm:$0xff] %v219
                %v221 = vld [vmem:[%s209 + $0xa0] sm:$0xff]
                %222 = vst [vmem:[%s210 + $0x28] sm:$0xff] %v221
                %v223 = vld [vmem:[%s209 + $0xc0] sm:$0xff]
                %224 = vst [vmem:[%s210 + $0x30] sm:$0xff] %v223
                %v225 = vld [vmem:[%s209 + $0xe0] sm:$0xff]
                %226 = vst [vmem:[%s210 + $0x38] sm:$0xff] %v225
                %v227 = vld [vmem:[%s209 + $0x100] sm:$0xff]
                %228 = vst [vmem:[%s210 + $0x40] sm:$0xff] %v227
                %v229 = vld [vmem:[%s209 + $0x120] sm:$0xff]
                %230 = vst [vmem:[%s210 + $0x48] sm:$0xff] %v229
                %v231 = vld [vmem:[%s209 + $0x140] sm:$0xff]
                %232 = vst [vmem:[%s210 + $0x50] sm:$0xff] %v231
                %v233 = vld [vmem:[%s209 + $0x160] sm:$0xff]
                %234 = vst [vmem:[%s210 + $0x58] sm:$0xff] %v233
                %v235 = vld [vmem:[%s209 + $0x180] sm:$0xff]
                %236 = vst [vmem:[%s210 + $0x60] sm:$0xff] %v235
                %v237 = vld [vmem:[%s209 + $0x1a0] sm:$0xff]
                %238 = vst [vmem:[%s210 + $0x68] sm:$0xff] %v237
                %v239 = vld [vmem:[%s209 + $0x1c0] sm:$0xff]
                %240 = vst [vmem:[%s210 + $0x70] sm:$0xff] %v239
                %v241 = vld [vmem:[%s209 + $0x1e0] sm:$0xff]
                %242 = vst [vmem:[%s210 + $0x78] sm:$0xff] %v241
                %v243 = vld [vmem:[%s209 + $0x200] sm:$0xff]
                %244 = vst [vmem:[%s210 + $0x80] sm:$0xff] %v243
                %v245 = vld [vmem:[%s209 + $0x220] sm:$0xff]
                %246 = vst [vmem:[%s210 + $0x88] sm:$0xff] %v245
                %v247 = vld [vmem:[%s209 + $0x240] sm:$0xff]
                %248 = vst [vmem:[%s210 + $0x90] sm:$0xff] %v247
                %v249 = vld [vmem:[%s209 + $0x260] sm:$0xff]
                %250 = vst [vmem:[%s210 + $0x98] sm:$0xff] %v249
                %v251 = vld [vmem:[%s209 + $0x280] sm:$0xff]
                %252 = vst [vmem:[%s210 + $0xa0] sm:$0xff] %v251
                %v253 = vld [vmem:[%s209 + $0x2a0] sm:$0xff]
                %254 = vst [vmem:[%s210 + $0xa8] sm:$0xff] %v253
                %v255 = vld [vmem:[%s209 + $0x2c0] sm:$0xff]
                %256 = vst [vmem:[%s210 + $0xb0] sm:$0xff] %v255
                %v257 = vld [vmem:[%s209 + $0x2e0] sm:$0xff]
                %258 = vst [vmem:[%s210 + $0xb8] sm:$0xff] %v257
                %v259 = vld [vmem:[%s209 + $0x300] sm:$0xff]
                %260 = vst [vmem:[%s210 + $0xc0] sm:$0xff] %v259
                %v261 = vld [vmem:[%s209 + $0x320] sm:$0xff]
                %262 = vst [vmem:[%s210 + $0xc8] sm:$0xff] %v261
                %v263 = vld [vmem:[%s209 + $0x340] sm:$0xff]
                %264 = vst [vmem:[%s210 + $0xd0] sm:$0xff] %v263
                %v265 = vld [vmem:[%s209 + $0x360] sm:$0xff]
                %266 = vst [vmem:[%s210 + $0xd8] sm:$0xff] %v265
                %v267 = vld [vmem:[%s209 + $0x380] sm:$0xff]
                %268 = vst [vmem:[%s210 + $0xe0] sm:$0xff] %v267
                %v269 = vld [vmem:[%s209 + $0x3a0] sm:$0xff]
                %270 = vst [vmem:[%s210 + $0xe8] sm:$0xff] %v269
                %v271 = vld [vmem:[%s209 + $0x3c0] sm:$0xff]
                %272 = vst [vmem:[%s210 + $0xf0] sm:$0xff] %v271
                %v273 = vld [vmem:[%s209 + $0x3e0] sm:$0xff]
                %274 = vst [vmem:[%s210 + $0xf8] sm:$0xff] %v273
                %v275 = vld [vmem:[%s209 + $0x400] sm:$0xff]
                %276 = vst [vmem:[%s210 + $0x100] sm:$0xff] %v275
                %v277 = vld [vmem:[%s209 + $0x420] sm:$0xff]
                %278 = vst [vmem:[%s210 + $0x108] sm:$0xff] %v277
                %v279 = vld [vmem:[%s209 + $0x440] sm:$0xff]
                %280 = vst [vmem:[%s210 + $0x110] sm:$0xff] %v279
                %v281 = vld [vmem:[%s209 + $0x460] sm:$0xff]
                %282 = vst [vmem:[%s210 + $0x118] sm:$0xff] %v281
                %v283 = vld [vmem:[%s209 + $0x480] sm:$0xff]
                %284 = vst [vmem:[%s210 + $0x120] sm:$0xff] %v283
                %v285 = vld [vmem:[%s209 + $0x4a0] sm:$0xff]
                %286 = vst [vmem:[%s210 + $0x128] sm:$0xff] %v285
                %v287 = vld [vmem:[%s209 + $0x4c0] sm:$0xff]
                %288 = vst [vmem:[%s210 + $0x130] sm:$0xff] %v287
                %v289 = vld [vmem:[%s209 + $0x4e0] sm:$0xff]
                %290 = vst [vmem:[%s210 + $0x138] sm:$0xff] %v289
                %v291 = vld [vmem:[%s209 + $0x500] sm:$0xff]
                %292 = vst [vmem:[%s210 + $0x140] sm:$0xff] %v291
                %v293 = vld [vmem:[%s209 + $0x520] sm:$0xff]
                %294 = vst [vmem:[%s210 + $0x148] sm:$0xff] %v293
                %v295 = vld [vmem:[%s209 + $0x540] sm:$0xff]
                %296 = vst [vmem:[%s210 + $0x150] sm:$0xff] %v295
                %v297 = vld [vmem:[%s209 + $0x560] sm:$0xff]
                %298 = vst [vmem:[%s210 + $0x158] sm:$0xff] %v297
                %v299 = vld [vmem:[%s209 + $0x580] sm:$0xff]
                %300 = vst [vmem:[%s210 + $0x160] sm:$0xff] %v299
                %v301 = vld [vmem:[%s209 + $0x5a0] sm:$0xff]
                %302 = vst [vmem:[%s210 + $0x168] sm:$0xff] %v301
                %v303 = vld [vmem:[%s209 + $0x5c0] sm:$0xff]
                %304 = vst [vmem:[%s210 + $0x170] sm:$0xff] %v303
                %v305 = vld [vmem:[%s209 + $0x5e0] sm:$0xff]
                %306 = vst [vmem:[%s210 + $0x178] sm:$0xff] %v305
                %v307 = vld [vmem:[%s209 + $0x600] sm:$0xff]
                %308 = vst [vmem:[%s210 + $0x180] sm:$0xff] %v307
                %v309 = vld [vmem:[%s209 + $0x620] sm:$0xff]
                %310 = vst [vmem:[%s210 + $0x188] sm:$0xff] %v309
                %v311 = vld [vmem:[%s209 + $0x640] sm:$0xff]
                %312 = vst [vmem:[%s210 + $0x190] sm:$0xff] %v311
                %v313 = vld [vmem:[%s209 + $0x660] sm:$0xff]
                %314 = vst [vmem:[%s210 + $0x198] sm:$0xff] %v313
                %v315 = vld [vmem:[%s209 + $0x680] sm:$0xff]
                %316 = vst [vmem:[%s210 + $0x1a0] sm:$0xff] %v315
                %v317 = vld [vmem:[%s209 + $0x6a0] sm:$0xff]
                %318 = vst [vmem:[%s210 + $0x1a8] sm:$0xff] %v317
                %v319 = vld [vmem:[%s209 + $0x6c0] sm:$0xff]
                %320 = vst [vmem:[%s210 + $0x1b0] sm:$0xff] %v319
                %v321 = vld [vmem:[%s209 + $0x6e0] sm:$0xff]
                %322 = vst [vmem:[%s210 + $0x1b8] sm:$0xff] %v321
                %v323 = vld [vmem:[%s209 + $0x700] sm:$0xff]
                %324 = vst [vmem:[%s210 + $0x1c0] sm:$0xff] %v323
                %v325 = vld [vmem:[%s209 + $0x720] sm:$0xff]
                %326 = vst [vmem:[%s210 + $0x1c8] sm:$0xff] %v325
                %v327 = vld [vmem:[%s209 + $0x740] sm:$0xff]
                %328 = vst [vmem:[%s210 + $0x1d0] sm:$0xff] %v327
                %v329 = vld [vmem:[%s209 + $0x760] sm:$0xff]
                %330 = vst [vmem:[%s210 + $0x1d8] sm:$0xff] %v329
                %v331 = vld [vmem:[%s209 + $0x780] sm:$0xff]
                %332 = vst [vmem:[%s210 + $0x1e0] sm:$0xff] %v331
                %v333 = vld [vmem:[%s209 + $0x7a0] sm:$0xff]
                %334 = vst [vmem:[%s210 + $0x1e8] sm:$0xff] %v333
                %v335 = vld [vmem:[%s209 + $0x7c0] sm:$0xff]
                %336 = vst [vmem:[%s210 + $0x1f0] sm:$0xff] %v335
                %v337 = vld [vmem:[%s209 + $0x7e0] sm:$0xff]
                %338 = vst [vmem:[%s210 + $0x1f8] sm:$0xff] %v337
                %v339 = vld [vmem:[%s209 + $0x800] sm:$0xff]
                %340 = vst [vmem:[%s210 + $0x200] sm:$0xff] %v339
                %v341 = vld [vmem:[%s209 + $0x820] sm:$0xff]
                %342 = vst [vmem:[%s210 + $0x208] sm:$0xff] %v341
                %v343 = vld [vmem:[%s209 + $0x840] sm:$0xff]
                %344 = vst [vmem:[%s210 + $0x210] sm:$0xff] %v343
                %v345 = vld [vmem:[%s209 + $0x860] sm:$0xff]
                %346 = vst [vmem:[%s210 + $0x218] sm:$0xff] %v345
                %v347 = vld [vmem:[%s209 + $0x880] sm:$0xff]
                %348 = vst [vmem:[%s210 + $0x220] sm:$0xff] %v347
                %v349 = vld [vmem:[%s209 + $0x8a0] sm:$0xff]
                %350 = vst [vmem:[%s210 + $0x228] sm:$0xff] %v349
                %v351 = vld [vmem:[%s209 + $0x8c0] sm:$0xff]
                %352 = vst [vmem:[%s210 + $0x230] sm:$0xff] %v351
                %v353 = vld [vmem:[%s209 + $0x8e0] sm:$0xff]
                %354 = vst [vmem:[%s210 + $0x238] sm:$0xff] %v353
                %v355 = vld [vmem:[%s209 + $0x900] sm:$0xff]
                %356 = vst [vmem:[%s210 + $0x240] sm:$0xff] %v355
                %v357 = vld [vmem:[%s209 + $0x920] sm:$0xff]
                %358 = vst [vmem:[%s210 + $0x248] sm:$0xff] %v357
                %v359 = vld [vmem:[%s209 + $0x940] sm:$0xff]
                %360 = vst [vmem:[%s210 + $0x250] sm:$0xff] %v359
                %v361 = vld [vmem:[%s209 + $0x960] sm:$0xff]
                %362 = vst [vmem:[%s210 + $0x258] sm:$0xff] %v361
                %v363 = vld [vmem:[%s209 + $0x980] sm:$0xff]
                %364 = vst [vmem:[%s210 + $0x260] sm:$0xff] %v363
                %v365 = vld [vmem:[%s209 + $0x9a0] sm:$0xff]
                %366 = vst [vmem:[%s210 + $0x268] sm:$0xff] %v365
                %v367 = vld [vmem:[%s209 + $0x9c0] sm:$0xff]
                %368 = vst [vmem:[%s210 + $0x270] sm:$0xff] %v367
                %v369 = vld [vmem:[%s209 + $0x9e0] sm:$0xff]
                %370 = vst [vmem:[%s210 + $0x278] sm:$0xff] %v369
                %v371 = vld [vmem:[%s209 + $0xa00] sm:$0xff]
                %372 = vst [vmem:[%s210 + $0x280] sm:$0xff] %v371
                %v373 = vld [vmem:[%s209 + $0xa20] sm:$0xff]
                %374 = vst [vmem:[%s210 + $0x288] sm:$0xff] %v373
                %v375 = vld [vmem:[%s209 + $0xa40] sm:$0xff]
                %376 = vst [vmem:[%s210 + $0x290] sm:$0xff] %v375
                %v377 = vld [vmem:[%s209 + $0xa60] sm:$0xff]
                %378 = vst [vmem:[%s210 + $0x298] sm:$0xff] %v377
                %v379 = vld [vmem:[%s209 + $0xa80] sm:$0xff]
                %380 = vst [vmem:[%s210 + $0x2a0] sm:$0xff] %v379
                %v381 = vld [vmem:[%s209 + $0xaa0] sm:$0xff]
                %382 = vst [vmem:[%s210 + $0x2a8] sm:$0xff] %v381
                %v383 = vld [vmem:[%s209 + $0xac0] sm:$0xff]
                %384 = vst [vmem:[%s210 + $0x2b0] sm:$0xff] %v383
                %v385 = vld [vmem:[%s209 + $0xae0] sm:$0xff]
                %386 = vst [vmem:[%s210 + $0x2b8] sm:$0xff] %v385
                %v387 = vld [vmem:[%s209 + $0xb00] sm:$0xff]
                %388 = vst [vmem:[%s210 + $0x2c0] sm:$0xff] %v387
                %v389 = vld [vmem:[%s209 + $0xb20] sm:$0xff]
                %390 = vst [vmem:[%s210 + $0x2c8] sm:$0xff] %v389
                %v391 = vld [vmem:[%s209 + $0xb40] sm:$0xff]
                %392 = vst [vmem:[%s210 + $0x2d0] sm:$0xff] %v391
                %v393 = vld [vmem:[%s209 + $0xb60] sm:$0xff]
                %394 = vst [vmem:[%s210 + $0x2d8] sm:$0xff] %v393
                %v395 = vld [vmem:[%s209 + $0xb80] sm:$0xff]
                %396 = vst [vmem:[%s210 + $0x2e0] sm:$0xff] %v395
                %v397 = vld [vmem:[%s209 + $0xba0] sm:$0xff]
                %398 = vst [vmem:[%s210 + $0x2e8] sm:$0xff] %v397
                %v399 = vld [vmem:[%s209 + $0xbc0] sm:$0xff]
                %400 = vst [vmem:[%s210 + $0x2f0] sm:$0xff] %v399
                %v401 = vld [vmem:[%s209 + $0xbe0] sm:$0xff]
                %402 = vst [vmem:[%s210 + $0x2f8] sm:$0xff] %v401
                %v403 = vld [vmem:[%s209 + $0xc00] sm:$0xff]
                %404 = vst [vmem:[%s210 + $0x300] sm:$0xff] %v403
                %v405 = vld [vmem:[%s209 + $0xc20] sm:$0xff]
                %406 = vst [vmem:[%s210 + $0x308] sm:$0xff] %v405
                %v407 = vld [vmem:[%s209 + $0xc40] sm:$0xff]
                %408 = vst [vmem:[%s210 + $0x310] sm:$0xff] %v407
                %v409 = vld [vmem:[%s209 + $0xc60] sm:$0xff]
                %410 = vst [vmem:[%s210 + $0x318] sm:$0xff] %v409
                %v411 = vld [vmem:[%s209 + $0xc80] sm:$0xff]
                %412 = vst [vmem:[%s210 + $0x320] sm:$0xff] %v411
                %v413 = vld [vmem:[%s209 + $0xca0] sm:$0xff]
                %414 = vst [vmem:[%s210 + $0x328] sm:$0xff] %v413
                %v415 = vld [vmem:[%s209 + $0xcc0] sm:$0xff]
                %416 = vst [vmem:[%s210 + $0x330] sm:$0xff] %v415
                %v417 = vld [vmem:[%s209 + $0xce0] sm:$0xff]
                %418 = vst [vmem:[%s210 + $0x338] sm:$0xff] %v417
                %v419 = vld [vmem:[%s209 + $0xd00] sm:$0xff]
                %420 = vst [vmem:[%s210 + $0x340] sm:$0xff] %v419
                %v421 = vld [vmem:[%s209 + $0xd20] sm:$0xff]
                %422 = vst [vmem:[%s210 + $0x348] sm:$0xff] %v421
                %v423 = vld [vmem:[%s209 + $0xd40] sm:$0xff]
                %424 = vst [vmem:[%s210 + $0x350] sm:$0xff] %v423
                %v425 = vld [vmem:[%s209 + $0xd60] sm:$0xff]
                %426 = vst [vmem:[%s210 + $0x358] sm:$0xff] %v425
                %v427 = vld [vmem:[%s209 + $0xd80] sm:$0xff]
                %428 = vst [vmem:[%s210 + $0x360] sm:$0xff] %v427
                %v429 = vld [vmem:[%s209 + $0xda0] sm:$0xff]
                %430 = vst [vmem:[%s210 + $0x368] sm:$0xff] %v429
                %v431 = vld [vmem:[%s209 + $0xdc0] sm:$0xff]
                %432 = vst [vmem:[%s210 + $0x370] sm:$0xff] %v431
                %v433 = vld [vmem:[%s209 + $0xde0] sm:$0xff]
                %434 = vst [vmem:[%s210 + $0x378] sm:$0xff] %v433
                %v435 = vld [vmem:[%s209 + $0xe00] sm:$0xff]
                %436 = vst [vmem:[%s210 + $0x380] sm:$0xff] %v435
                %v437 = vld [vmem:[%s209 + $0xe20] sm:$0xff]
                %438 = vst [vmem:[%s210 + $0x388] sm:$0xff] %v437
                %v439 = vld [vmem:[%s209 + $0xe40] sm:$0xff]
                %440 = vst [vmem:[%s210 + $0x390] sm:$0xff] %v439
                %v441 = vld [vmem:[%s209 + $0xe60] sm:$0xff]
                %442 = vst [vmem:[%s210 + $0x398] sm:$0xff] %v441
                %v443 = vld [vmem:[%s209 + $0xe80] sm:$0xff]
                %444 = vst [vmem:[%s210 + $0x3a0] sm:$0xff] %v443
                %v445 = vld [vmem:[%s209 + $0xea0] sm:$0xff]
                %446 = vst [vmem:[%s210 + $0x3a8] sm:$0xff] %v445
                %v447 = vld [vmem:[%s209 + $0xec0] sm:$0xff]
                %448 = vst [vmem:[%s210 + $0x3b0] sm:$0xff] %v447
                %v449 = vld [vmem:[%s209 + $0xee0] sm:$0xff]
                %450 = vst [vmem:[%s210 + $0x3b8] sm:$0xff] %v449
                %v451 = vld [vmem:[%s209 + $0xf00] sm:$0xff]
                %452 = vst [vmem:[%s210 + $0x3c0] sm:$0xff] %v451
                %v453 = vld [vmem:[%s209 + $0xf20] sm:$0xff]
                %454 = vst [vmem:[%s210 + $0x3c8] sm:$0xff] %v453
                %v455 = vld [vmem:[%s209 + $0xf40] sm:$0xff]
                %456 = vst [vmem:[%s210 + $0x3d0] sm:$0xff] %v455
                %v457 = vld [vmem:[%s209 + $0xf60] sm:$0xff]
                %458 = vst [vmem:[%s210 + $0x3d8] sm:$0xff] %v457
                %v459 = vld [vmem:[%s209 + $0xf80] sm:$0xff]
                %460 = vst [vmem:[%s210 + $0x3e0] sm:$0xff] %v459
                %v461 = vld [vmem:[%s209 + $0xfa0] sm:$0xff]
                %462 = vst [vmem:[%s210 + $0x3e8] sm:$0xff] %v461
                %v463 = vld [vmem:[%s209 + $0xfc0] sm:$0xff]
                %464 = vst [vmem:[%s210 + $0x3f0] sm:$0xff] %v463
                %v465 = vld [vmem:[%s209 + $0xfe0] sm:$0xff]
                %466 = vst [vmem:[%s210 + $0x3f8] sm:$0xff] %v465
                %v467 = vld [vmem:[%s209 + $0x1000] sm:$0xff]
                %468 = vst [vmem:[%s210 + $0x400] sm:$0xff] %v467
                %v469 = vld [vmem:[%s209 + $0x1020] sm:$0xff]
                %470 = vst [vmem:[%s210 + $0x408] sm:$0xff] %v469
                %v471 = vld [vmem:[%s209 + $0x1040] sm:$0xff]
                %472 = vst [vmem:[%s210 + $0x410] sm:$0xff] %v471
                %v473 = vld [vmem:[%s209 + $0x1060] sm:$0xff]
                %474 = vst [vmem:[%s210 + $0x418] sm:$0xff] %v473
                %v475 = vld [vmem:[%s209 + $0x1080] sm:$0xff]
                %476 = vst [vmem:[%s210 + $0x420] sm:$0xff] %v475
                %v477 = vld [vmem:[%s209 + $0x10a0] sm:$0xff]
                %478 = vst [vmem:[%s210 + $0x428] sm:$0xff] %v477
                %v479 = vld [vmem:[%s209 + $0x10c0] sm:$0xff]
                %480 = vst [vmem:[%s210 + $0x430] sm:$0xff] %v479
                %v481 = vld [vmem:[%s209 + $0x10e0] sm:$0xff]
                %482 = vst [vmem:[%s210 + $0x438] sm:$0xff] %v481
                %v483 = vld [vmem:[%s209 + $0x1100] sm:$0xff]
                %484 = vst [vmem:[%s210 + $0x440] sm:$0xff] %v483
                %v485 = vld [vmem:[%s209 + $0x1120] sm:$0xff]
                %486 = vst [vmem:[%s210 + $0x448] sm:$0xff] %v485
                %v487 = vld [vmem:[%s209 + $0x1140] sm:$0xff]
                %488 = vst [vmem:[%s210 + $0x450] sm:$0xff] %v487
                %v489 = vld [vmem:[%s209 + $0x1160] sm:$0xff]
                %490 = vst [vmem:[%s210 + $0x458] sm:$0xff] %v489
                %v491 = vld [vmem:[%s209 + $0x1180] sm:$0xff]
                %492 = vst [vmem:[%s210 + $0x460] sm:$0xff] %v491
                %v493 = vld [vmem:[%s209 + $0x11a0] sm:$0xff]
                %494 = vst [vmem:[%s210 + $0x468] sm:$0xff] %v493
                %v495 = vld [vmem:[%s209 + $0x11c0] sm:$0xff]
                %496 = vst [vmem:[%s210 + $0x470] sm:$0xff] %v495
                %v497 = vld [vmem:[%s209 + $0x11e0] sm:$0xff]
                %498 = vst [vmem:[%s210 + $0x478] sm:$0xff] %v497
                %v499 = vld [vmem:[%s209 + $0x1200] sm:$0xff]
                %500 = vst [vmem:[%s210 + $0x480] sm:$0xff] %v499
                %v501 = vld [vmem:[%s209 + $0x1220] sm:$0xff]
                %502 = vst [vmem:[%s210 + $0x488] sm:$0xff] %v501
                %v503 = vld [vmem:[%s209 + $0x1240] sm:$0xff]
                %504 = vst [vmem:[%s210 + $0x490] sm:$0xff] %v503
                %v505 = vld [vmem:[%s209 + $0x1260] sm:$0xff]
                %506 = vst [vmem:[%s210 + $0x498] sm:$0xff] %v505
                %v507 = vld [vmem:[%s209 + $0x1280] sm:$0xff]
                %508 = vst [vmem:[%s210 + $0x4a0] sm:$0xff] %v507
                %v509 = vld [vmem:[%s209 + $0x12a0] sm:$0xff]
                %510 = vst [vmem:[%s210 + $0x4a8] sm:$0xff] %v509
                %v511 = vld [vmem:[%s209 + $0x12c0] sm:$0xff]
                %512 = vst [vmem:[%s210 + $0x4b0] sm:$0xff] %v511
                %v513 = vld [vmem:[%s209 + $0x12e0] sm:$0xff]
                %514 = vst [vmem:[%s210 + $0x4b8] sm:$0xff] %v513
                %v515 = vld [vmem:[%s209 + $0x1300] sm:$0xff]
                %516 = vst [vmem:[%s210 + $0x4c0] sm:$0xff] %v515
                %v517 = vld [vmem:[%s209 + $0x1320] sm:$0xff]
                %518 = vst [vmem:[%s210 + $0x4c8] sm:$0xff] %v517
                %v519 = vld [vmem:[%s209 + $0x1340] sm:$0xff]
                %520 = vst [vmem:[%s210 + $0x4d0] sm:$0xff] %v519
                %v521 = vld [vmem:[%s209 + $0x1360] sm:$0xff]
                %522 = vst [vmem:[%s210 + $0x4d8] sm:$0xff] %v521
                %v523 = vld [vmem:[%s209 + $0x1380] sm:$0xff]
                %524 = vst [vmem:[%s210 + $0x4e0] sm:$0xff] %v523
                %v525 = vld [vmem:[%s209 + $0x13a0] sm:$0xff]
                %526 = vst [vmem:[%s210 + $0x4e8] sm:$0xff] %v525
                %v527 = vld [vmem:[%s209 + $0x13c0] sm:$0xff]
                %528 = vst [vmem:[%s210 + $0x4f0] sm:$0xff] %v527
                %v529 = vld [vmem:[%s209 + $0x13e0] sm:$0xff]
                %530 = vst [vmem:[%s210 + $0x4f8] sm:$0xff] %v529
                %v531 = vld [vmem:[%s209 + $0x1400] sm:$0xff]
                %532 = vst [vmem:[%s210 + $0x500] sm:$0xff] %v531
                %v533 = vld [vmem:[%s209 + $0x1420] sm:$0xff]
                %534 = vst [vmem:[%s210 + $0x508] sm:$0xff] %v533
                %v535 = vld [vmem:[%s209 + $0x1440] sm:$0xff]
                %536 = vst [vmem:[%s210 + $0x510] sm:$0xff] %v535
                %v537 = vld [vmem:[%s209 + $0x1460] sm:$0xff]
                %538 = vst [vmem:[%s210 + $0x518] sm:$0xff] %v537
                %v539 = vld [vmem:[%s209 + $0x1480] sm:$0xff]
                %540 = vst [vmem:[%s210 + $0x520] sm:$0xff] %v539
                %v541 = vld [vmem:[%s209 + $0x14a0] sm:$0xff]
                %542 = vst [vmem:[%s210 + $0x528] sm:$0xff] %v541
                %v543 = vld [vmem:[%s209 + $0x14c0] sm:$0xff]
                %544 = vst [vmem:[%s210 + $0x530] sm:$0xff] %v543
                %v545 = vld [vmem:[%s209 + $0x14e0] sm:$0xff]
                %546 = vst [vmem:[%s210 + $0x538] sm:$0xff] %v545
                %v547 = vld [vmem:[%s209 + $0x1500] sm:$0xff]
                %548 = vst [vmem:[%s210 + $0x540] sm:$0xff] %v547
                %v549 = vld [vmem:[%s209 + $0x1520] sm:$0xff]
                %550 = vst [vmem:[%s210 + $0x548] sm:$0xff] %v549
                %v551 = vld [vmem:[%s209 + $0x1540] sm:$0xff]
                %552 = vst [vmem:[%s210 + $0x550] sm:$0xff] %v551
                %v553 = vld [vmem:[%s209 + $0x1560] sm:$0xff]
                %554 = vst [vmem:[%s210 + $0x558] sm:$0xff] %v553
                %v555 = vld [vmem:[%s209 + $0x1580] sm:$0xff]
                %556 = vst [vmem:[%s210 + $0x560] sm:$0xff] %v555
                %v557 = vld [vmem:[%s209 + $0x15a0] sm:$0xff]
                %558 = vst [vmem:[%s210 + $0x568] sm:$0xff] %v557
                %v559 = vld [vmem:[%s209 + $0x15c0] sm:$0xff]
                %560 = vst [vmem:[%s210 + $0x570] sm:$0xff] %v559
                %v561 = vld [vmem:[%s209 + $0x15e0] sm:$0xff]
                %562 = vst [vmem:[%s210 + $0x578] sm:$0xff] %v561
                %v563 = vld [vmem:[%s209 + $0x1600] sm:$0xff]
                %564 = vst [vmem:[%s210 + $0x580] sm:$0xff] %v563
                %v565 = vld [vmem:[%s209 + $0x1620] sm:$0xff]
                %566 = vst [vmem:[%s210 + $0x588] sm:$0xff] %v565
                %v567 = vld [vmem:[%s209 + $0x1640] sm:$0xff]
                %568 = vst [vmem:[%s210 + $0x590] sm:$0xff] %v567
                %v569 = vld [vmem:[%s209 + $0x1660] sm:$0xff]
                %570 = vst [vmem:[%s210 + $0x598] sm:$0xff] %v569
                %v571 = vld [vmem:[%s209 + $0x1680] sm:$0xff]
                %572 = vst [vmem:[%s210 + $0x5a0] sm:$0xff] %v571
                %v573 = vld [vmem:[%s209 + $0x16a0] sm:$0xff]
                %574 = vst [vmem:[%s210 + $0x5a8] sm:$0xff] %v573
                %v575 = vld [vmem:[%s209 + $0x16c0] sm:$0xff]
                %576 = vst [vmem:[%s210 + $0x5b0] sm:$0xff] %v575
                %v577 = vld [vmem:[%s209 + $0x16e0] sm:$0xff]
                %578 = vst [vmem:[%s210 + $0x5b8] sm:$0xff] %v577
                %v579 = vld [vmem:[%s209 + $0x1700] sm:$0xff]
                %580 = vst [vmem:[%s210 + $0x5c0] sm:$0xff] %v579
                %v581 = vld [vmem:[%s209 + $0x1720] sm:$0xff]
                %582 = vst [vmem:[%s210 + $0x5c8] sm:$0xff] %v581
                %v583 = vld [vmem:[%s209 + $0x1740] sm:$0xff]
                %584 = vst [vmem:[%s210 + $0x5d0] sm:$0xff] %v583
                %v585 = vld [vmem:[%s209 + $0x1760] sm:$0xff]
                %586 = vst [vmem:[%s210 + $0x5d8] sm:$0xff] %v585
                %v587 = vld [vmem:[%s209 + $0x1780] sm:$0xff]
                %588 = vst [vmem:[%s210 + $0x5e0] sm:$0xff] %v587
                %v589 = vld [vmem:[%s209 + $0x17a0] sm:$0xff]
                %590 = vst [vmem:[%s210 + $0x5e8] sm:$0xff] %v589
                %v591 = vld [vmem:[%s209 + $0x17c0] sm:$0xff]
                %592 = vst [vmem:[%s210 + $0x5f0] sm:$0xff] %v591
                %v593 = vld [vmem:[%s209 + $0x17e0] sm:$0xff]
                %594 = vst [vmem:[%s210 + $0x5f8] sm:$0xff] %v593
                %v595 = vld [vmem:[%s209 + $0x1800] sm:$0xff]
                %596 = vst [vmem:[%s210 + $0x600] sm:$0xff] %v595
                %v597 = vld [vmem:[%s209 + $0x1820] sm:$0xff]
                %598 = vst [vmem:[%s210 + $0x608] sm:$0xff] %v597
                %v599 = vld [vmem:[%s209 + $0x1840] sm:$0xff]
                %600 = vst [vmem:[%s210 + $0x610] sm:$0xff] %v599
                %v601 = vld [vmem:[%s209 + $0x1860] sm:$0xff]
                %602 = vst [vmem:[%s210 + $0x618] sm:$0xff] %v601
                %v603 = vld [vmem:[%s209 + $0x1880] sm:$0xff]
                %604 = vst [vmem:[%s210 + $0x620] sm:$0xff] %v603
                %v605 = vld [vmem:[%s209 + $0x18a0] sm:$0xff]
                %606 = vst [vmem:[%s210 + $0x628] sm:$0xff] %v605
                %v607 = vld [vmem:[%s209 + $0x18c0] sm:$0xff]
                %608 = vst [vmem:[%s210 + $0x630] sm:$0xff] %v607
                %v609 = vld [vmem:[%s209 + $0x18e0] sm:$0xff]
                %610 = vst [vmem:[%s210 + $0x638] sm:$0xff] %v609
                %v611 = vld [vmem:[%s209 + $0x1900] sm:$0xff]
                %612 = vst [vmem:[%s210 + $0x640] sm:$0xff] %v611
                %v613 = vld [vmem:[%s209 + $0x1920] sm:$0xff]
                %614 = vst [vmem:[%s210 + $0x648] sm:$0xff] %v613
                %v615 = vld [vmem:[%s209 + $0x1940] sm:$0xff]
                %616 = vst [vmem:[%s210 + $0x650] sm:$0xff] %v615
                %v617 = vld [vmem:[%s209 + $0x1960] sm:$0xff]
                %618 = vst [vmem:[%s210 + $0x658] sm:$0xff] %v617
                %v619 = vld [vmem:[%s209 + $0x1980] sm:$0xff]
                %620 = vst [vmem:[%s210 + $0x660] sm:$0xff] %v619
                %v621 = vld [vmem:[%s209 + $0x19a0] sm:$0xff]
                %622 = vst [vmem:[%s210 + $0x668] sm:$0xff] %v621
                %v623 = vld [vmem:[%s209 + $0x19c0] sm:$0xff]
                %624 = vst [vmem:[%s210 + $0x670] sm:$0xff] %v623
                %v625 = vld [vmem:[%s209 + $0x19e0] sm:$0xff]
                %626 = vst [vmem:[%s210 + $0x678] sm:$0xff] %v625
                %v627 = vld [vmem:[%s209 + $0x1a00] sm:$0xff]
                %628 = vst [vmem:[%s210 + $0x680] sm:$0xff] %v627
                %v629 = vld [vmem:[%s209 + $0x1a20] sm:$0xff]
                %630 = vst [vmem:[%s210 + $0x688] sm:$0xff] %v629
                %v631 = vld [vmem:[%s209 + $0x1a40] sm:$0xff]
                %632 = vst [vmem:[%s210 + $0x690] sm:$0xff] %v631
                %v633 = vld [vmem:[%s209 + $0x1a60] sm:$0xff]
                %634 = vst [vmem:[%s210 + $0x698] sm:$0xff] %v633
                %v635 = vld [vmem:[%s209 + $0x1a80] sm:$0xff]
                %636 = vst [vmem:[%s210 + $0x6a0] sm:$0xff] %v635
                %v637 = vld [vmem:[%s209 + $0x1aa0] sm:$0xff]
                %638 = vst [vmem:[%s210 + $0x6a8] sm:$0xff] %v637
                %v639 = vld [vmem:[%s209 + $0x1ac0] sm:$0xff]
                %640 = vst [vmem:[%s210 + $0x6b0] sm:$0xff] %v639
                %v641 = vld [vmem:[%s209 + $0x1ae0] sm:$0xff]
                %642 = vst [vmem:[%s210 + $0x6b8] sm:$0xff] %v641
                %v643 = vld [vmem:[%s209 + $0x1b00] sm:$0xff]
                %644 = vst [vmem:[%s210 + $0x6c0] sm:$0xff] %v643
                %v645 = vld [vmem:[%s209 + $0x1b20] sm:$0xff]
                %646 = vst [vmem:[%s210 + $0x6c8] sm:$0xff] %v645
                %v647 = vld [vmem:[%s209 + $0x1b40] sm:$0xff]
                %648 = vst [vmem:[%s210 + $0x6d0] sm:$0xff] %v647
                %v649 = vld [vmem:[%s209 + $0x1b60] sm:$0xff]
                %650 = vst [vmem:[%s210 + $0x6d8] sm:$0xff] %v649
                %v651 = vld [vmem:[%s209 + $0x1b80] sm:$0xff]
                %652 = vst [vmem:[%s210 + $0x6e0] sm:$0xff] %v651
                %v653 = vld [vmem:[%s209 + $0x1ba0] sm:$0xff]
                %654 = vst [vmem:[%s210 + $0x6e8] sm:$0xff] %v653
                %v655 = vld [vmem:[%s209 + $0x1bc0] sm:$0xff]
                %656 = vst [vmem:[%s210 + $0x6f0] sm:$0xff] %v655
                %v657 = vld [vmem:[%s209 + $0x1be0] sm:$0xff]
                %658 = vst [vmem:[%s210 + $0x6f8] sm:$0xff] %v657
                %v659 = vld [vmem:[%s209 + $0x1c00] sm:$0xff]
                %660 = vst [vmem:[%s210 + $0x700] sm:$0xff] %v659
                %v661 = vld [vmem:[%s209 + $0x1c20] sm:$0xff]
                %662 = vst [vmem:[%s210 + $0x708] sm:$0xff] %v661
                %v663 = vld [vmem:[%s209 + $0x1c40] sm:$0xff]
                %664 = vst [vmem:[%s210 + $0x710] sm:$0xff] %v663
                %v665 = vld [vmem:[%s209 + $0x1c60] sm:$0xff]
                %666 = vst [vmem:[%s210 + $0x718] sm:$0xff] %v665
                %v667 = vld [vmem:[%s209 + $0x1c80] sm:$0xff]
                %668 = vst [vmem:[%s210 + $0x720] sm:$0xff] %v667
                %v669 = vld [vmem:[%s209 + $0x1ca0] sm:$0xff]
                %670 = vst [vmem:[%s210 + $0x728] sm:$0xff] %v669
                %v671 = vld [vmem:[%s209 + $0x1cc0] sm:$0xff]
                %672 = vst [vmem:[%s210 + $0x730] sm:$0xff] %v671
                %v673 = vld [vmem:[%s209 + $0x1ce0] sm:$0xff]
                %674 = vst [vmem:[%s210 + $0x738] sm:$0xff] %v673
                %v675 = vld [vmem:[%s209 + $0x1d00] sm:$0xff]
                %676 = vst [vmem:[%s210 + $0x740] sm:$0xff] %v675
                %v677 = vld [vmem:[%s209 + $0x1d20] sm:$0xff]
                %678 = vst [vmem:[%s210 + $0x748] sm:$0xff] %v677
                %v679 = vld [vmem:[%s209 + $0x1d40] sm:$0xff]
                %680 = vst [vmem:[%s210 + $0x750] sm:$0xff] %v679
                %v681 = vld [vmem:[%s209 + $0x1d60] sm:$0xff]
                %682 = vst [vmem:[%s210 + $0x758] sm:$0xff] %v681
                %v683 = vld [vmem:[%s209 + $0x1d80] sm:$0xff]
                %684 = vst [vmem:[%s210 + $0x760] sm:$0xff] %v683
                %v685 = vld [vmem:[%s209 + $0x1da0] sm:$0xff]
                %686 = vst [vmem:[%s210 + $0x768] sm:$0xff] %v685
                %v687 = vld [vmem:[%s209 + $0x1dc0] sm:$0xff]
                %688 = vst [vmem:[%s210 + $0x770] sm:$0xff] %v687
                %v689 = vld [vmem:[%s209 + $0x1de0] sm:$0xff]
                %690 = vst [vmem:[%s210 + $0x778] sm:$0xff] %v689
                %v691 = vld [vmem:[%s209 + $0x1e00] sm:$0xff]
                %692 = vst [vmem:[%s210 + $0x780] sm:$0xff] %v691
                %v693 = vld [vmem:[%s209 + $0x1e20] sm:$0xff]
                %694 = vst [vmem:[%s210 + $0x788] sm:$0xff] %v693
                %v695 = vld [vmem:[%s209 + $0x1e40] sm:$0xff]
                %696 = vst [vmem:[%s210 + $0x790] sm:$0xff] %v695
                %v697 = vld [vmem:[%s209 + $0x1e60] sm:$0xff]
                %698 = vst [vmem:[%s210 + $0x798] sm:$0xff] %v697
                %v699 = vld [vmem:[%s209 + $0x1e80] sm:$0xff]
                %700 = vst [vmem:[%s210 + $0x7a0] sm:$0xff] %v699
                %v701 = vld [vmem:[%s209 + $0x1ea0] sm:$0xff]
                %702 = vst [vmem:[%s210 + $0x7a8] sm:$0xff] %v701
                %v703 = vld [vmem:[%s209 + $0x1ec0] sm:$0xff]
                %704 = vst [vmem:[%s210 + $0x7b0] sm:$0xff] %v703
                %v705 = vld [vmem:[%s209 + $0x1ee0] sm:$0xff]
                %706 = vst [vmem:[%s210 + $0x7b8] sm:$0xff] %v705
                %v707 = vld [vmem:[%s209 + $0x1f00] sm:$0xff]
                %708 = vst [vmem:[%s210 + $0x7c0] sm:$0xff] %v707
                %v709 = vld [vmem:[%s209 + $0x1f20] sm:$0xff]
                %710 = vst [vmem:[%s210 + $0x7c8] sm:$0xff] %v709
                %v711 = vld [vmem:[%s209 + $0x1f40] sm:$0xff]
                %712 = vst [vmem:[%s210 + $0x7d0] sm:$0xff] %v711
                %v713 = vld [vmem:[%s209 + $0x1f60] sm:$0xff]
                %714 = vst [vmem:[%s210 + $0x7d8] sm:$0xff] %v713
                %v715 = vld [vmem:[%s209 + $0x1f80] sm:$0xff]
                %716 = vst [vmem:[%s210 + $0x7e0] sm:$0xff] %v715
                %v717 = vld [vmem:[%s209 + $0x1fa0] sm:$0xff]
                %718 = vst [vmem:[%s210 + $0x7e8] sm:$0xff] %v717
                %v719 = vld [vmem:[%s209 + $0x1fc0] sm:$0xff]
                %720 = vst [vmem:[%s210 + $0x7f0] sm:$0xff] %v719
                %v721 = vld [vmem:[%s209 + $0x1fe0] sm:$0xff]
                %722 = vst [vmem:[%s210 + $0x7f8] sm:$0xff] %v721
                %v723 = vld [vmem:[%s209 + $0x2000] sm:$0xff]
                %724 = vst [vmem:[%s210 + $0x800] sm:$0xff] %v723
                %v725 = vld [vmem:[%s209 + $0x2020] sm:$0xff]
                %726 = vst [vmem:[%s210 + $0x808] sm:$0xff] %v725
                %v727 = vld [vmem:[%s209 + $0x2040] sm:$0xff]
                %728 = vst [vmem:[%s210 + $0x810] sm:$0xff] %v727
                %v729 = vld [vmem:[%s209 + $0x2060] sm:$0xff]
                %730 = vst [vmem:[%s210 + $0x818] sm:$0xff] %v729
                %v731 = vld [vmem:[%s209 + $0x2080] sm:$0xff]
                %732 = vst [vmem:[%s210 + $0x820] sm:$0xff] %v731
                %v733 = vld [vmem:[%s209 + $0x20a0] sm:$0xff]
                %734 = vst [vmem:[%s210 + $0x828] sm:$0xff] %v733
                %v735 = vld [vmem:[%s209 + $0x20c0] sm:$0xff]
                %736 = vst [vmem:[%s210 + $0x830] sm:$0xff] %v735
                %v737 = vld [vmem:[%s209 + $0x20e0] sm:$0xff]
                %738 = vst [vmem:[%s210 + $0x838] sm:$0xff] %v737
                %v739 = vld [vmem:[%s209 + $0x2100] sm:$0xff]
                %740 = vst [vmem:[%s210 + $0x840] sm:$0xff] %v739
                %v741 = vld [vmem:[%s209 + $0x2120] sm:$0xff]
                %742 = vst [vmem:[%s210 + $0x848] sm:$0xff] %v741
                %v743 = vld [vmem:[%s209 + $0x2140] sm:$0xff]
                %744 = vst [vmem:[%s210 + $0x850] sm:$0xff] %v743
                %v745 = vld [vmem:[%s209 + $0x2160] sm:$0xff]
                %746 = vst [vmem:[%s210 + $0x858] sm:$0xff] %v745
                %v747 = vld [vmem:[%s209 + $0x2180] sm:$0xff]
                %748 = vst [vmem:[%s210 + $0x860] sm:$0xff] %v747
                %v749 = vld [vmem:[%s209 + $0x21a0] sm:$0xff]
                %750 = vst [vmem:[%s210 + $0x868] sm:$0xff] %v749
                %v751 = vld [vmem:[%s209 + $0x21c0] sm:$0xff]
                %752 = vst [vmem:[%s210 + $0x870] sm:$0xff] %v751
                %v753 = vld [vmem:[%s209 + $0x21e0] sm:$0xff]
                %754 = vst [vmem:[%s210 + $0x878] sm:$0xff] %v753
                %v755 = vld [vmem:[%s209 + $0x2200] sm:$0xff]
                %756 = vst [vmem:[%s210 + $0x880] sm:$0xff] %v755
                %v757 = vld [vmem:[%s209 + $0x2220] sm:$0xff]
                %758 = vst [vmem:[%s210 + $0x888] sm:$0xff] %v757
                %v759 = vld [vmem:[%s209 + $0x2240] sm:$0xff]
                %760 = vst [vmem:[%s210 + $0x890] sm:$0xff] %v759
                %v761 = vld [vmem:[%s209 + $0x2260] sm:$0xff]
                %762 = vst [vmem:[%s210 + $0x898] sm:$0xff] %v761
                %v763 = vld [vmem:[%s209 + $0x2280] sm:$0xff]
                %764 = vst [vmem:[%s210 + $0x8a0] sm:$0xff] %v763
                %v765 = vld [vmem:[%s209 + $0x22a0] sm:$0xff]
                %766 = vst [vmem:[%s210 + $0x8a8] sm:$0xff] %v765
                %v767 = vld [vmem:[%s209 + $0x22c0] sm:$0xff]
                %768 = vst [vmem:[%s210 + $0x8b0] sm:$0xff] %v767
                %v769 = vld [vmem:[%s209 + $0x22e0] sm:$0xff]
                %770 = vst [vmem:[%s210 + $0x8b8] sm:$0xff] %v769
                %v771 = vld [vmem:[%s209 + $0x2300] sm:$0xff]
                %772 = vst [vmem:[%s210 + $0x8c0] sm:$0xff] %v771
                %v773 = vld [vmem:[%s209 + $0x2320] sm:$0xff]
                %774 = vst [vmem:[%s210 + $0x8c8] sm:$0xff] %v773
                %v775 = vld [vmem:[%s209 + $0x2340] sm:$0xff]
                %776 = vst [vmem:[%s210 + $0x8d0] sm:$0xff] %v775
                %v777 = vld [vmem:[%s209 + $0x2360] sm:$0xff]
                %778 = vst [vmem:[%s210 + $0x8d8] sm:$0xff] %v777
                %v779 = vld [vmem:[%s209 + $0x2380] sm:$0xff]
                %780 = vst [vmem:[%s210 + $0x8e0] sm:$0xff] %v779
                %v781 = vld [vmem:[%s209 + $0x23a0] sm:$0xff]
                %782 = vst [vmem:[%s210 + $0x8e8] sm:$0xff] %v781
                %v783 = vld [vmem:[%s209 + $0x23c0] sm:$0xff]
                %784 = vst [vmem:[%s210 + $0x8f0] sm:$0xff] %v783
                %v785 = vld [vmem:[%s209 + $0x23e0] sm:$0xff]
                %786 = vst [vmem:[%s210 + $0x8f8] sm:$0xff] %v785
                %v787 = vld [vmem:[%s209 + $0x2400] sm:$0xff]
                %788 = vst [vmem:[%s210 + $0x900] sm:$0xff] %v787
                %v789 = vld [vmem:[%s209 + $0x2420] sm:$0xff]
                %790 = vst [vmem:[%s210 + $0x908] sm:$0xff] %v789
                %v791 = vld [vmem:[%s209 + $0x2440] sm:$0xff]
                %792 = vst [vmem:[%s210 + $0x910] sm:$0xff] %v791
                %v793 = vld [vmem:[%s209 + $0x2460] sm:$0xff]
                %794 = vst [vmem:[%s210 + $0x918] sm:$0xff] %v793
                %v795 = vld [vmem:[%s209 + $0x2480] sm:$0xff]
                %796 = vst [vmem:[%s210 + $0x920] sm:$0xff] %v795
                %v797 = vld [vmem:[%s209 + $0x24a0] sm:$0xff]
                %798 = vst [vmem:[%s210 + $0x928] sm:$0xff] %v797
                %v799 = vld [vmem:[%s209 + $0x24c0] sm:$0xff]
                %800 = vst [vmem:[%s210 + $0x930] sm:$0xff] %v799
                %v801 = vld [vmem:[%s209 + $0x24e0] sm:$0xff]
                %802 = vst [vmem:[%s210 + $0x938] sm:$0xff] %v801
                %v803 = vld [vmem:[%s209 + $0x2500] sm:$0xff]
                %804 = vst [vmem:[%s210 + $0x940] sm:$0xff] %v803
                %v805 = vld [vmem:[%s209 + $0x2520] sm:$0xff]
                %806 = vst [vmem:[%s210 + $0x948] sm:$0xff] %v805
                %v807 = vld [vmem:[%s209 + $0x2540] sm:$0xff]
                %808 = vst [vmem:[%s210 + $0x950] sm:$0xff] %v807
                %v809 = vld [vmem:[%s209 + $0x2560] sm:$0xff]
                %810 = vst [vmem:[%s210 + $0x958] sm:$0xff] %v809
                %v811 = vld [vmem:[%s209 + $0x2580] sm:$0xff]
                %812 = vst [vmem:[%s210 + $0x960] sm:$0xff] %v811
                %v813 = vld [vmem:[%s209 + $0x25a0] sm:$0xff]
                %814 = vst [vmem:[%s210 + $0x968] sm:$0xff] %v813
                %v815 = vld [vmem:[%s209 + $0x25c0] sm:$0xff]
                %816 = vst [vmem:[%s210 + $0x970] sm:$0xff] %v815
                %v817 = vld [vmem:[%s209 + $0x25e0] sm:$0xff]
                %818 = vst [vmem:[%s210 + $0x978] sm:$0xff] %v817
                %v819 = vld [vmem:[%s209 + $0x2600] sm:$0xff]
                %820 = vst [vmem:[%s210 + $0x980] sm:$0xff] %v819
                %v821 = vld [vmem:[%s209 + $0x2620] sm:$0xff]
                %822 = vst [vmem:[%s210 + $0x988] sm:$0xff] %v821
                %v823 = vld [vmem:[%s209 + $0x2640] sm:$0xff]
                %824 = vst [vmem:[%s210 + $0x990] sm:$0xff] %v823
                %v825 = vld [vmem:[%s209 + $0x2660] sm:$0xff]
                %826 = vst [vmem:[%s210 + $0x998] sm:$0xff] %v825
                %v827 = vld [vmem:[%s209 + $0x2680] sm:$0xff]
                %828 = vst [vmem:[%s210 + $0x9a0] sm:$0xff] %v827
                %v829 = vld [vmem:[%s209 + $0x26a0] sm:$0xff]
                %830 = vst [vmem:[%s210 + $0x9a8] sm:$0xff] %v829
                %v831 = vld [vmem:[%s209 + $0x26c0] sm:$0xff]
                %832 = vst [vmem:[%s210 + $0x9b0] sm:$0xff] %v831
                %v833 = vld [vmem:[%s209 + $0x26e0] sm:$0xff]
                %834 = vst [vmem:[%s210 + $0x9b8] sm:$0xff] %v833
                %v835 = vld [vmem:[%s209 + $0x2700] sm:$0xff]
                %836 = vst [vmem:[%s210 + $0x9c0] sm:$0xff] %v835
                %v837 = vld [vmem:[%s209 + $0x2720] sm:$0xff]
                %838 = vst [vmem:[%s210 + $0x9c8] sm:$0xff] %v837
                %v839 = vld [vmem:[%s209 + $0x2740] sm:$0xff]
                %840 = vst [vmem:[%s210 + $0x9d0] sm:$0xff] %v839
                %v841 = vld [vmem:[%s209 + $0x2760] sm:$0xff]
                %842 = vst [vmem:[%s210 + $0x9d8] sm:$0xff] %v841
                %v843 = vld [vmem:[%s209 + $0x2780] sm:$0xff]
                %844 = vst [vmem:[%s210 + $0x9e0] sm:$0xff] %v843
                %v845 = vld [vmem:[%s209 + $0x27a0] sm:$0xff]
                %846 = vst [vmem:[%s210 + $0x9e8] sm:$0xff] %v845
                %v847 = vld [vmem:[%s209 + $0x27c0] sm:$0xff]
                %848 = vst [vmem:[%s210 + $0x9f0] sm:$0xff] %v847
                %v849 = vld [vmem:[%s209 + $0x27e0] sm:$0xff]
                %850 = vst [vmem:[%s210 + $0x9f8] sm:$0xff] %v849
                %v851 = vld [vmem:[%s209 + $0x2800] sm:$0xff]
                %852 = vst [vmem:[%s210 + $0xa00] sm:$0xff] %v851
                %v853 = vld [vmem:[%s209 + $0x2820] sm:$0xff]
                %854 = vst [vmem:[%s210 + $0xa08] sm:$0xff] %v853
                %v855 = vld [vmem:[%s209 + $0x2840] sm:$0xff]
                %856 = vst [vmem:[%s210 + $0xa10] sm:$0xff] %v855
                %v857 = vld [vmem:[%s209 + $0x2860] sm:$0xff]
                %858 = vst [vmem:[%s210 + $0xa18] sm:$0xff] %v857
                %v859 = vld [vmem:[%s209 + $0x2880] sm:$0xff]
                %860 = vst [vmem:[%s210 + $0xa20] sm:$0xff] %v859
                %v861 = vld [vmem:[%s209 + $0x28a0] sm:$0xff]
                %862 = vst [vmem:[%s210 + $0xa28] sm:$0xff] %v861
                %v863 = vld [vmem:[%s209 + $0x28c0] sm:$0xff]
                %864 = vst [vmem:[%s210 + $0xa30] sm:$0xff] %v863
                %v865 = vld [vmem:[%s209 + $0x28e0] sm:$0xff]
                %866 = vst [vmem:[%s210 + $0xa38] sm:$0xff] %v865
                %v867 = vld [vmem:[%s209 + $0x2900] sm:$0xff]
                %868 = vst [vmem:[%s210 + $0xa40] sm:$0xff] %v867
                %v869 = vld [vmem:[%s209 + $0x2920] sm:$0xff]
                %870 = vst [vmem:[%s210 + $0xa48] sm:$0xff] %v869
                %v871 = vld [vmem:[%s209 + $0x2940] sm:$0xff]
                %872 = vst [vmem:[%s210 + $0xa50] sm:$0xff] %v871
                %v873 = vld [vmem:[%s209 + $0x2960] sm:$0xff]
                %874 = vst [vmem:[%s210 + $0xa58] sm:$0xff] %v873
                %v875 = vld [vmem:[%s209 + $0x2980] sm:$0xff]
                %876 = vst [vmem:[%s210 + $0xa60] sm:$0xff] %v875
                %v877 = vld [vmem:[%s209 + $0x29a0] sm:$0xff]
                %878 = vst [vmem:[%s210 + $0xa68] sm:$0xff] %v877
                %v879 = vld [vmem:[%s209 + $0x29c0] sm:$0xff]
                %880 = vst [vmem:[%s210 + $0xa70] sm:$0xff] %v879
                %v881 = vld [vmem:[%s209 + $0x29e0] sm:$0xff]
                %882 = vst [vmem:[%s210 + $0xa78] sm:$0xff] %v881
                %v883 = vld [vmem:[%s209 + $0x2a00] sm:$0xff]
                %884 = vst [vmem:[%s210 + $0xa80] sm:$0xff] %v883
                %v885 = vld [vmem:[%s209 + $0x2a20] sm:$0xff]
                %886 = vst [vmem:[%s210 + $0xa88] sm:$0xff] %v885
                %v887 = vld [vmem:[%s209 + $0x2a40] sm:$0xff]
                %888 = vst [vmem:[%s210 + $0xa90] sm:$0xff] %v887
                %v889 = vld [vmem:[%s209 + $0x2a60] sm:$0xff]
                %890 = vst [vmem:[%s210 + $0xa98] sm:$0xff] %v889
                %v891 = vld [vmem:[%s209 + $0x2a80] sm:$0xff]
                %892 = vst [vmem:[%s210 + $0xaa0] sm:$0xff] %v891
                %v893 = vld [vmem:[%s209 + $0x2aa0] sm:$0xff]
                %894 = vst [vmem:[%s210 + $0xaa8] sm:$0xff] %v893
                %v895 = vld [vmem:[%s209 + $0x2ac0] sm:$0xff]
                %896 = vst [vmem:[%s210 + $0xab0] sm:$0xff] %v895
                %v897 = vld [vmem:[%s209 + $0x2ae0] sm:$0xff]
                %898 = vst [vmem:[%s210 + $0xab8] sm:$0xff] %v897
                %v899 = vld [vmem:[%s209 + $0x2b00] sm:$0xff]
                %900 = vst [vmem:[%s210 + $0xac0] sm:$0xff] %v899
                %v901 = vld [vmem:[%s209 + $0x2b20] sm:$0xff]
                %902 = vst [vmem:[%s210 + $0xac8] sm:$0xff] %v901
                %v903 = vld [vmem:[%s209 + $0x2b40] sm:$0xff]
                %904 = vst [vmem:[%s210 + $0xad0] sm:$0xff] %v903
                %v905 = vld [vmem:[%s209 + $0x2b60] sm:$0xff]
                %906 = vst [vmem:[%s210 + $0xad8] sm:$0xff] %v905
                %v907 = vld [vmem:[%s209 + $0x2b80] sm:$0xff]
                %908 = vst [vmem:[%s210 + $0xae0] sm:$0xff] %v907
                %v909 = vld [vmem:[%s209 + $0x2ba0] sm:$0xff]
                %910 = vst [vmem:[%s210 + $0xae8] sm:$0xff] %v909
                %v911 = vld [vmem:[%s209 + $0x2bc0] sm:$0xff]
                %912 = vst [vmem:[%s210 + $0xaf0] sm:$0xff] %v911
                %v913 = vld [vmem:[%s209 + $0x2be0] sm:$0xff]
                %914 = vst [vmem:[%s210 + $0xaf8] sm:$0xff] %v913
                %v915 = vld [vmem:[%s209 + $0x2c00] sm:$0xff]
                %916 = vst [vmem:[%s210 + $0xb00] sm:$0xff] %v915
                %v917 = vld [vmem:[%s209 + $0x2c20] sm:$0xff]
                %918 = vst [vmem:[%s210 + $0xb08] sm:$0xff] %v917
                %v919 = vld [vmem:[%s209 + $0x2c40] sm:$0xff]
                %920 = vst [vmem:[%s210 + $0xb10] sm:$0xff] %v919
                %v921 = vld [vmem:[%s209 + $0x2c60] sm:$0xff]
                %922 = vst [vmem:[%s210 + $0xb18] sm:$0xff] %v921
                %v923 = vld [vmem:[%s209 + $0x2c80] sm:$0xff]
                %924 = vst [vmem:[%s210 + $0xb20] sm:$0xff] %v923
                %v925 = vld [vmem:[%s209 + $0x2ca0] sm:$0xff]
                %926 = vst [vmem:[%s210 + $0xb28] sm:$0xff] %v925
                %v927 = vld [vmem:[%s209 + $0x2cc0] sm:$0xff]
                %928 = vst [vmem:[%s210 + $0xb30] sm:$0xff] %v927
                %v929 = vld [vmem:[%s209 + $0x2ce0] sm:$0xff]
                %930 = vst [vmem:[%s210 + $0xb38] sm:$0xff] %v929
                %v931 = vld [vmem:[%s209 + $0x2d00] sm:$0xff]
                %932 = vst [vmem:[%s210 + $0xb40] sm:$0xff] %v931
                %v933 = vld [vmem:[%s209 + $0x2d20] sm:$0xff]
                %934 = vst [vmem:[%s210 + $0xb48] sm:$0xff] %v933
                %v935 = vld [vmem:[%s209 + $0x2d40] sm:$0xff]
                %936 = vst [vmem:[%s210 + $0xb50] sm:$0xff] %v935
                %v937 = vld [vmem:[%s209 + $0x2d60] sm:$0xff]
                %938 = vst [vmem:[%s210 + $0xb58] sm:$0xff] %v937
                %v939 = vld [vmem:[%s209 + $0x2d80] sm:$0xff]
                %940 = vst [vmem:[%s210 + $0xb60] sm:$0xff] %v939
                %v941 = vld [vmem:[%s209 + $0x2da0] sm:$0xff]
                %942 = vst [vmem:[%s210 + $0xb68] sm:$0xff] %v941
                %v943 = vld [vmem:[%s209 + $0x2dc0] sm:$0xff]
                %944 = vst [vmem:[%s210 + $0xb70] sm:$0xff] %v943
                %v945 = vld [vmem:[%s209 + $0x2de0] sm:$0xff]
                %946 = vst [vmem:[%s210 + $0xb78] sm:$0xff] %v945
                %v947 = vld [vmem:[%s209 + $0x2e00] sm:$0xff]
                %948 = vst [vmem:[%s210 + $0xb80] sm:$0xff] %v947
                %v949 = vld [vmem:[%s209 + $0x2e20] sm:$0xff]
                %950 = vst [vmem:[%s210 + $0xb88] sm:$0xff] %v949
                %v951 = vld [vmem:[%s209 + $0x2e40] sm:$0xff]
                %952 = vst [vmem:[%s210 + $0xb90] sm:$0xff] %v951
                %v953 = vld [vmem:[%s209 + $0x2e60] sm:$0xff]
                %954 = vst [vmem:[%s210 + $0xb98] sm:$0xff] %v953
                %v955 = vld [vmem:[%s209 + $0x2e80] sm:$0xff]
                %956 = vst [vmem:[%s210 + $0xba0] sm:$0xff] %v955
                %v957 = vld [vmem:[%s209 + $0x2ea0] sm:$0xff]
                %958 = vst [vmem:[%s210 + $0xba8] sm:$0xff] %v957
                %v959 = vld [vmem:[%s209 + $0x2ec0] sm:$0xff]
                %960 = vst [vmem:[%s210 + $0xbb0] sm:$0xff] %v959
                %v961 = vld [vmem:[%s209 + $0x2ee0] sm:$0xff]
                %962 = vst [vmem:[%s210 + $0xbb8] sm:$0xff] %v961
                %v963 = vld [vmem:[%s209 + $0x2f00] sm:$0xff]
                %964 = vst [vmem:[%s210 + $0xbc0] sm:$0xff] %v963
                %v965 = vld [vmem:[%s209 + $0x2f20] sm:$0xff]
                %966 = vst [vmem:[%s210 + $0xbc8] sm:$0xff] %v965
                %v967 = vld [vmem:[%s209 + $0x2f40] sm:$0xff]
                %968 = vst [vmem:[%s210 + $0xbd0] sm:$0xff] %v967
                %v969 = vld [vmem:[%s209 + $0x2f60] sm:$0xff]
                %970 = vst [vmem:[%s210 + $0xbd8] sm:$0xff] %v969
                %v971 = vld [vmem:[%s209 + $0x2f80] sm:$0xff]
                %972 = vst [vmem:[%s210 + $0xbe0] sm:$0xff] %v971
                %v973 = vld [vmem:[%s209 + $0x2fa0] sm:$0xff]
                %974 = vst [vmem:[%s210 + $0xbe8] sm:$0xff] %v973
                %v975 = vld [vmem:[%s209 + $0x2fc0] sm:$0xff]
                %976 = vst [vmem:[%s210 + $0xbf0] sm:$0xff] %v975
                %v977 = vld [vmem:[%s209 + $0x2fe0] sm:$0xff]
                %978 = vst [vmem:[%s210 + $0xbf8] sm:$0xff] %v977
                %v979 = vld [vmem:[%s209 + $0x3000] sm:$0xff]
                %980 = vst [vmem:[%s210 + $0xc00] sm:$0xff] %v979
                %v981 = vld [vmem:[%s209 + $0x3020] sm:$0xff]
                %982 = vst [vmem:[%s210 + $0xc08] sm:$0xff] %v981
                %v983 = vld [vmem:[%s209 + $0x3040] sm:$0xff]
                %984 = vst [vmem:[%s210 + $0xc10] sm:$0xff] %v983
                %v985 = vld [vmem:[%s209 + $0x3060] sm:$0xff]
                %986 = vst [vmem:[%s210 + $0xc18] sm:$0xff] %v985
                %v987 = vld [vmem:[%s209 + $0x3080] sm:$0xff]
                %988 = vst [vmem:[%s210 + $0xc20] sm:$0xff] %v987
                %v989 = vld [vmem:[%s209 + $0x30a0] sm:$0xff]
                %990 = vst [vmem:[%s210 + $0xc28] sm:$0xff] %v989
                %v991 = vld [vmem:[%s209 + $0x30c0] sm:$0xff]
                %992 = vst [vmem:[%s210 + $0xc30] sm:$0xff] %v991
                %v993 = vld [vmem:[%s209 + $0x30e0] sm:$0xff]
                %994 = vst [vmem:[%s210 + $0xc38] sm:$0xff] %v993
                %v995 = vld [vmem:[%s209 + $0x3100] sm:$0xff]
                %996 = vst [vmem:[%s210 + $0xc40] sm:$0xff] %v995
                %v997 = vld [vmem:[%s209 + $0x3120] sm:$0xff]
                %998 = vst [vmem:[%s210 + $0xc48] sm:$0xff] %v997
                %v999 = vld [vmem:[%s209 + $0x3140] sm:$0xff]
                %1000 = vst [vmem:[%s210 + $0xc50] sm:$0xff] %v999
                %v1001 = vld [vmem:[%s209 + $0x3160] sm:$0xff]
                %1002 = vst [vmem:[%s210 + $0xc58] sm:$0xff] %v1001
                %v1003 = vld [vmem:[%s209 + $0x3180] sm:$0xff]
                %1004 = vst [vmem:[%s210 + $0xc60] sm:$0xff] %v1003
                %v1005 = vld [vmem:[%s209 + $0x31a0] sm:$0xff]
                %1006 = vst [vmem:[%s210 + $0xc68] sm:$0xff] %v1005
                %v1007 = vld [vmem:[%s209 + $0x31c0] sm:$0xff]
                %1008 = vst [vmem:[%s210 + $0xc70] sm:$0xff] %v1007
                %v1009 = vld [vmem:[%s209 + $0x31e0] sm:$0xff]
                %1010 = vst [vmem:[%s210 + $0xc78] sm:$0xff] %v1009
                %v1011 = vld [vmem:[%s209 + $0x3200] sm:$0xff]
                %1012 = vst [vmem:[%s210 + $0xc80] sm:$0xff] %v1011
                %v1013 = vld [vmem:[%s209 + $0x3220] sm:$0xff]
                %1014 = vst [vmem:[%s210 + $0xc88] sm:$0xff] %v1013
                %v1015 = vld [vmem:[%s209 + $0x3240] sm:$0xff]
                %1016 = vst [vmem:[%s210 + $0xc90] sm:$0xff] %v1015
                %v1017 = vld [vmem:[%s209 + $0x3260] sm:$0xff]
                %1018 = vst [vmem:[%s210 + $0xc98] sm:$0xff] %v1017
                %v1019 = vld [vmem:[%s209 + $0x3280] sm:$0xff]
                %1020 = vst [vmem:[%s210 + $0xca0] sm:$0xff] %v1019
                %v1021 = vld [vmem:[%s209 + $0x32a0] sm:$0xff]
                %1022 = vst [vmem:[%s210 + $0xca8] sm:$0xff] %v1021
                %v1023 = vld [vmem:[%s209 + $0x32c0] sm:$0xff]
                %1024 = vst [vmem:[%s210 + $0xcb0] sm:$0xff] %v1023
                %v1025 = vld [vmem:[%s209 + $0x32e0] sm:$0xff]
                %1026 = vst [vmem:[%s210 + $0xcb8] sm:$0xff] %v1025
                %v1027 = vld [vmem:[%s209 + $0x3300] sm:$0xff]
                %1028 = vst [vmem:[%s210 + $0xcc0] sm:$0xff] %v1027
                %v1029 = vld [vmem:[%s209 + $0x3320] sm:$0xff]
                %1030 = vst [vmem:[%s210 + $0xcc8] sm:$0xff] %v1029
                %v1031 = vld [vmem:[%s209 + $0x3340] sm:$0xff]
                %1032 = vst [vmem:[%s210 + $0xcd0] sm:$0xff] %v1031
                %v1033 = vld [vmem:[%s209 + $0x3360] sm:$0xff]
                %1034 = vst [vmem:[%s210 + $0xcd8] sm:$0xff] %v1033
                %v1035 = vld [vmem:[%s209 + $0x3380] sm:$0xff]
                %1036 = vst [vmem:[%s210 + $0xce0] sm:$0xff] %v1035
                %v1037 = vld [vmem:[%s209 + $0x33a0] sm:$0xff]
                %1038 = vst [vmem:[%s210 + $0xce8] sm:$0xff] %v1037
                %v1039 = vld [vmem:[%s209 + $0x33c0] sm:$0xff]
                %1040 = vst [vmem:[%s210 + $0xcf0] sm:$0xff] %v1039
                %v1041 = vld [vmem:[%s209 + $0x33e0] sm:$0xff]
                %1042 = vst [vmem:[%s210 + $0xcf8] sm:$0xff] %v1041
                %v1043 = vld [vmem:[%s209 + $0x3400] sm:$0xff]
                %1044 = vst [vmem:[%s210 + $0xd00] sm:$0xff] %v1043
                %v1045 = vld [vmem:[%s209 + $0x3420] sm:$0xff]
                %1046 = vst [vmem:[%s210 + $0xd08] sm:$0xff] %v1045
                %v1047 = vld [vmem:[%s209 + $0x3440] sm:$0xff]
                %1048 = vst [vmem:[%s210 + $0xd10] sm:$0xff] %v1047
                %v1049 = vld [vmem:[%s209 + $0x3460] sm:$0xff]
                %1050 = vst [vmem:[%s210 + $0xd18] sm:$0xff] %v1049
                %v1051 = vld [vmem:[%s209 + $0x3480] sm:$0xff]
                %1052 = vst [vmem:[%s210 + $0xd20] sm:$0xff] %v1051
                %v1053 = vld [vmem:[%s209 + $0x34a0] sm:$0xff]
                %1054 = vst [vmem:[%s210 + $0xd28] sm:$0xff] %v1053
                %v1055 = vld [vmem:[%s209 + $0x34c0] sm:$0xff]
                %1056 = vst [vmem:[%s210 + $0xd30] sm:$0xff] %v1055
                %v1057 = vld [vmem:[%s209 + $0x34e0] sm:$0xff]
                %1058 = vst [vmem:[%s210 + $0xd38] sm:$0xff] %v1057
                %v1059 = vld [vmem:[%s209 + $0x3500] sm:$0xff]
                %1060 = vst [vmem:[%s210 + $0xd40] sm:$0xff] %v1059
                %v1061 = vld [vmem:[%s209 + $0x3520] sm:$0xff]
                %1062 = vst [vmem:[%s210 + $0xd48] sm:$0xff] %v1061
                %v1063 = vld [vmem:[%s209 + $0x3540] sm:$0xff]
                %1064 = vst [vmem:[%s210 + $0xd50] sm:$0xff] %v1063
                %v1065 = vld [vmem:[%s209 + $0x3560] sm:$0xff]
                %1066 = vst [vmem:[%s210 + $0xd58] sm:$0xff] %v1065
                %v1067 = vld [vmem:[%s209 + $0x3580] sm:$0xff]
                %1068 = vst [vmem:[%s210 + $0xd60] sm:$0xff] %v1067
                %v1069 = vld [vmem:[%s209 + $0x35a0] sm:$0xff]
                %1070 = vst [vmem:[%s210 + $0xd68] sm:$0xff] %v1069
                %v1071 = vld [vmem:[%s209 + $0x35c0] sm:$0xff]
                %1072 = vst [vmem:[%s210 + $0xd70] sm:$0xff] %v1071
                %v1073 = vld [vmem:[%s209 + $0x35e0] sm:$0xff]
                %1074 = vst [vmem:[%s210 + $0xd78] sm:$0xff] %v1073
              $region41: #{layer12_forward.1} parent=35 // loop_footer
                %s208 = sadd.s32 1, %s204
              $region42: #{layer12_forward.1} parent=35 // loop_footer_branch
                %203 = sbr.rel target = $region38
              $region43: #{layer12_forward.1} parent=35 // loop_exit
                _
            $region36: #{layer12_forward.1} parent=27 // pred_fallthru
              _
          $region28: #{layer12_forward.1} parent=23 // pred_fallthru
            _
          %1951 = vnop
        $region24: #{layer12_forward.1} parent=19 // pred_fallthru
          _
        // Predicated region
        $region59: #{layer12_forward.1} parent=19 // pred_check
          %p1952 = pneg %p97
        $region60: #{layer12_forward.1} parent=19 // pred_check_branch
          %1954 = sbr.rel (%p1952) target = $region62
        $region61: #{layer12_forward.1} parent=19 // pred_region
          %s1955 = smul.u32 2, %s21
          %p1956 = scmp.lt.s32.totalorder %s1955, 7
          %s1957 = scalar_select %p1956, %s1955, 7
          %s1958 = scalar_lea.vmem %s2, %s1957
          %s1959 = smul.u32 2, %s21
        $region62: #{layer12_forward.1} parent=19 // pred_fallthru
          _
        // Predicated region
        $region63: #{layer12_forward.1} parent=19 // pred_check
          %p1960 = pneg %p123
        $region64: #{layer12_forward.1} parent=19 // pred_check_branch
          %1962 = sbr.rel (%p1960) target = $region66
        $region65: #{layer12_forward.1} parent=19 // pred_region
          %s1963 = smul.u32 2, %s21
          %p1964 = scmp.lt.s32.totalorder %s1963, 7
          %s1965 = scalar_select %p1964, %s1963, 7
          %s1966 = scalar_lea.vmem %s3, %s1965
          %s1967 = smul.u32 2, %s21
        $region66: #{layer12_forward.1} parent=19 // pred_fallthru
          _
      $region20: #{layer12_forward.1} parent=5 // pred_fallthru
        _
      %p1968 = scmp.le.s32.totalorder 1, %s13
      %p1969 = scmp.lt.s32.totalorder %s13, 5
      %p1970 = pnand %p1968, %p1969
      %p1971 = pneg %p1970
      // Predicated region
      $region67: #{layer12_forward.1} parent=5 // pred_check
        _
      $region68: #{layer12_forward.1} parent=5 // pred_check_branch
        %1973 = sbr.rel (%p1970) target = $region70
      $region69: #{layer12_forward.1} parent=5 // pred_region
        %s1974 = ssub.s32 %s13, 1
        %s1975 = sand.u32 %s64, 1
        %s1976 = sand.u32 %s64, 1
        %s1977 = smul.addr %s1976, 3456
        %s1978 = scalar_lea.vmem [#allocation2], %s1977
        // Predicated region
        $region71: #{layer12_forward.1} parent=69 // pred_check
          %p1979 = pneg %p77
        $region72: #{layer12_forward.1} parent=69 // pred_check_branch
          %1981 = sbr.rel (%p1979) target = $region74
        $region73: #{layer12_forward.1} parent=69 // pred_region
          _
        $region74: #{layer12_forward.1} parent=69 // pred_fallthru
          _
        %s1982 = smul.u32 16, %s22
        %p1983 = scmp.lt.s32.totalorder %s1982, 15
        %s1984 = scalar_select %p1983, %s1982, 15
        %s1985 = smul.addr %s1984, 27
        %s1986 = smul.addr %s1985, 4
        %s1987 = scalar_lea.vmem %s0, %s1986
        %p1988 = pneg %p51
        %p1989 = pneg %p48
        %s1990 = sand.u32 %s64, 1
        %s1991 = sand.u32 %s64, 1
        %s1992 = smul.addr %s1991, 3456
        %s1993 = scalar_lea.vmem [#allocation2], %s1992
        %p1994 = pneg %p77
        %p1995 = pneg %p74
        %s1996 = smul.u32 2, %s23
        %p1997 = scmp.lt.s32.totalorder %s1996, 7
        %s1998 = scalar_select %p1997, %s1996, 7
        %s1999 = scalar_lea.vmem %s2, %s1998
        %p2000 = pneg %p103
        %p2001 = pneg %p100
        %s2002 = smul.u32 2, %s23
        %p2003 = scmp.lt.s32.totalorder %s2002, 7
        %s2004 = scalar_select %p2003, %s2002, 7
        %s2005 = scalar_lea.vmem %s3, %s2004
        %p2006 = pneg %p129
        %p2007 = pneg %p126
        %p2008 = pneg %p157
        %p2009 = pneg %p154
        %s2010 = sand.u32 %s144, 1
        %s2011 = scalar_lea.sflag [#allocation4], %s2010
        %s2012 = sand.u32 %s144, 1
        %s2013 = smul.addr %s2012, 128
        %s2014 = scalar_lea.vmem [#allocation3], %s2013
        %s2015 = smul.u32 16, %s22
        %p2016 = scmp.lt.s32.totalorder %s2015, 15
        %s2017 = scalar_select %p2016, %s2015, 15
        %s2018 = smul.addr %s2017, 27
        %s2019 = smul.addr %s2018, 4
        %s2020 = scalar_lea.vmem %s0, %s2019
        %s2021 = smul.u32 16, %s22
        %s2022 = smul.u32 2, %s23
        %s2023 = smul.u32 2, %s23
        %p2024 = scmp.lt.s32.totalorder %s2023, 7
        %s2025 = scalar_select %p2024, %s2023, 7
        %s2026 = scalar_lea.vmem %s2, %s2025
        %s2027 = smul.u32 2, %s23
        %s2028 = smul.u32 2, %s23
        %p2029 = scmp.lt.s32.totalorder %s2028, 7
        %s2030 = scalar_select %p2029, %s2028, 7
        %s2031 = scalar_lea.vmem %s3, %s2030
        %s2032 = smul.u32 2, %s23
        %s2033 = smul.u32 16, %s22
        %s2034 = smul.u32 2, %s23
        %v2036 = vld [vmem:[%s2020] sm:$0xff]
        %v2037 = vld [vmem:[%s2020 + $0x8] sm:$0xff]
        %v2038 = vld [vmem:[%s2020 + $0x10] sm:$0xff]
        %v2039 = vld [vmem:[%s2020 + $0x18] sm:$0xff]
        %v2040 = vld [vmem:[%s2020 + $0x20] sm:$0xff]
        %v2041 = vld [vmem:[%s2020 + $0x28] sm:$0xff]
        %v2042 = vld [vmem:[%s2020 + $0x30] sm:$0xff]
        %v2043 = vld [vmem:[%s2020 + $0x38] sm:$0xff]
        %v2044 = vld [vmem:[%s2020 + $0x40] sm:$0xff]
        %v2045 = vld [vmem:[%s2020 + $0x48] sm:$0xff]
        %v2046 = vld [vmem:[%s2020 + $0x50] sm:$0xff]
        %v2047 = vld [vmem:[%s2020 + $0x58] sm:$0xff]
        %v2048 = vld [vmem:[%s2020 + $0x60] sm:$0xff]
        %v2049 = vld [vmem:[%s2020 + $0x68] sm:$0xf]
        %v2050 = vld [vmem:[%s2020 + $0x6c] sm:$0xff]
        %v2051 = vld [vmem:[%s2020 + $0x74] sm:$0xff]
        %v2052 = vld [vmem:[%s2020 + $0x7c] sm:$0xff]
        %v2053 = vld [vmem:[%s2020 + $0x84] sm:$0xff]
        %v2054 = vld [vmem:[%s2020 + $0x8c] sm:$0xff]
        %v2055 = vld [vmem:[%s2020 + $0x94] sm:$0xff]
        %v2056 = vld [vmem:[%s2020 + $0x9c] sm:$0xff]
        %v2057 = vld [vmem:[%s2020 + $0xa4] sm:$0xff]
        %v2058 = vld [vmem:[%s2020 + $0xac] sm:$0xff]
        %v2059 = vld [vmem:[%s2020 + $0xb4] sm:$0xff]
        %v2060 = vld [vmem:[%s2020 + $0xbc] sm:$0xff]
        %v2061 = vld [vmem:[%s2020 + $0xc4] sm:$0xff]
        %v2062 = vld [vmem:[%s2020 + $0xcc] sm:$0xff]
        %v2063 = vld [vmem:[%s2020 + $0xd4] sm:$0xf]
        %v2064 = vld [vmem:[%s2020 + $0xd8] sm:$0xff]
        %v2065 = vld [vmem:[%s2020 + $0xe0] sm:$0xff]
        %v2066 = vld [vmem:[%s2020 + $0xe8] sm:$0xff]
        %v2067 = vld [vmem:[%s2020 + $0xf0] sm:$0xff]
        %v2068 = vld [vmem:[%s2020 + $0xf8] sm:$0xff]
        %v2069 = vld [vmem:[%s2020 + $0x100] sm:$0xff]
        %v2070 = vld [vmem:[%s2020 + $0x108] sm:$0xff]
        %v2071 = vld [vmem:[%s2020 + $0x110] sm:$0xff]
        %v2072 = vld [vmem:[%s2020 + $0x118] sm:$0xff]
        %v2073 = vld [vmem:[%s2020 + $0x120] sm:$0xff]
        %v2074 = vld [vmem:[%s2020 + $0x128] sm:$0xff]
        %v2075 = vld [vmem:[%s2020 + $0x130] sm:$0xff]
        %v2076 = vld [vmem:[%s2020 + $0x138] sm:$0xff]
        %v2077 = vld [vmem:[%s2020 + $0x140] sm:$0xf]
        %v2078 = vld [vmem:[%s2020 + $0x144] sm:$0xff]
        %v2079 = vld [vmem:[%s2020 + $0x14c] sm:$0xff]
        %v2080 = vld [vmem:[%s2020 + $0x154] sm:$0xff]
        %v2081 = vld [vmem:[%s2020 + $0x15c] sm:$0xff]
        %v2082 = vld [vmem:[%s2020 + $0x164] sm:$0xff]
        %v2083 = vld [vmem:[%s2020 + $0x16c] sm:$0xff]
        %v2084 = vld [vmem:[%s2020 + $0x174] sm:$0xff]
        %v2085 = vld [vmem:[%s2020 + $0x17c] sm:$0xff]
        %v2086 = vld [vmem:[%s2020 + $0x184] sm:$0xff]
        %v2087 = vld [vmem:[%s2020 + $0x18c] sm:$0xff]
        %v2088 = vld [vmem:[%s2020 + $0x194] sm:$0xff]
        %v2089 = vld [vmem:[%s2020 + $0x19c] sm:$0xff]
        %v2090 = vld [vmem:[%s2020 + $0x1a4] sm:$0xff]
        %v2091 = vld [vmem:[%s2020 + $0x1ac] sm:$0xf]
        %v2092 = vld [vmem:[%s2020 + $0x1b0] sm:$0xff]
        %v2093 = vld [vmem:[%s2020 + $0x1b8] sm:$0xff]
        %v2094 = vld [vmem:[%s2020 + $0x1c0] sm:$0xff]
        %v2095 = vld [vmem:[%s2020 + $0x1c8] sm:$0xff]
        %v2096 = vld [vmem:[%s2020 + $0x1d0] sm:$0xff]
        %v2097 = vld [vmem:[%s2020 + $0x1d8] sm:$0xff]
        %v2098 = vld [vmem:[%s2020 + $0x1e0] sm:$0xff]
        %v2099 = vld [vmem:[%s2020 + $0x1e8] sm:$0xff]
        %v2100 = vld [vmem:[%s2020 + $0x1f0] sm:$0xff]
        %v2101 = vld [vmem:[%s2020 + $0x1f8] sm:$0xff]
        %v2102 = vld [vmem:[%s2020 + $0x200] sm:$0xff]
        %v2103 = vld [vmem:[%s2020 + $0x208] sm:$0xff]
        %v2104 = vld [vmem:[%s2020 + $0x210] sm:$0xff]
        %v2105 = vld [vmem:[%s2020 + $0x218] sm:$0xf]
        %v2106 = vld [vmem:[%s2020 + $0x21c] sm:$0xff]
        %v2107 = vld [vmem:[%s2020 + $0x224] sm:$0xff]
        %v2108 = vld [vmem:[%s2020 + $0x22c] sm:$0xff]
        %v2109 = vld [vmem:[%s2020 + $0x234] sm:$0xff]
        %v2110 = vld [vmem:[%s2020 + $0x23c] sm:$0xff]
        %v2111 = vld [vmem:[%s2020 + $0x244] sm:$0xff]
        %v2112 = vld [vmem:[%s2020 + $0x24c] sm:$0xff]
        %v2113 = vld [vmem:[%s2020 + $0x254] sm:$0xff]
        %v2114 = vld [vmem:[%s2020 + $0x25c] sm:$0xff]
        %v2115 = vld [vmem:[%s2020 + $0x264] sm:$0xff]
        %v2116 = vld [vmem:[%s2020 + $0x26c] sm:$0xff]
        %v2117 = vld [vmem:[%s2020 + $0x274] sm:$0xff]
        %v2118 = vld [vmem:[%s2020 + $0x27c] sm:$0xff]
        %v2119 = vld [vmem:[%s2020 + $0x284] sm:$0xf]
        %v2120 = vld [vmem:[%s2020 + $0x288] sm:$0xff]
        %v2121 = vld [vmem:[%s2020 + $0x290] sm:$0xff]
        %v2122 = vld [vmem:[%s2020 + $0x298] sm:$0xff]
        %v2123 = vld [vmem:[%s2020 + $0x2a0] sm:$0xff]
        %v2124 = vld [vmem:[%s2020 + $0x2a8] sm:$0xff]
        %v2125 = vld [vmem:[%s2020 + $0x2b0] sm:$0xff]
        %v2126 = vld [vmem:[%s2020 + $0x2b8] sm:$0xff]
        %v2127 = vld [vmem:[%s2020 + $0x2c0] sm:$0xff]
        %v2128 = vld [vmem:[%s2020 + $0x2c8] sm:$0xff]
        %v2129 = vld [vmem:[%s2020 + $0x2d0] sm:$0xff]
        %v2130 = vld [vmem:[%s2020 + $0x2d8] sm:$0xff]
        %v2131 = vld [vmem:[%s2020 + $0x2e0] sm:$0xff]
        %v2132 = vld [vmem:[%s2020 + $0x2e8] sm:$0xff]
        %v2133 = vld [vmem:[%s2020 + $0x2f0] sm:$0xf]
        %v2134 = vld [vmem:[%s2020 + $0x2f4] sm:$0xff]
        %v2135 = vld [vmem:[%s2020 + $0x2fc] sm:$0xff]
        %v2136 = vld [vmem:[%s2020 + $0x304] sm:$0xff]
        %v2137 = vld [vmem:[%s2020 + $0x30c] sm:$0xff]
        %v2138 = vld [vmem:[%s2020 + $0x314] sm:$0xff]
        %v2139 = vld [vmem:[%s2020 + $0x31c] sm:$0xff]
        %v2140 = vld [vmem:[%s2020 + $0x324] sm:$0xff]
        %v2141 = vld [vmem:[%s2020 + $0x32c] sm:$0xff]
        %v2142 = vld [vmem:[%s2020 + $0x334] sm:$0xff]
        %v2143 = vld [vmem:[%s2020 + $0x33c] sm:$0xff]
        %v2144 = vld [vmem:[%s2020 + $0x344] sm:$0xff]
        %v2145 = vld [vmem:[%s2020 + $0x34c] sm:$0xff]
        %v2146 = vld [vmem:[%s2020 + $0x354] sm:$0xff]
        %v2147 = vld [vmem:[%s2020 + $0x35c] sm:$0xf]
        %v2148 = vld [vmem:[%s2020 + $0x360] sm:$0xff]
        %v2149 = vld [vmem:[%s2020 + $0x368] sm:$0xff]
        %v2150 = vld [vmem:[%s2020 + $0x370] sm:$0xff]
        %v2151 = vld [vmem:[%s2020 + $0x378] sm:$0xff]
        %v2152 = vld [vmem:[%s2020 + $0x380] sm:$0xff]
        %v2153 = vld [vmem:[%s2020 + $0x388] sm:$0xff]
        %v2154 = vld [vmem:[%s2020 + $0x390] sm:$0xff]
        %v2155 = vld [vmem:[%s2020 + $0x398] sm:$0xff]
        %v2156 = vld [vmem:[%s2020 + $0x3a0] sm:$0xff]
        %v2157 = vld [vmem:[%s2020 + $0x3a8] sm:$0xff]
        %v2158 = vld [vmem:[%s2020 + $0x3b0] sm:$0xff]
        %v2159 = vld [vmem:[%s2020 + $0x3b8] sm:$0xff]
        %v2160 = vld [vmem:[%s2020 + $0x3c0] sm:$0xff]
        %v2161 = vld [vmem:[%s2020 + $0x3c8] sm:$0xf]
        %v2162 = vld [vmem:[%s2020 + $0x3cc] sm:$0xff]
        %v2163 = vld [vmem:[%s2020 + $0x3d4] sm:$0xff]
        %v2164 = vld [vmem:[%s2020 + $0x3dc] sm:$0xff]
        %v2165 = vld [vmem:[%s2020 + $0x3e4] sm:$0xff]
        %v2166 = vld [vmem:[%s2020 + $0x3ec] sm:$0xff]
        %v2167 = vld [vmem:[%s2020 + $0x3f4] sm:$0xff]
        %v2168 = vld [vmem:[%s2020 + $0x3fc] sm:$0xff]
        %v2169 = vld [vmem:[%s2020 + $0x404] sm:$0xff]
        %v2170 = vld [vmem:[%s2020 + $0x40c] sm:$0xff]
        %v2171 = vld [vmem:[%s2020 + $0x414] sm:$0xff]
        %v2172 = vld [vmem:[%s2020 + $0x41c] sm:$0xff]
        %v2173 = vld [vmem:[%s2020 + $0x424] sm:$0xff]
        %v2174 = vld [vmem:[%s2020 + $0x42c] sm:$0xff]
        %v2175 = vld [vmem:[%s2020 + $0x434] sm:$0xf]
        %v2176 = vld [vmem:[%s2020 + $0x438] sm:$0xff]
        %v2177 = vld [vmem:[%s2020 + $0x440] sm:$0xff]
        %v2178 = vld [vmem:[%s2020 + $0x448] sm:$0xff]
        %v2179 = vld [vmem:[%s2020 + $0x450] sm:$0xff]
        %v2180 = vld [vmem:[%s2020 + $0x458] sm:$0xff]
        %v2181 = vld [vmem:[%s2020 + $0x460] sm:$0xff]
        %v2182 = vld [vmem:[%s2020 + $0x468] sm:$0xff]
        %v2183 = vld [vmem:[%s2020 + $0x470] sm:$0xff]
        %v2184 = vld [vmem:[%s2020 + $0x478] sm:$0xff]
        %v2185 = vld [vmem:[%s2020 + $0x480] sm:$0xff]
        %v2186 = vld [vmem:[%s2020 + $0x488] sm:$0xff]
        %v2187 = vld [vmem:[%s2020 + $0x490] sm:$0xff]
        %v2188 = vld [vmem:[%s2020 + $0x498] sm:$0xff]
        %v2189 = vld [vmem:[%s2020 + $0x4a0] sm:$0xf]
        %v2190 = vld [vmem:[%s2020 + $0x4a4] sm:$0xff]
        %v2191 = vld [vmem:[%s2020 + $0x4ac] sm:$0xff]
        %v2192 = vld [vmem:[%s2020 + $0x4b4] sm:$0xff]
        %v2193 = vld [vmem:[%s2020 + $0x4bc] sm:$0xff]
        %v2194 = vld [vmem:[%s2020 + $0x4c4] sm:$0xff]
        %v2195 = vld [vmem:[%s2020 + $0x4cc] sm:$0xff]
        %v2196 = vld [vmem:[%s2020 + $0x4d4] sm:$0xff]
        %v2197 = vld [vmem:[%s2020 + $0x4dc] sm:$0xff]
        %v2198 = vld [vmem:[%s2020 + $0x4e4] sm:$0xff]
        %v2199 = vld [vmem:[%s2020 + $0x4ec] sm:$0xff]
        %v2200 = vld [vmem:[%s2020 + $0x4f4] sm:$0xff]
        %v2201 = vld [vmem:[%s2020 + $0x4fc] sm:$0xff]
        %v2202 = vld [vmem:[%s2020 + $0x504] sm:$0xff]
        %v2203 = vld [vmem:[%s2020 + $0x50c] sm:$0xf]
        %v2204 = vld [vmem:[%s2020 + $0x510] sm:$0xff]
        %v2205 = vld [vmem:[%s2020 + $0x518] sm:$0xff]
        %v2206 = vld [vmem:[%s2020 + $0x520] sm:$0xff]
        %v2207 = vld [vmem:[%s2020 + $0x528] sm:$0xff]
        %v2208 = vld [vmem:[%s2020 + $0x530] sm:$0xff]
        %v2209 = vld [vmem:[%s2020 + $0x538] sm:$0xff]
        %v2210 = vld [vmem:[%s2020 + $0x540] sm:$0xff]
        %v2211 = vld [vmem:[%s2020 + $0x548] sm:$0xff]
        %v2212 = vld [vmem:[%s2020 + $0x550] sm:$0xff]
        %v2213 = vld [vmem:[%s2020 + $0x558] sm:$0xff]
        %v2214 = vld [vmem:[%s2020 + $0x560] sm:$0xff]
        %v2215 = vld [vmem:[%s2020 + $0x568] sm:$0xff]
        %v2216 = vld [vmem:[%s2020 + $0x570] sm:$0xff]
        %v2217 = vld [vmem:[%s2020 + $0x578] sm:$0xf]
        %v2218 = vld [vmem:[%s2020 + $0x57c] sm:$0xff]
        %v2219 = vld [vmem:[%s2020 + $0x584] sm:$0xff]
        %v2220 = vld [vmem:[%s2020 + $0x58c] sm:$0xff]
        %v2221 = vld [vmem:[%s2020 + $0x594] sm:$0xff]
        %v2222 = vld [vmem:[%s2020 + $0x59c] sm:$0xff]
        %v2223 = vld [vmem:[%s2020 + $0x5a4] sm:$0xff]
        %v2224 = vld [vmem:[%s2020 + $0x5ac] sm:$0xff]
        %v2225 = vld [vmem:[%s2020 + $0x5b4] sm:$0xff]
        %v2226 = vld [vmem:[%s2020 + $0x5bc] sm:$0xff]
        %v2227 = vld [vmem:[%s2020 + $0x5c4] sm:$0xff]
        %v2228 = vld [vmem:[%s2020 + $0x5cc] sm:$0xff]
        %v2229 = vld [vmem:[%s2020 + $0x5d4] sm:$0xff]
        %v2230 = vld [vmem:[%s2020 + $0x5dc] sm:$0xff]
        %v2231 = vld [vmem:[%s2020 + $0x5e4] sm:$0xf]
        %v2232 = vld [vmem:[%s2020 + $0x5e8] sm:$0xff]
        %v2233 = vld [vmem:[%s2020 + $0x5f0] sm:$0xff]
        %v2234 = vld [vmem:[%s2020 + $0x5f8] sm:$0xff]
        %v2235 = vld [vmem:[%s2020 + $0x600] sm:$0xff]
        %v2236 = vld [vmem:[%s2020 + $0x608] sm:$0xff]
        %v2237 = vld [vmem:[%s2020 + $0x610] sm:$0xff]
        %v2238 = vld [vmem:[%s2020 + $0x618] sm:$0xff]
        %v2239 = vld [vmem:[%s2020 + $0x620] sm:$0xff]
        %v2240 = vld [vmem:[%s2020 + $0x628] sm:$0xff]
        %v2241 = vld [vmem:[%s2020 + $0x630] sm:$0xff]
        %v2242 = vld [vmem:[%s2020 + $0x638] sm:$0xff]
        %v2243 = vld [vmem:[%s2020 + $0x640] sm:$0xff]
        %v2244 = vld [vmem:[%s2020 + $0x648] sm:$0xff]
        %v2245 = vld [vmem:[%s2020 + $0x650] sm:$0xf]
        %v2246 = vld [vmem:[%s2020 + $0x654] sm:$0xff]
        %v2247 = vld [vmem:[%s2020 + $0x65c] sm:$0xff]
        %v2248 = vld [vmem:[%s2020 + $0x664] sm:$0xff]
        %v2249 = vld [vmem:[%s2020 + $0x66c] sm:$0xff]
        %v2250 = vld [vmem:[%s2020 + $0x674] sm:$0xff]
        %v2251 = vld [vmem:[%s2020 + $0x67c] sm:$0xff]
        %v2252 = vld [vmem:[%s2020 + $0x684] sm:$0xff]
        %v2253 = vld [vmem:[%s2020 + $0x68c] sm:$0xff]
        %v2254 = vld [vmem:[%s2020 + $0x694] sm:$0xff]
        %v2255 = vld [vmem:[%s2020 + $0x69c] sm:$0xff]
        %v2256 = vld [vmem:[%s2020 + $0x6a4] sm:$0xff]
        %v2257 = vld [vmem:[%s2020 + $0x6ac] sm:$0xff]
        %v2258 = vld [vmem:[%s2020 + $0x6b4] sm:$0xff]
        %v2259 = vld [vmem:[%s2020 + $0x6bc] sm:$0xf]
        %v2260 = vld [vmem:[%s1978] sm:$0xff]
        %v2261 = vld [vmem:[%s1978 + $0x8] sm:$0xff]
        %v2262 = vld [vmem:[%s1978 + $0x10] sm:$0xff]
        %v2263 = vld [vmem:[%s1978 + $0x18] sm:$0xff]
        %v2264 = vld [vmem:[%s1978 + $0x20] sm:$0xff]
        %v2265 = vld [vmem:[%s1978 + $0x28] sm:$0xff]
        %v2266 = vld [vmem:[%s1978 + $0x30] sm:$0xff]
        %v2267 = vld [vmem:[%s1978 + $0x38] sm:$0xff]
        %v2268 = vld [vmem:[%s1978 + $0x40] sm:$0xff]
        %v2269 = vld [vmem:[%s1978 + $0x48] sm:$0xff]
        %v2270 = vld [vmem:[%s1978 + $0x50] sm:$0xff]
        %v2271 = vld [vmem:[%s1978 + $0x58] sm:$0xff]
        %v2272 = vld [vmem:[%s1978 + $0x60] sm:$0xff]
        %v2273 = vld [vmem:[%s1978 + $0x68] sm:$0xff]
        %v2274 = vld [vmem:[%s1978 + $0x70] sm:$0xff]
        %v2275 = vld [vmem:[%s1978 + $0x78] sm:$0xff]
        %v2276 = vld [vmem:[%s1978 + $0x80] sm:$0xff]
        %v2277 = vld [vmem:[%s1978 + $0x88] sm:$0xff]
        %v2278 = vld [vmem:[%s1978 + $0x90] sm:$0xff]
        %v2279 = vld [vmem:[%s1978 + $0x98] sm:$0xff]
        %v2280 = vld [vmem:[%s1978 + $0xa0] sm:$0xff]
        %v2281 = vld [vmem:[%s1978 + $0xa8] sm:$0xff]
        %v2282 = vld [vmem:[%s1978 + $0xb0] sm:$0xff]
        %v2283 = vld [vmem:[%s1978 + $0xb8] sm:$0xff]
        %v2284 = vld [vmem:[%s1978 + $0xc0] sm:$0xff]
        %v2285 = vld [vmem:[%s1978 + $0xc8] sm:$0xff]
        %v2286 = vld [vmem:[%s1978 + $0xd0] sm:$0xff]
        %v2287 = vld [vmem:[%s1978 + $0xd8] sm:$0xff]
        %v2288 = vld [vmem:[%s1978 + $0xe0] sm:$0xff]
        %v2289 = vld [vmem:[%s1978 + $0xe8] sm:$0xff]
        %v2290 = vld [vmem:[%s1978 + $0xf0] sm:$0xff]
        %v2291 = vld [vmem:[%s1978 + $0xf8] sm:$0xff]
        %v2292 = vld [vmem:[%s1978 + $0x100] sm:$0xff]
        %v2293 = vld [vmem:[%s1978 + $0x108] sm:$0xff]
        %v2294 = vld [vmem:[%s1978 + $0x110] sm:$0xff]
        %v2295 = vld [vmem:[%s1978 + $0x118] sm:$0xff]
        %v2296 = vld [vmem:[%s1978 + $0x120] sm:$0xff]
        %v2297 = vld [vmem:[%s1978 + $0x128] sm:$0xff]
        %v2298 = vld [vmem:[%s1978 + $0x130] sm:$0xff]
        %v2299 = vld [vmem:[%s1978 + $0x138] sm:$0xff]
        %v2300 = vld [vmem:[%s1978 + $0x140] sm:$0xff]
        %v2301 = vld [vmem:[%s1978 + $0x148] sm:$0xff]
        %v2302 = vld [vmem:[%s1978 + $0x150] sm:$0xff]
        %v2303 = vld [vmem:[%s1978 + $0x158] sm:$0xff]
        %v2304 = vld [vmem:[%s1978 + $0x160] sm:$0xff]
        %v2305 = vld [vmem:[%s1978 + $0x168] sm:$0xff]
        %v2306 = vld [vmem:[%s1978 + $0x170] sm:$0xff]
        %v2307 = vld [vmem:[%s1978 + $0x178] sm:$0xff]
        %v2308 = vld [vmem:[%s1978 + $0x180] sm:$0xff]
        %v2309 = vld [vmem:[%s1978 + $0x188] sm:$0xff]
        %v2310 = vld [vmem:[%s1978 + $0x190] sm:$0xff]
        %v2311 = vld [vmem:[%s1978 + $0x198] sm:$0xff]
        %v2312 = vld [vmem:[%s1978 + $0x1a0] sm:$0xff]
        %v2313 = vld [vmem:[%s1978 + $0x1a8] sm:$0xff]
        %v2314 = vld [vmem:[%s1978 + $0x1b0] sm:$0xff]
        %v2315 = vld [vmem:[%s1978 + $0x1b8] sm:$0xff]
        %v2316 = vld [vmem:[%s1978 + $0x1c0] sm:$0xff]
        %v2317 = vld [vmem:[%s1978 + $0x1c8] sm:$0xff]
        %v2318 = vld [vmem:[%s1978 + $0x1d0] sm:$0xff]
        %v2319 = vld [vmem:[%s1978 + $0x1d8] sm:$0xff]
        %v2320 = vld [vmem:[%s1978 + $0x1e0] sm:$0xff]
        %v2321 = vld [vmem:[%s1978 + $0x1e8] sm:$0xff]
        %v2322 = vld [vmem:[%s1978 + $0x1f0] sm:$0xff]
        %v2323 = vld [vmem:[%s1978 + $0x1f8] sm:$0xff]
        %v2324 = vld [vmem:[%s1978 + $0x200] sm:$0xff]
        %v2325 = vld [vmem:[%s1978 + $0x208] sm:$0xff]
        %v2326 = vld [vmem:[%s1978 + $0x210] sm:$0xff]
        %v2327 = vld [vmem:[%s1978 + $0x218] sm:$0xff]
        %v2328 = vld [vmem:[%s1978 + $0x220] sm:$0xff]
        %v2329 = vld [vmem:[%s1978 + $0x228] sm:$0xff]
        %v2330 = vld [vmem:[%s1978 + $0x230] sm:$0xff]
        %v2331 = vld [vmem:[%s1978 + $0x238] sm:$0xff]
        %v2332 = vld [vmem:[%s1978 + $0x240] sm:$0xff]
        %v2333 = vld [vmem:[%s1978 + $0x248] sm:$0xff]
        %v2334 = vld [vmem:[%s1978 + $0x250] sm:$0xff]
        %v2335 = vld [vmem:[%s1978 + $0x258] sm:$0xff]
        %v2336 = vld [vmem:[%s1978 + $0x260] sm:$0xff]
        %v2337 = vld [vmem:[%s1978 + $0x268] sm:$0xff]
        %v2338 = vld [vmem:[%s1978 + $0x270] sm:$0xff]
        %v2339 = vld [vmem:[%s1978 + $0x278] sm:$0xff]
        %v2340 = vld [vmem:[%s1978 + $0x280] sm:$0xff]
        %v2341 = vld [vmem:[%s1978 + $0x288] sm:$0xff]
        %v2342 = vld [vmem:[%s1978 + $0x290] sm:$0xff]
        %v2343 = vld [vmem:[%s1978 + $0x298] sm:$0xff]
        %v2344 = vld [vmem:[%s1978 + $0x2a0] sm:$0xff]
        %v2345 = vld [vmem:[%s1978 + $0x2a8] sm:$0xff]
        %v2346 = vld [vmem:[%s1978 + $0x2b0] sm:$0xff]
        %v2347 = vld [vmem:[%s1978 + $0x2b8] sm:$0xff]
        %v2348 = vld [vmem:[%s1978 + $0x2c0] sm:$0xff]
        %v2349 = vld [vmem:[%s1978 + $0x2c8] sm:$0xff]
        %v2350 = vld [vmem:[%s1978 + $0x2d0] sm:$0xff]
        %v2351 = vld [vmem:[%s1978 + $0x2d8] sm:$0xff]
        %v2352 = vld [vmem:[%s1978 + $0x2e0] sm:$0xff]
        %v2353 = vld [vmem:[%s1978 + $0x2e8] sm:$0xff]
        %v2354 = vld [vmem:[%s1978 + $0x2f0] sm:$0xff]
        %v2355 = vld [vmem:[%s1978 + $0x2f8] sm:$0xff]
        %v2356 = vld [vmem:[%s1978 + $0x300] sm:$0xff]
        %v2357 = vld [vmem:[%s1978 + $0x308] sm:$0xff]
        %v2358 = vld [vmem:[%s1978 + $0x310] sm:$0xff]
        %v2359 = vld [vmem:[%s1978 + $0x318] sm:$0xff]
        %v2360 = vld [vmem:[%s1978 + $0x320] sm:$0xff]
        %v2361 = vld [vmem:[%s1978 + $0x328] sm:$0xff]
        %v2362 = vld [vmem:[%s1978 + $0x330] sm:$0xff]
        %v2363 = vld [vmem:[%s1978 + $0x338] sm:$0xff]
        %v2364 = vld [vmem:[%s1978 + $0x340] sm:$0xff]
        %v2365 = vld [vmem:[%s1978 + $0x348] sm:$0xff]
        %v2366 = vld [vmem:[%s1978 + $0x350] sm:$0xff]
        %v2367 = vld [vmem:[%s1978 + $0x358] sm:$0xff]
        %v2368 = vld [vmem:[%s1978 + $0x360] sm:$0xff]
        %v2369 = vld [vmem:[%s1978 + $0x368] sm:$0xff]
        %v2370 = vld [vmem:[%s1978 + $0x370] sm:$0xff]
        %v2371 = vld [vmem:[%s1978 + $0x378] sm:$0xff]
        %v2372 = vld [vmem:[%s1978 + $0x380] sm:$0xff]
        %v2373 = vld [vmem:[%s1978 + $0x388] sm:$0xff]
        %v2374 = vld [vmem:[%s1978 + $0x390] sm:$0xff]
        %v2375 = vld [vmem:[%s1978 + $0x398] sm:$0xff]
        %v2376 = vld [vmem:[%s1978 + $0x3a0] sm:$0xff]
        %v2377 = vld [vmem:[%s1978 + $0x3a8] sm:$0xff]
        %v2378 = vld [vmem:[%s1978 + $0x3b0] sm:$0xff]
        %v2379 = vld [vmem:[%s1978 + $0x3b8] sm:$0xff]
        %v2380 = vld [vmem:[%s1978 + $0x3c0] sm:$0xff]
        %v2381 = vld [vmem:[%s1978 + $0x3c8] sm:$0xff]
        %v2382 = vld [vmem:[%s1978 + $0x3d0] sm:$0xff]
        %v2383 = vld [vmem:[%s1978 + $0x3d8] sm:$0xff]
        %v2384 = vld [vmem:[%s1978 + $0x3e0] sm:$0xff]
        %v2385 = vld [vmem:[%s1978 + $0x3e8] sm:$0xff]
        %v2386 = vld [vmem:[%s1978 + $0x3f0] sm:$0xff]
        %v2387 = vld [vmem:[%s1978 + $0x3f8] sm:$0xff]
        %v2388 = vld [vmem:[%s1978 + $0x400] sm:$0xff]
        %v2389 = vld [vmem:[%s1978 + $0x408] sm:$0xff]
        %v2390 = vld [vmem:[%s1978 + $0x410] sm:$0xff]
        %v2391 = vld [vmem:[%s1978 + $0x418] sm:$0xff]
        %v2392 = vld [vmem:[%s1978 + $0x420] sm:$0xff]
        %v2393 = vld [vmem:[%s1978 + $0x428] sm:$0xff]
        %v2394 = vld [vmem:[%s1978 + $0x430] sm:$0xff]
        %v2395 = vld [vmem:[%s1978 + $0x438] sm:$0xff]
        %v2396 = vld [vmem:[%s1978 + $0x440] sm:$0xff]
        %v2397 = vld [vmem:[%s1978 + $0x448] sm:$0xff]
        %v2398 = vld [vmem:[%s1978 + $0x450] sm:$0xff]
        %v2399 = vld [vmem:[%s1978 + $0x458] sm:$0xff]
        %v2400 = vld [vmem:[%s1978 + $0x460] sm:$0xff]
        %v2401 = vld [vmem:[%s1978 + $0x468] sm:$0xff]
        %v2402 = vld [vmem:[%s1978 + $0x470] sm:$0xff]
        %v2403 = vld [vmem:[%s1978 + $0x478] sm:$0xff]
        %v2404 = vld [vmem:[%s1978 + $0x480] sm:$0xff]
        %v2405 = vld [vmem:[%s1978 + $0x488] sm:$0xff]
        %v2406 = vld [vmem:[%s1978 + $0x490] sm:$0xff]
        %v2407 = vld [vmem:[%s1978 + $0x498] sm:$0xff]
        %v2408 = vld [vmem:[%s1978 + $0x4a0] sm:$0xff]
        %v2409 = vld [vmem:[%s1978 + $0x4a8] sm:$0xff]
        %v2410 = vld [vmem:[%s1978 + $0x4b0] sm:$0xff]
        %v2411 = vld [vmem:[%s1978 + $0x4b8] sm:$0xff]
        %v2412 = vld [vmem:[%s1978 + $0x4c0] sm:$0xff]
        %v2413 = vld [vmem:[%s1978 + $0x4c8] sm:$0xff]
        %v2414 = vld [vmem:[%s1978 + $0x4d0] sm:$0xff]
        %v2415 = vld [vmem:[%s1978 + $0x4d8] sm:$0xff]
        %v2416 = vld [vmem:[%s1978 + $0x4e0] sm:$0xff]
        %v2417 = vld [vmem:[%s1978 + $0x4e8] sm:$0xff]
        %v2418 = vld [vmem:[%s1978 + $0x4f0] sm:$0xff]
        %v2419 = vld [vmem:[%s1978 + $0x4f8] sm:$0xff]
        %v2420 = vld [vmem:[%s1978 + $0x500] sm:$0xff]
        %v2421 = vld [vmem:[%s1978 + $0x508] sm:$0xff]
        %v2422 = vld [vmem:[%s1978 + $0x510] sm:$0xff]
        %v2423 = vld [vmem:[%s1978 + $0x518] sm:$0xff]
        %v2424 = vld [vmem:[%s1978 + $0x520] sm:$0xff]
        %v2425 = vld [vmem:[%s1978 + $0x528] sm:$0xff]
        %v2426 = vld [vmem:[%s1978 + $0x530] sm:$0xff]
        %v2427 = vld [vmem:[%s1978 + $0x538] sm:$0xff]
        %v2428 = vld [vmem:[%s1978 + $0x540] sm:$0xff]
        %v2429 = vld [vmem:[%s1978 + $0x548] sm:$0xff]
        %v2430 = vld [vmem:[%s1978 + $0x550] sm:$0xff]
        %v2431 = vld [vmem:[%s1978 + $0x558] sm:$0xff]
        %v2432 = vld [vmem:[%s1978 + $0x560] sm:$0xff]
        %v2433 = vld [vmem:[%s1978 + $0x568] sm:$0xff]
        %v2434 = vld [vmem:[%s1978 + $0x570] sm:$0xff]
        %v2435 = vld [vmem:[%s1978 + $0x578] sm:$0xff]
        %v2436 = vld [vmem:[%s1978 + $0x580] sm:$0xff]
        %v2437 = vld [vmem:[%s1978 + $0x588] sm:$0xff]
        %v2438 = vld [vmem:[%s1978 + $0x590] sm:$0xff]
        %v2439 = vld [vmem:[%s1978 + $0x598] sm:$0xff]
        %v2440 = vld [vmem:[%s1978 + $0x5a0] sm:$0xff]
        %v2441 = vld [vmem:[%s1978 + $0x5a8] sm:$0xff]
        %v2442 = vld [vmem:[%s1978 + $0x5b0] sm:$0xff]
        %v2443 = vld [vmem:[%s1978 + $0x5b8] sm:$0xff]
        %v2444 = vld [vmem:[%s1978 + $0x5c0] sm:$0xff]
        %v2445 = vld [vmem:[%s1978 + $0x5c8] sm:$0xff]
        %v2446 = vld [vmem:[%s1978 + $0x5d0] sm:$0xff]
        %v2447 = vld [vmem:[%s1978 + $0x5d8] sm:$0xff]
        %v2448 = vld [vmem:[%s1978 + $0x5e0] sm:$0xff]
        %v2449 = vld [vmem:[%s1978 + $0x5e8] sm:$0xff]
        %v2450 = vld [vmem:[%s1978 + $0x5f0] sm:$0xff]
        %v2451 = vld [vmem:[%s1978 + $0x5f8] sm:$0xff]
        %v2452 = vld [vmem:[%s1978 + $0x600] sm:$0xff]
        %v2453 = vld [vmem:[%s1978 + $0x608] sm:$0xff]
        %v2454 = vld [vmem:[%s1978 + $0x610] sm:$0xff]
        %v2455 = vld [vmem:[%s1978 + $0x618] sm:$0xff]
        %v2456 = vld [vmem:[%s1978 + $0x620] sm:$0xff]
        %v2457 = vld [vmem:[%s1978 + $0x628] sm:$0xff]
        %v2458 = vld [vmem:[%s1978 + $0x630] sm:$0xff]
        %v2459 = vld [vmem:[%s1978 + $0x638] sm:$0xff]
        %v2460 = vld [vmem:[%s1978 + $0x640] sm:$0xff]
        %v2461 = vld [vmem:[%s1978 + $0x648] sm:$0xff]
        %v2462 = vld [vmem:[%s1978 + $0x650] sm:$0xff]
        %v2463 = vld [vmem:[%s1978 + $0x658] sm:$0xff]
        %v2464 = vld [vmem:[%s1978 + $0x660] sm:$0xff]
        %v2465 = vld [vmem:[%s1978 + $0x668] sm:$0xff]
        %v2466 = vld [vmem:[%s1978 + $0x670] sm:$0xff]
        %v2467 = vld [vmem:[%s1978 + $0x678] sm:$0xff]
        %v2468 = vld [vmem:[%s1978 + $0x680] sm:$0xff]
        %v2469 = vld [vmem:[%s1978 + $0x688] sm:$0xff]
        %v2470 = vld [vmem:[%s1978 + $0x690] sm:$0xff]
        %v2471 = vld [vmem:[%s1978 + $0x698] sm:$0xff]
        %v2472 = vld [vmem:[%s1978 + $0x6a0] sm:$0xff]
        %v2473 = vld [vmem:[%s1978 + $0x6a8] sm:$0xff]
        %v2474 = vld [vmem:[%s1978 + $0x6b0] sm:$0xff]
        %v2475 = vld [vmem:[%s1978 + $0x6b8] sm:$0xff]
        %v2476 = vld [vmem:[%s1978 + $0x6c0] sm:$0xff]
        %v2477 = vld [vmem:[%s1978 + $0x6c8] sm:$0xff]
        %v2478 = vld [vmem:[%s1978 + $0x6d0] sm:$0xff]
        %v2479 = vld [vmem:[%s1978 + $0x6d8] sm:$0xff]
        %v2480 = vld [vmem:[%s1978 + $0x6e0] sm:$0xff]
        %v2481 = vld [vmem:[%s1978 + $0x6e8] sm:$0xff]
        %v2482 = vld [vmem:[%s1978 + $0x6f0] sm:$0xff]
        %v2483 = vld [vmem:[%s1978 + $0x6f8] sm:$0xff]
        %v2484 = vld [vmem:[%s1978 + $0x700] sm:$0xff]
        %v2485 = vld [vmem:[%s1978 + $0x708] sm:$0xff]
        %v2486 = vld [vmem:[%s1978 + $0x710] sm:$0xff]
        %v2487 = vld [vmem:[%s1978 + $0x718] sm:$0xff]
        %v2488 = vld [vmem:[%s1978 + $0x720] sm:$0xff]
        %v2489 = vld [vmem:[%s1978 + $0x728] sm:$0xff]
        %v2490 = vld [vmem:[%s1978 + $0x730] sm:$0xff]
        %v2491 = vld [vmem:[%s1978 + $0x738] sm:$0xff]
        %v2492 = vld [vmem:[%s1978 + $0x740] sm:$0xff]
        %v2493 = vld [vmem:[%s1978 + $0x748] sm:$0xff]
        %v2494 = vld [vmem:[%s1978 + $0x750] sm:$0xff]
        %v2495 = vld [vmem:[%s1978 + $0x758] sm:$0xff]
        %v2496 = vld [vmem:[%s1978 + $0x760] sm:$0xff]
        %v2497 = vld [vmem:[%s1978 + $0x768] sm:$0xff]
        %v2498 = vld [vmem:[%s1978 + $0x770] sm:$0xff]
        %v2499 = vld [vmem:[%s1978 + $0x778] sm:$0xff]
        %v2500 = vld [vmem:[%s1978 + $0x780] sm:$0xff]
        %v2501 = vld [vmem:[%s1978 + $0x788] sm:$0xff]
        %v2502 = vld [vmem:[%s1978 + $0x790] sm:$0xff]
        %v2503 = vld [vmem:[%s1978 + $0x798] sm:$0xff]
        %v2504 = vld [vmem:[%s1978 + $0x7a0] sm:$0xff]
        %v2505 = vld [vmem:[%s1978 + $0x7a8] sm:$0xff]
        %v2506 = vld [vmem:[%s1978 + $0x7b0] sm:$0xff]
        %v2507 = vld [vmem:[%s1978 + $0x7b8] sm:$0xff]
        %v2508 = vld [vmem:[%s1978 + $0x7c0] sm:$0xff]
        %v2509 = vld [vmem:[%s1978 + $0x7c8] sm:$0xff]
        %v2510 = vld [vmem:[%s1978 + $0x7d0] sm:$0xff]
        %v2511 = vld [vmem:[%s1978 + $0x7d8] sm:$0xff]
        %v2512 = vld [vmem:[%s1978 + $0x7e0] sm:$0xff]
        %v2513 = vld [vmem:[%s1978 + $0x7e8] sm:$0xff]
        %v2514 = vld [vmem:[%s1978 + $0x7f0] sm:$0xff]
        %v2515 = vld [vmem:[%s1978 + $0x7f8] sm:$0xff]
        %v2516 = vld [vmem:[%s1978 + $0x800] sm:$0xff]
        %v2517 = vld [vmem:[%s1978 + $0x808] sm:$0xff]
        %v2518 = vld [vmem:[%s1978 + $0x810] sm:$0xff]
        %v2519 = vld [vmem:[%s1978 + $0x818] sm:$0xff]
        %v2520 = vld [vmem:[%s1978 + $0x820] sm:$0xff]
        %v2521 = vld [vmem:[%s1978 + $0x828] sm:$0xff]
        %v2522 = vld [vmem:[%s1978 + $0x830] sm:$0xff]
        %v2523 = vld [vmem:[%s1978 + $0x838] sm:$0xff]
        %v2524 = vld [vmem:[%s1978 + $0x840] sm:$0xff]
        %v2525 = vld [vmem:[%s1978 + $0x848] sm:$0xff]
        %v2526 = vld [vmem:[%s1978 + $0x850] sm:$0xff]
        %v2527 = vld [vmem:[%s1978 + $0x858] sm:$0xff]
        %v2528 = vld [vmem:[%s1978 + $0x860] sm:$0xff]
        %v2529 = vld [vmem:[%s1978 + $0x868] sm:$0xff]
        %v2530 = vld [vmem:[%s1978 + $0x870] sm:$0xff]
        %v2531 = vld [vmem:[%s1978 + $0x878] sm:$0xff]
        %v2532 = vld [vmem:[%s1978 + $0x880] sm:$0xff]
        %v2533 = vld [vmem:[%s1978 + $0x888] sm:$0xff]
        %v2534 = vld [vmem:[%s1978 + $0x890] sm:$0xff]
        %v2535 = vld [vmem:[%s1978 + $0x898] sm:$0xff]
        %v2536 = vld [vmem:[%s1978 + $0x8a0] sm:$0xff]
        %v2537 = vld [vmem:[%s1978 + $0x8a8] sm:$0xff]
        %v2538 = vld [vmem:[%s1978 + $0x8b0] sm:$0xff]
        %v2539 = vld [vmem:[%s1978 + $0x8b8] sm:$0xff]
        %v2540 = vld [vmem:[%s1978 + $0x8c0] sm:$0xff]
        %v2541 = vld [vmem:[%s1978 + $0x8c8] sm:$0xff]
        %v2542 = vld [vmem:[%s1978 + $0x8d0] sm:$0xff]
        %v2543 = vld [vmem:[%s1978 + $0x8d8] sm:$0xff]
        %v2544 = vld [vmem:[%s1978 + $0x8e0] sm:$0xff]
        %v2545 = vld [vmem:[%s1978 + $0x8e8] sm:$0xff]
        %v2546 = vld [vmem:[%s1978 + $0x8f0] sm:$0xff]
        %v2547 = vld [vmem:[%s1978 + $0x8f8] sm:$0xff]
        %v2548 = vld [vmem:[%s1978 + $0x900] sm:$0xff]
        %v2549 = vld [vmem:[%s1978 + $0x908] sm:$0xff]
        %v2550 = vld [vmem:[%s1978 + $0x910] sm:$0xff]
        %v2551 = vld [vmem:[%s1978 + $0x918] sm:$0xff]
        %v2552 = vld [vmem:[%s1978 + $0x920] sm:$0xff]
        %v2553 = vld [vmem:[%s1978 + $0x928] sm:$0xff]
        %v2554 = vld [vmem:[%s1978 + $0x930] sm:$0xff]
        %v2555 = vld [vmem:[%s1978 + $0x938] sm:$0xff]
        %v2556 = vld [vmem:[%s1978 + $0x940] sm:$0xff]
        %v2557 = vld [vmem:[%s1978 + $0x948] sm:$0xff]
        %v2558 = vld [vmem:[%s1978 + $0x950] sm:$0xff]
        %v2559 = vld [vmem:[%s1978 + $0x958] sm:$0xff]
        %v2560 = vld [vmem:[%s1978 + $0x960] sm:$0xff]
        %v2561 = vld [vmem:[%s1978 + $0x968] sm:$0xff]
        %v2562 = vld [vmem:[%s1978 + $0x970] sm:$0xff]
        %v2563 = vld [vmem:[%s1978 + $0x978] sm:$0xff]
        %v2564 = vld [vmem:[%s1978 + $0x980] sm:$0xff]
        %v2565 = vld [vmem:[%s1978 + $0x988] sm:$0xff]
        %v2566 = vld [vmem:[%s1978 + $0x990] sm:$0xff]
        %v2567 = vld [vmem:[%s1978 + $0x998] sm:$0xff]
        %v2568 = vld [vmem:[%s1978 + $0x9a0] sm:$0xff]
        %v2569 = vld [vmem:[%s1978 + $0x9a8] sm:$0xff]
        %v2570 = vld [vmem:[%s1978 + $0x9b0] sm:$0xff]
        %v2571 = vld [vmem:[%s1978 + $0x9b8] sm:$0xff]
        %v2572 = vld [vmem:[%s1978 + $0x9c0] sm:$0xff]
        %v2573 = vld [vmem:[%s1978 + $0x9c8] sm:$0xff]
        %v2574 = vld [vmem:[%s1978 + $0x9d0] sm:$0xff]
        %v2575 = vld [vmem:[%s1978 + $0x9d8] sm:$0xff]
        %v2576 = vld [vmem:[%s1978 + $0x9e0] sm:$0xff]
        %v2577 = vld [vmem:[%s1978 + $0x9e8] sm:$0xff]
        %v2578 = vld [vmem:[%s1978 + $0x9f0] sm:$0xff]
        %v2579 = vld [vmem:[%s1978 + $0x9f8] sm:$0xff]
        %v2580 = vld [vmem:[%s1978 + $0xa00] sm:$0xff]
        %v2581 = vld [vmem:[%s1978 + $0xa08] sm:$0xff]
        %v2582 = vld [vmem:[%s1978 + $0xa10] sm:$0xff]
        %v2583 = vld [vmem:[%s1978 + $0xa18] sm:$0xff]
        %v2584 = vld [vmem:[%s1978 + $0xa20] sm:$0xff]
        %v2585 = vld [vmem:[%s1978 + $0xa28] sm:$0xff]
        %v2586 = vld [vmem:[%s1978 + $0xa30] sm:$0xff]
        %v2587 = vld [vmem:[%s1978 + $0xa38] sm:$0xff]
        %v2588 = vld [vmem:[%s1978 + $0xa40] sm:$0xff]
        %v2589 = vld [vmem:[%s1978 + $0xa48] sm:$0xff]
        %v2590 = vld [vmem:[%s1978 + $0xa50] sm:$0xff]
        %v2591 = vld [vmem:[%s1978 + $0xa58] sm:$0xff]
        %v2592 = vld [vmem:[%s1978 + $0xa60] sm:$0xff]
        %v2593 = vld [vmem:[%s1978 + $0xa68] sm:$0xff]
        %v2594 = vld [vmem:[%s1978 + $0xa70] sm:$0xff]
        %v2595 = vld [vmem:[%s1978 + $0xa78] sm:$0xff]
        %v2596 = vld [vmem:[%s1978 + $0xa80] sm:$0xff]
        %v2597 = vld [vmem:[%s1978 + $0xa88] sm:$0xff]
        %v2598 = vld [vmem:[%s1978 + $0xa90] sm:$0xff]
        %v2599 = vld [vmem:[%s1978 + $0xa98] sm:$0xff]
        %v2600 = vld [vmem:[%s1978 + $0xaa0] sm:$0xff]
        %v2601 = vld [vmem:[%s1978 + $0xaa8] sm:$0xff]
        %v2602 = vld [vmem:[%s1978 + $0xab0] sm:$0xff]
        %v2603 = vld [vmem:[%s1978 + $0xab8] sm:$0xff]
        %v2604 = vld [vmem:[%s1978 + $0xac0] sm:$0xff]
        %v2605 = vld [vmem:[%s1978 + $0xac8] sm:$0xff]
        %v2606 = vld [vmem:[%s1978 + $0xad0] sm:$0xff]
        %v2607 = vld [vmem:[%s1978 + $0xad8] sm:$0xff]
        %v2608 = vld [vmem:[%s1978 + $0xae0] sm:$0xff]
        %v2609 = vld [vmem:[%s1978 + $0xae8] sm:$0xff]
        %v2610 = vld [vmem:[%s1978 + $0xaf0] sm:$0xff]
        %v2611 = vld [vmem:[%s1978 + $0xaf8] sm:$0xff]
        %v2612 = vld [vmem:[%s1978 + $0xb00] sm:$0xff]
        %v2613 = vld [vmem:[%s1978 + $0xb08] sm:$0xff]
        %v2614 = vld [vmem:[%s1978 + $0xb10] sm:$0xff]
        %v2615 = vld [vmem:[%s1978 + $0xb18] sm:$0xff]
        %v2616 = vld [vmem:[%s1978 + $0xb20] sm:$0xff]
        %v2617 = vld [vmem:[%s1978 + $0xb28] sm:$0xff]
        %v2618 = vld [vmem:[%s1978 + $0xb30] sm:$0xff]
        %v2619 = vld [vmem:[%s1978 + $0xb38] sm:$0xff]
        %v2620 = vld [vmem:[%s1978 + $0xb40] sm:$0xff]
        %v2621 = vld [vmem:[%s1978 + $0xb48] sm:$0xff]
        %v2622 = vld [vmem:[%s1978 + $0xb50] sm:$0xff]
        %v2623 = vld [vmem:[%s1978 + $0xb58] sm:$0xff]
        %v2624 = vld [vmem:[%s1978 + $0xb60] sm:$0xff]
        %v2625 = vld [vmem:[%s1978 + $0xb68] sm:$0xff]
        %v2626 = vld [vmem:[%s1978 + $0xb70] sm:$0xff]
        %v2627 = vld [vmem:[%s1978 + $0xb78] sm:$0xff]
        %v2628 = vld [vmem:[%s1978 + $0xb80] sm:$0xff]
        %v2629 = vld [vmem:[%s1978 + $0xb88] sm:$0xff]
        %v2630 = vld [vmem:[%s1978 + $0xb90] sm:$0xff]
        %v2631 = vld [vmem:[%s1978 + $0xb98] sm:$0xff]
        %v2632 = vld [vmem:[%s1978 + $0xba0] sm:$0xff]
        %v2633 = vld [vmem:[%s1978 + $0xba8] sm:$0xff]
        %v2634 = vld [vmem:[%s1978 + $0xbb0] sm:$0xff]
        %v2635 = vld [vmem:[%s1978 + $0xbb8] sm:$0xff]
        %v2636 = vld [vmem:[%s1978 + $0xbc0] sm:$0xff]
        %v2637 = vld [vmem:[%s1978 + $0xbc8] sm:$0xff]
        %v2638 = vld [vmem:[%s1978 + $0xbd0] sm:$0xff]
        %v2639 = vld [vmem:[%s1978 + $0xbd8] sm:$0xff]
        %v2640 = vld [vmem:[%s1978 + $0xbe0] sm:$0xff]
        %v2641 = vld [vmem:[%s1978 + $0xbe8] sm:$0xff]
        %v2642 = vld [vmem:[%s1978 + $0xbf0] sm:$0xff]
        %v2643 = vld [vmem:[%s1978 + $0xbf8] sm:$0xff]
        %v2644 = vld [vmem:[%s1978 + $0xc00] sm:$0xff]
        %v2645 = vld [vmem:[%s1978 + $0xc08] sm:$0xff]
        %v2646 = vld [vmem:[%s1978 + $0xc10] sm:$0xff]
        %v2647 = vld [vmem:[%s1978 + $0xc18] sm:$0xff]
        %v2648 = vld [vmem:[%s1978 + $0xc20] sm:$0xff]
        %v2649 = vld [vmem:[%s1978 + $0xc28] sm:$0xff]
        %v2650 = vld [vmem:[%s1978 + $0xc30] sm:$0xff]
        %v2651 = vld [vmem:[%s1978 + $0xc38] sm:$0xff]
        %v2652 = vld [vmem:[%s1978 + $0xc40] sm:$0xff]
        %v2653 = vld [vmem:[%s1978 + $0xc48] sm:$0xff]
        %v2654 = vld [vmem:[%s1978 + $0xc50] sm:$0xff]
        %v2655 = vld [vmem:[%s1978 + $0xc58] sm:$0xff]
        %v2656 = vld [vmem:[%s1978 + $0xc60] sm:$0xff]
        %v2657 = vld [vmem:[%s1978 + $0xc68] sm:$0xff]
        %v2658 = vld [vmem:[%s1978 + $0xc70] sm:$0xff]
        %v2659 = vld [vmem:[%s1978 + $0xc78] sm:$0xff]
        %v2660 = vld [vmem:[%s1978 + $0xc80] sm:$0xff]
        %v2661 = vld [vmem:[%s1978 + $0xc88] sm:$0xff]
        %v2662 = vld [vmem:[%s1978 + $0xc90] sm:$0xff]
        %v2663 = vld [vmem:[%s1978 + $0xc98] sm:$0xff]
        %v2664 = vld [vmem:[%s1978 + $0xca0] sm:$0xff]
        %v2665 = vld [vmem:[%s1978 + $0xca8] sm:$0xff]
        %v2666 = vld [vmem:[%s1978 + $0xcb0] sm:$0xff]
        %v2667 = vld [vmem:[%s1978 + $0xcb8] sm:$0xff]
        %v2668 = vld [vmem:[%s1978 + $0xcc0] sm:$0xff]
        %v2669 = vld [vmem:[%s1978 + $0xcc8] sm:$0xff]
        %v2670 = vld [vmem:[%s1978 + $0xcd0] sm:$0xff]
        %v2671 = vld [vmem:[%s1978 + $0xcd8] sm:$0xff]
        %v2672 = vld [vmem:[%s1978 + $0xce0] sm:$0xff]
        %v2673 = vld [vmem:[%s1978 + $0xce8] sm:$0xff]
        %v2674 = vld [vmem:[%s1978 + $0xcf0] sm:$0xff]
        %v2675 = vld [vmem:[%s1978 + $0xcf8] sm:$0xff]
        %v2676 = vld [vmem:[%s1978 + $0xd00] sm:$0xff]
        %v2677 = vld [vmem:[%s1978 + $0xd08] sm:$0xff]
        %v2678 = vld [vmem:[%s1978 + $0xd10] sm:$0xff]
        %v2679 = vld [vmem:[%s1978 + $0xd18] sm:$0xff]
        %v2680 = vld [vmem:[%s1978 + $0xd20] sm:$0xff]
        %v2681 = vld [vmem:[%s1978 + $0xd28] sm:$0xff]
        %v2682 = vld [vmem:[%s1978 + $0xd30] sm:$0xff]
        %v2683 = vld [vmem:[%s1978 + $0xd38] sm:$0xff]
        %v2684 = vld [vmem:[%s1978 + $0xd40] sm:$0xff]
        %v2685 = vld [vmem:[%s1978 + $0xd48] sm:$0xff]
        %v2686 = vld [vmem:[%s1978 + $0xd50] sm:$0xff]
        %v2687 = vld [vmem:[%s1978 + $0xd58] sm:$0xff]
        %v2688 = vld [vmem:[%s1978 + $0xd60] sm:$0xff]
        %v2689 = vld [vmem:[%s1978 + $0xd68] sm:$0xff]
        %v2690 = vld [vmem:[%s1978 + $0xd70] sm:$0xff]
        %v2691 = vld [vmem:[%s1978 + $0xd78] sm:$0xff]
        %v2916 = vunpack.c.l.b16 %v2036
        %v2917 = vunpack.c.h.b16 %v2036
        %v2918 = vunpack.c.l.b16 %v2037
        %v2919 = vunpack.c.h.b16 %v2037
        %v2920 = vunpack.c.l.b16 %v2038
        %v2921 = vunpack.c.h.b16 %v2038
        %v2922 = vunpack.c.l.b16 %v2039
        %v2923 = vunpack.c.h.b16 %v2039
        %v2924 = vunpack.c.l.b16 %v2040
        %v2925 = vunpack.c.h.b16 %v2040
        %v2926 = vunpack.c.l.b16 %v2041
        %v2927 = vunpack.c.h.b16 %v2041
        %v2928 = vunpack.c.l.b16 %v2042
        %v2929 = vunpack.c.h.b16 %v2042
        %v2930 = vunpack.c.l.b16 %v2043
        %v2931 = vunpack.c.h.b16 %v2043
        %v2932 = vunpack.c.l.b16 %v2044
        %v2933 = vunpack.c.h.b16 %v2044
        %v2934 = vunpack.c.l.b16 %v2045
        %v2935 = vunpack.c.h.b16 %v2045
        %v2936 = vunpack.c.l.b16 %v2046
        %v2937 = vunpack.c.h.b16 %v2046
        %v2938 = vunpack.c.l.b16 %v2047
        %v2939 = vunpack.c.h.b16 %v2047
        %v2940 = vunpack.c.l.b16 %v2048
        %v2941 = vunpack.c.h.b16 %v2048
        %v2942 = vunpack.c.l.b16 %v2049
        %v2943 = vunpack.c.l.b16 %v2050
        %v2944 = vunpack.c.h.b16 %v2050
        %v2945 = vunpack.c.l.b16 %v2051
        %v2946 = vunpack.c.h.b16 %v2051
        %v2947 = vunpack.c.l.b16 %v2052
        %v2948 = vunpack.c.h.b16 %v2052
        %v2949 = vunpack.c.l.b16 %v2053
        %v2950 = vunpack.c.h.b16 %v2053
        %v2951 = vunpack.c.l.b16 %v2054
        %v2952 = vunpack.c.h.b16 %v2054
        %v2953 = vunpack.c.l.b16 %v2055
        %v2954 = vunpack.c.h.b16 %v2055
        %v2955 = vunpack.c.l.b16 %v2056
        %v2956 = vunpack.c.h.b16 %v2056
        %v2957 = vunpack.c.l.b16 %v2057
        %v2958 = vunpack.c.h.b16 %v2057
        %v2959 = vunpack.c.l.b16 %v2058
        %v2960 = vunpack.c.h.b16 %v2058
        %v2961 = vunpack.c.l.b16 %v2059
        %v2962 = vunpack.c.h.b16 %v2059
        %v2963 = vunpack.c.l.b16 %v2060
        %v2964 = vunpack.c.h.b16 %v2060
        %v2965 = vunpack.c.l.b16 %v2061
        %v2966 = vunpack.c.h.b16 %v2061
        %v2967 = vunpack.c.l.b16 %v2062
        %v2968 = vunpack.c.h.b16 %v2062
        %v2969 = vunpack.c.l.b16 %v2063
        %v2970 = vunpack.c.l.b16 %v2064
        %v2971 = vunpack.c.h.b16 %v2064
        %v2972 = vunpack.c.l.b16 %v2065
        %v2973 = vunpack.c.h.b16 %v2065
        %v2974 = vunpack.c.l.b16 %v2066
        %v2975 = vunpack.c.h.b16 %v2066
        %v2976 = vunpack.c.l.b16 %v2067
        %v2977 = vunpack.c.h.b16 %v2067
        %v2978 = vunpack.c.l.b16 %v2068
        %v2979 = vunpack.c.h.b16 %v2068
        %v2980 = vunpack.c.l.b16 %v2069
        %v2981 = vunpack.c.h.b16 %v2069
        %v2982 = vunpack.c.l.b16 %v2070
        %v2983 = vunpack.c.h.b16 %v2070
        %v2984 = vunpack.c.l.b16 %v2071
        %v2985 = vunpack.c.h.b16 %v2071
        %v2986 = vunpack.c.l.b16 %v2072
        %v2987 = vunpack.c.h.b16 %v2072
        %v2988 = vunpack.c.l.b16 %v2073
        %v2989 = vunpack.c.h.b16 %v2073
        %v2990 = vunpack.c.l.b16 %v2074
        %v2991 = vunpack.c.h.b16 %v2074
        %v2992 = vunpack.c.l.b16 %v2075
        %v2993 = vunpack.c.h.b16 %v2075
        %v2994 = vunpack.c.l.b16 %v2076
        %v2995 = vunpack.c.h.b16 %v2076
        %v2996 = vunpack.c.l.b16 %v2077
        %v2997 = vunpack.c.l.b16 %v2078
        %v2998 = vunpack.c.h.b16 %v2078
        %v2999 = vunpack.c.l.b16 %v2079
        %v3000 = vunpack.c.h.b16 %v2079
        %v3001 = vunpack.c.l.b16 %v2080
        %v3002 = vunpack.c.h.b16 %v2080
        %v3003 = vunpack.c.l.b16 %v2081
        %v3004 = vunpack.c.h.b16 %v2081
        %v3005 = vunpack.c.l.b16 %v2082
        %v3006 = vunpack.c.h.b16 %v2082
        %v3007 = vunpack.c.l.b16 %v2083
        %v3008 = vunpack.c.h.b16 %v2083
        %v3009 = vunpack.c.l.b16 %v2084
        %v3010 = vunpack.c.h.b16 %v2084
        %v3011 = vunpack.c.l.b16 %v2085
        %v3012 = vunpack.c.h.b16 %v2085
        %v3013 = vunpack.c.l.b16 %v2086
        %v3014 = vunpack.c.h.b16 %v2086
        %v3015 = vunpack.c.l.b16 %v2087
        %v3016 = vunpack.c.h.b16 %v2087
        %v3017 = vunpack.c.l.b16 %v2088
        %v3018 = vunpack.c.h.b16 %v2088
        %v3019 = vunpack.c.l.b16 %v2089
        %v3020 = vunpack.c.h.b16 %v2089
        %v3021 = vunpack.c.l.b16 %v2090
        %v3022 = vunpack.c.h.b16 %v2090
        %v3023 = vunpack.c.l.b16 %v2091
        %v3024 = vunpack.c.l.b16 %v2092
        %v3025 = vunpack.c.h.b16 %v2092
        %v3026 = vunpack.c.l.b16 %v2093
        %v3027 = vunpack.c.h.b16 %v2093
        %v3028 = vunpack.c.l.b16 %v2094
        %v3029 = vunpack.c.h.b16 %v2094
        %v3030 = vunpack.c.l.b16 %v2095
        %v3031 = vunpack.c.h.b16 %v2095
        %v3032 = vunpack.c.l.b16 %v2096
        %v3033 = vunpack.c.h.b16 %v2096
        %v3034 = vunpack.c.l.b16 %v2097
        %v3035 = vunpack.c.h.b16 %v2097
        %v3036 = vunpack.c.l.b16 %v2098
        %v3037 = vunpack.c.h.b16 %v2098
        %v3038 = vunpack.c.l.b16 %v2099
        %v3039 = vunpack.c.h.b16 %v2099
        %v3040 = vunpack.c.l.b16 %v2100
        %v3041 = vunpack.c.h.b16 %v2100
        %v3042 = vunpack.c.l.b16 %v2101
        %v3043 = vunpack.c.h.b16 %v2101
        %v3044 = vunpack.c.l.b16 %v2102
        %v3045 = vunpack.c.h.b16 %v2102
        %v3046 = vunpack.c.l.b16 %v2103
        %v3047 = vunpack.c.h.b16 %v2103
        %v3048 = vunpack.c.l.b16 %v2104
        %v3049 = vunpack.c.h.b16 %v2104
        %v3050 = vunpack.c.l.b16 %v2105
        %v3051 = vunpack.c.l.b16 %v2106
        %v3052 = vunpack.c.h.b16 %v2106
        %v3053 = vunpack.c.l.b16 %v2107
        %v3054 = vunpack.c.h.b16 %v2107
        %v3055 = vunpack.c.l.b16 %v2108
        %v3056 = vunpack.c.h.b16 %v2108
        %v3057 = vunpack.c.l.b16 %v2109
        %v3058 = vunpack.c.h.b16 %v2109
        %v3059 = vunpack.c.l.b16 %v2110
        %v3060 = vunpack.c.h.b16 %v2110
        %v3061 = vunpack.c.l.b16 %v2111
        %v3062 = vunpack.c.h.b16 %v2111
        %v3063 = vunpack.c.l.b16 %v2112
        %v3064 = vunpack.c.h.b16 %v2112
        %v3065 = vunpack.c.l.b16 %v2113
        %v3066 = vunpack.c.h.b16 %v2113
        %v3067 = vunpack.c.l.b16 %v2114
        %v3068 = vunpack.c.h.b16 %v2114
        %v3069 = vunpack.c.l.b16 %v2115
        %v3070 = vunpack.c.h.b16 %v2115
        %v3071 = vunpack.c.l.b16 %v2116
        %v3072 = vunpack.c.h.b16 %v2116
        %v3073 = vunpack.c.l.b16 %v2117
        %v3074 = vunpack.c.h.b16 %v2117
        %v3075 = vunpack.c.l.b16 %v2118
        %v3076 = vunpack.c.h.b16 %v2118
        %v3077 = vunpack.c.l.b16 %v2119
        %v3078 = vunpack.c.l.b16 %v2120
        %v3079 = vunpack.c.h.b16 %v2120
        %v3080 = vunpack.c.l.b16 %v2121
        %v3081 = vunpack.c.h.b16 %v2121
        %v3082 = vunpack.c.l.b16 %v2122
        %v3083 = vunpack.c.h.b16 %v2122
        %v3084 = vunpack.c.l.b16 %v2123
        %v3085 = vunpack.c.h.b16 %v2123
        %v3086 = vunpack.c.l.b16 %v2124
        %v3087 = vunpack.c.h.b16 %v2124
        %v3088 = vunpack.c.l.b16 %v2125
        %v3089 = vunpack.c.h.b16 %v2125
        %v3090 = vunpack.c.l.b16 %v2126
        %v3091 = vunpack.c.h.b16 %v2126
        %v3092 = vunpack.c.l.b16 %v2127
        %v3093 = vunpack.c.h.b16 %v2127
        %v3094 = vunpack.c.l.b16 %v2128
        %v3095 = vunpack.c.h.b16 %v2128
        %v3096 = vunpack.c.l.b16 %v2129
        %v3097 = vunpack.c.h.b16 %v2129
        %v3098 = vunpack.c.l.b16 %v2130
        %v3099 = vunpack.c.h.b16 %v2130
        %v3100 = vunpack.c.l.b16 %v2131
        %v3101 = vunpack.c.h.b16 %v2131
        %v3102 = vunpack.c.l.b16 %v2132
        %v3103 = vunpack.c.h.b16 %v2132
        %v3104 = vunpack.c.l.b16 %v2133
        %v3105 = vunpack.c.l.b16 %v2134
        %v3106 = vunpack.c.h.b16 %v2134
        %v3107 = vunpack.c.l.b16 %v2135
        %v3108 = vunpack.c.h.b16 %v2135
        %v3109 = vunpack.c.l.b16 %v2136
        %v3110 = vunpack.c.h.b16 %v2136
        %v3111 = vunpack.c.l.b16 %v2137
        %v3112 = vunpack.c.h.b16 %v2137
        %v3113 = vunpack.c.l.b16 %v2138
        %v3114 = vunpack.c.h.b16 %v2138
        %v3115 = vunpack.c.l.b16 %v2139
        %v3116 = vunpack.c.h.b16 %v2139
        %v3117 = vunpack.c.l.b16 %v2140
        %v3118 = vunpack.c.h.b16 %v2140
        %v3119 = vunpack.c.l.b16 %v2141
        %v3120 = vunpack.c.h.b16 %v2141
        %v3121 = vunpack.c.l.b16 %v2142
        %v3122 = vunpack.c.h.b16 %v2142
        %v3123 = vunpack.c.l.b16 %v2143
        %v3124 = vunpack.c.h.b16 %v2143
        %v3125 = vunpack.c.l.b16 %v2144
        %v3126 = vunpack.c.h.b16 %v2144
        %v3127 = vunpack.c.l.b16 %v2145
        %v3128 = vunpack.c.h.b16 %v2145
        %v3129 = vunpack.c.l.b16 %v2146
        %v3130 = vunpack.c.h.b16 %v2146
        %v3131 = vunpack.c.l.b16 %v2147
        %v3132 = vunpack.c.l.b16 %v2148
        %v3133 = vunpack.c.h.b16 %v2148
        %v3134 = vunpack.c.l.b16 %v2149
        %v3135 = vunpack.c.h.b16 %v2149
        %v3136 = vunpack.c.l.b16 %v2150
        %v3137 = vunpack.c.h.b16 %v2150
        %v3138 = vunpack.c.l.b16 %v2151
        %v3139 = vunpack.c.h.b16 %v2151
        %v3140 = vunpack.c.l.b16 %v2152
        %v3141 = vunpack.c.h.b16 %v2152
        %v3142 = vunpack.c.l.b16 %v2153
        %v3143 = vunpack.c.h.b16 %v2153
        %v3144 = vunpack.c.l.b16 %v2154
        %v3145 = vunpack.c.h.b16 %v2154
        %v3146 = vunpack.c.l.b16 %v2155
        %v3147 = vunpack.c.h.b16 %v2155
        %v3148 = vunpack.c.l.b16 %v2156
        %v3149 = vunpack.c.h.b16 %v2156
        %v3150 = vunpack.c.l.b16 %v2157
        %v3151 = vunpack.c.h.b16 %v2157
        %v3152 = vunpack.c.l.b16 %v2158
        %v3153 = vunpack.c.h.b16 %v2158
        %v3154 = vunpack.c.l.b16 %v2159
        %v3155 = vunpack.c.h.b16 %v2159
        %v3156 = vunpack.c.l.b16 %v2160
        %v3157 = vunpack.c.h.b16 %v2160
        %v3158 = vunpack.c.l.b16 %v2161
        %v3159 = vunpack.c.l.b16 %v2162
        %v3160 = vunpack.c.h.b16 %v2162
        %v3161 = vunpack.c.l.b16 %v2163
        %v3162 = vunpack.c.h.b16 %v2163
        %v3163 = vunpack.c.l.b16 %v2164
        %v3164 = vunpack.c.h.b16 %v2164
        %v3165 = vunpack.c.l.b16 %v2165
        %v3166 = vunpack.c.h.b16 %v2165
        %v3167 = vunpack.c.l.b16 %v2166
        %v3168 = vunpack.c.h.b16 %v2166
        %v3169 = vunpack.c.l.b16 %v2167
        %v3170 = vunpack.c.h.b16 %v2167
        %v3171 = vunpack.c.l.b16 %v2168
        %v3172 = vunpack.c.h.b16 %v2168
        %v3173 = vunpack.c.l.b16 %v2169
        %v3174 = vunpack.c.h.b16 %v2169
        %v3175 = vunpack.c.l.b16 %v2170
        %v3176 = vunpack.c.h.b16 %v2170
        %v3177 = vunpack.c.l.b16 %v2171
        %v3178 = vunpack.c.h.b16 %v2171
        %v3179 = vunpack.c.l.b16 %v2172
        %v3180 = vunpack.c.h.b16 %v2172
        %v3181 = vunpack.c.l.b16 %v2173
        %v3182 = vunpack.c.h.b16 %v2173
        %v3183 = vunpack.c.l.b16 %v2174
        %v3184 = vunpack.c.h.b16 %v2174
        %v3185 = vunpack.c.l.b16 %v2175
        %v3186 = vunpack.c.l.b16 %v2176
        %v3187 = vunpack.c.h.b16 %v2176
        %v3188 = vunpack.c.l.b16 %v2177
        %v3189 = vunpack.c.h.b16 %v2177
        %v3190 = vunpack.c.l.b16 %v2178
        %v3191 = vunpack.c.h.b16 %v2178
        %v3192 = vunpack.c.l.b16 %v2179
        %v3193 = vunpack.c.h.b16 %v2179
        %v3194 = vunpack.c.l.b16 %v2180
        %v3195 = vunpack.c.h.b16 %v2180
        %v3196 = vunpack.c.l.b16 %v2181
        %v3197 = vunpack.c.h.b16 %v2181
        %v3198 = vunpack.c.l.b16 %v2182
        %v3199 = vunpack.c.h.b16 %v2182
        %v3200 = vunpack.c.l.b16 %v2183
        %v3201 = vunpack.c.h.b16 %v2183
        %v3202 = vunpack.c.l.b16 %v2184
        %v3203 = vunpack.c.h.b16 %v2184
        %v3204 = vunpack.c.l.b16 %v2185
        %v3205 = vunpack.c.h.b16 %v2185
        %v3206 = vunpack.c.l.b16 %v2186
        %v3207 = vunpack.c.h.b16 %v2186
        %v3208 = vunpack.c.l.b16 %v2187
        %v3209 = vunpack.c.h.b16 %v2187
        %v3210 = vunpack.c.l.b16 %v2188
        %v3211 = vunpack.c.h.b16 %v2188
        %v3212 = vunpack.c.l.b16 %v2189
        %v3213 = vunpack.c.l.b16 %v2190
        %v3214 = vunpack.c.h.b16 %v2190
        %v3215 = vunpack.c.l.b16 %v2191
        %v3216 = vunpack.c.h.b16 %v2191
        %v3217 = vunpack.c.l.b16 %v2192
        %v3218 = vunpack.c.h.b16 %v2192
        %v3219 = vunpack.c.l.b16 %v2193
        %v3220 = vunpack.c.h.b16 %v2193
        %v3221 = vunpack.c.l.b16 %v2194
        %v3222 = vunpack.c.h.b16 %v2194
        %v3223 = vunpack.c.l.b16 %v2195
        %v3224 = vunpack.c.h.b16 %v2195
        %v3225 = vunpack.c.l.b16 %v2196
        %v3226 = vunpack.c.h.b16 %v2196
        %v3227 = vunpack.c.l.b16 %v2197
        %v3228 = vunpack.c.h.b16 %v2197
        %v3229 = vunpack.c.l.b16 %v2198
        %v3230 = vunpack.c.h.b16 %v2198
        %v3231 = vunpack.c.l.b16 %v2199
        %v3232 = vunpack.c.h.b16 %v2199
        %v3233 = vunpack.c.l.b16 %v2200
        %v3234 = vunpack.c.h.b16 %v2200
        %v3235 = vunpack.c.l.b16 %v2201
        %v3236 = vunpack.c.h.b16 %v2201
        %v3237 = vunpack.c.l.b16 %v2202
        %v3238 = vunpack.c.h.b16 %v2202
        %v3239 = vunpack.c.l.b16 %v2203
        %v3240 = vunpack.c.l.b16 %v2204
        %v3241 = vunpack.c.h.b16 %v2204
        %v3242 = vunpack.c.l.b16 %v2205
        %v3243 = vunpack.c.h.b16 %v2205
        %v3244 = vunpack.c.l.b16 %v2206
        %v3245 = vunpack.c.h.b16 %v2206
        %v3246 = vunpack.c.l.b16 %v2207
        %v3247 = vunpack.c.h.b16 %v2207
        %v3248 = vunpack.c.l.b16 %v2208
        %v3249 = vunpack.c.h.b16 %v2208
        %v3250 = vunpack.c.l.b16 %v2209
        %v3251 = vunpack.c.h.b16 %v2209
        %v3252 = vunpack.c.l.b16 %v2210
        %v3253 = vunpack.c.h.b16 %v2210
        %v3254 = vunpack.c.l.b16 %v2211
        %v3255 = vunpack.c.h.b16 %v2211
        %v3256 = vunpack.c.l.b16 %v2212
        %v3257 = vunpack.c.h.b16 %v2212
        %v3258 = vunpack.c.l.b16 %v2213
        %v3259 = vunpack.c.h.b16 %v2213
        %v3260 = vunpack.c.l.b16 %v2214
        %v3261 = vunpack.c.h.b16 %v2214
        %v3262 = vunpack.c.l.b16 %v2215
        %v3263 = vunpack.c.h.b16 %v2215
        %v3264 = vunpack.c.l.b16 %v2216
        %v3265 = vunpack.c.h.b16 %v2216
        %v3266 = vunpack.c.l.b16 %v2217
        %v3267 = vunpack.c.l.b16 %v2218
        %v3268 = vunpack.c.h.b16 %v2218
        %v3269 = vunpack.c.l.b16 %v2219
        %v3270 = vunpack.c.h.b16 %v2219
        %v3271 = vunpack.c.l.b16 %v2220
        %v3272 = vunpack.c.h.b16 %v2220
        %v3273 = vunpack.c.l.b16 %v2221
        %v3274 = vunpack.c.h.b16 %v2221
        %v3275 = vunpack.c.l.b16 %v2222
        %v3276 = vunpack.c.h.b16 %v2222
        %v3277 = vunpack.c.l.b16 %v2223
        %v3278 = vunpack.c.h.b16 %v2223
        %v3279 = vunpack.c.l.b16 %v2224
        %v3280 = vunpack.c.h.b16 %v2224
        %v3281 = vunpack.c.l.b16 %v2225
        %v3282 = vunpack.c.h.b16 %v2225
        %v3283 = vunpack.c.l.b16 %v2226
        %v3284 = vunpack.c.h.b16 %v2226
        %v3285 = vunpack.c.l.b16 %v2227
        %v3286 = vunpack.c.h.b16 %v2227
        %v3287 = vunpack.c.l.b16 %v2228
        %v3288 = vunpack.c.h.b16 %v2228
        %v3289 = vunpack.c.l.b16 %v2229
        %v3290 = vunpack.c.h.b16 %v2229
        %v3291 = vunpack.c.l.b16 %v2230
        %v3292 = vunpack.c.h.b16 %v2230
        %v3293 = vunpack.c.l.b16 %v2231
        %v3294 = vunpack.c.l.b16 %v2232
        %v3295 = vunpack.c.h.b16 %v2232
        %v3296 = vunpack.c.l.b16 %v2233
        %v3297 = vunpack.c.h.b16 %v2233
        %v3298 = vunpack.c.l.b16 %v2234
        %v3299 = vunpack.c.h.b16 %v2234
        %v3300 = vunpack.c.l.b16 %v2235
        %v3301 = vunpack.c.h.b16 %v2235
        %v3302 = vunpack.c.l.b16 %v2236
        %v3303 = vunpack.c.h.b16 %v2236
        %v3304 = vunpack.c.l.b16 %v2237
        %v3305 = vunpack.c.h.b16 %v2237
        %v3306 = vunpack.c.l.b16 %v2238
        %v3307 = vunpack.c.h.b16 %v2238
        %v3308 = vunpack.c.l.b16 %v2239
        %v3309 = vunpack.c.h.b16 %v2239
        %v3310 = vunpack.c.l.b16 %v2240
        %v3311 = vunpack.c.h.b16 %v2240
        %v3312 = vunpack.c.l.b16 %v2241
        %v3313 = vunpack.c.h.b16 %v2241
        %v3314 = vunpack.c.l.b16 %v2242
        %v3315 = vunpack.c.h.b16 %v2242
        %v3316 = vunpack.c.l.b16 %v2243
        %v3317 = vunpack.c.h.b16 %v2243
        %v3318 = vunpack.c.l.b16 %v2244
        %v3319 = vunpack.c.h.b16 %v2244
        %v3320 = vunpack.c.l.b16 %v2245
        %v3321 = vunpack.c.l.b16 %v2246
        %v3322 = vunpack.c.h.b16 %v2246
        %v3323 = vunpack.c.l.b16 %v2247
        %v3324 = vunpack.c.h.b16 %v2247
        %v3325 = vunpack.c.l.b16 %v2248
        %v3326 = vunpack.c.h.b16 %v2248
        %v3327 = vunpack.c.l.b16 %v2249
        %v3328 = vunpack.c.h.b16 %v2249
        %v3329 = vunpack.c.l.b16 %v2250
        %v3330 = vunpack.c.h.b16 %v2250
        %v3331 = vunpack.c.l.b16 %v2251
        %v3332 = vunpack.c.h.b16 %v2251
        %v3333 = vunpack.c.l.b16 %v2252
        %v3334 = vunpack.c.h.b16 %v2252
        %v3335 = vunpack.c.l.b16 %v2253
        %v3336 = vunpack.c.h.b16 %v2253
        %v3337 = vunpack.c.l.b16 %v2254
        %v3338 = vunpack.c.h.b16 %v2254
        %v3339 = vunpack.c.l.b16 %v2255
        %v3340 = vunpack.c.h.b16 %v2255
        %v3341 = vunpack.c.l.b16 %v2256
        %v3342 = vunpack.c.h.b16 %v2256
        %v3343 = vunpack.c.l.b16 %v2257
        %v3344 = vunpack.c.h.b16 %v2257
        %v3345 = vunpack.c.l.b16 %v2258
        %v3346 = vunpack.c.h.b16 %v2258
        %v3347 = vunpack.c.l.b16 %v2259
        %v3348 = vpack.c.b16 %v2943, %v2916
        %v3349 = vpack.c.b16 %v2944, %v2917
        %v3350 = vpack.c.b16 %v2945, %v2918
        %v3351 = vpack.c.b16 %v2946, %v2919
        %v3352 = vpack.c.b16 %v2947, %v2920
        %v3353 = vpack.c.b16 %v2948, %v2921
        %v3354 = vpack.c.b16 %v2949, %v2922
        %v3355 = vpack.c.b16 %v2950, %v2923
        %v3356 = vpack.c.b16 %v2951, %v2924
        %v3357 = vpack.c.b16 %v2952, %v2925
        %v3358 = vpack.c.b16 %v2953, %v2926
        %v3359 = vpack.c.b16 %v2954, %v2927
        %v3360 = vpack.c.b16 %v2955, %v2928
        %v3361 = vpack.c.b16 %v2956, %v2929
        %v3362 = vpack.c.b16 %v2957, %v2930
        %v3363 = vpack.c.b16 %v2958, %v2931
        %v3364 = vpack.c.b16 %v2959, %v2932
        %v3365 = vpack.c.b16 %v2960, %v2933
        %v3366 = vpack.c.b16 %v2961, %v2934
        %v3367 = vpack.c.b16 %v2962, %v2935
        %v3368 = vpack.c.b16 %v2963, %v2936
        %v3369 = vpack.c.b16 %v2964, %v2937
        %v3370 = vpack.c.b16 %v2965, %v2938
        %v3371 = vpack.c.b16 %v2966, %v2939
        %v3372 = vpack.c.b16 %v2967, %v2940
        %v3373 = vpack.c.b16 %v2968, %v2941
        %v3374 = vpack.c.b16 %v2969, %v2942
        %v3375 = vpack.c.b16 %v2997, %v2970
        %v3376 = vpack.c.b16 %v2998, %v2971
        %v3377 = vpack.c.b16 %v2999, %v2972
        %v3378 = vpack.c.b16 %v3000, %v2973
        %v3379 = vpack.c.b16 %v3001, %v2974
        %v3380 = vpack.c.b16 %v3002, %v2975
        %v3381 = vpack.c.b16 %v3003, %v2976
        %v3382 = vpack.c.b16 %v3004, %v2977
        %v3383 = vpack.c.b16 %v3005, %v2978
        %v3384 = vpack.c.b16 %v3006, %v2979
        %v3385 = vpack.c.b16 %v3007, %v2980
        %v3386 = vpack.c.b16 %v3008, %v2981
        %v3387 = vpack.c.b16 %v3009, %v2982
        %v3388 = vpack.c.b16 %v3010, %v2983
        %v3389 = vpack.c.b16 %v3011, %v2984
        %v3390 = vpack.c.b16 %v3012, %v2985
        %v3391 = vpack.c.b16 %v3013, %v2986
        %v3392 = vpack.c.b16 %v3014, %v2987
        %v3393 = vpack.c.b16 %v3015, %v2988
        %v3394 = vpack.c.b16 %v3016, %v2989
        %v3395 = vpack.c.b16 %v3017, %v2990
        %v3396 = vpack.c.b16 %v3018, %v2991
        %v3397 = vpack.c.b16 %v3019, %v2992
        %v3398 = vpack.c.b16 %v3020, %v2993
        %v3399 = vpack.c.b16 %v3021, %v2994
        %v3400 = vpack.c.b16 %v3022, %v2995
        %v3401 = vpack.c.b16 %v3023, %v2996
        %v3402 = vpack.c.b16 %v3051, %v3024
        %v3403 = vpack.c.b16 %v3052, %v3025
        %v3404 = vpack.c.b16 %v3053, %v3026
        %v3405 = vpack.c.b16 %v3054, %v3027
        %v3406 = vpack.c.b16 %v3055, %v3028
        %v3407 = vpack.c.b16 %v3056, %v3029
        %v3408 = vpack.c.b16 %v3057, %v3030
        %v3409 = vpack.c.b16 %v3058, %v3031
        %v3410 = vpack.c.b16 %v3059, %v3032
        %v3411 = vpack.c.b16 %v3060, %v3033
        %v3412 = vpack.c.b16 %v3061, %v3034
        %v3413 = vpack.c.b16 %v3062, %v3035
        %v3414 = vpack.c.b16 %v3063, %v3036
        %v3415 = vpack.c.b16 %v3064, %v3037
        %v3416 = vpack.c.b16 %v3065, %v3038
        %v3417 = vpack.c.b16 %v3066, %v3039
        %v3418 = vpack.c.b16 %v3067, %v3040
        %v3419 = vpack.c.b16 %v3068, %v3041
        %v3420 = vpack.c.b16 %v3069, %v3042
        %v3421 = vpack.c.b16 %v3070, %v3043
        %v3422 = vpack.c.b16 %v3071, %v3044
        %v3423 = vpack.c.b16 %v3072, %v3045
        %v3424 = vpack.c.b16 %v3073, %v3046
        %v3425 = vpack.c.b16 %v3074, %v3047
        %v3426 = vpack.c.b16 %v3075, %v3048
        %v3427 = vpack.c.b16 %v3076, %v3049
        %v3428 = vpack.c.b16 %v3077, %v3050
        %v3429 = vpack.c.b16 %v3105, %v3078
        %v3430 = vpack.c.b16 %v3106, %v3079
        %v3431 = vpack.c.b16 %v3107, %v3080
        %v3432 = vpack.c.b16 %v3108, %v3081
        %v3433 = vpack.c.b16 %v3109, %v3082
        %v3434 = vpack.c.b16 %v3110, %v3083
        %v3435 = vpack.c.b16 %v3111, %v3084
        %v3436 = vpack.c.b16 %v3112, %v3085
        %v3437 = vpack.c.b16 %v3113, %v3086
        %v3438 = vpack.c.b16 %v3114, %v3087
        %v3439 = vpack.c.b16 %v3115, %v3088
        %v3440 = vpack.c.b16 %v3116, %v3089
        %v3441 = vpack.c.b16 %v3117, %v3090
        %v3442 = vpack.c.b16 %v3118, %v3091
        %v3443 = vpack.c.b16 %v3119, %v3092
        %v3444 = vpack.c.b16 %v3120, %v3093
        %v3445 = vpack.c.b16 %v3121, %v3094
        %v3446 = vpack.c.b16 %v3122, %v3095
        %v3447 = vpack.c.b16 %v3123, %v3096
        %v3448 = vpack.c.b16 %v3124, %v3097
        %v3449 = vpack.c.b16 %v3125, %v3098
        %v3450 = vpack.c.b16 %v3126, %v3099
        %v3451 = vpack.c.b16 %v3127, %v3100
        %v3452 = vpack.c.b16 %v3128, %v3101
        %v3453 = vpack.c.b16 %v3129, %v3102
        %v3454 = vpack.c.b16 %v3130, %v3103
        %v3455 = vpack.c.b16 %v3131, %v3104
        %v3456 = vpack.c.b16 %v3159, %v3132
        %v3457 = vpack.c.b16 %v3160, %v3133
        %v3458 = vpack.c.b16 %v3161, %v3134
        %v3459 = vpack.c.b16 %v3162, %v3135
        %v3460 = vpack.c.b16 %v3163, %v3136
        %v3461 = vpack.c.b16 %v3164, %v3137
        %v3462 = vpack.c.b16 %v3165, %v3138
        %v3463 = vpack.c.b16 %v3166, %v3139
        %v3464 = vpack.c.b16 %v3167, %v3140
        %v3465 = vpack.c.b16 %v3168, %v3141
        %v3466 = vpack.c.b16 %v3169, %v3142
        %v3467 = vpack.c.b16 %v3170, %v3143
        %v3468 = vpack.c.b16 %v3171, %v3144
        %v3469 = vpack.c.b16 %v3172, %v3145
        %v3470 = vpack.c.b16 %v3173, %v3146
        %v3471 = vpack.c.b16 %v3174, %v3147
        %v3472 = vpack.c.b16 %v3175, %v3148
        %v3473 = vpack.c.b16 %v3176, %v3149
        %v3474 = vpack.c.b16 %v3177, %v3150
        %v3475 = vpack.c.b16 %v3178, %v3151
        %v3476 = vpack.c.b16 %v3179, %v3152
        %v3477 = vpack.c.b16 %v3180, %v3153
        %v3478 = vpack.c.b16 %v3181, %v3154
        %v3479 = vpack.c.b16 %v3182, %v3155
        %v3480 = vpack.c.b16 %v3183, %v3156
        %v3481 = vpack.c.b16 %v3184, %v3157
        %v3482 = vpack.c.b16 %v3185, %v3158
        %v3483 = vpack.c.b16 %v3213, %v3186
        %v3484 = vpack.c.b16 %v3214, %v3187
        %v3485 = vpack.c.b16 %v3215, %v3188
        %v3486 = vpack.c.b16 %v3216, %v3189
        %v3487 = vpack.c.b16 %v3217, %v3190
        %v3488 = vpack.c.b16 %v3218, %v3191
        %v3489 = vpack.c.b16 %v3219, %v3192
        %v3490 = vpack.c.b16 %v3220, %v3193
        %v3491 = vpack.c.b16 %v3221, %v3194
        %v3492 = vpack.c.b16 %v3222, %v3195
        %v3493 = vpack.c.b16 %v3223, %v3196
        %v3494 = vpack.c.b16 %v3224, %v3197
        %v3495 = vpack.c.b16 %v3225, %v3198
        %v3496 = vpack.c.b16 %v3226, %v3199
        %v3497 = vpack.c.b16 %v3227, %v3200
        %v3498 = vpack.c.b16 %v3228, %v3201
        %v3499 = vpack.c.b16 %v3229, %v3202
        %v3500 = vpack.c.b16 %v3230, %v3203
        %v3501 = vpack.c.b16 %v3231, %v3204
        %v3502 = vpack.c.b16 %v3232, %v3205
        %v3503 = vpack.c.b16 %v3233, %v3206
        %v3504 = vpack.c.b16 %v3234, %v3207
        %v3505 = vpack.c.b16 %v3235, %v3208
        %v3506 = vpack.c.b16 %v3236, %v3209
        %v3507 = vpack.c.b16 %v3237, %v3210
        %v3508 = vpack.c.b16 %v3238, %v3211
        %v3509 = vpack.c.b16 %v3239, %v3212
        %v3510 = vpack.c.b16 %v3267, %v3240
        %v3511 = vpack.c.b16 %v3268, %v3241
        %v3512 = vpack.c.b16 %v3269, %v3242
        %v3513 = vpack.c.b16 %v3270, %v3243
        %v3514 = vpack.c.b16 %v3271, %v3244
        %v3515 = vpack.c.b16 %v3272, %v3245
        %v3516 = vpack.c.b16 %v3273, %v3246
        %v3517 = vpack.c.b16 %v3274, %v3247
        %v3518 = vpack.c.b16 %v3275, %v3248
        %v3519 = vpack.c.b16 %v3276, %v3249
        %v3520 = vpack.c.b16 %v3277, %v3250
        %v3521 = vpack.c.b16 %v3278, %v3251
        %v3522 = vpack.c.b16 %v3279, %v3252
        %v3523 = vpack.c.b16 %v3280, %v3253
        %v3524 = vpack.c.b16 %v3281, %v3254
        %v3525 = vpack.c.b16 %v3282, %v3255
        %v3526 = vpack.c.b16 %v3283, %v3256
        %v3527 = vpack.c.b16 %v3284, %v3257
        %v3528 = vpack.c.b16 %v3285, %v3258
        %v3529 = vpack.c.b16 %v3286, %v3259
        %v3530 = vpack.c.b16 %v3287, %v3260
        %v3531 = vpack.c.b16 %v3288, %v3261
        %v3532 = vpack.c.b16 %v3289, %v3262
        %v3533 = vpack.c.b16 %v3290, %v3263
        %v3534 = vpack.c.b16 %v3291, %v3264
        %v3535 = vpack.c.b16 %v3292, %v3265
        %v3536 = vpack.c.b16 %v3293, %v3266
        %v3537 = vpack.c.b16 %v3321, %v3294
        %v3538 = vpack.c.b16 %v3322, %v3295
        %v3539 = vpack.c.b16 %v3323, %v3296
        %v3540 = vpack.c.b16 %v3324, %v3297
        %v3541 = vpack.c.b16 %v3325, %v3298
        %v3542 = vpack.c.b16 %v3326, %v3299
        %v3543 = vpack.c.b16 %v3327, %v3300
        %v3544 = vpack.c.b16 %v3328, %v3301
        %v3545 = vpack.c.b16 %v3329, %v3302
        %v3546 = vpack.c.b16 %v3330, %v3303
        %v3547 = vpack.c.b16 %v3331, %v3304
        %v3548 = vpack.c.b16 %v3332, %v3305
        %v3549 = vpack.c.b16 %v3333, %v3306
        %v3550 = vpack.c.b16 %v3334, %v3307
        %v3551 = vpack.c.b16 %v3335, %v3308
        %v3552 = vpack.c.b16 %v3336, %v3309
        %v3553 = vpack.c.b16 %v3337, %v3310
        %v3554 = vpack.c.b16 %v3338, %v3311
        %v3555 = vpack.c.b16 %v3339, %v3312
        %v3556 = vpack.c.b16 %v3340, %v3313
        %v3557 = vpack.c.b16 %v3341, %v3314
        %v3558 = vpack.c.b16 %v3342, %v3315
        %v3559 = vpack.c.b16 %v3343, %v3316
        %v3560 = vpack.c.b16 %v3344, %v3317
        %v3561 = vpack.c.b16 %v3345, %v3318
        %v3562 = vpack.c.b16 %v3346, %v3319
        %v3563 = vpack.c.b16 %v3347, %v3320
        %v4212 = vunpack.c.l.b16 %v2260
        %v4213 = vunpack.c.h.b16 %v2260
        %v4214 = vunpack.c.l.b16 %v2261
        %v4215 = vunpack.c.h.b16 %v2261
        %v4216 = vunpack.c.l.b16 %v2262
        %v4217 = vunpack.c.h.b16 %v2262
        %v4218 = vunpack.c.l.b16 %v2263
        %v4219 = vunpack.c.h.b16 %v2263
        %v4220 = vunpack.c.l.b16 %v2264
        %v4221 = vunpack.c.h.b16 %v2264
        %v4222 = vunpack.c.l.b16 %v2265
        %v4223 = vunpack.c.h.b16 %v2265
        %v4224 = vunpack.c.l.b16 %v2266
        %v4225 = vunpack.c.h.b16 %v2266
        %v4226 = vunpack.c.l.b16 %v2267
        %v4227 = vunpack.c.h.b16 %v2267
        %v4228 = vunpack.c.l.b16 %v2268
        %v4229 = vunpack.c.h.b16 %v2268
        %v4230 = vunpack.c.l.b16 %v2269
        %v4231 = vunpack.c.h.b16 %v2269
        %v4232 = vunpack.c.l.b16 %v2270
        %v4233 = vunpack.c.h.b16 %v2270
        %v4234 = vunpack.c.l.b16 %v2271
        %v4235 = vunpack.c.h.b16 %v2271
        %v4236 = vunpack.c.l.b16 %v2272
        %v4237 = vunpack.c.h.b16 %v2272
        %v4238 = vunpack.c.l.b16 %v2273
        %v4239 = vunpack.c.h.b16 %v2273
        %v4240 = vunpack.c.l.b16 %v2274
        %v4241 = vunpack.c.h.b16 %v2274
        %v4242 = vunpack.c.l.b16 %v2275
        %v4243 = vunpack.c.h.b16 %v2275
        %v4244 = vunpack.c.l.b16 %v2276
        %v4245 = vunpack.c.h.b16 %v2276
        %v4246 = vunpack.c.l.b16 %v2277
        %v4247 = vunpack.c.h.b16 %v2277
        %v4248 = vunpack.c.l.b16 %v2278
        %v4249 = vunpack.c.h.b16 %v2278
        %v4250 = vunpack.c.l.b16 %v2279
        %v4251 = vunpack.c.h.b16 %v2279
        %v4252 = vunpack.c.l.b16 %v2280
        %v4253 = vunpack.c.h.b16 %v2280
        %v4254 = vunpack.c.l.b16 %v2281
        %v4255 = vunpack.c.h.b16 %v2281
        %v4256 = vunpack.c.l.b16 %v2282
        %v4257 = vunpack.c.h.b16 %v2282
        %v4258 = vunpack.c.l.b16 %v2283
        %v4259 = vunpack.c.h.b16 %v2283
        %v4260 = vunpack.c.l.b16 %v2284
        %v4261 = vunpack.c.h.b16 %v2284
        %v4262 = vunpack.c.l.b16 %v2285
        %v4263 = vunpack.c.h.b16 %v2285
        %v4264 = vunpack.c.l.b16 %v2286
        %v4265 = vunpack.c.h.b16 %v2286
        %v4266 = vunpack.c.l.b16 %v2287
        %v4267 = vunpack.c.h.b16 %v2287
        %v4268 = vunpack.c.l.b16 %v2288
        %v4269 = vunpack.c.h.b16 %v2288
        %v4270 = vunpack.c.l.b16 %v2289
        %v4271 = vunpack.c.h.b16 %v2289
        %v4272 = vunpack.c.l.b16 %v2290
        %v4273 = vunpack.c.h.b16 %v2290
        %v4274 = vunpack.c.l.b16 %v2291
        %v4275 = vunpack.c.h.b16 %v2291
        %v4276 = vunpack.c.l.b16 %v2292
        %v4277 = vunpack.c.h.b16 %v2292
        %v4278 = vunpack.c.l.b16 %v2293
        %v4279 = vunpack.c.h.b16 %v2293
        %v4280 = vunpack.c.l.b16 %v2294
        %v4281 = vunpack.c.h.b16 %v2294
        %v4282 = vunpack.c.l.b16 %v2295
        %v4283 = vunpack.c.h.b16 %v2295
        %v4284 = vunpack.c.l.b16 %v2296
        %v4285 = vunpack.c.h.b16 %v2296
        %v4286 = vunpack.c.l.b16 %v2297
        %v4287 = vunpack.c.h.b16 %v2297
        %v4288 = vunpack.c.l.b16 %v2298
        %v4289 = vunpack.c.h.b16 %v2298
        %v4290 = vunpack.c.l.b16 %v2299
        %v4291 = vunpack.c.h.b16 %v2299
        %v4292 = vunpack.c.l.b16 %v2300
        %v4293 = vunpack.c.h.b16 %v2300
        %v4294 = vunpack.c.l.b16 %v2301
        %v4295 = vunpack.c.h.b16 %v2301
        %v4296 = vunpack.c.l.b16 %v2302
        %v4297 = vunpack.c.h.b16 %v2302
        %v4298 = vunpack.c.l.b16 %v2303
        %v4299 = vunpack.c.h.b16 %v2303
        %v4300 = vunpack.c.l.b16 %v2304
        %v4301 = vunpack.c.h.b16 %v2304
        %v4302 = vunpack.c.l.b16 %v2305
        %v4303 = vunpack.c.h.b16 %v2305
        %v4304 = vunpack.c.l.b16 %v2306
        %v4305 = vunpack.c.h.b16 %v2306
        %v4306 = vunpack.c.l.b16 %v2307
        %v4307 = vunpack.c.h.b16 %v2307
        %v4308 = vunpack.c.l.b16 %v2308
        %v4309 = vunpack.c.h.b16 %v2308
        %v4310 = vunpack.c.l.b16 %v2309
        %v4311 = vunpack.c.h.b16 %v2309
        %v4312 = vunpack.c.l.b16 %v2310
        %v4313 = vunpack.c.h.b16 %v2310
        %v4314 = vunpack.c.l.b16 %v2311
        %v4315 = vunpack.c.h.b16 %v2311
        %v4316 = vunpack.c.l.b16 %v2312
        %v4317 = vunpack.c.h.b16 %v2312
        %v4318 = vunpack.c.l.b16 %v2313
        %v4319 = vunpack.c.h.b16 %v2313
        %v4320 = vunpack.c.l.b16 %v2314
        %v4321 = vunpack.c.h.b16 %v2314
        %v4322 = vunpack.c.l.b16 %v2315
        %v4323 = vunpack.c.h.b16 %v2315
        %v4324 = vunpack.c.l.b16 %v2316
        %v4325 = vunpack.c.h.b16 %v2316
        %v4326 = vunpack.c.l.b16 %v2317
        %v4327 = vunpack.c.h.b16 %v2317
        %v4328 = vunpack.c.l.b16 %v2318
        %v4329 = vunpack.c.h.b16 %v2318
        %v4330 = vunpack.c.l.b16 %v2319
        %v4331 = vunpack.c.h.b16 %v2319
        %v4332 = vunpack.c.l.b16 %v2320
        %v4333 = vunpack.c.h.b16 %v2320
        %v4334 = vunpack.c.l.b16 %v2321
        %v4335 = vunpack.c.h.b16 %v2321
        %v4336 = vunpack.c.l.b16 %v2322
        %v4337 = vunpack.c.h.b16 %v2322
        %v4338 = vunpack.c.l.b16 %v2323
        %v4339 = vunpack.c.h.b16 %v2323
        %v4340 = vunpack.c.l.b16 %v2324
        %v4341 = vunpack.c.h.b16 %v2324
        %v4342 = vunpack.c.l.b16 %v2325
        %v4343 = vunpack.c.h.b16 %v2325
        %v4344 = vunpack.c.l.b16 %v2326
        %v4345 = vunpack.c.h.b16 %v2326
        %v4346 = vunpack.c.l.b16 %v2327
        %v4347 = vunpack.c.h.b16 %v2327
        %v4348 = vunpack.c.l.b16 %v2328
        %v4349 = vunpack.c.h.b16 %v2328
        %v4350 = vunpack.c.l.b16 %v2329
        %v4351 = vunpack.c.h.b16 %v2329
        %v4352 = vunpack.c.l.b16 %v2330
        %v4353 = vunpack.c.h.b16 %v2330
        %v4354 = vunpack.c.l.b16 %v2331
        %v4355 = vunpack.c.h.b16 %v2331
        %v4356 = vunpack.c.l.b16 %v2332
        %v4357 = vunpack.c.h.b16 %v2332
        %v4358 = vunpack.c.l.b16 %v2333
        %v4359 = vunpack.c.h.b16 %v2333
        %v4360 = vunpack.c.l.b16 %v2334
        %v4361 = vunpack.c.h.b16 %v2334
        %v4362 = vunpack.c.l.b16 %v2335
        %v4363 = vunpack.c.h.b16 %v2335
        %v4364 = vunpack.c.l.b16 %v2336
        %v4365 = vunpack.c.h.b16 %v2336
        %v4366 = vunpack.c.l.b16 %v2337
        %v4367 = vunpack.c.h.b16 %v2337
        %v4368 = vunpack.c.l.b16 %v2338
        %v4369 = vunpack.c.h.b16 %v2338
        %v4370 = vunpack.c.l.b16 %v2339
        %v4371 = vunpack.c.h.b16 %v2339
        %v4372 = vunpack.c.l.b16 %v2340
        %v4373 = vunpack.c.h.b16 %v2340
        %v4374 = vunpack.c.l.b16 %v2341
        %v4375 = vunpack.c.h.b16 %v2341
        %v4376 = vunpack.c.l.b16 %v2342
        %v4377 = vunpack.c.h.b16 %v2342
        %v4378 = vunpack.c.l.b16 %v2343
        %v4379 = vunpack.c.h.b16 %v2343
        %v4380 = vunpack.c.l.b16 %v2344
        %v4381 = vunpack.c.h.b16 %v2344
        %v4382 = vunpack.c.l.b16 %v2345
        %v4383 = vunpack.c.h.b16 %v2345
        %v4384 = vunpack.c.l.b16 %v2346
        %v4385 = vunpack.c.h.b16 %v2346
        %v4386 = vunpack.c.l.b16 %v2347
        %v4387 = vunpack.c.h.b16 %v2347
        %v4388 = vunpack.c.l.b16 %v2348
        %v4389 = vunpack.c.h.b16 %v2348
        %v4390 = vunpack.c.l.b16 %v2349
        %v4391 = vunpack.c.h.b16 %v2349
        %v4392 = vunpack.c.l.b16 %v2350
        %v4393 = vunpack.c.h.b16 %v2350
        %v4394 = vunpack.c.l.b16 %v2351
        %v4395 = vunpack.c.h.b16 %v2351
        %v4396 = vunpack.c.l.b16 %v2352
        %v4397 = vunpack.c.h.b16 %v2352
        %v4398 = vunpack.c.l.b16 %v2353
        %v4399 = vunpack.c.h.b16 %v2353
        %v4400 = vunpack.c.l.b16 %v2354
        %v4401 = vunpack.c.h.b16 %v2354
        %v4402 = vunpack.c.l.b16 %v2355
        %v4403 = vunpack.c.h.b16 %v2355
        %v4404 = vunpack.c.l.b16 %v2356
        %v4405 = vunpack.c.h.b16 %v2356
        %v4406 = vunpack.c.l.b16 %v2357
        %v4407 = vunpack.c.h.b16 %v2357
        %v4408 = vunpack.c.l.b16 %v2358
        %v4409 = vunpack.c.h.b16 %v2358
        %v4410 = vunpack.c.l.b16 %v2359
        %v4411 = vunpack.c.h.b16 %v2359
        %v4412 = vunpack.c.l.b16 %v2360
        %v4413 = vunpack.c.h.b16 %v2360
        %v4414 = vunpack.c.l.b16 %v2361
        %v4415 = vunpack.c.h.b16 %v2361
        %v4416 = vunpack.c.l.b16 %v2362
        %v4417 = vunpack.c.h.b16 %v2362
        %v4418 = vunpack.c.l.b16 %v2363
        %v4419 = vunpack.c.h.b16 %v2363
        %v4420 = vunpack.c.l.b16 %v2364
        %v4421 = vunpack.c.h.b16 %v2364
        %v4422 = vunpack.c.l.b16 %v2365
        %v4423 = vunpack.c.h.b16 %v2365
        %v4424 = vunpack.c.l.b16 %v2366
        %v4425 = vunpack.c.h.b16 %v2366
        %v4426 = vunpack.c.l.b16 %v2367
        %v4427 = vunpack.c.h.b16 %v2367
        %v4428 = vunpack.c.l.b16 %v2368
        %v4429 = vunpack.c.h.b16 %v2368
        %v4430 = vunpack.c.l.b16 %v2369
        %v4431 = vunpack.c.h.b16 %v2369
        %v4432 = vunpack.c.l.b16 %v2370
        %v4433 = vunpack.c.h.b16 %v2370
        %v4434 = vunpack.c.l.b16 %v2371
        %v4435 = vunpack.c.h.b16 %v2371
        %v4436 = vunpack.c.l.b16 %v2372
        %v4437 = vunpack.c.h.b16 %v2372
        %v4438 = vunpack.c.l.b16 %v2373
        %v4439 = vunpack.c.h.b16 %v2373
        %v4440 = vunpack.c.l.b16 %v2374
        %v4441 = vunpack.c.h.b16 %v2374
        %v4442 = vunpack.c.l.b16 %v2375
        %v4443 = vunpack.c.h.b16 %v2375
        %v4444 = vunpack.c.l.b16 %v2376
        %v4445 = vunpack.c.h.b16 %v2376
        %v4446 = vunpack.c.l.b16 %v2377
        %v4447 = vunpack.c.h.b16 %v2377
        %v4448 = vunpack.c.l.b16 %v2378
        %v4449 = vunpack.c.h.b16 %v2378
        %v4450 = vunpack.c.l.b16 %v2379
        %v4451 = vunpack.c.h.b16 %v2379
        %v4452 = vunpack.c.l.b16 %v2380
        %v4453 = vunpack.c.h.b16 %v2380
        %v4454 = vunpack.c.l.b16 %v2381
        %v4455 = vunpack.c.h.b16 %v2381
        %v4456 = vunpack.c.l.b16 %v2382
        %v4457 = vunpack.c.h.b16 %v2382
        %v4458 = vunpack.c.l.b16 %v2383
        %v4459 = vunpack.c.h.b16 %v2383
        %v4460 = vunpack.c.l.b16 %v2384
        %v4461 = vunpack.c.h.b16 %v2384
        %v4462 = vunpack.c.l.b16 %v2385
        %v4463 = vunpack.c.h.b16 %v2385
        %v4464 = vunpack.c.l.b16 %v2386
        %v4465 = vunpack.c.h.b16 %v2386
        %v4466 = vunpack.c.l.b16 %v2387
        %v4467 = vunpack.c.h.b16 %v2387
        %v4468 = vunpack.c.l.b16 %v2388
        %v4469 = vunpack.c.h.b16 %v2388
        %v4470 = vunpack.c.l.b16 %v2389
        %v4471 = vunpack.c.h.b16 %v2389
        %v4472 = vunpack.c.l.b16 %v2390
        %v4473 = vunpack.c.h.b16 %v2390
        %v4474 = vunpack.c.l.b16 %v2391
        %v4475 = vunpack.c.h.b16 %v2391
        %v4476 = vunpack.c.l.b16 %v2392
        %v4477 = vunpack.c.h.b16 %v2392
        %v4478 = vunpack.c.l.b16 %v2393
        %v4479 = vunpack.c.h.b16 %v2393
        %v4480 = vunpack.c.l.b16 %v2394
        %v4481 = vunpack.c.h.b16 %v2394
        %v4482 = vunpack.c.l.b16 %v2395
        %v4483 = vunpack.c.h.b16 %v2395
        %v4484 = vunpack.c.l.b16 %v2396
        %v4485 = vunpack.c.h.b16 %v2396
        %v4486 = vunpack.c.l.b16 %v2397
        %v4487 = vunpack.c.h.b16 %v2397
        %v4488 = vunpack.c.l.b16 %v2398
        %v4489 = vunpack.c.h.b16 %v2398
        %v4490 = vunpack.c.l.b16 %v2399
        %v4491 = vunpack.c.h.b16 %v2399
        %v4492 = vunpack.c.l.b16 %v2400
        %v4493 = vunpack.c.h.b16 %v2400
        %v4494 = vunpack.c.l.b16 %v2401
        %v4495 = vunpack.c.h.b16 %v2401
        %v4496 = vunpack.c.l.b16 %v2402
        %v4497 = vunpack.c.h.b16 %v2402
        %v4498 = vunpack.c.l.b16 %v2403
        %v4499 = vunpack.c.h.b16 %v2403
        %v4500 = vunpack.c.l.b16 %v2404
        %v4501 = vunpack.c.h.b16 %v2404
        %v4502 = vunpack.c.l.b16 %v2405
        %v4503 = vunpack.c.h.b16 %v2405
        %v4504 = vunpack.c.l.b16 %v2406
        %v4505 = vunpack.c.h.b16 %v2406
        %v4506 = vunpack.c.l.b16 %v2407
        %v4507 = vunpack.c.h.b16 %v2407
        %v4508 = vunpack.c.l.b16 %v2408
        %v4509 = vunpack.c.h.b16 %v2408
        %v4510 = vunpack.c.l.b16 %v2409
        %v4511 = vunpack.c.h.b16 %v2409
        %v4512 = vunpack.c.l.b16 %v2410
        %v4513 = vunpack.c.h.b16 %v2410
        %v4514 = vunpack.c.l.b16 %v2411
        %v4515 = vunpack.c.h.b16 %v2411
        %v4516 = vunpack.c.l.b16 %v2412
        %v4517 = vunpack.c.h.b16 %v2412
        %v4518 = vunpack.c.l.b16 %v2413
        %v4519 = vunpack.c.h.b16 %v2413
        %v4520 = vunpack.c.l.b16 %v2414
        %v4521 = vunpack.c.h.b16 %v2414
        %v4522 = vunpack.c.l.b16 %v2415
        %v4523 = vunpack.c.h.b16 %v2415
        %v4524 = vunpack.c.l.b16 %v2416
        %v4525 = vunpack.c.h.b16 %v2416
        %v4526 = vunpack.c.l.b16 %v2417
        %v4527 = vunpack.c.h.b16 %v2417
        %v4528 = vunpack.c.l.b16 %v2418
        %v4529 = vunpack.c.h.b16 %v2418
        %v4530 = vunpack.c.l.b16 %v2419
        %v4531 = vunpack.c.h.b16 %v2419
        %v4532 = vunpack.c.l.b16 %v2420
        %v4533 = vunpack.c.h.b16 %v2420
        %v4534 = vunpack.c.l.b16 %v2421
        %v4535 = vunpack.c.h.b16 %v2421
        %v4536 = vunpack.c.l.b16 %v2422
        %v4537 = vunpack.c.h.b16 %v2422
        %v4538 = vunpack.c.l.b16 %v2423
        %v4539 = vunpack.c.h.b16 %v2423
        %v4540 = vunpack.c.l.b16 %v2424
        %v4541 = vunpack.c.h.b16 %v2424
        %v4542 = vunpack.c.l.b16 %v2425
        %v4543 = vunpack.c.h.b16 %v2425
        %v4544 = vunpack.c.l.b16 %v2426
        %v4545 = vunpack.c.h.b16 %v2426
        %v4546 = vunpack.c.l.b16 %v2427
        %v4547 = vunpack.c.h.b16 %v2427
        %v4548 = vunpack.c.l.b16 %v2428
        %v4549 = vunpack.c.h.b16 %v2428
        %v4550 = vunpack.c.l.b16 %v2429
        %v4551 = vunpack.c.h.b16 %v2429
        %v4552 = vunpack.c.l.b16 %v2430
        %v4553 = vunpack.c.h.b16 %v2430
        %v4554 = vunpack.c.l.b16 %v2431
        %v4555 = vunpack.c.h.b16 %v2431
        %v4556 = vunpack.c.l.b16 %v2432
        %v4557 = vunpack.c.h.b16 %v2432
        %v4558 = vunpack.c.l.b16 %v2433
        %v4559 = vunpack.c.h.b16 %v2433
        %v4560 = vunpack.c.l.b16 %v2434
        %v4561 = vunpack.c.h.b16 %v2434
        %v4562 = vunpack.c.l.b16 %v2435
        %v4563 = vunpack.c.h.b16 %v2435
        %v4564 = vunpack.c.l.b16 %v2436
        %v4565 = vunpack.c.h.b16 %v2436
        %v4566 = vunpack.c.l.b16 %v2437
        %v4567 = vunpack.c.h.b16 %v2437
        %v4568 = vunpack.c.l.b16 %v2438
        %v4569 = vunpack.c.h.b16 %v2438
        %v4570 = vunpack.c.l.b16 %v2439
        %v4571 = vunpack.c.h.b16 %v2439
        %v4572 = vunpack.c.l.b16 %v2440
        %v4573 = vunpack.c.h.b16 %v2440
        %v4574 = vunpack.c.l.b16 %v2441
        %v4575 = vunpack.c.h.b16 %v2441
        %v4576 = vunpack.c.l.b16 %v2442
        %v4577 = vunpack.c.h.b16 %v2442
        %v4578 = vunpack.c.l.b16 %v2443
        %v4579 = vunpack.c.h.b16 %v2443
        %v4580 = vunpack.c.l.b16 %v2444
        %v4581 = vunpack.c.h.b16 %v2444
        %v4582 = vunpack.c.l.b16 %v2445
        %v4583 = vunpack.c.h.b16 %v2445
        %v4584 = vunpack.c.l.b16 %v2446
        %v4585 = vunpack.c.h.b16 %v2446
        %v4586 = vunpack.c.l.b16 %v2447
        %v4587 = vunpack.c.h.b16 %v2447
        %v4588 = vunpack.c.l.b16 %v2448
        %v4589 = vunpack.c.h.b16 %v2448
        %v4590 = vunpack.c.l.b16 %v2449
        %v4591 = vunpack.c.h.b16 %v2449
        %v4592 = vunpack.c.l.b16 %v2450
        %v4593 = vunpack.c.h.b16 %v2450
        %v4594 = vunpack.c.l.b16 %v2451
        %v4595 = vunpack.c.h.b16 %v2451
        %v4596 = vunpack.c.l.b16 %v2452
        %v4597 = vunpack.c.h.b16 %v2452
        %v4598 = vunpack.c.l.b16 %v2453
        %v4599 = vunpack.c.h.b16 %v2453
        %v4600 = vunpack.c.l.b16 %v2454
        %v4601 = vunpack.c.h.b16 %v2454
        %v4602 = vunpack.c.l.b16 %v2455
        %v4603 = vunpack.c.h.b16 %v2455
        %v4604 = vunpack.c.l.b16 %v2456
        %v4605 = vunpack.c.h.b16 %v2456
        %v4606 = vunpack.c.l.b16 %v2457
        %v4607 = vunpack.c.h.b16 %v2457
        %v4608 = vunpack.c.l.b16 %v2458
        %v4609 = vunpack.c.h.b16 %v2458
        %v4610 = vunpack.c.l.b16 %v2459
        %v4611 = vunpack.c.h.b16 %v2459
        %v4612 = vunpack.c.l.b16 %v2460
        %v4613 = vunpack.c.h.b16 %v2460
        %v4614 = vunpack.c.l.b16 %v2461
        %v4615 = vunpack.c.h.b16 %v2461
        %v4616 = vunpack.c.l.b16 %v2462
        %v4617 = vunpack.c.h.b16 %v2462
        %v4618 = vunpack.c.l.b16 %v2463
        %v4619 = vunpack.c.h.b16 %v2463
        %v4620 = vunpack.c.l.b16 %v2464
        %v4621 = vunpack.c.h.b16 %v2464
        %v4622 = vunpack.c.l.b16 %v2465
        %v4623 = vunpack.c.h.b16 %v2465
        %v4624 = vunpack.c.l.b16 %v2466
        %v4625 = vunpack.c.h.b16 %v2466
        %v4626 = vunpack.c.l.b16 %v2467
        %v4627 = vunpack.c.h.b16 %v2467
        %v4628 = vunpack.c.l.b16 %v2468
        %v4629 = vunpack.c.h.b16 %v2468
        %v4630 = vunpack.c.l.b16 %v2469
        %v4631 = vunpack.c.h.b16 %v2469
        %v4632 = vunpack.c.l.b16 %v2470
        %v4633 = vunpack.c.h.b16 %v2470
        %v4634 = vunpack.c.l.b16 %v2471
        %v4635 = vunpack.c.h.b16 %v2471
        %v4636 = vunpack.c.l.b16 %v2472
        %v4637 = vunpack.c.h.b16 %v2472
        %v4638 = vunpack.c.l.b16 %v2473
        %v4639 = vunpack.c.h.b16 %v2473
        %v4640 = vunpack.c.l.b16 %v2474
        %v4641 = vunpack.c.h.b16 %v2474
        %v4642 = vunpack.c.l.b16 %v2475
        %v4643 = vunpack.c.h.b16 %v2475
        %v4644 = vunpack.c.l.b16 %v2476
        %v4645 = vunpack.c.h.b16 %v2476
        %v4646 = vunpack.c.l.b16 %v2477
        %v4647 = vunpack.c.h.b16 %v2477
        %v4648 = vunpack.c.l.b16 %v2478
        %v4649 = vunpack.c.h.b16 %v2478
        %v4650 = vunpack.c.l.b16 %v2479
        %v4651 = vunpack.c.h.b16 %v2479
        %v4652 = vunpack.c.l.b16 %v2480
        %v4653 = vunpack.c.h.b16 %v2480
        %v4654 = vunpack.c.l.b16 %v2481
        %v4655 = vunpack.c.h.b16 %v2481
        %v4656 = vunpack.c.l.b16 %v2482
        %v4657 = vunpack.c.h.b16 %v2482
        %v4658 = vunpack.c.l.b16 %v2483
        %v4659 = vunpack.c.h.b16 %v2483
        %v4660 = vunpack.c.l.b16 %v2484
        %v4661 = vunpack.c.h.b16 %v2484
        %v4662 = vunpack.c.l.b16 %v2485
        %v4663 = vunpack.c.h.b16 %v2485
        %v4664 = vunpack.c.l.b16 %v2486
        %v4665 = vunpack.c.h.b16 %v2486
        %v4666 = vunpack.c.l.b16 %v2487
        %v4667 = vunpack.c.h.b16 %v2487
        %v4668 = vunpack.c.l.b16 %v2488
        %v4669 = vunpack.c.h.b16 %v2488
        %v4670 = vunpack.c.l.b16 %v2489
        %v4671 = vunpack.c.h.b16 %v2489
        %v4672 = vunpack.c.l.b16 %v2490
        %v4673 = vunpack.c.h.b16 %v2490
        %v4674 = vunpack.c.l.b16 %v2491
        %v4675 = vunpack.c.h.b16 %v2491
        %v4676 = vunpack.c.l.b16 %v2492
        %v4677 = vunpack.c.h.b16 %v2492
        %v4678 = vunpack.c.l.b16 %v2493
        %v4679 = vunpack.c.h.b16 %v2493
        %v4680 = vunpack.c.l.b16 %v2494
        %v4681 = vunpack.c.h.b16 %v2494
        %v4682 = vunpack.c.l.b16 %v2495
        %v4683 = vunpack.c.h.b16 %v2495
        %v4684 = vunpack.c.l.b16 %v2496
        %v4685 = vunpack.c.h.b16 %v2496
        %v4686 = vunpack.c.l.b16 %v2497
        %v4687 = vunpack.c.h.b16 %v2497
        %v4688 = vunpack.c.l.b16 %v2498
        %v4689 = vunpack.c.h.b16 %v2498
        %v4690 = vunpack.c.l.b16 %v2499
        %v4691 = vunpack.c.h.b16 %v2499
        %v4692 = vunpack.c.l.b16 %v2500
        %v4693 = vunpack.c.h.b16 %v2500
        %v4694 = vunpack.c.l.b16 %v2501
        %v4695 = vunpack.c.h.b16 %v2501
        %v4696 = vunpack.c.l.b16 %v2502
        %v4697 = vunpack.c.h.b16 %v2502
        %v4698 = vunpack.c.l.b16 %v2503
        %v4699 = vunpack.c.h.b16 %v2503
        %v4700 = vunpack.c.l.b16 %v2504
        %v4701 = vunpack.c.h.b16 %v2504
        %v4702 = vunpack.c.l.b16 %v2505
        %v4703 = vunpack.c.h.b16 %v2505
        %v4704 = vunpack.c.l.b16 %v2506
        %v4705 = vunpack.c.h.b16 %v2506
        %v4706 = vunpack.c.l.b16 %v2507
        %v4707 = vunpack.c.h.b16 %v2507
        %v4708 = vunpack.c.l.b16 %v2508
        %v4709 = vunpack.c.h.b16 %v2508
        %v4710 = vunpack.c.l.b16 %v2509
        %v4711 = vunpack.c.h.b16 %v2509
        %v4712 = vunpack.c.l.b16 %v2510
        %v4713 = vunpack.c.h.b16 %v2510
        %v4714 = vunpack.c.l.b16 %v2511
        %v4715 = vunpack.c.h.b16 %v2511
        %v4716 = vunpack.c.l.b16 %v2512
        %v4717 = vunpack.c.h.b16 %v2512
        %v4718 = vunpack.c.l.b16 %v2513
        %v4719 = vunpack.c.h.b16 %v2513
        %v4720 = vunpack.c.l.b16 %v2514
        %v4721 = vunpack.c.h.b16 %v2514
        %v4722 = vunpack.c.l.b16 %v2515
        %v4723 = vunpack.c.h.b16 %v2515
        %v4724 = vunpack.c.l.b16 %v2516
        %v4725 = vunpack.c.h.b16 %v2516
        %v4726 = vunpack.c.l.b16 %v2517
        %v4727 = vunpack.c.h.b16 %v2517
        %v4728 = vunpack.c.l.b16 %v2518
        %v4729 = vunpack.c.h.b16 %v2518
        %v4730 = vunpack.c.l.b16 %v2519
        %v4731 = vunpack.c.h.b16 %v2519
        %v4732 = vunpack.c.l.b16 %v2520
        %v4733 = vunpack.c.h.b16 %v2520
        %v4734 = vunpack.c.l.b16 %v2521
        %v4735 = vunpack.c.h.b16 %v2521
        %v4736 = vunpack.c.l.b16 %v2522
        %v4737 = vunpack.c.h.b16 %v2522
        %v4738 = vunpack.c.l.b16 %v2523
        %v4739 = vunpack.c.h.b16 %v2523
        %v4740 = vunpack.c.l.b16 %v2524
        %v4741 = vunpack.c.h.b16 %v2524
        %v4742 = vunpack.c.l.b16 %v2525
        %v4743 = vunpack.c.h.b16 %v2525
        %v4744 = vunpack.c.l.b16 %v2526
        %v4745 = vunpack.c.h.b16 %v2526
        %v4746 = vunpack.c.l.b16 %v2527
        %v4747 = vunpack.c.h.b16 %v2527
        %v4748 = vunpack.c.l.b16 %v2528
        %v4749 = vunpack.c.h.b16 %v2528
        %v4750 = vunpack.c.l.b16 %v2529
        %v4751 = vunpack.c.h.b16 %v2529
        %v4752 = vunpack.c.l.b16 %v2530
        %v4753 = vunpack.c.h.b16 %v2530
        %v4754 = vunpack.c.l.b16 %v2531
        %v4755 = vunpack.c.h.b16 %v2531
        %v4756 = vunpack.c.l.b16 %v2532
        %v4757 = vunpack.c.h.b16 %v2532
        %v4758 = vunpack.c.l.b16 %v2533
        %v4759 = vunpack.c.h.b16 %v2533
        %v4760 = vunpack.c.l.b16 %v2534
        %v4761 = vunpack.c.h.b16 %v2534
        %v4762 = vunpack.c.l.b16 %v2535
        %v4763 = vunpack.c.h.b16 %v2535
        %v4764 = vunpack.c.l.b16 %v2536
        %v4765 = vunpack.c.h.b16 %v2536
        %v4766 = vunpack.c.l.b16 %v2537
        %v4767 = vunpack.c.h.b16 %v2537
        %v4768 = vunpack.c.l.b16 %v2538
        %v4769 = vunpack.c.h.b16 %v2538
        %v4770 = vunpack.c.l.b16 %v2539
        %v4771 = vunpack.c.h.b16 %v2539
        %v4772 = vunpack.c.l.b16 %v2540
        %v4773 = vunpack.c.h.b16 %v2540
        %v4774 = vunpack.c.l.b16 %v2541
        %v4775 = vunpack.c.h.b16 %v2541
        %v4776 = vunpack.c.l.b16 %v2542
        %v4777 = vunpack.c.h.b16 %v2542
        %v4778 = vunpack.c.l.b16 %v2543
        %v4779 = vunpack.c.h.b16 %v2543
        %v4780 = vunpack.c.l.b16 %v2544
        %v4781 = vunpack.c.h.b16 %v2544
        %v4782 = vunpack.c.l.b16 %v2545
        %v4783 = vunpack.c.h.b16 %v2545
        %v4784 = vunpack.c.l.b16 %v2546
        %v4785 = vunpack.c.h.b16 %v2546
        %v4786 = vunpack.c.l.b16 %v2547
        %v4787 = vunpack.c.h.b16 %v2547
        %v4788 = vunpack.c.l.b16 %v2548
        %v4789 = vunpack.c.h.b16 %v2548
        %v4790 = vunpack.c.l.b16 %v2549
        %v4791 = vunpack.c.h.b16 %v2549
        %v4792 = vunpack.c.l.b16 %v2550
        %v4793 = vunpack.c.h.b16 %v2550
        %v4794 = vunpack.c.l.b16 %v2551
        %v4795 = vunpack.c.h.b16 %v2551
        %v4796 = vunpack.c.l.b16 %v2552
        %v4797 = vunpack.c.h.b16 %v2552
        %v4798 = vunpack.c.l.b16 %v2553
        %v4799 = vunpack.c.h.b16 %v2553
        %v4800 = vunpack.c.l.b16 %v2554
        %v4801 = vunpack.c.h.b16 %v2554
        %v4802 = vunpack.c.l.b16 %v2555
        %v4803 = vunpack.c.h.b16 %v2555
        %v4804 = vunpack.c.l.b16 %v2556
        %v4805 = vunpack.c.h.b16 %v2556
        %v4806 = vunpack.c.l.b16 %v2557
        %v4807 = vunpack.c.h.b16 %v2557
        %v4808 = vunpack.c.l.b16 %v2558
        %v4809 = vunpack.c.h.b16 %v2558
        %v4810 = vunpack.c.l.b16 %v2559
        %v4811 = vunpack.c.h.b16 %v2559
        %v4812 = vunpack.c.l.b16 %v2560
        %v4813 = vunpack.c.h.b16 %v2560
        %v4814 = vunpack.c.l.b16 %v2561
        %v4815 = vunpack.c.h.b16 %v2561
        %v4816 = vunpack.c.l.b16 %v2562
        %v4817 = vunpack.c.h.b16 %v2562
        %v4818 = vunpack.c.l.b16 %v2563
        %v4819 = vunpack.c.h.b16 %v2563
        %v4820 = vunpack.c.l.b16 %v2564
        %v4821 = vunpack.c.h.b16 %v2564
        %v4822 = vunpack.c.l.b16 %v2565
        %v4823 = vunpack.c.h.b16 %v2565
        %v4824 = vunpack.c.l.b16 %v2566
        %v4825 = vunpack.c.h.b16 %v2566
        %v4826 = vunpack.c.l.b16 %v2567
        %v4827 = vunpack.c.h.b16 %v2567
        %v4828 = vunpack.c.l.b16 %v2568
        %v4829 = vunpack.c.h.b16 %v2568
        %v4830 = vunpack.c.l.b16 %v2569
        %v4831 = vunpack.c.h.b16 %v2569
        %v4832 = vunpack.c.l.b16 %v2570
        %v4833 = vunpack.c.h.b16 %v2570
        %v4834 = vunpack.c.l.b16 %v2571
        %v4835 = vunpack.c.h.b16 %v2571
        %v4836 = vunpack.c.l.b16 %v2572
        %v4837 = vunpack.c.h.b16 %v2572
        %v4838 = vunpack.c.l.b16 %v2573
        %v4839 = vunpack.c.h.b16 %v2573
        %v4840 = vunpack.c.l.b16 %v2574
        %v4841 = vunpack.c.h.b16 %v2574
        %v4842 = vunpack.c.l.b16 %v2575
        %v4843 = vunpack.c.h.b16 %v2575
        %v4844 = vunpack.c.l.b16 %v2576
        %v4845 = vunpack.c.h.b16 %v2576
        %v4846 = vunpack.c.l.b16 %v2577
        %v4847 = vunpack.c.h.b16 %v2577
        %v4848 = vunpack.c.l.b16 %v2578
        %v4849 = vunpack.c.h.b16 %v2578
        %v4850 = vunpack.c.l.b16 %v2579
        %v4851 = vunpack.c.h.b16 %v2579
        %v4852 = vunpack.c.l.b16 %v2580
        %v4853 = vunpack.c.h.b16 %v2580
        %v4854 = vunpack.c.l.b16 %v2581
        %v4855 = vunpack.c.h.b16 %v2581
        %v4856 = vunpack.c.l.b16 %v2582
        %v4857 = vunpack.c.h.b16 %v2582
        %v4858 = vunpack.c.l.b16 %v2583
        %v4859 = vunpack.c.h.b16 %v2583
        %v4860 = vunpack.c.l.b16 %v2584
        %v4861 = vunpack.c.h.b16 %v2584
        %v4862 = vunpack.c.l.b16 %v2585
        %v4863 = vunpack.c.h.b16 %v2585
        %v4864 = vunpack.c.l.b16 %v2586
        %v4865 = vunpack.c.h.b16 %v2586
        %v4866 = vunpack.c.l.b16 %v2587
        %v4867 = vunpack.c.h.b16 %v2587
        %v4868 = vunpack.c.l.b16 %v2588
        %v4869 = vunpack.c.h.b16 %v2588
        %v4870 = vunpack.c.l.b16 %v2589
        %v4871 = vunpack.c.h.b16 %v2589
        %v4872 = vunpack.c.l.b16 %v2590
        %v4873 = vunpack.c.h.b16 %v2590
        %v4874 = vunpack.c.l.b16 %v2591
        %v4875 = vunpack.c.h.b16 %v2591
        %v4876 = vunpack.c.l.b16 %v2592
        %v4877 = vunpack.c.h.b16 %v2592
        %v4878 = vunpack.c.l.b16 %v2593
        %v4879 = vunpack.c.h.b16 %v2593
        %v4880 = vunpack.c.l.b16 %v2594
        %v4881 = vunpack.c.h.b16 %v2594
        %v4882 = vunpack.c.l.b16 %v2595
        %v4883 = vunpack.c.h.b16 %v2595
        %v4884 = vunpack.c.l.b16 %v2596
        %v4885 = vunpack.c.h.b16 %v2596
        %v4886 = vunpack.c.l.b16 %v2597
        %v4887 = vunpack.c.h.b16 %v2597
        %v4888 = vunpack.c.l.b16 %v2598
        %v4889 = vunpack.c.h.b16 %v2598
        %v4890 = vunpack.c.l.b16 %v2599
        %v4891 = vunpack.c.h.b16 %v2599
        %v4892 = vunpack.c.l.b16 %v2600
        %v4893 = vunpack.c.h.b16 %v2600
        %v4894 = vunpack.c.l.b16 %v2601
        %v4895 = vunpack.c.h.b16 %v2601
        %v4896 = vunpack.c.l.b16 %v2602
        %v4897 = vunpack.c.h.b16 %v2602
        %v4898 = vunpack.c.l.b16 %v2603
        %v4899 = vunpack.c.h.b16 %v2603
        %v4900 = vunpack.c.l.b16 %v2604
        %v4901 = vunpack.c.h.b16 %v2604
        %v4902 = vunpack.c.l.b16 %v2605
        %v4903 = vunpack.c.h.b16 %v2605
        %v4904 = vunpack.c.l.b16 %v2606
        %v4905 = vunpack.c.h.b16 %v2606
        %v4906 = vunpack.c.l.b16 %v2607
        %v4907 = vunpack.c.h.b16 %v2607
        %v4908 = vunpack.c.l.b16 %v2608
        %v4909 = vunpack.c.h.b16 %v2608
        %v4910 = vunpack.c.l.b16 %v2609
        %v4911 = vunpack.c.h.b16 %v2609
        %v4912 = vunpack.c.l.b16 %v2610
        %v4913 = vunpack.c.h.b16 %v2610
        %v4914 = vunpack.c.l.b16 %v2611
        %v4915 = vunpack.c.h.b16 %v2611
        %v4916 = vunpack.c.l.b16 %v2612
        %v4917 = vunpack.c.h.b16 %v2612
        %v4918 = vunpack.c.l.b16 %v2613
        %v4919 = vunpack.c.h.b16 %v2613
        %v4920 = vunpack.c.l.b16 %v2614
        %v4921 = vunpack.c.h.b16 %v2614
        %v4922 = vunpack.c.l.b16 %v2615
        %v4923 = vunpack.c.h.b16 %v2615
        %v4924 = vunpack.c.l.b16 %v2616
        %v4925 = vunpack.c.h.b16 %v2616
        %v4926 = vunpack.c.l.b16 %v2617
        %v4927 = vunpack.c.h.b16 %v2617
        %v4928 = vunpack.c.l.b16 %v2618
        %v4929 = vunpack.c.h.b16 %v2618
        %v4930 = vunpack.c.l.b16 %v2619
        %v4931 = vunpack.c.h.b16 %v2619
        %v4932 = vunpack.c.l.b16 %v2620
        %v4933 = vunpack.c.h.b16 %v2620
        %v4934 = vunpack.c.l.b16 %v2621
        %v4935 = vunpack.c.h.b16 %v2621
        %v4936 = vunpack.c.l.b16 %v2622
        %v4937 = vunpack.c.h.b16 %v2622
        %v4938 = vunpack.c.l.b16 %v2623
        %v4939 = vunpack.c.h.b16 %v2623
        %v4940 = vunpack.c.l.b16 %v2624
        %v4941 = vunpack.c.h.b16 %v2624
        %v4942 = vunpack.c.l.b16 %v2625
        %v4943 = vunpack.c.h.b16 %v2625
        %v4944 = vunpack.c.l.b16 %v2626
        %v4945 = vunpack.c.h.b16 %v2626
        %v4946 = vunpack.c.l.b16 %v2627
        %v4947 = vunpack.c.h.b16 %v2627
        %v4948 = vunpack.c.l.b16 %v2628
        %v4949 = vunpack.c.h.b16 %v2628
        %v4950 = vunpack.c.l.b16 %v2629
        %v4951 = vunpack.c.h.b16 %v2629
        %v4952 = vunpack.c.l.b16 %v2630
        %v4953 = vunpack.c.h.b16 %v2630
        %v4954 = vunpack.c.l.b16 %v2631
        %v4955 = vunpack.c.h.b16 %v2631
        %v4956 = vunpack.c.l.b16 %v2632
        %v4957 = vunpack.c.h.b16 %v2632
        %v4958 = vunpack.c.l.b16 %v2633
        %v4959 = vunpack.c.h.b16 %v2633
        %v4960 = vunpack.c.l.b16 %v2634
        %v4961 = vunpack.c.h.b16 %v2634
        %v4962 = vunpack.c.l.b16 %v2635
        %v4963 = vunpack.c.h.b16 %v2635
        %v4964 = vunpack.c.l.b16 %v2636
        %v4965 = vunpack.c.h.b16 %v2636
        %v4966 = vunpack.c.l.b16 %v2637
        %v4967 = vunpack.c.h.b16 %v2637
        %v4968 = vunpack.c.l.b16 %v2638
        %v4969 = vunpack.c.h.b16 %v2638
        %v4970 = vunpack.c.l.b16 %v2639
        %v4971 = vunpack.c.h.b16 %v2639
        %v4972 = vunpack.c.l.b16 %v2640
        %v4973 = vunpack.c.h.b16 %v2640
        %v4974 = vunpack.c.l.b16 %v2641
        %v4975 = vunpack.c.h.b16 %v2641
        %v4976 = vunpack.c.l.b16 %v2642
        %v4977 = vunpack.c.h.b16 %v2642
        %v4978 = vunpack.c.l.b16 %v2643
        %v4979 = vunpack.c.h.b16 %v2643
        %v4980 = vunpack.c.l.b16 %v2644
        %v4981 = vunpack.c.h.b16 %v2644
        %v4982 = vunpack.c.l.b16 %v2645
        %v4983 = vunpack.c.h.b16 %v2645
        %v4984 = vunpack.c.l.b16 %v2646
        %v4985 = vunpack.c.h.b16 %v2646
        %v4986 = vunpack.c.l.b16 %v2647
        %v4987 = vunpack.c.h.b16 %v2647
        %v4988 = vunpack.c.l.b16 %v2648
        %v4989 = vunpack.c.h.b16 %v2648
        %v4990 = vunpack.c.l.b16 %v2649
        %v4991 = vunpack.c.h.b16 %v2649
        %v4992 = vunpack.c.l.b16 %v2650
        %v4993 = vunpack.c.h.b16 %v2650
        %v4994 = vunpack.c.l.b16 %v2651
        %v4995 = vunpack.c.h.b16 %v2651
        %v4996 = vunpack.c.l.b16 %v2652
        %v4997 = vunpack.c.h.b16 %v2652
        %v4998 = vunpack.c.l.b16 %v2653
        %v4999 = vunpack.c.h.b16 %v2653
        %v5000 = vunpack.c.l.b16 %v2654
        %v5001 = vunpack.c.h.b16 %v2654
        %v5002 = vunpack.c.l.b16 %v2655
        %v5003 = vunpack.c.h.b16 %v2655
        %v5004 = vunpack.c.l.b16 %v2656
        %v5005 = vunpack.c.h.b16 %v2656
        %v5006 = vunpack.c.l.b16 %v2657
        %v5007 = vunpack.c.h.b16 %v2657
        %v5008 = vunpack.c.l.b16 %v2658
        %v5009 = vunpack.c.h.b16 %v2658
        %v5010 = vunpack.c.l.b16 %v2659
        %v5011 = vunpack.c.h.b16 %v2659
        %v5012 = vunpack.c.l.b16 %v2660
        %v5013 = vunpack.c.h.b16 %v2660
        %v5014 = vunpack.c.l.b16 %v2661
        %v5015 = vunpack.c.h.b16 %v2661
        %v5016 = vunpack.c.l.b16 %v2662
        %v5017 = vunpack.c.h.b16 %v2662
        %v5018 = vunpack.c.l.b16 %v2663
        %v5019 = vunpack.c.h.b16 %v2663
        %v5020 = vunpack.c.l.b16 %v2664
        %v5021 = vunpack.c.h.b16 %v2664
        %v5022 = vunpack.c.l.b16 %v2665
        %v5023 = vunpack.c.h.b16 %v2665
        %v5024 = vunpack.c.l.b16 %v2666
        %v5025 = vunpack.c.h.b16 %v2666
        %v5026 = vunpack.c.l.b16 %v2667
        %v5027 = vunpack.c.h.b16 %v2667
        %v5028 = vunpack.c.l.b16 %v2668
        %v5029 = vunpack.c.h.b16 %v2668
        %v5030 = vunpack.c.l.b16 %v2669
        %v5031 = vunpack.c.h.b16 %v2669
        %v5032 = vunpack.c.l.b16 %v2670
        %v5033 = vunpack.c.h.b16 %v2670
        %v5034 = vunpack.c.l.b16 %v2671
        %v5035 = vunpack.c.h.b16 %v2671
        %v5036 = vunpack.c.l.b16 %v2672
        %v5037 = vunpack.c.h.b16 %v2672
        %v5038 = vunpack.c.l.b16 %v2673
        %v5039 = vunpack.c.h.b16 %v2673
        %v5040 = vunpack.c.l.b16 %v2674
        %v5041 = vunpack.c.h.b16 %v2674
        %v5042 = vunpack.c.l.b16 %v2675
        %v5043 = vunpack.c.h.b16 %v2675
        %v5044 = vunpack.c.l.b16 %v2676
        %v5045 = vunpack.c.h.b16 %v2676
        %v5046 = vunpack.c.l.b16 %v2677
        %v5047 = vunpack.c.h.b16 %v2677
        %v5048 = vunpack.c.l.b16 %v2678
        %v5049 = vunpack.c.h.b16 %v2678
        %v5050 = vunpack.c.l.b16 %v2679
        %v5051 = vunpack.c.h.b16 %v2679
        %v5052 = vunpack.c.l.b16 %v2680
        %v5053 = vunpack.c.h.b16 %v2680
        %v5054 = vunpack.c.l.b16 %v2681
        %v5055 = vunpack.c.h.b16 %v2681
        %v5056 = vunpack.c.l.b16 %v2682
        %v5057 = vunpack.c.h.b16 %v2682
        %v5058 = vunpack.c.l.b16 %v2683
        %v5059 = vunpack.c.h.b16 %v2683
        %v5060 = vunpack.c.l.b16 %v2684
        %v5061 = vunpack.c.h.b16 %v2684
        %v5062 = vunpack.c.l.b16 %v2685
        %v5063 = vunpack.c.h.b16 %v2685
        %v5064 = vunpack.c.l.b16 %v2686
        %v5065 = vunpack.c.h.b16 %v2686
        %v5066 = vunpack.c.l.b16 %v2687
        %v5067 = vunpack.c.h.b16 %v2687
        %v5068 = vunpack.c.l.b16 %v2688
        %v5069 = vunpack.c.h.b16 %v2688
        %v5070 = vunpack.c.l.b16 %v2689
        %v5071 = vunpack.c.h.b16 %v2689
        %v5072 = vunpack.c.l.b16 %v2690
        %v5073 = vunpack.c.h.b16 %v2690
        %v5074 = vunpack.c.l.b16 %v2691
        %v5075 = vunpack.c.h.b16 %v2691
        %v5076 = vpack.c.b16 %v4214, %v4212
        %v5077 = vpack.c.b16 %v4215, %v4213
        %v5078 = vpack.c.b16 %v4218, %v4216
        %v5079 = vpack.c.b16 %v4219, %v4217
        %v5080 = vpack.c.b16 %v4222, %v4220
        %v5081 = vpack.c.b16 %v4223, %v4221
        %v5082 = vpack.c.b16 %v4226, %v4224
        %v5083 = vpack.c.b16 %v4227, %v4225
        %v5084 = vpack.c.b16 %v4230, %v4228
        %v5085 = vpack.c.b16 %v4231, %v4229
        %v5086 = vpack.c.b16 %v4234, %v4232
        %v5087 = vpack.c.b16 %v4235, %v4233
        %v5088 = vpack.c.b16 %v4238, %v4236
        %v5089 = vpack.c.b16 %v4239, %v4237
        %v5090 = vpack.c.b16 %v4242, %v4240
        %v5091 = vpack.c.b16 %v4243, %v4241
        %v5092 = vpack.c.b16 %v4246, %v4244
        %v5093 = vpack.c.b16 %v4247, %v4245
        %v5094 = vpack.c.b16 %v4250, %v4248
        %v5095 = vpack.c.b16 %v4251, %v4249
        %v5096 = vpack.c.b16 %v4254, %v4252
        %v5097 = vpack.c.b16 %v4255, %v4253
        %v5098 = vpack.c.b16 %v4258, %v4256
        %v5099 = vpack.c.b16 %v4259, %v4257
        %v5100 = vpack.c.b16 %v4262, %v4260
        %v5101 = vpack.c.b16 %v4263, %v4261
        %v5102 = vpack.c.b16 %v4266, %v4264
        %v5103 = vpack.c.b16 %v4267, %v4265
        %v5104 = vpack.c.b16 %v4270, %v4268
        %v5105 = vpack.c.b16 %v4271, %v4269
        %v5106 = vpack.c.b16 %v4274, %v4272
        %v5107 = vpack.c.b16 %v4275, %v4273
        %v5108 = vpack.c.b16 %v4278, %v4276
        %v5109 = vpack.c.b16 %v4279, %v4277
        %v5110 = vpack.c.b16 %v4282, %v4280
        %v5111 = vpack.c.b16 %v4283, %v4281
        %v5112 = vpack.c.b16 %v4286, %v4284
        %v5113 = vpack.c.b16 %v4287, %v4285
        %v5114 = vpack.c.b16 %v4290, %v4288
        %v5115 = vpack.c.b16 %v4291, %v4289
        %v5116 = vpack.c.b16 %v4294, %v4292
        %v5117 = vpack.c.b16 %v4295, %v4293
        %v5118 = vpack.c.b16 %v4298, %v4296
        %v5119 = vpack.c.b16 %v4299, %v4297
        %v5120 = vpack.c.b16 %v4302, %v4300
        %v5121 = vpack.c.b16 %v4303, %v4301
        %v5122 = vpack.c.b16 %v4306, %v4304
        %v5123 = vpack.c.b16 %v4307, %v4305
        %v5124 = vpack.c.b16 %v4310, %v4308
        %v5125 = vpack.c.b16 %v4311, %v4309
        %v5126 = vpack.c.b16 %v4314, %v4312
        %v5127 = vpack.c.b16 %v4315, %v4313
        %v5128 = vpack.c.b16 %v4318, %v4316
        %v5129 = vpack.c.b16 %v4319, %v4317
        %v5130 = vpack.c.b16 %v4322, %v4320
        %v5131 = vpack.c.b16 %v4323, %v4321
        %v5132 = vpack.c.b16 %v4326, %v4324
        %v5133 = vpack.c.b16 %v4327, %v4325
        %v5134 = vpack.c.b16 %v4330, %v4328
        %v5135 = vpack.c.b16 %v4331, %v4329
        %v5136 = vpack.c.b16 %v4334, %v4332
        %v5137 = vpack.c.b16 %v4335, %v4333
        %v5138 = vpack.c.b16 %v4338, %v4336
        %v5139 = vpack.c.b16 %v4339, %v4337
        %v5140 = vpack.c.b16 %v4342, %v4340
        %v5141 = vpack.c.b16 %v4343, %v4341
        %v5142 = vpack.c.b16 %v4346, %v4344
        %v5143 = vpack.c.b16 %v4347, %v4345
        %v5144 = vpack.c.b16 %v4350, %v4348
        %v5145 = vpack.c.b16 %v4351, %v4349
        %v5146 = vpack.c.b16 %v4354, %v4352
        %v5147 = vpack.c.b16 %v4355, %v4353
        %v5148 = vpack.c.b16 %v4358, %v4356
        %v5149 = vpack.c.b16 %v4359, %v4357
        %v5150 = vpack.c.b16 %v4362, %v4360
        %v5151 = vpack.c.b16 %v4363, %v4361
        %v5152 = vpack.c.b16 %v4366, %v4364
        %v5153 = vpack.c.b16 %v4367, %v4365
        %v5154 = vpack.c.b16 %v4370, %v4368
        %v5155 = vpack.c.b16 %v4371, %v4369
        %v5156 = vpack.c.b16 %v4374, %v4372
        %v5157 = vpack.c.b16 %v4375, %v4373
        %v5158 = vpack.c.b16 %v4378, %v4376
        %v5159 = vpack.c.b16 %v4379, %v4377
        %v5160 = vpack.c.b16 %v4382, %v4380
        %v5161 = vpack.c.b16 %v4383, %v4381
        %v5162 = vpack.c.b16 %v4386, %v4384
        %v5163 = vpack.c.b16 %v4387, %v4385
        %v5164 = vpack.c.b16 %v4390, %v4388
        %v5165 = vpack.c.b16 %v4391, %v4389
        %v5166 = vpack.c.b16 %v4394, %v4392
        %v5167 = vpack.c.b16 %v4395, %v4393
        %v5168 = vpack.c.b16 %v4398, %v4396
        %v5169 = vpack.c.b16 %v4399, %v4397
        %v5170 = vpack.c.b16 %v4402, %v4400
        %v5171 = vpack.c.b16 %v4403, %v4401
        %v5172 = vpack.c.b16 %v4406, %v4404
        %v5173 = vpack.c.b16 %v4407, %v4405
        %v5174 = vpack.c.b16 %v4410, %v4408
        %v5175 = vpack.c.b16 %v4411, %v4409
        %v5176 = vpack.c.b16 %v4414, %v4412
        %v5177 = vpack.c.b16 %v4415, %v4413
        %v5178 = vpack.c.b16 %v4418, %v4416
        %v5179 = vpack.c.b16 %v4419, %v4417
        %v5180 = vpack.c.b16 %v4422, %v4420
        %v5181 = vpack.c.b16 %v4423, %v4421
        %v5182 = vpack.c.b16 %v4426, %v4424
        %v5183 = vpack.c.b16 %v4427, %v4425
        %v5184 = vpack.c.b16 %v4430, %v4428
        %v5185 = vpack.c.b16 %v4431, %v4429
        %v5186 = vpack.c.b16 %v4434, %v4432
        %v5187 = vpack.c.b16 %v4435, %v4433
        %v5188 = vpack.c.b16 %v4438, %v4436
        %v5189 = vpack.c.b16 %v4439, %v4437
        %v5190 = vpack.c.b16 %v4442, %v4440
        %v5191 = vpack.c.b16 %v4443, %v4441
        %v5192 = vpack.c.b16 %v4446, %v4444
        %v5193 = vpack.c.b16 %v4447, %v4445
        %v5194 = vpack.c.b16 %v4450, %v4448
        %v5195 = vpack.c.b16 %v4451, %v4449
        %v5196 = vpack.c.b16 %v4454, %v4452
        %v5197 = vpack.c.b16 %v4455, %v4453
        %v5198 = vpack.c.b16 %v4458, %v4456
        %v5199 = vpack.c.b16 %v4459, %v4457
        %v5200 = vpack.c.b16 %v4462, %v4460
        %v5201 = vpack.c.b16 %v4463, %v4461
        %v5202 = vpack.c.b16 %v4466, %v4464
        %v5203 = vpack.c.b16 %v4467, %v4465
        %v5204 = vpack.c.b16 %v4470, %v4468
        %v5205 = vpack.c.b16 %v4471, %v4469
        %v5206 = vpack.c.b16 %v4474, %v4472
        %v5207 = vpack.c.b16 %v4475, %v4473
        %v5208 = vpack.c.b16 %v4478, %v4476
        %v5209 = vpack.c.b16 %v4479, %v4477
        %v5210 = vpack.c.b16 %v4482, %v4480
        %v5211 = vpack.c.b16 %v4483, %v4481
        %v5212 = vpack.c.b16 %v4486, %v4484
        %v5213 = vpack.c.b16 %v4487, %v4485
        %v5214 = vpack.c.b16 %v4490, %v4488
        %v5215 = vpack.c.b16 %v4491, %v4489
        %v5216 = vpack.c.b16 %v4494, %v4492
        %v5217 = vpack.c.b16 %v4495, %v4493
        %v5218 = vpack.c.b16 %v4498, %v4496
        %v5219 = vpack.c.b16 %v4499, %v4497
        %v5220 = vpack.c.b16 %v4502, %v4500
        %v5221 = vpack.c.b16 %v4503, %v4501
        %v5222 = vpack.c.b16 %v4506, %v4504
        %v5223 = vpack.c.b16 %v4507, %v4505
        %v5224 = vpack.c.b16 %v4510, %v4508
        %v5225 = vpack.c.b16 %v4511, %v4509
        %v5226 = vpack.c.b16 %v4514, %v4512
        %v5227 = vpack.c.b16 %v4515, %v4513
        %v5228 = vpack.c.b16 %v4518, %v4516
        %v5229 = vpack.c.b16 %v4519, %v4517
        %v5230 = vpack.c.b16 %v4522, %v4520
        %v5231 = vpack.c.b16 %v4523, %v4521
        %v5232 = vpack.c.b16 %v4526, %v4524
        %v5233 = vpack.c.b16 %v4527, %v4525
        %v5234 = vpack.c.b16 %v4530, %v4528
        %v5235 = vpack.c.b16 %v4531, %v4529
        %v5236 = vpack.c.b16 %v4534, %v4532
        %v5237 = vpack.c.b16 %v4535, %v4533
        %v5238 = vpack.c.b16 %v4538, %v4536
        %v5239 = vpack.c.b16 %v4539, %v4537
        %v5240 = vpack.c.b16 %v4542, %v4540
        %v5241 = vpack.c.b16 %v4543, %v4541
        %v5242 = vpack.c.b16 %v4546, %v4544
        %v5243 = vpack.c.b16 %v4547, %v4545
        %v5244 = vpack.c.b16 %v4550, %v4548
        %v5245 = vpack.c.b16 %v4551, %v4549
        %v5246 = vpack.c.b16 %v4554, %v4552
        %v5247 = vpack.c.b16 %v4555, %v4553
        %v5248 = vpack.c.b16 %v4558, %v4556
        %v5249 = vpack.c.b16 %v4559, %v4557
        %v5250 = vpack.c.b16 %v4562, %v4560
        %v5251 = vpack.c.b16 %v4563, %v4561
        %v5252 = vpack.c.b16 %v4566, %v4564
        %v5253 = vpack.c.b16 %v4567, %v4565
        %v5254 = vpack.c.b16 %v4570, %v4568
        %v5255 = vpack.c.b16 %v4571, %v4569
        %v5256 = vpack.c.b16 %v4574, %v4572
        %v5257 = vpack.c.b16 %v4575, %v4573
        %v5258 = vpack.c.b16 %v4578, %v4576
        %v5259 = vpack.c.b16 %v4579, %v4577
        %v5260 = vpack.c.b16 %v4582, %v4580
        %v5261 = vpack.c.b16 %v4583, %v4581
        %v5262 = vpack.c.b16 %v4586, %v4584
        %v5263 = vpack.c.b16 %v4587, %v4585
        %v5264 = vpack.c.b16 %v4590, %v4588
        %v5265 = vpack.c.b16 %v4591, %v4589
        %v5266 = vpack.c.b16 %v4594, %v4592
        %v5267 = vpack.c.b16 %v4595, %v4593
        %v5268 = vpack.c.b16 %v4598, %v4596
        %v5269 = vpack.c.b16 %v4599, %v4597
        %v5270 = vpack.c.b16 %v4602, %v4600
        %v5271 = vpack.c.b16 %v4603, %v4601
        %v5272 = vpack.c.b16 %v4606, %v4604
        %v5273 = vpack.c.b16 %v4607, %v4605
        %v5274 = vpack.c.b16 %v4610, %v4608
        %v5275 = vpack.c.b16 %v4611, %v4609
        %v5276 = vpack.c.b16 %v4614, %v4612
        %v5277 = vpack.c.b16 %v4615, %v4613
        %v5278 = vpack.c.b16 %v4618, %v4616
        %v5279 = vpack.c.b16 %v4619, %v4617
        %v5280 = vpack.c.b16 %v4622, %v4620
        %v5281 = vpack.c.b16 %v4623, %v4621
        %v5282 = vpack.c.b16 %v4626, %v4624
        %v5283 = vpack.c.b16 %v4627, %v4625
        %v5284 = vpack.c.b16 %v4630, %v4628
        %v5285 = vpack.c.b16 %v4631, %v4629
        %v5286 = vpack.c.b16 %v4634, %v4632
        %v5287 = vpack.c.b16 %v4635, %v4633
        %v5288 = vpack.c.b16 %v4638, %v4636
        %v5289 = vpack.c.b16 %v4639, %v4637
        %v5290 = vpack.c.b16 %v4642, %v4640
        %v5291 = vpack.c.b16 %v4643, %v4641
        %v5292 = vpack.c.b16 %v4646, %v4644
        %v5293 = vpack.c.b16 %v4647, %v4645
        %v5294 = vpack.c.b16 %v4650, %v4648
        %v5295 = vpack.c.b16 %v4651, %v4649
        %v5296 = vpack.c.b16 %v4654, %v4652
        %v5297 = vpack.c.b16 %v4655, %v4653
        %v5298 = vpack.c.b16 %v4658, %v4656
        %v5299 = vpack.c.b16 %v4659, %v4657
        %v5300 = vpack.c.b16 %v4662, %v4660
        %v5301 = vpack.c.b16 %v4663, %v4661
        %v5302 = vpack.c.b16 %v4666, %v4664
        %v5303 = vpack.c.b16 %v4667, %v4665
        %v5304 = vpack.c.b16 %v4670, %v4668
        %v5305 = vpack.c.b16 %v4671, %v4669
        %v5306 = vpack.c.b16 %v4674, %v4672
        %v5307 = vpack.c.b16 %v4675, %v4673
        %v5308 = vpack.c.b16 %v4678, %v4676
        %v5309 = vpack.c.b16 %v4679, %v4677
        %v5310 = vpack.c.b16 %v4682, %v4680
        %v5311 = vpack.c.b16 %v4683, %v4681
        %v5312 = vpack.c.b16 %v4686, %v4684
        %v5313 = vpack.c.b16 %v4687, %v4685
        %v5314 = vpack.c.b16 %v4690, %v4688
        %v5315 = vpack.c.b16 %v4691, %v4689
        %v5316 = vpack.c.b16 %v4694, %v4692
        %v5317 = vpack.c.b16 %v4695, %v4693
        %v5318 = vpack.c.b16 %v4698, %v4696
        %v5319 = vpack.c.b16 %v4699, %v4697
        %v5320 = vpack.c.b16 %v4702, %v4700
        %v5321 = vpack.c.b16 %v4703, %v4701
        %v5322 = vpack.c.b16 %v4706, %v4704
        %v5323 = vpack.c.b16 %v4707, %v4705
        %v5324 = vpack.c.b16 %v4710, %v4708
        %v5325 = vpack.c.b16 %v4711, %v4709
        %v5326 = vpack.c.b16 %v4714, %v4712
        %v5327 = vpack.c.b16 %v4715, %v4713
        %v5328 = vpack.c.b16 %v4718, %v4716
        %v5329 = vpack.c.b16 %v4719, %v4717
        %v5330 = vpack.c.b16 %v4722, %v4720
        %v5331 = vpack.c.b16 %v4723, %v4721
        %v5332 = vpack.c.b16 %v4726, %v4724
        %v5333 = vpack.c.b16 %v4727, %v4725
        %v5334 = vpack.c.b16 %v4730, %v4728
        %v5335 = vpack.c.b16 %v4731, %v4729
        %v5336 = vpack.c.b16 %v4734, %v4732
        %v5337 = vpack.c.b16 %v4735, %v4733
        %v5338 = vpack.c.b16 %v4738, %v4736
        %v5339 = vpack.c.b16 %v4739, %v4737
        %v5340 = vpack.c.b16 %v4742, %v4740
        %v5341 = vpack.c.b16 %v4743, %v4741
        %v5342 = vpack.c.b16 %v4746, %v4744
        %v5343 = vpack.c.b16 %v4747, %v4745
        %v5344 = vpack.c.b16 %v4750, %v4748
        %v5345 = vpack.c.b16 %v4751, %v4749
        %v5346 = vpack.c.b16 %v4754, %v4752
        %v5347 = vpack.c.b16 %v4755, %v4753
        %v5348 = vpack.c.b16 %v4758, %v4756
        %v5349 = vpack.c.b16 %v4759, %v4757
        %v5350 = vpack.c.b16 %v4762, %v4760
        %v5351 = vpack.c.b16 %v4763, %v4761
        %v5352 = vpack.c.b16 %v4766, %v4764
        %v5353 = vpack.c.b16 %v4767, %v4765
        %v5354 = vpack.c.b16 %v4770, %v4768
        %v5355 = vpack.c.b16 %v4771, %v4769
        %v5356 = vpack.c.b16 %v4774, %v4772
        %v5357 = vpack.c.b16 %v4775, %v4773
        %v5358 = vpack.c.b16 %v4778, %v4776
        %v5359 = vpack.c.b16 %v4779, %v4777
        %v5360 = vpack.c.b16 %v4782, %v4780
        %v5361 = vpack.c.b16 %v4783, %v4781
        %v5362 = vpack.c.b16 %v4786, %v4784
        %v5363 = vpack.c.b16 %v4787, %v4785
        %v5364 = vpack.c.b16 %v4790, %v4788
        %v5365 = vpack.c.b16 %v4791, %v4789
        %v5366 = vpack.c.b16 %v4794, %v4792
        %v5367 = vpack.c.b16 %v4795, %v4793
        %v5368 = vpack.c.b16 %v4798, %v4796
        %v5369 = vpack.c.b16 %v4799, %v4797
        %v5370 = vpack.c.b16 %v4802, %v4800
        %v5371 = vpack.c.b16 %v4803, %v4801
        %v5372 = vpack.c.b16 %v4806, %v4804
        %v5373 = vpack.c.b16 %v4807, %v4805
        %v5374 = vpack.c.b16 %v4810, %v4808
        %v5375 = vpack.c.b16 %v4811, %v4809
        %v5376 = vpack.c.b16 %v4814, %v4812
        %v5377 = vpack.c.b16 %v4815, %v4813
        %v5378 = vpack.c.b16 %v4818, %v4816
        %v5379 = vpack.c.b16 %v4819, %v4817
        %v5380 = vpack.c.b16 %v4822, %v4820
        %v5381 = vpack.c.b16 %v4823, %v4821
        %v5382 = vpack.c.b16 %v4826, %v4824
        %v5383 = vpack.c.b16 %v4827, %v4825
        %v5384 = vpack.c.b16 %v4830, %v4828
        %v5385 = vpack.c.b16 %v4831, %v4829
        %v5386 = vpack.c.b16 %v4834, %v4832
        %v5387 = vpack.c.b16 %v4835, %v4833
        %v5388 = vpack.c.b16 %v4838, %v4836
        %v5389 = vpack.c.b16 %v4839, %v4837
        %v5390 = vpack.c.b16 %v4842, %v4840
        %v5391 = vpack.c.b16 %v4843, %v4841
        %v5392 = vpack.c.b16 %v4846, %v4844
        %v5393 = vpack.c.b16 %v4847, %v4845
        %v5394 = vpack.c.b16 %v4850, %v4848
        %v5395 = vpack.c.b16 %v4851, %v4849
        %v5396 = vpack.c.b16 %v4854, %v4852
        %v5397 = vpack.c.b16 %v4855, %v4853
        %v5398 = vpack.c.b16 %v4858, %v4856
        %v5399 = vpack.c.b16 %v4859, %v4857
        %v5400 = vpack.c.b16 %v4862, %v4860
        %v5401 = vpack.c.b16 %v4863, %v4861
        %v5402 = vpack.c.b16 %v4866, %v4864
        %v5403 = vpack.c.b16 %v4867, %v4865
        %v5404 = vpack.c.b16 %v4870, %v4868
        %v5405 = vpack.c.b16 %v4871, %v4869
        %v5406 = vpack.c.b16 %v4874, %v4872
        %v5407 = vpack.c.b16 %v4875, %v4873
        %v5408 = vpack.c.b16 %v4878, %v4876
        %v5409 = vpack.c.b16 %v4879, %v4877
        %v5410 = vpack.c.b16 %v4882, %v4880
        %v5411 = vpack.c.b16 %v4883, %v4881
        %v5412 = vpack.c.b16 %v4886, %v4884
        %v5413 = vpack.c.b16 %v4887, %v4885
        %v5414 = vpack.c.b16 %v4890, %v4888
        %v5415 = vpack.c.b16 %v4891, %v4889
        %v5416 = vpack.c.b16 %v4894, %v4892
        %v5417 = vpack.c.b16 %v4895, %v4893
        %v5418 = vpack.c.b16 %v4898, %v4896
        %v5419 = vpack.c.b16 %v4899, %v4897
        %v5420 = vpack.c.b16 %v4902, %v4900
        %v5421 = vpack.c.b16 %v4903, %v4901
        %v5422 = vpack.c.b16 %v4906, %v4904
        %v5423 = vpack.c.b16 %v4907, %v4905
        %v5424 = vpack.c.b16 %v4910, %v4908
        %v5425 = vpack.c.b16 %v4911, %v4909
        %v5426 = vpack.c.b16 %v4914, %v4912
        %v5427 = vpack.c.b16 %v4915, %v4913
        %v5428 = vpack.c.b16 %v4918, %v4916
        %v5429 = vpack.c.b16 %v4919, %v4917
        %v5430 = vpack.c.b16 %v4922, %v4920
        %v5431 = vpack.c.b16 %v4923, %v4921
        %v5432 = vpack.c.b16 %v4926, %v4924
        %v5433 = vpack.c.b16 %v4927, %v4925
        %v5434 = vpack.c.b16 %v4930, %v4928
        %v5435 = vpack.c.b16 %v4931, %v4929
        %v5436 = vpack.c.b16 %v4934, %v4932
        %v5437 = vpack.c.b16 %v4935, %v4933
        %v5438 = vpack.c.b16 %v4938, %v4936
        %v5439 = vpack.c.b16 %v4939, %v4937
        %v5440 = vpack.c.b16 %v4942, %v4940
        %v5441 = vpack.c.b16 %v4943, %v4941
        %v5442 = vpack.c.b16 %v4946, %v4944
        %v5443 = vpack.c.b16 %v4947, %v4945
        %v5444 = vpack.c.b16 %v4950, %v4948
        %v5445 = vpack.c.b16 %v4951, %v4949
        %v5446 = vpack.c.b16 %v4954, %v4952
        %v5447 = vpack.c.b16 %v4955, %v4953
        %v5448 = vpack.c.b16 %v4958, %v4956
        %v5449 = vpack.c.b16 %v4959, %v4957
        %v5450 = vpack.c.b16 %v4962, %v4960
        %v5451 = vpack.c.b16 %v4963, %v4961
        %v5452 = vpack.c.b16 %v4966, %v4964
        %v5453 = vpack.c.b16 %v4967, %v4965
        %v5454 = vpack.c.b16 %v4970, %v4968
        %v5455 = vpack.c.b16 %v4971, %v4969
        %v5456 = vpack.c.b16 %v4974, %v4972
        %v5457 = vpack.c.b16 %v4975, %v4973
        %v5458 = vpack.c.b16 %v4978, %v4976
        %v5459 = vpack.c.b16 %v4979, %v4977
        %v5460 = vpack.c.b16 %v4982, %v4980
        %v5461 = vpack.c.b16 %v4983, %v4981
        %v5462 = vpack.c.b16 %v4986, %v4984
        %v5463 = vpack.c.b16 %v4987, %v4985
        %v5464 = vpack.c.b16 %v4990, %v4988
        %v5465 = vpack.c.b16 %v4991, %v4989
        %v5466 = vpack.c.b16 %v4994, %v4992
        %v5467 = vpack.c.b16 %v4995, %v4993
        %v5468 = vpack.c.b16 %v4998, %v4996
        %v5469 = vpack.c.b16 %v4999, %v4997
        %v5470 = vpack.c.b16 %v5002, %v5000
        %v5471 = vpack.c.b16 %v5003, %v5001
        %v5472 = vpack.c.b16 %v5006, %v5004
        %v5473 = vpack.c.b16 %v5007, %v5005
        %v5474 = vpack.c.b16 %v5010, %v5008
        %v5475 = vpack.c.b16 %v5011, %v5009
        %v5476 = vpack.c.b16 %v5014, %v5012
        %v5477 = vpack.c.b16 %v5015, %v5013
        %v5478 = vpack.c.b16 %v5018, %v5016
        %v5479 = vpack.c.b16 %v5019, %v5017
        %v5480 = vpack.c.b16 %v5022, %v5020
        %v5481 = vpack.c.b16 %v5023, %v5021
        %v5482 = vpack.c.b16 %v5026, %v5024
        %v5483 = vpack.c.b16 %v5027, %v5025
        %v5484 = vpack.c.b16 %v5030, %v5028
        %v5485 = vpack.c.b16 %v5031, %v5029
        %v5486 = vpack.c.b16 %v5034, %v5032
        %v5487 = vpack.c.b16 %v5035, %v5033
        %v5488 = vpack.c.b16 %v5038, %v5036
        %v5489 = vpack.c.b16 %v5039, %v5037
        %v5490 = vpack.c.b16 %v5042, %v5040
        %v5491 = vpack.c.b16 %v5043, %v5041
        %v5492 = vpack.c.b16 %v5046, %v5044
        %v5493 = vpack.c.b16 %v5047, %v5045
        %v5494 = vpack.c.b16 %v5050, %v5048
        %v5495 = vpack.c.b16 %v5051, %v5049
        %v5496 = vpack.c.b16 %v5054, %v5052
        %v5497 = vpack.c.b16 %v5055, %v5053
        %v5498 = vpack.c.b16 %v5058, %v5056
        %v5499 = vpack.c.b16 %v5059, %v5057
        %v5500 = vpack.c.b16 %v5062, %v5060
        %v5501 = vpack.c.b16 %v5063, %v5061
        %v5502 = vpack.c.b16 %v5066, %v5064
        %v5503 = vpack.c.b16 %v5067, %v5065
        %v5504 = vpack.c.b16 %v5070, %v5068
        %v5505 = vpack.c.b16 %v5071, %v5069
        %v5506 = vpack.c.b16 %v5074, %v5072
        %v5507 = vpack.c.b16 %v5075, %v5073
        %5940 = vmatprep.subr.bf16.mxu0 %v5077
        %5941 = vmatpush1.bf16.msra.mxu0 %v5076
        %5942 = vmatprep.subr.bf16.mxu0 %v5079
        %5943 = vmatpush1.bf16.msra.mxu0 %v5078
        %5944 = vmatprep.subr.bf16.mxu0 %v5081
        %5945 = vmatpush1.bf16.msra.mxu0 %v5080
        %5946 = vmatprep.subr.bf16.mxu0 %v5083
        %5947 = vmatpush1.bf16.msra.mxu0 %v5082
        %5948 = vmatprep.subr.bf16.mxu0 %v5085
        %5949 = vmatpush1.bf16.msra.mxu0 %v5084
        %5950 = vmatprep.subr.bf16.mxu0 %v5087
        %5951 = vmatpush1.bf16.msra.mxu0 %v5086
        %5952 = vmatprep.subr.bf16.mxu0 %v5089
        %5953 = vmatpush1.bf16.msra.mxu0 %v5088
        %5954 = vmatprep.subr.bf16.mxu0 %v5091
        %5955 = vmatpush1.bf16.msra.mxu0 %v5090
        %5956 = vmatprep.subr.bf16.mxu0 %v5093
        %5957 = vmatpush1.bf16.msra.mxu0 %v5092
        %5958 = vmatprep.subr.bf16.mxu0 %v5095
        %5959 = vmatpush1.bf16.msra.mxu0 %v5094
        %5960 = vmatprep.subr.bf16.mxu0 %v5097
        %5961 = vmatpush1.bf16.msra.mxu0 %v5096
        %5962 = vmatprep.subr.bf16.mxu0 %v5099
        %5963 = vmatpush1.bf16.msra.mxu0 %v5098
        %5964 = vmatprep.subr.bf16.mxu0 %v5101
        %5965 = vmatpush1.bf16.msra.mxu0 %v5100
        %5966 = vmatprep.subr.bf16.mxu0 %v5103
        %5967 = vmatpush1.bf16.msra.mxu0 %v5102
        %5968 = vmatprep.subr.bf16.mxu0 %v5105
        %5969 = vmatpush1.bf16.msra.mxu0 %v5104
        %5970 = vmatprep.subr.bf16.mxu0 %v5107
        %5971 = vmatpush1.bf16.msra.mxu0 %v5106
        %5972 = vmatprep.mubr.bf16.mxu0 %v3349
        %5973 = vmatmul.mubr.bf16.gmra.mrb[0].mxu0 %v3348
        %v5974 = vpop.f32.mrb[0].mxu0
        %v5975 = vadd.f32 0.0, %v5974
        %v5976 = vpop.f32.mrb[0].mxu0
        %v5977 = vadd.f32 0.0, %v5976
        %v5978 = vpop.f32.mrb[0].mxu0
        %v5979 = vadd.f32 0.0, %v5978
        %v5980 = vpop.f32.mrb[0].mxu0
        %v5981 = vadd.f32 0.0, %v5980
        %5982 = vmatprep.mubr.bf16.mxu0 %v3376
        %5983 = vmatmul.mubr.bf16.gmra.mrb[0].mxu0 %v3375
        %v5984 = vpop.f32.mrb[0].mxu0
        %v5985 = vadd.f32 0.0, %v5984
        %v5986 = vpop.f32.mrb[0].mxu0
        %v5987 = vadd.f32 0.0, %v5986
        %v5988 = vpop.f32.mrb[0].mxu0
        %v5989 = vadd.f32 0.0, %v5988
        %v5990 = vpop.f32.mrb[0].mxu0
        %v5991 = vadd.f32 0.0, %v5990
        %5992 = vmatprep.mubr.bf16.mxu0 %v3403
        %5993 = vmatmul.mubr.bf16.gmra.mrb[0].mxu0 %v3402
        %v5994 = vpop.f32.mrb[0].mxu0
        %v5995 = vadd.f32 0.0, %v5994
        %v5996 = vpop.f32.mrb[0].mxu0
        %v5997 = vadd.f32 0.0, %v5996
        %v5998 = vpop.f32.mrb[0].mxu0
        %v5999 = vadd.f32 0.0, %v5998
        %v6000 = vpop.f32.mrb[0].mxu0
        %v6001 = vadd.f32 0.0, %v6000
        %6002 = vmatprep.mubr.bf16.mxu0 %v3430
        %6003 = vmatmul.mubr.bf16.gmra.mrb[0].mxu0 %v3429
        %v6004 = vpop.f32.mrb[0].mxu0
        %v6005 = vadd.f32 0.0, %v6004
        %v6006 = vpop.f32.mrb[0].mxu0
        %v6007 = vadd.f32 0.0, %v6006
        %v6008 = vpop.f32.mrb[0].mxu0
        %v6009 = vadd.f32 0.0, %v6008
        %v6010 = vpop.f32.mrb[0].mxu0
        %v6011 = vadd.f32 0.0, %v6010
        %6012 = vmatprep.mubr.bf16.mxu0 %v3457
        %6013 = vmatmul.mubr.bf16.gmra.mrb[0].mxu0 %v3456
        %v6014 = vpop.f32.mrb[0].mxu0
        %v6015 = vadd.f32 0.0, %v6014
        %v6016 = vpop.f32.mrb[0].mxu0
        %v6017 = vadd.f32 0.0, %v6016
        %v6018 = vpop.f32.mrb[0].mxu0
        %v6019 = vadd.f32 0.0, %v6018
        %v6020 = vpop.f32.mrb[0].mxu0
        %v6021 = vadd.f32 0.0, %v6020
        %6022 = vmatprep.mubr.bf16.mxu0 %v3484
        %6023 = vmatmul.mubr.bf16.gmra.mrb[0].mxu0 %v3483
        %v6024 = vpop.f32.mrb[0].mxu0
        %v6025 = vadd.f32 0.0, %v6024
        %v6026 = vpop.f32.mrb[0].mxu0
        %v6027 = vadd.f32 0.0, %v6026
        %v6028 = vpop.f32.mrb[0].mxu0
        %v6029 = vadd.f32 0.0, %v6028
        %v6030 = vpop.f32.mrb[0].mxu0
        %v6031 = vadd.f32 0.0, %v6030
        %6032 = vmatprep.mubr.bf16.mxu0 %v3511
        %6033 = vmatmul.mubr.bf16.gmra.mrb[0].mxu0 %v3510
        %v6034 = vpop.f32.mrb[0].mxu0
        %v6035 = vadd.f32 0.0, %v6034
        %v6036 = vpop.f32.mrb[0].mxu0
        %v6037 = vadd.f32 0.0, %v6036
        %v6038 = vpop.f32.mrb[0].mxu0
        %v6039 = vadd.f32 0.0, %v6038
        %v6040 = vpop.f32.mrb[0].mxu0
        %v6041 = vadd.f32 0.0, %v6040
        %6042 = vmatprep.mubr.bf16.mxu0 %v3538
        %6043 = vmatmul.mubr.bf16.gmra.mrb[0].mxu0 %v3537
        %v6044 = vpop.f32.mrb[0].mxu0
        %v6045 = vadd.f32 0.0, %v6044
        %v6046 = vpop.f32.mrb[0].mxu0
        %v6047 = vadd.f32 0.0, %v6046
        %v6048 = vpop.f32.mrb[0].mxu0
        %v6049 = vadd.f32 0.0, %v6048
        %v6050 = vpop.f32.mrb[0].mxu0
        %v6051 = vadd.f32 0.0, %v6050
        %6052 = vdwg.mxu0
        %6053 = vmatprep.subr.bf16.mxu0 %v5109
        %6054 = vmatpush1.bf16.msra.mxu0 %v5108
        %6055 = vmatprep.subr.bf16.mxu0 %v5111
        %6056 = vmatpush1.bf16.msra.mxu0 %v5110
        %6057 = vmatprep.subr.bf16.mxu0 %v5113
        %6058 = vmatpush1.bf16.msra.mxu0 %v5112
        %6059 = vmatprep.subr.bf16.mxu0 %v5115
        %6060 = vmatpush1.bf16.msra.mxu0 %v5114
        %6061 = vmatprep.subr.bf16.mxu0 %v5117
        %6062 = vmatpush1.bf16.msra.mxu0 %v5116
        %6063 = vmatprep.subr.bf16.mxu0 %v5119
        %6064 = vmatpush1.bf16.msra.mxu0 %v5118
        %6065 = vmatprep.subr.bf16.mxu0 %v5121
        %6066 = vmatpush1.bf16.msra.mxu0 %v5120
        %6067 = vmatprep.subr.bf16.mxu0 %v5123
        %6068 = vmatpush1.bf16.msra.mxu0 %v5122
        %6069 = vmatprep.subr.bf16.mxu0 %v5125
        %6070 = vmatpush1.bf16.msra.mxu0 %v5124
        %6071 = vmatprep.subr.bf16.mxu0 %v5127
        %6072 = vmatpush1.bf16.msra.mxu0 %v5126
        %6073 = vmatprep.subr.bf16.mxu0 %v5129
        %6074 = vmatpush1.bf16.msra.mxu0 %v5128
        %6075 = vmatprep.subr.bf16.mxu0 %v5131
        %6076 = vmatpush1.bf16.msra.mxu0 %v5130
        %6077 = vmatprep.subr.bf16.mxu0 %v5133
        %6078 = vmatpush1.bf16.msra.mxu0 %v5132
        %6079 = vmatprep.subr.bf16.mxu0 %v5135
        %6080 = vmatpush1.bf16.msra.mxu0 %v5134
        %6081 = vmatprep.subr.bf16.mxu0 %v5137
        %6082 = vmatpush1.bf16.msra.mxu0 %v5136
        %6083 = vmatprep.subr.bf16.mxu0 %v5139
        %6084 = vmatpush1.bf16.msra.mxu0 %v5138
        %6085 = vmatprep.mubr.bf16.mxu0 %v3351
        %6086 = vmatmul.mubr.bf16.gmra.mrb[0].mxu0 %v3350
        %v6087 = vpop.f32.mrb[0].mxu0
        %v6088 = vadd.f32 %v5975, %v6087
        %v6089 = vpop.f32.mrb[0].mxu0
        %v6090 = vadd.f32 %v5977, %v6089
        %v6091 = vpop.f32.mrb[0].mxu0
        %v6092 = vadd.f32 %v5979, %v6091
        %v6093 = vpop.f32.mrb[0].mxu0
        %v6094 = vadd.f32 %v5981, %v6093
        %6095 = vmatprep.mubr.bf16.mxu0 %v3378
        %6096 = vmatmul.mubr.bf16.gmra.mrb[0].mxu0 %v3377
        %v6097 = vpop.f32.mrb[0].mxu0
        %v6098 = vadd.f32 %v5985, %v6097
        %v6099 = vpop.f32.mrb[0].mxu0
        %v6100 = vadd.f32 %v5987, %v6099
        %v6101 = vpop.f32.mrb[0].mxu0
        %v6102 = vadd.f32 %v5989, %v6101
        %v6103 = vpop.f32.mrb[0].mxu0
        %v6104 = vadd.f32 %v5991, %v6103
        %6105 = vmatprep.mubr.bf16.mxu0 %v3405
        %6106 = vmatmul.mubr.bf16.gmra.mrb[0].mxu0 %v3404
        %v6107 = vpop.f32.mrb[0].mxu0
        %v6108 = vadd.f32 %v5995, %v6107
        %v6109 = vpop.f32.mrb[0].mxu0
        %v6110 = vadd.f32 %v5997, %v6109
        %v6111 = vpop.f32.mrb[0].mxu0
        %v6112 = vadd.f32 %v5999, %v6111
        %v6113 = vpop.f32.mrb[0].mxu0
        %v6114 = vadd.f32 %v6001, %v6113
        %6115 = vmatprep.mubr.bf16.mxu0 %v3432
        %6116 = vmatmul.mubr.bf16.gmra.mrb[0].mxu0 %v3431
        %v6117 = vpop.f32.mrb[0].mxu0
        %v6118 = vadd.f32 %v6005, %v6117
        %v6119 = vpop.f32.mrb[0].mxu0
        %v6120 = vadd.f32 %v6007, %v6119
        %v6121 = vpop.f32.mrb[0].mxu0
        %v6122 = vadd.f32 %v6009, %v6121
        %v6123 = vpop.f32.mrb[0].mxu0
        %v6124 = vadd.f32 %v6011, %v6123
        %6125 = vmatprep.mubr.bf16.mxu0 %v3459
        %6126 = vmatmul.mubr.bf16.gmra.mrb[0].mxu0 %v3458
        %v6127 = vpop.f32.mrb[0].mxu0
        %v6128 = vadd.f32 %v6015, %v6127
        %v6129 = vpop.f32.mrb[0].mxu0
        %v6130 = vadd.f32 %v6017, %v6129
        %v6131 = vpop.f32.mrb[0].mxu0
        %v6132 = vadd.f32 %v6019, %v6131
        %v6133 = vpop.f32.mrb[0].mxu0
        %v6134 = vadd.f32 %v6021, %v6133
        %6135 = vmatprep.mubr.bf16.mxu0 %v3486
        %6136 = vmatmul.mubr.bf16.gmra.mrb[0].mxu0 %v3485
        %v6137 = vpop.f32.mrb[0].mxu0
        %v6138 = vadd.f32 %v6025, %v6137
        %v6139 = vpop.f32.mrb[0].mxu0
        %v6140 = vadd.f32 %v6027, %v6139
        %v6141 = vpop.f32.mrb[0].mxu0
        %v6142 = vadd.f32 %v6029, %v6141
        %v6143 = vpop.f32.mrb[0].mxu0
        %v6144 = vadd.f32 %v6031, %v6143
        %6145 = vmatprep.mubr.bf16.mxu0 %v3513
        %6146 = vmatmul.mubr.bf16.gmra.mrb[0].mxu0 %v3512
        %v6147 = vpop.f32.mrb[0].mxu0
        %v6148 = vadd.f32 %v6035, %v6147
        %v6149 = vpop.f32.mrb[0].mxu0
        %v6150 = vadd.f32 %v6037, %v6149
        %v6151 = vpop.f32.mrb[0].mxu0
        %v6152 = vadd.f32 %v6039, %v6151
        %v6153 = vpop.f32.mrb[0].mxu0
        %v6154 = vadd.f32 %v6041, %v6153
        %6155 = vmatprep.mubr.bf16.mxu0 %v3540
        %6156 = vmatmul.mubr.bf16.gmra.mrb[0].mxu0 %v3539
        %v6157 = vpop.f32.mrb[0].mxu0
        %v6158 = vadd.f32 %v6045, %v6157
        %v6159 = vpop.f32.mrb[0].mxu0
        %v6160 = vadd.f32 %v6047, %v6159
        %v6161 = vpop.f32.mrb[0].mxu0
        %v6162 = vadd.f32 %v6049, %v6161
        %v6163 = vpop.f32.mrb[0].mxu0
        %v6164 = vadd.f32 %v6051, %v6163
        %6165 = vdwg.mxu0
        %6166 = vmatprep.subr.bf16.mxu0 %v5141
        %6167 = vmatpush1.bf16.msra.mxu0 %v5140
        %6168 = vmatprep.subr.bf16.mxu0 %v5143
        %6169 = vmatpush1.bf16.msra.mxu0 %v5142
        %6170 = vmatprep.subr.bf16.mxu0 %v5145
        %6171 = vmatpush1.bf16.msra.mxu0 %v5144
        %6172 = vmatprep.subr.bf16.mxu0 %v5147
        %6173 = vmatpush1.bf16.msra.mxu0 %v5146
        %6174 = vmatprep.subr.bf16.mxu0 %v5149
        %6175 = vmatpush1.bf16.msra.mxu0 %v5148
        %6176 = vmatprep.subr.bf16.mxu0 %v5151
        %6177 = vmatpush1.bf16.msra.mxu0 %v5150
        %6178 = vmatprep.subr.bf16.mxu0 %v5153
        %6179 = vmatpush1.bf16.msra.mxu0 %v5152
        %6180 = vmatprep.subr.bf16.mxu0 %v5155
        %6181 = vmatpush1.bf16.msra.mxu0 %v5154
        %6182 = vmatprep.subr.bf16.mxu0 %v5157
        %6183 = vmatpush1.bf16.msra.mxu0 %v5156
        %6184 = vmatprep.subr.bf16.mxu0 %v5159
        %6185 = vmatpush1.bf16.msra.mxu0 %v5158
        %6186 = vmatprep.subr.bf16.mxu0 %v5161
        %6187 = vmatpush1.bf16.msra.mxu0 %v5160
        %6188 = vmatprep.subr.bf16.mxu0 %v5163
        %6189 = vmatpush1.bf16.msra.mxu0 %v5162
        %6190 = vmatprep.subr.bf16.mxu0 %v5165
        %6191 = vmatpush1.bf16.msra.mxu0 %v5164
        %6192 = vmatprep.subr.bf16.mxu0 %v5167
        %6193 = vmatpush1.bf16.msra.mxu0 %v5166
        %6194 = vmatprep.subr.bf16.mxu0 %v5169
        %6195 = vmatpush1.bf16.msra.mxu0 %v5168
        %6196 = vmatprep.subr.bf16.mxu0 %v5171
        %6197 = vmatpush1.bf16.msra.mxu0 %v5170
        %6198 = vmatprep.mubr.bf16.mxu0 %v3353
        %6199 = vmatmul.mubr.bf16.gmra.mrb[0].mxu0 %v3352
        %v6200 = vpop.f32.mrb[0].mxu0
        %v6201 = vadd.f32 %v6088, %v6200
        %v6202 = vpop.f32.mrb[0].mxu0
        %v6203 = vadd.f32 %v6090, %v6202
        %v6204 = vpop.f32.mrb[0].mxu0
        %v6205 = vadd.f32 %v6092, %v6204
        %v6206 = vpop.f32.mrb[0].mxu0
        %v6207 = vadd.f32 %v6094, %v6206
        %6208 = vmatprep.mubr.bf16.mxu0 %v3380
        %6209 = vmatmul.mubr.bf16.gmra.mrb[0].mxu0 %v3379
        %v6210 = vpop.f32.mrb[0].mxu0
        %v6211 = vadd.f32 %v6098, %v6210
        %v6212 = vpop.f32.mrb[0].mxu0
        %v6213 = vadd.f32 %v6100, %v6212
        %v6214 = vpop.f32.mrb[0].mxu0
        %v6215 = vadd.f32 %v6102, %v6214
        %v6216 = vpop.f32.mrb[0].mxu0
        %v6217 = vadd.f32 %v6104, %v6216
        %6218 = vmatprep.mubr.bf16.mxu0 %v3407
        %6219 = vmatmul.mubr.bf16.gmra.mrb[0].mxu0 %v3406
        %v6220 = vpop.f32.mrb[0].mxu0
        %v6221 = vadd.f32 %v6108, %v6220
        %v6222 = vpop.f32.mrb[0].mxu0
        %v6223 = vadd.f32 %v6110, %v6222
        %v6224 = vpop.f32.mrb[0].mxu0
        %v6225 = vadd.f32 %v6112, %v6224
        %v6226 = vpop.f32.mrb[0].mxu0
        %v6227 = vadd.f32 %v6114, %v6226
        %6228 = vmatprep.mubr.bf16.mxu0 %v3434
        %6229 = vmatmul.mubr.bf16.gmra.mrb[0].mxu0 %v3433
        %v6230 = vpop.f32.mrb[0].mxu0
        %v6231 = vadd.f32 %v6118, %v6230
        %v6232 = vpop.f32.mrb[0].mxu0
        %v6233 = vadd.f32 %v6120, %v6232
        %v6234 = vpop.f32.mrb[0].mxu0
        %v6235 = vadd.f32 %v6122, %v6234
        %v6236 = vpop.f32.mrb[0].mxu0
        %v6237 = vadd.f32 %v6124, %v6236
        %6238 = vmatprep.mubr.bf16.mxu0 %v3461
        %6239 = vmatmul.mubr.bf16.gmra.mrb[0].mxu0 %v3460
        %v6240 = vpop.f32.mrb[0].mxu0
        %v6241 = vadd.f32 %v6128, %v6240
        %v6242 = vpop.f32.mrb[0].mxu0
        %v6243 = vadd.f32 %v6130, %v6242
        %v6244 = vpop.f32.mrb[0].mxu0
        %v6245 = vadd.f32 %v6132, %v6244
        %v6246 = vpop.f32.mrb[0].mxu0
        %v6247 = vadd.f32 %v6134, %v6246
        %6248 = vmatprep.mubr.bf16.mxu0 %v3488
        %6249 = vmatmul.mubr.bf16.gmra.mrb[0].mxu0 %v3487
        %v6250 = vpop.f32.mrb[0].mxu0
        %v6251 = vadd.f32 %v6138, %v6250
        %v6252 = vpop.f32.mrb[0].mxu0
        %v6253 = vadd.f32 %v6140, %v6252
        %v6254 = vpop.f32.mrb[0].mxu0
        %v6255 = vadd.f32 %v6142, %v6254
        %v6256 = vpop.f32.mrb[0].mxu0
        %v6257 = vadd.f32 %v6144, %v6256
        %6258 = vmatprep.mubr.bf16.mxu0 %v3515
        %6259 = vmatmul.mubr.bf16.gmra.mrb[0].mxu0 %v3514
        %v6260 = vpop.f32.mrb[0].mxu0
        %v6261 = vadd.f32 %v6148, %v6260
        %v6262 = vpop.f32.mrb[0].mxu0
        %v6263 = vadd.f32 %v6150, %v6262
        %v6264 = vpop.f32.mrb[0].mxu0
        %v6265 = vadd.f32 %v6152, %v6264
        %v6266 = vpop.f32.mrb[0].mxu0
        %v6267 = vadd.f32 %v6154, %v6266
        %6268 = vmatprep.mubr.bf16.mxu0 %v3542
        %6269 = vmatmul.mubr.bf16.gmra.mrb[0].mxu0 %v3541
        %v6270 = vpop.f32.mrb[0].mxu0
        %v6271 = vadd.f32 %v6158, %v6270
        %v6272 = vpop.f32.mrb[0].mxu0
        %v6273 = vadd.f32 %v6160, %v6272
        %v6274 = vpop.f32.mrb[0].mxu0
        %v6275 = vadd.f32 %v6162, %v6274
        %v6276 = vpop.f32.mrb[0].mxu0
        %v6277 = vadd.f32 %v6164, %v6276
        %6278 = vdwg.mxu0
        %6279 = vmatprep.subr.bf16.mxu0 %v5173
        %6280 = vmatpush1.bf16.msra.mxu0 %v5172
        %6281 = vmatprep.subr.bf16.mxu0 %v5175
        %6282 = vmatpush1.bf16.msra.mxu0 %v5174
        %6283 = vmatprep.subr.bf16.mxu0 %v5177
        %6284 = vmatpush1.bf16.msra.mxu0 %v5176
        %6285 = vmatprep.subr.bf16.mxu0 %v5179
        %6286 = vmatpush1.bf16.msra.mxu0 %v5178
        %6287 = vmatprep.subr.bf16.mxu0 %v5181
        %6288 = vmatpush1.bf16.msra.mxu0 %v5180
        %6289 = vmatprep.subr.bf16.mxu0 %v5183
        %6290 = vmatpush1.bf16.msra.mxu0 %v5182
        %6291 = vmatprep.subr.bf16.mxu0 %v5185
        %6292 = vmatpush1.bf16.msra.mxu0 %v5184
        %6293 = vmatprep.subr.bf16.mxu0 %v5187
        %6294 = vmatpush1.bf16.msra.mxu0 %v5186
        %6295 = vmatprep.subr.bf16.mxu0 %v5189
        %6296 = vmatpush1.bf16.msra.mxu0 %v5188
        %6297 = vmatprep.subr.bf16.mxu0 %v5191
        %6298 = vmatpush1.bf16.msra.mxu0 %v5190
        %6299 = vmatprep.subr.bf16.mxu0 %v5193
        %6300 = vmatpush1.bf16.msra.mxu0 %v5192
        %6301 = vmatprep.subr.bf16.mxu0 %v5195
        %6302 = vmatpush1.bf16.msra.mxu0 %v5194
        %6303 = vmatprep.subr.bf16.mxu0 %v5197
        %6304 = vmatpush1.bf16.msra.mxu0 %v5196
        %6305 = vmatprep.subr.bf16.mxu0 %v5199
        %6306 = vmatpush1.bf16.msra.mxu0 %v5198
        %6307 = vmatprep.subr.bf16.mxu0 %v5201
        %6308 = vmatpush1.bf16.msra.mxu0 %v5200
        %6309 = vmatprep.subr.bf16.mxu0 %v5203
        %6310 = vmatpush1.bf16.msra.mxu0 %v5202
        %6311 = vmatprep.mubr.bf16.mxu0 %v3355
        %6312 = vmatmul.mubr.bf16.gmra.mrb[0].mxu0 %v3354
        %v6313 = vpop.f32.mrb[0].mxu0
        %v6314 = vadd.f32 %v6201, %v6313
        %v6315 = vpop.f32.mrb[0].mxu0
        %v6316 = vadd.f32 %v6203, %v6315
        %v6317 = vpop.f32.mrb[0].mxu0
        %v6318 = vadd.f32 %v6205, %v6317
        %v6319 = vpop.f32.mrb[0].mxu0
        %v6320 = vadd.f32 %v6207, %v6319
        %6321 = vmatprep.mubr.bf16.mxu0 %v3382
        %6322 = vmatmul.mubr.bf16.gmra.mrb[0].mxu0 %v3381
        %v6323 = vpop.f32.mrb[0].mxu0
        %v6324 = vadd.f32 %v6211, %v6323
        %v6325 = vpop.f32.mrb[0].mxu0
        %v6326 = vadd.f32 %v6213, %v6325
        %v6327 = vpop.f32.mrb[0].mxu0
        %v6328 = vadd.f32 %v6215, %v6327
        %v6329 = vpop.f32.mrb[0].mxu0
        %v6330 = vadd.f32 %v6217, %v6329
        %6331 = vmatprep.mubr.bf16.mxu0 %v3409
        %6332 = vmatmul.mubr.bf16.gmra.mrb[0].mxu0 %v3408
        %v6333 = vpop.f32.mrb[0].mxu0
        %v6334 = vadd.f32 %v6221, %v6333
        %v6335 = vpop.f32.mrb[0].mxu0
        %v6336 = vadd.f32 %v6223, %v6335
        %v6337 = vpop.f32.mrb[0].mxu0
        %v6338 = vadd.f32 %v6225, %v6337
        %v6339 = vpop.f32.mrb[0].mxu0
        %v6340 = vadd.f32 %v6227, %v6339
        %6341 = vmatprep.mubr.bf16.mxu0 %v3436
        %6342 = vmatmul.mubr.bf16.gmra.mrb[0].mxu0 %v3435
        %v6343 = vpop.f32.mrb[0].mxu0
        %v6344 = vadd.f32 %v6231, %v6343
        %v6345 = vpop.f32.mrb[0].mxu0
        %v6346 = vadd.f32 %v6233, %v6345
        %v6347 = vpop.f32.mrb[0].mxu0
        %v6348 = vadd.f32 %v6235, %v6347
        %v6349 = vpop.f32.mrb[0].mxu0
        %v6350 = vadd.f32 %v6237, %v6349
        %6351 = vmatprep.mubr.bf16.mxu0 %v3463
        %6352 = vmatmul.mubr.bf16.gmra.mrb[0].mxu0 %v3462
        %v6353 = vpop.f32.mrb[0].mxu0
        %v6354 = vadd.f32 %v6241, %v6353
        %v6355 = vpop.f32.mrb[0].mxu0
        %v6356 = vadd.f32 %v6243, %v6355
        %v6357 = vpop.f32.mrb[0].mxu0
        %v6358 = vadd.f32 %v6245, %v6357
        %v6359 = vpop.f32.mrb[0].mxu0
        %v6360 = vadd.f32 %v6247, %v6359
        %6361 = vmatprep.mubr.bf16.mxu0 %v3490
        %6362 = vmatmul.mubr.bf16.gmra.mrb[0].mxu0 %v3489
        %v6363 = vpop.f32.mrb[0].mxu0
        %v6364 = vadd.f32 %v6251, %v6363
        %v6365 = vpop.f32.mrb[0].mxu0
        %v6366 = vadd.f32 %v6253, %v6365
        %v6367 = vpop.f32.mrb[0].mxu0
        %v6368 = vadd.f32 %v6255, %v6367
        %v6369 = vpop.f32.mrb[0].mxu0
        %v6370 = vadd.f32 %v6257, %v6369
        %6371 = vmatprep.mubr.bf16.mxu0 %v3517
        %6372 = vmatmul.mubr.bf16.gmra.mrb[0].mxu0 %v3516
        %v6373 = vpop.f32.mrb[0].mxu0
        %v6374 = vadd.f32 %v6261, %v6373
        %v6375 = vpop.f32.mrb[0].mxu0
        %v6376 = vadd.f32 %v6263, %v6375
        %v6377 = vpop.f32.mrb[0].mxu0
        %v6378 = vadd.f32 %v6265, %v6377
        %v6379 = vpop.f32.mrb[0].mxu0
        %v6380 = vadd.f32 %v6267, %v6379
        %6381 = vmatprep.mubr.bf16.mxu0 %v3544
        %6382 = vmatmul.mubr.bf16.gmra.mrb[0].mxu0 %v3543
        %v6383 = vpop.f32.mrb[0].mxu0
        %v6384 = vadd.f32 %v6271, %v6383
        %v6385 = vpop.f32.mrb[0].mxu0
        %v6386 = vadd.f32 %v6273, %v6385
        %v6387 = vpop.f32.mrb[0].mxu0
        %v6388 = vadd.f32 %v6275, %v6387
        %v6389 = vpop.f32.mrb[0].mxu0
        %v6390 = vadd.f32 %v6277, %v6389
        %6391 = vdwg.mxu0
        %6392 = vmatprep.subr.bf16.mxu0 %v5205
        %6393 = vmatpush1.bf16.msra.mxu0 %v5204
        %6394 = vmatprep.subr.bf16.mxu0 %v5207
        %6395 = vmatpush1.bf16.msra.mxu0 %v5206
        %6396 = vmatprep.subr.bf16.mxu0 %v5209
        %6397 = vmatpush1.bf16.msra.mxu0 %v5208
        %6398 = vmatprep.subr.bf16.mxu0 %v5211
        %6399 = vmatpush1.bf16.msra.mxu0 %v5210
        %6400 = vmatprep.subr.bf16.mxu0 %v5213
        %6401 = vmatpush1.bf16.msra.mxu0 %v5212
        %6402 = vmatprep.subr.bf16.mxu0 %v5215
        %6403 = vmatpush1.bf16.msra.mxu0 %v5214
        %6404 = vmatprep.subr.bf16.mxu0 %v5217
        %6405 = vmatpush1.bf16.msra.mxu0 %v5216
        %6406 = vmatprep.subr.bf16.mxu0 %v5219
        %6407 = vmatpush1.bf16.msra.mxu0 %v5218
        %6408 = vmatprep.subr.bf16.mxu0 %v5221
        %6409 = vmatpush1.bf16.msra.mxu0 %v5220
        %6410 = vmatprep.subr.bf16.mxu0 %v5223
        %6411 = vmatpush1.bf16.msra.mxu0 %v5222
        %6412 = vmatprep.subr.bf16.mxu0 %v5225
        %6413 = vmatpush1.bf16.msra.mxu0 %v5224
        %6414 = vmatprep.subr.bf16.mxu0 %v5227
        %6415 = vmatpush1.bf16.msra.mxu0 %v5226
        %6416 = vmatprep.subr.bf16.mxu0 %v5229
        %6417 = vmatpush1.bf16.msra.mxu0 %v5228
        %6418 = vmatprep.subr.bf16.mxu0 %v5231
        %6419 = vmatpush1.bf16.msra.mxu0 %v5230
        %6420 = vmatprep.subr.bf16.mxu0 %v5233
        %6421 = vmatpush1.bf16.msra.mxu0 %v5232
        %6422 = vmatprep.subr.bf16.mxu0 %v5235
        %6423 = vmatpush1.bf16.msra.mxu0 %v5234
        %6424 = vmatprep.mubr.bf16.mxu0 %v3357
        %6425 = vmatmul.mubr.bf16.gmra.mrb[0].mxu0 %v3356
        %v6426 = vpop.f32.mrb[0].mxu0
        %v6427 = vadd.f32 %v6314, %v6426
        %v6428 = vpop.f32.mrb[0].mxu0
        %v6429 = vadd.f32 %v6316, %v6428
        %v6430 = vpop.f32.mrb[0].mxu0
        %v6431 = vadd.f32 %v6318, %v6430
        %v6432 = vpop.f32.mrb[0].mxu0
        %v6433 = vadd.f32 %v6320, %v6432
        %6434 = vmatprep.mubr.bf16.mxu0 %v3384
        %6435 = vmatmul.mubr.bf16.gmra.mrb[0].mxu0 %v3383
        %v6436 = vpop.f32.mrb[0].mxu0
        %v6437 = vadd.f32 %v6324, %v6436
        %v6438 = vpop.f32.mrb[0].mxu0
        %v6439 = vadd.f32 %v6326, %v6438
        %v6440 = vpop.f32.mrb[0].mxu0
        %v6441 = vadd.f32 %v6328, %v6440
        %v6442 = vpop.f32.mrb[0].mxu0
        %v6443 = vadd.f32 %v6330, %v6442
        %6444 = vmatprep.mubr.bf16.mxu0 %v3411
        %6445 = vmatmul.mubr.bf16.gmra.mrb[0].mxu0 %v3410
        %v6446 = vpop.f32.mrb[0].mxu0
        %v6447 = vadd.f32 %v6334, %v6446
        %v6448 = vpop.f32.mrb[0].mxu0
        %v6449 = vadd.f32 %v6336, %v6448
        %v6450 = vpop.f32.mrb[0].mxu0
        %v6451 = vadd.f32 %v6338, %v6450
        %v6452 = vpop.f32.mrb[0].mxu0
        %v6453 = vadd.f32 %v6340, %v6452
        %6454 = vmatprep.mubr.bf16.mxu0 %v3438
        %6455 = vmatmul.mubr.bf16.gmra.mrb[0].mxu0 %v3437
        %v6456 = vpop.f32.mrb[0].mxu0
        %v6457 = vadd.f32 %v6344, %v6456
        %v6458 = vpop.f32.mrb[0].mxu0
        %v6459 = vadd.f32 %v6346, %v6458
        %v6460 = vpop.f32.mrb[0].mxu0
        %v6461 = vadd.f32 %v6348, %v6460
        %v6462 = vpop.f32.mrb[0].mxu0
        %v6463 = vadd.f32 %v6350, %v6462
        %6464 = vmatprep.mubr.bf16.mxu0 %v3465
        %6465 = vmatmul.mubr.bf16.gmra.mrb[0].mxu0 %v3464
        %v6466 = vpop.f32.mrb[0].mxu0
        %v6467 = vadd.f32 %v6354, %v6466
        %v6468 = vpop.f32.mrb[0].mxu0
        %v6469 = vadd.f32 %v6356, %v6468
        %v6470 = vpop.f32.mrb[0].mxu0
        %v6471 = vadd.f32 %v6358, %v6470
        %v6472 = vpop.f32.mrb[0].mxu0
        %v6473 = vadd.f32 %v6360, %v6472
        %6474 = vmatprep.mubr.bf16.mxu0 %v3492
        %6475 = vmatmul.mubr.bf16.gmra.mrb[0].mxu0 %v3491
        %v6476 = vpop.f32.mrb[0].mxu0
        %v6477 = vadd.f32 %v6364, %v6476
        %v6478 = vpop.f32.mrb[0].mxu0
        %v6479 = vadd.f32 %v6366, %v6478
        %v6480 = vpop.f32.mrb[0].mxu0
        %v6481 = vadd.f32 %v6368, %v6480
        %v6482 = vpop.f32.mrb[0].mxu0
        %v6483 = vadd.f32 %v6370, %v6482
        %6484 = vmatprep.mubr.bf16.mxu0 %v3519
        %6485 = vmatmul.mubr.bf16.gmra.mrb[0].mxu0 %v3518
        %v6486 = vpop.f32.mrb[0].mxu0
        %v6487 = vadd.f32 %v6374, %v6486
        %v6488 = vpop.f32.mrb[0].mxu0
        %v6489 = vadd.f32 %v6376, %v6488
        %v6490 = vpop.f32.mrb[0].mxu0
        %v6491 = vadd.f32 %v6378, %v6490
        %v6492 = vpop.f32.mrb[0].mxu0
        %v6493 = vadd.f32 %v6380, %v6492
        %6494 = vmatprep.mubr.bf16.mxu0 %v3546
        %6495 = vmatmul.mubr.bf16.gmra.mrb[0].mxu0 %v3545
        %v6496 = vpop.f32.mrb[0].mxu0
        %v6497 = vadd.f32 %v6384, %v6496
        %v6498 = vpop.f32.mrb[0].mxu0
        %v6499 = vadd.f32 %v6386, %v6498
        %v6500 = vpop.f32.mrb[0].mxu0
        %v6501 = vadd.f32 %v6388, %v6500
        %v6502 = vpop.f32.mrb[0].mxu0
        %v6503 = vadd.f32 %v6390, %v6502
        %6504 = vdwg.mxu0
        %6505 = vmatprep.subr.bf16.mxu0 %v5237
        %6506 = vmatpush1.bf16.msra.mxu0 %v5236
        %6507 = vmatprep.subr.bf16.mxu0 %v5239
        %6508 = vmatpush1.bf16.msra.mxu0 %v5238
        %6509 = vmatprep.subr.bf16.mxu0 %v5241
        %6510 = vmatpush1.bf16.msra.mxu0 %v5240
        %6511 = vmatprep.subr.bf16.mxu0 %v5243
        %6512 = vmatpush1.bf16.msra.mxu0 %v5242
        %6513 = vmatprep.subr.bf16.mxu0 %v5245
        %6514 = vmatpush1.bf16.msra.mxu0 %v5244
        %6515 = vmatprep.subr.bf16.mxu0 %v5247
        %6516 = vmatpush1.bf16.msra.mxu0 %v5246
        %6517 = vmatprep.subr.bf16.mxu0 %v5249
        %6518 = vmatpush1.bf16.msra.mxu0 %v5248
        %6519 = vmatprep.subr.bf16.mxu0 %v5251
        %6520 = vmatpush1.bf16.msra.mxu0 %v5250
        %6521 = vmatprep.subr.bf16.mxu0 %v5253
        %6522 = vmatpush1.bf16.msra.mxu0 %v5252
        %6523 = vmatprep.subr.bf16.mxu0 %v5255
        %6524 = vmatpush1.bf16.msra.mxu0 %v5254
        %6525 = vmatprep.subr.bf16.mxu0 %v5257
        %6526 = vmatpush1.bf16.msra.mxu0 %v5256
        %6527 = vmatprep.subr.bf16.mxu0 %v5259
        %6528 = vmatpush1.bf16.msra.mxu0 %v5258
        %6529 = vmatprep.subr.bf16.mxu0 %v5261
        %6530 = vmatpush1.bf16.msra.mxu0 %v5260
        %6531 = vmatprep.subr.bf16.mxu0 %v5263
        %6532 = vmatpush1.bf16.msra.mxu0 %v5262
        %6533 = vmatprep.subr.bf16.mxu0 %v5265
        %6534 = vmatpush1.bf16.msra.mxu0 %v5264
        %6535 = vmatprep.subr.bf16.mxu0 %v5267
        %6536 = vmatpush1.bf16.msra.mxu0 %v5266
        %6537 = vmatprep.mubr.bf16.mxu0 %v3359
        %6538 = vmatmul.mubr.bf16.gmra.mrb[0].mxu0 %v3358
        %v6539 = vpop.f32.mrb[0].mxu0
        %v6540 = vadd.f32 %v6427, %v6539
        %v6541 = vpop.f32.mrb[0].mxu0
        %v6542 = vadd.f32 %v6429, %v6541
        %v6543 = vpop.f32.mrb[0].mxu0
        %v6544 = vadd.f32 %v6431, %v6543
        %v6545 = vpop.f32.mrb[0].mxu0
        %v6546 = vadd.f32 %v6433, %v6545
        %6547 = vmatprep.mubr.bf16.mxu0 %v3386
        %6548 = vmatmul.mubr.bf16.gmra.mrb[0].mxu0 %v3385
        %v6549 = vpop.f32.mrb[0].mxu0
        %v6550 = vadd.f32 %v6437, %v6549
        %v6551 = vpop.f32.mrb[0].mxu0
        %v6552 = vadd.f32 %v6439, %v6551
        %v6553 = vpop.f32.mrb[0].mxu0
        %v6554 = vadd.f32 %v6441, %v6553
        %v6555 = vpop.f32.mrb[0].mxu0
        %v6556 = vadd.f32 %v6443, %v6555
        %6557 = vmatprep.mubr.bf16.mxu0 %v3413
        %6558 = vmatmul.mubr.bf16.gmra.mrb[0].mxu0 %v3412
        %v6559 = vpop.f32.mrb[0].mxu0
        %v6560 = vadd.f32 %v6447, %v6559
        %v6561 = vpop.f32.mrb[0].mxu0
        %v6562 = vadd.f32 %v6449, %v6561
        %v6563 = vpop.f32.mrb[0].mxu0
        %v6564 = vadd.f32 %v6451, %v6563
        %v6565 = vpop.f32.mrb[0].mxu0
        %v6566 = vadd.f32 %v6453, %v6565
        %6567 = vmatprep.mubr.bf16.mxu0 %v3440
        %6568 = vmatmul.mubr.bf16.gmra.mrb[0].mxu0 %v3439
        %v6569 = vpop.f32.mrb[0].mxu0
        %v6570 = vadd.f32 %v6457, %v6569
        %v6571 = vpop.f32.mrb[0].mxu0
        %v6572 = vadd.f32 %v6459, %v6571
        %v6573 = vpop.f32.mrb[0].mxu0
        %v6574 = vadd.f32 %v6461, %v6573
        %v6575 = vpop.f32.mrb[0].mxu0
        %v6576 = vadd.f32 %v6463, %v6575
        %6577 = vmatprep.mubr.bf16.mxu0 %v3467
        %6578 = vmatmul.mubr.bf16.gmra.mrb[0].mxu0 %v3466
        %v6579 = vpop.f32.mrb[0].mxu0
        %v6580 = vadd.f32 %v6467, %v6579
        %v6581 = vpop.f32.mrb[0].mxu0
        %v6582 = vadd.f32 %v6469, %v6581
        %v6583 = vpop.f32.mrb[0].mxu0
        %v6584 = vadd.f32 %v6471, %v6583
        %v6585 = vpop.f32.mrb[0].mxu0
        %v6586 = vadd.f32 %v6473, %v6585
        %6587 = vmatprep.mubr.bf16.mxu0 %v3494
        %6588 = vmatmul.mubr.bf16.gmra.mrb[0].mxu0 %v3493
        %v6589 = vpop.f32.mrb[0].mxu0
        %v6590 = vadd.f32 %v6477, %v6589
        %v6591 = vpop.f32.mrb[0].mxu0
        %v6592 = vadd.f32 %v6479, %v6591
        %v6593 = vpop.f32.mrb[0].mxu0
        %v6594 = vadd.f32 %v6481, %v6593
        %v6595 = vpop.f32.mrb[0].mxu0
        %v6596 = vadd.f32 %v6483, %v6595
        %6597 = vmatprep.mubr.bf16.mxu0 %v3521
        %6598 = vmatmul.mubr.bf16.gmra.mrb[0].mxu0 %v3520
        %v6599 = vpop.f32.mrb[0].mxu0
        %v6600 = vadd.f32 %v6487, %v6599
        %v6601 = vpop.f32.mrb[0].mxu0
        %v6602 = vadd.f32 %v6489, %v6601
        %v6603 = vpop.f32.mrb[0].mxu0
        %v6604 = vadd.f32 %v6491, %v6603
        %v6605 = vpop.f32.mrb[0].mxu0
        %v6606 = vadd.f32 %v6493, %v6605
        %6607 = vmatprep.mubr.bf16.mxu0 %v3548
        %6608 = vmatmul.mubr.bf16.gmra.mrb[0].mxu0 %v3547
        %v6609 = vpop.f32.mrb[0].mxu0
        %v6610 = vadd.f32 %v6497, %v6609
        %v6611 = vpop.f32.mrb[0].mxu0
        %v6612 = vadd.f32 %v6499, %v6611
        %v6613 = vpop.f32.mrb[0].mxu0
        %v6614 = vadd.f32 %v6501, %v6613
        %v6615 = vpop.f32.mrb[0].mxu0
        %v6616 = vadd.f32 %v6503, %v6615
        %6617 = vdwg.mxu0
        %6618 = vmatprep.subr.bf16.mxu0 %v5269
        %6619 = vmatpush1.bf16.msra.mxu0 %v5268
        %6620 = vmatprep.subr.bf16.mxu0 %v5271
        %6621 = vmatpush1.bf16.msra.mxu0 %v5270
        %6622 = vmatprep.subr.bf16.mxu0 %v5273
        %6623 = vmatpush1.bf16.msra.mxu0 %v5272
        %6624 = vmatprep.subr.bf16.mxu0 %v5275
        %6625 = vmatpush1.bf16.msra.mxu0 %v5274
        %6626 = vmatprep.subr.bf16.mxu0 %v5277
        %6627 = vmatpush1.bf16.msra.mxu0 %v5276
        %6628 = vmatprep.subr.bf16.mxu0 %v5279
        %6629 = vmatpush1.bf16.msra.mxu0 %v5278
        %6630 = vmatprep.subr.bf16.mxu0 %v5281
        %6631 = vmatpush1.bf16.msra.mxu0 %v5280
        %6632 = vmatprep.subr.bf16.mxu0 %v5283
        %6633 = vmatpush1.bf16.msra.mxu0 %v5282
        %6634 = vmatprep.subr.bf16.mxu0 %v5285
        %6635 = vmatpush1.bf16.msra.mxu0 %v5284
        %6636 = vmatprep.subr.bf16.mxu0 %v5287
        %6637 = vmatpush1.bf16.msra.mxu0 %v5286
        %6638 = vmatprep.subr.bf16.mxu0 %v5289
        %6639 = vmatpush1.bf16.msra.mxu0 %v5288
        %6640 = vmatprep.subr.bf16.mxu0 %v5291
        %6641 = vmatpush1.bf16.msra.mxu0 %v5290
        %6642 = vmatprep.subr.bf16.mxu0 %v5293
        %6643 = vmatpush1.bf16.msra.mxu0 %v5292
        %6644 = vmatprep.subr.bf16.mxu0 %v5295
        %6645 = vmatpush1.bf16.msra.mxu0 %v5294
        %6646 = vmatprep.subr.bf16.mxu0 %v5297
        %6647 = vmatpush1.bf16.msra.mxu0 %v5296
        %6648 = vmatprep.subr.bf16.mxu0 %v5299
        %6649 = vmatpush1.bf16.msra.mxu0 %v5298
        %6650 = vmatprep.mubr.bf16.mxu0 %v3361
        %6651 = vmatmul.mubr.bf16.gmra.mrb[0].mxu0 %v3360
        %v6652 = vpop.f32.mrb[0].mxu0
        %v6653 = vadd.f32 %v6540, %v6652
        %v6654 = vpop.f32.mrb[0].mxu0
        %v6655 = vadd.f32 %v6542, %v6654
        %v6656 = vpop.f32.mrb[0].mxu0
        %v6657 = vadd.f32 %v6544, %v6656
        %v6658 = vpop.f32.mrb[0].mxu0
        %v6659 = vadd.f32 %v6546, %v6658
        %6660 = vmatprep.mubr.bf16.mxu0 %v3388
        %6661 = vmatmul.mubr.bf16.gmra.mrb[0].mxu0 %v3387
        %v6662 = vpop.f32.mrb[0].mxu0
        %v6663 = vadd.f32 %v6550, %v6662
        %v6664 = vpop.f32.mrb[0].mxu0
        %v6665 = vadd.f32 %v6552, %v6664
        %v6666 = vpop.f32.mrb[0].mxu0
        %v6667 = vadd.f32 %v6554, %v6666
        %v6668 = vpop.f32.mrb[0].mxu0
        %v6669 = vadd.f32 %v6556, %v6668
        %6670 = vmatprep.mubr.bf16.mxu0 %v3415
        %6671 = vmatmul.mubr.bf16.gmra.mrb[0].mxu0 %v3414
        %v6672 = vpop.f32.mrb[0].mxu0
        %v6673 = vadd.f32 %v6560, %v6672
        %v6674 = vpop.f32.mrb[0].mxu0
        %v6675 = vadd.f32 %v6562, %v6674
        %v6676 = vpop.f32.mrb[0].mxu0
        %v6677 = vadd.f32 %v6564, %v6676
        %v6678 = vpop.f32.mrb[0].mxu0
        %v6679 = vadd.f32 %v6566, %v6678
        %6680 = vmatprep.mubr.bf16.mxu0 %v3442
        %6681 = vmatmul.mubr.bf16.gmra.mrb[0].mxu0 %v3441
        %v6682 = vpop.f32.mrb[0].mxu0
        %v6683 = vadd.f32 %v6570, %v6682
        %v6684 = vpop.f32.mrb[0].mxu0
        %v6685 = vadd.f32 %v6572, %v6684
        %v6686 = vpop.f32.mrb[0].mxu0
        %v6687 = vadd.f32 %v6574, %v6686
        %v6688 = vpop.f32.mrb[0].mxu0
        %v6689 = vadd.f32 %v6576, %v6688
        %6690 = vmatprep.mubr.bf16.mxu0 %v3469
        %6691 = vmatmul.mubr.bf16.gmra.mrb[0].mxu0 %v3468
        %v6692 = vpop.f32.mrb[0].mxu0
        %v6693 = vadd.f32 %v6580, %v6692
        %v6694 = vpop.f32.mrb[0].mxu0
        %v6695 = vadd.f32 %v6582, %v6694
        %v6696 = vpop.f32.mrb[0].mxu0
        %v6697 = vadd.f32 %v6584, %v6696
        %v6698 = vpop.f32.mrb[0].mxu0
        %v6699 = vadd.f32 %v6586, %v6698
        %6700 = vmatprep.mubr.bf16.mxu0 %v3496
        %6701 = vmatmul.mubr.bf16.gmra.mrb[0].mxu0 %v3495
        %v6702 = vpop.f32.mrb[0].mxu0
        %v6703 = vadd.f32 %v6590, %v6702
        %v6704 = vpop.f32.mrb[0].mxu0
        %v6705 = vadd.f32 %v6592, %v6704
        %v6706 = vpop.f32.mrb[0].mxu0
        %v6707 = vadd.f32 %v6594, %v6706
        %v6708 = vpop.f32.mrb[0].mxu0
        %v6709 = vadd.f32 %v6596, %v6708
        %6710 = vmatprep.mubr.bf16.mxu0 %v3523
        %6711 = vmatmul.mubr.bf16.gmra.mrb[0].mxu0 %v3522
        %v6712 = vpop.f32.mrb[0].mxu0
        %v6713 = vadd.f32 %v6600, %v6712
        %v6714 = vpop.f32.mrb[0].mxu0
        %v6715 = vadd.f32 %v6602, %v6714
        %v6716 = vpop.f32.mrb[0].mxu0
        %v6717 = vadd.f32 %v6604, %v6716
        %v6718 = vpop.f32.mrb[0].mxu0
        %v6719 = vadd.f32 %v6606, %v6718
        %6720 = vmatprep.mubr.bf16.mxu0 %v3550
        %6721 = vmatmul.mubr.bf16.gmra.mrb[0].mxu0 %v3549
        %v6722 = vpop.f32.mrb[0].mxu0
        %v6723 = vadd.f32 %v6610, %v6722
        %v6724 = vpop.f32.mrb[0].mxu0
        %v6725 = vadd.f32 %v6612, %v6724
        %v6726 = vpop.f32.mrb[0].mxu0
        %v6727 = vadd.f32 %v6614, %v6726
        %v6728 = vpop.f32.mrb[0].mxu0
        %v6729 = vadd.f32 %v6616, %v6728
        %6730 = vdwg.mxu0
        %6731 = vmatprep.subr.bf16.mxu0 %v5301
        %6732 = vmatpush1.bf16.msra.mxu0 %v5300
        %6733 = vmatprep.subr.bf16.mxu0 %v5303
        %6734 = vmatpush1.bf16.msra.mxu0 %v5302
        %6735 = vmatprep.subr.bf16.mxu0 %v5305
        %6736 = vmatpush1.bf16.msra.mxu0 %v5304
        %6737 = vmatprep.subr.bf16.mxu0 %v5307
        %6738 = vmatpush1.bf16.msra.mxu0 %v5306
        %6739 = vmatprep.subr.bf16.mxu0 %v5309
        %6740 = vmatpush1.bf16.msra.mxu0 %v5308
        %6741 = vmatprep.subr.bf16.mxu0 %v5311
        %6742 = vmatpush1.bf16.msra.mxu0 %v5310
        %6743 = vmatprep.subr.bf16.mxu0 %v5313
        %6744 = vmatpush1.bf16.msra.mxu0 %v5312
        %6745 = vmatprep.subr.bf16.mxu0 %v5315
        %6746 = vmatpush1.bf16.msra.mxu0 %v5314
        %6747 = vmatprep.subr.bf16.mxu0 %v5317
        %6748 = vmatpush1.bf16.msra.mxu0 %v5316
        %6749 = vmatprep.subr.bf16.mxu0 %v5319
        %6750 = vmatpush1.bf16.msra.mxu0 %v5318
        %6751 = vmatprep.subr.bf16.mxu0 %v5321
        %6752 = vmatpush1.bf16.msra.mxu0 %v5320
        %6753 = vmatprep.subr.bf16.mxu0 %v5323
        %6754 = vmatpush1.bf16.msra.mxu0 %v5322
        %6755 = vmatprep.subr.bf16.mxu0 %v5325
        %6756 = vmatpush1.bf16.msra.mxu0 %v5324
        %6757 = vmatprep.subr.bf16.mxu0 %v5327
        %6758 = vmatpush1.bf16.msra.mxu0 %v5326
        %6759 = vmatprep.subr.bf16.mxu0 %v5329
        %6760 = vmatpush1.bf16.msra.mxu0 %v5328
        %6761 = vmatprep.subr.bf16.mxu0 %v5331
        %6762 = vmatpush1.bf16.msra.mxu0 %v5330
        %6763 = vmatprep.mubr.bf16.mxu0 %v3363
        %6764 = vmatmul.mubr.bf16.gmra.mrb[0].mxu0 %v3362
        %v6765 = vpop.f32.mrb[0].mxu0
        %v6766 = vadd.f32 %v6653, %v6765
        %v6767 = vpop.f32.mrb[0].mxu0
        %v6768 = vadd.f32 %v6655, %v6767
        %v6769 = vpop.f32.mrb[0].mxu0
        %v6770 = vadd.f32 %v6657, %v6769
        %v6771 = vpop.f32.mrb[0].mxu0
        %v6772 = vadd.f32 %v6659, %v6771
        %6773 = vmatprep.mubr.bf16.mxu0 %v3390
        %6774 = vmatmul.mubr.bf16.gmra.mrb[0].mxu0 %v3389
        %v6775 = vpop.f32.mrb[0].mxu0
        %v6776 = vadd.f32 %v6663, %v6775
        %v6777 = vpop.f32.mrb[0].mxu0
        %v6778 = vadd.f32 %v6665, %v6777
        %v6779 = vpop.f32.mrb[0].mxu0
        %v6780 = vadd.f32 %v6667, %v6779
        %v6781 = vpop.f32.mrb[0].mxu0
        %v6782 = vadd.f32 %v6669, %v6781
        %6783 = vmatprep.mubr.bf16.mxu0 %v3417
        %6784 = vmatmul.mubr.bf16.gmra.mrb[0].mxu0 %v3416
        %v6785 = vpop.f32.mrb[0].mxu0
        %v6786 = vadd.f32 %v6673, %v6785
        %v6787 = vpop.f32.mrb[0].mxu0
        %v6788 = vadd.f32 %v6675, %v6787
        %v6789 = vpop.f32.mrb[0].mxu0
        %v6790 = vadd.f32 %v6677, %v6789
        %v6791 = vpop.f32.mrb[0].mxu0
        %v6792 = vadd.f32 %v6679, %v6791
        %6793 = vmatprep.mubr.bf16.mxu0 %v3444
        %6794 = vmatmul.mubr.bf16.gmra.mrb[0].mxu0 %v3443
        %v6795 = vpop.f32.mrb[0].mxu0
        %v6796 = vadd.f32 %v6683, %v6795
        %v6797 = vpop.f32.mrb[0].mxu0
        %v6798 = vadd.f32 %v6685, %v6797
        %v6799 = vpop.f32.mrb[0].mxu0
        %v6800 = vadd.f32 %v6687, %v6799
        %v6801 = vpop.f32.mrb[0].mxu0
        %v6802 = vadd.f32 %v6689, %v6801
        %6803 = vmatprep.mubr.bf16.mxu0 %v3471
        %6804 = vmatmul.mubr.bf16.gmra.mrb[0].mxu0 %v3470
        %v6805 = vpop.f32.mrb[0].mxu0
        %v6806 = vadd.f32 %v6693, %v6805
        %v6807 = vpop.f32.mrb[0].mxu0
        %v6808 = vadd.f32 %v6695, %v6807
        %v6809 = vpop.f32.mrb[0].mxu0
        %v6810 = vadd.f32 %v6697, %v6809
        %v6811 = vpop.f32.mrb[0].mxu0
        %v6812 = vadd.f32 %v6699, %v6811
        %6813 = vmatprep.mubr.bf16.mxu0 %v3498
        %6814 = vmatmul.mubr.bf16.gmra.mrb[0].mxu0 %v3497
        %v6815 = vpop.f32.mrb[0].mxu0
        %v6816 = vadd.f32 %v6703, %v6815
        %v6817 = vpop.f32.mrb[0].mxu0
        %v6818 = vadd.f32 %v6705, %v6817
        %v6819 = vpop.f32.mrb[0].mxu0
        %v6820 = vadd.f32 %v6707, %v6819
        %v6821 = vpop.f32.mrb[0].mxu0
        %v6822 = vadd.f32 %v6709, %v6821
        %6823 = vmatprep.mubr.bf16.mxu0 %v3525
        %6824 = vmatmul.mubr.bf16.gmra.mrb[0].mxu0 %v3524
        %v6825 = vpop.f32.mrb[0].mxu0
        %v6826 = vadd.f32 %v6713, %v6825
        %v6827 = vpop.f32.mrb[0].mxu0
        %v6828 = vadd.f32 %v6715, %v6827
        %v6829 = vpop.f32.mrb[0].mxu0
        %v6830 = vadd.f32 %v6717, %v6829
        %v6831 = vpop.f32.mrb[0].mxu0
        %v6832 = vadd.f32 %v6719, %v6831
        %6833 = vmatprep.mubr.bf16.mxu0 %v3552
        %6834 = vmatmul.mubr.bf16.gmra.mrb[0].mxu0 %v3551
        %v6835 = vpop.f32.mrb[0].mxu0
        %v6836 = vadd.f32 %v6723, %v6835
        %v6837 = vpop.f32.mrb[0].mxu0
        %v6838 = vadd.f32 %v6725, %v6837
        %v6839 = vpop.f32.mrb[0].mxu0
        %v6840 = vadd.f32 %v6727, %v6839
        %v6841 = vpop.f32.mrb[0].mxu0
        %v6842 = vadd.f32 %v6729, %v6841
        %6843 = vdwg.mxu0
        %6844 = vmatprep.subr.bf16.mxu0 %v5333
        %6845 = vmatpush1.bf16.msra.mxu0 %v5332
        %6846 = vmatprep.subr.bf16.mxu0 %v5335
        %6847 = vmatpush1.bf16.msra.mxu0 %v5334
        %6848 = vmatprep.subr.bf16.mxu0 %v5337
        %6849 = vmatpush1.bf16.msra.mxu0 %v5336
        %6850 = vmatprep.subr.bf16.mxu0 %v5339
        %6851 = vmatpush1.bf16.msra.mxu0 %v5338
        %6852 = vmatprep.subr.bf16.mxu0 %v5341
        %6853 = vmatpush1.bf16.msra.mxu0 %v5340
        %6854 = vmatprep.subr.bf16.mxu0 %v5343
        %6855 = vmatpush1.bf16.msra.mxu0 %v5342
        %6856 = vmatprep.subr.bf16.mxu0 %v5345
        %6857 = vmatpush1.bf16.msra.mxu0 %v5344
        %6858 = vmatprep.subr.bf16.mxu0 %v5347
        %6859 = vmatpush1.bf16.msra.mxu0 %v5346
        %6860 = vmatprep.subr.bf16.mxu0 %v5349
        %6861 = vmatpush1.bf16.msra.mxu0 %v5348
        %6862 = vmatprep.subr.bf16.mxu0 %v5351
        %6863 = vmatpush1.bf16.msra.mxu0 %v5350
        %6864 = vmatprep.subr.bf16.mxu0 %v5353
        %6865 = vmatpush1.bf16.msra.mxu0 %v5352
        %6866 = vmatprep.subr.bf16.mxu0 %v5355
        %6867 = vmatpush1.bf16.msra.mxu0 %v5354
        %6868 = vmatprep.subr.bf16.mxu0 %v5357
        %6869 = vmatpush1.bf16.msra.mxu0 %v5356
        %6870 = vmatprep.subr.bf16.mxu0 %v5359
        %6871 = vmatpush1.bf16.msra.mxu0 %v5358
        %6872 = vmatprep.subr.bf16.mxu0 %v5361
        %6873 = vmatpush1.bf16.msra.mxu0 %v5360
        %6874 = vmatprep.subr.bf16.mxu0 %v5363
        %6875 = vmatpush1.bf16.msra.mxu0 %v5362
        %6876 = vmatprep.mubr.bf16.mxu0 %v3365
        %6877 = vmatmul.mubr.bf16.gmra.mrb[0].mxu0 %v3364
        %v6878 = vpop.f32.mrb[0].mxu0
        %v6879 = vadd.f32 %v6766, %v6878
        %v6880 = vpop.f32.mrb[0].mxu0
        %v6881 = vadd.f32 %v6768, %v6880
        %v6882 = vpop.f32.mrb[0].mxu0
        %v6883 = vadd.f32 %v6770, %v6882
        %v6884 = vpop.f32.mrb[0].mxu0
        %v6885 = vadd.f32 %v6772, %v6884
        %6886 = vmatprep.mubr.bf16.mxu0 %v3392
        %6887 = vmatmul.mubr.bf16.gmra.mrb[0].mxu0 %v3391
        %v6888 = vpop.f32.mrb[0].mxu0
        %v6889 = vadd.f32 %v6776, %v6888
        %v6890 = vpop.f32.mrb[0].mxu0
        %v6891 = vadd.f32 %v6778, %v6890
        %v6892 = vpop.f32.mrb[0].mxu0
        %v6893 = vadd.f32 %v6780, %v6892
        %v6894 = vpop.f32.mrb[0].mxu0
        %v6895 = vadd.f32 %v6782, %v6894
        %6896 = vmatprep.mubr.bf16.mxu0 %v3419
        %6897 = vmatmul.mubr.bf16.gmra.mrb[0].mxu0 %v3418
        %v6898 = vpop.f32.mrb[0].mxu0
        %v6899 = vadd.f32 %v6786, %v6898
        %v6900 = vpop.f32.mrb[0].mxu0
        %v6901 = vadd.f32 %v6788, %v6900
        %v6902 = vpop.f32.mrb[0].mxu0
        %v6903 = vadd.f32 %v6790, %v6902
        %v6904 = vpop.f32.mrb[0].mxu0
        %v6905 = vadd.f32 %v6792, %v6904
        %6906 = vmatprep.mubr.bf16.mxu0 %v3446
        %6907 = vmatmul.mubr.bf16.gmra.mrb[0].mxu0 %v3445
        %v6908 = vpop.f32.mrb[0].mxu0
        %v6909 = vadd.f32 %v6796, %v6908
        %v6910 = vpop.f32.mrb[0].mxu0
        %v6911 = vadd.f32 %v6798, %v6910
        %v6912 = vpop.f32.mrb[0].mxu0
        %v6913 = vadd.f32 %v6800, %v6912
        %v6914 = vpop.f32.mrb[0].mxu0
        %v6915 = vadd.f32 %v6802, %v6914
        %6916 = vmatprep.mubr.bf16.mxu0 %v3473
        %6917 = vmatmul.mubr.bf16.gmra.mrb[0].mxu0 %v3472
        %v6918 = vpop.f32.mrb[0].mxu0
        %v6919 = vadd.f32 %v6806, %v6918
        %v6920 = vpop.f32.mrb[0].mxu0
        %v6921 = vadd.f32 %v6808, %v6920
        %v6922 = vpop.f32.mrb[0].mxu0
        %v6923 = vadd.f32 %v6810, %v6922
        %v6924 = vpop.f32.mrb[0].mxu0
        %v6925 = vadd.f32 %v6812, %v6924
        %6926 = vmatprep.mubr.bf16.mxu0 %v3500
        %6927 = vmatmul.mubr.bf16.gmra.mrb[0].mxu0 %v3499
        %v6928 = vpop.f32.mrb[0].mxu0
        %v6929 = vadd.f32 %v6816, %v6928
        %v6930 = vpop.f32.mrb[0].mxu0
        %v6931 = vadd.f32 %v6818, %v6930
        %v6932 = vpop.f32.mrb[0].mxu0
        %v6933 = vadd.f32 %v6820, %v6932
        %v6934 = vpop.f32.mrb[0].mxu0
        %v6935 = vadd.f32 %v6822, %v6934
        %6936 = vmatprep.mubr.bf16.mxu0 %v3527
        %6937 = vmatmul.mubr.bf16.gmra.mrb[0].mxu0 %v3526
        %v6938 = vpop.f32.mrb[0].mxu0
        %v6939 = vadd.f32 %v6826, %v6938
        %v6940 = vpop.f32.mrb[0].mxu0
        %v6941 = vadd.f32 %v6828, %v6940
        %v6942 = vpop.f32.mrb[0].mxu0
        %v6943 = vadd.f32 %v6830, %v6942
        %v6944 = vpop.f32.mrb[0].mxu0
        %v6945 = vadd.f32 %v6832, %v6944
        %6946 = vmatprep.mubr.bf16.mxu0 %v3554
        %6947 = vmatmul.mubr.bf16.gmra.mrb[0].mxu0 %v3553
        %v6948 = vpop.f32.mrb[0].mxu0
        %v6949 = vadd.f32 %v6836, %v6948
        %v6950 = vpop.f32.mrb[0].mxu0
        %v6951 = vadd.f32 %v6838, %v6950
        %v6952 = vpop.f32.mrb[0].mxu0
        %v6953 = vadd.f32 %v6840, %v6952
        %v6954 = vpop.f32.mrb[0].mxu0
        %v6955 = vadd.f32 %v6842, %v6954
        %6956 = vdwg.mxu0
        %6957 = vmatprep.subr.bf16.mxu0 %v5365
        %6958 = vmatpush1.bf16.msra.mxu0 %v5364
        %6959 = vmatprep.subr.bf16.mxu0 %v5367
        %6960 = vmatpush1.bf16.msra.mxu0 %v5366
        %6961 = vmatprep.subr.bf16.mxu0 %v5369
        %6962 = vmatpush1.bf16.msra.mxu0 %v5368
        %6963 = vmatprep.subr.bf16.mxu0 %v5371
        %6964 = vmatpush1.bf16.msra.mxu0 %v5370
        %6965 = vmatprep.subr.bf16.mxu0 %v5373
        %6966 = vmatpush1.bf16.msra.mxu0 %v5372
        %6967 = vmatprep.subr.bf16.mxu0 %v5375
        %6968 = vmatpush1.bf16.msra.mxu0 %v5374
        %6969 = vmatprep.subr.bf16.mxu0 %v5377
        %6970 = vmatpush1.bf16.msra.mxu0 %v5376
        %6971 = vmatprep.subr.bf16.mxu0 %v5379
        %6972 = vmatpush1.bf16.msra.mxu0 %v5378
        %6973 = vmatprep.subr.bf16.mxu0 %v5381
        %6974 = vmatpush1.bf16.msra.mxu0 %v5380
        %6975 = vmatprep.subr.bf16.mxu0 %v5383
        %6976 = vmatpush1.bf16.msra.mxu0 %v5382
        %6977 = vmatprep.subr.bf16.mxu0 %v5385
        %6978 = vmatpush1.bf16.msra.mxu0 %v5384
        %6979 = vmatprep.subr.bf16.mxu0 %v5387
        %6980 = vmatpush1.bf16.msra.mxu0 %v5386
        %6981 = vmatprep.subr.bf16.mxu0 %v5389
        %6982 = vmatpush1.bf16.msra.mxu0 %v5388
        %6983 = vmatprep.subr.bf16.mxu0 %v5391
        %6984 = vmatpush1.bf16.msra.mxu0 %v5390
        %6985 = vmatprep.subr.bf16.mxu0 %v5393
        %6986 = vmatpush1.bf16.msra.mxu0 %v5392
        %6987 = vmatprep.subr.bf16.mxu0 %v5395
        %6988 = vmatpush1.bf16.msra.mxu0 %v5394
        %6989 = vmatprep.mubr.bf16.mxu0 %v3367
        %6990 = vmatmul.mubr.bf16.gmra.mrb[0].mxu0 %v3366
        %v6991 = vpop.f32.mrb[0].mxu0
        %v6992 = vadd.f32 %v6879, %v6991
        %v6993 = vpop.f32.mrb[0].mxu0
        %v6994 = vadd.f32 %v6881, %v6993
        %v6995 = vpop.f32.mrb[0].mxu0
        %v6996 = vadd.f32 %v6883, %v6995
        %v6997 = vpop.f32.mrb[0].mxu0
        %v6998 = vadd.f32 %v6885, %v6997
        %6999 = vmatprep.mubr.bf16.mxu0 %v3394
        %7000 = vmatmul.mubr.bf16.gmra.mrb[0].mxu0 %v3393
        %v7001 = vpop.f32.mrb[0].mxu0
        %v7002 = vadd.f32 %v6889, %v7001
        %v7003 = vpop.f32.mrb[0].mxu0
        %v7004 = vadd.f32 %v6891, %v7003
        %v7005 = vpop.f32.mrb[0].mxu0
        %v7006 = vadd.f32 %v6893, %v7005
        %v7007 = vpop.f32.mrb[0].mxu0
        %v7008 = vadd.f32 %v6895, %v7007
        %7009 = vmatprep.mubr.bf16.mxu0 %v3421
        %7010 = vmatmul.mubr.bf16.gmra.mrb[0].mxu0 %v3420
        %v7011 = vpop.f32.mrb[0].mxu0
        %v7012 = vadd.f32 %v6899, %v7011
        %v7013 = vpop.f32.mrb[0].mxu0
        %v7014 = vadd.f32 %v6901, %v7013
        %v7015 = vpop.f32.mrb[0].mxu0
        %v7016 = vadd.f32 %v6903, %v7015
        %v7017 = vpop.f32.mrb[0].mxu0
        %v7018 = vadd.f32 %v6905, %v7017
        %7019 = vmatprep.mubr.bf16.mxu0 %v3448
        %7020 = vmatmul.mubr.bf16.gmra.mrb[0].mxu0 %v3447
        %v7021 = vpop.f32.mrb[0].mxu0
        %v7022 = vadd.f32 %v6909, %v7021
        %v7023 = vpop.f32.mrb[0].mxu0
        %v7024 = vadd.f32 %v6911, %v7023
        %v7025 = vpop.f32.mrb[0].mxu0
        %v7026 = vadd.f32 %v6913, %v7025
        %v7027 = vpop.f32.mrb[0].mxu0
        %v7028 = vadd.f32 %v6915, %v7027
        %7029 = vmatprep.mubr.bf16.mxu0 %v3475
        %7030 = vmatmul.mubr.bf16.gmra.mrb[0].mxu0 %v3474
        %v7031 = vpop.f32.mrb[0].mxu0
        %v7032 = vadd.f32 %v6919, %v7031
        %v7033 = vpop.f32.mrb[0].mxu0
        %v7034 = vadd.f32 %v6921, %v7033
        %v7035 = vpop.f32.mrb[0].mxu0
        %v7036 = vadd.f32 %v6923, %v7035
        %v7037 = vpop.f32.mrb[0].mxu0
        %v7038 = vadd.f32 %v6925, %v7037
        %7039 = vmatprep.mubr.bf16.mxu0 %v3502
        %7040 = vmatmul.mubr.bf16.gmra.mrb[0].mxu0 %v3501
        %v7041 = vpop.f32.mrb[0].mxu0
        %v7042 = vadd.f32 %v6929, %v7041
        %v7043 = vpop.f32.mrb[0].mxu0
        %v7044 = vadd.f32 %v6931, %v7043
        %v7045 = vpop.f32.mrb[0].mxu0
        %v7046 = vadd.f32 %v6933, %v7045
        %v7047 = vpop.f32.mrb[0].mxu0
        %v7048 = vadd.f32 %v6935, %v7047
        %7049 = vmatprep.mubr.bf16.mxu0 %v3529
        %7050 = vmatmul.mubr.bf16.gmra.mrb[0].mxu0 %v3528
        %v7051 = vpop.f32.mrb[0].mxu0
        %v7052 = vadd.f32 %v6939, %v7051
        %v7053 = vpop.f32.mrb[0].mxu0
        %v7054 = vadd.f32 %v6941, %v7053
        %v7055 = vpop.f32.mrb[0].mxu0
        %v7056 = vadd.f32 %v6943, %v7055
        %v7057 = vpop.f32.mrb[0].mxu0
        %v7058 = vadd.f32 %v6945, %v7057
        %7059 = vmatprep.mubr.bf16.mxu0 %v3556
        %7060 = vmatmul.mubr.bf16.gmra.mrb[0].mxu0 %v3555
        %v7061 = vpop.f32.mrb[0].mxu0
        %v7062 = vadd.f32 %v6949, %v7061
        %v7063 = vpop.f32.mrb[0].mxu0
        %v7064 = vadd.f32 %v6951, %v7063
        %v7065 = vpop.f32.mrb[0].mxu0
        %v7066 = vadd.f32 %v6953, %v7065
        %v7067 = vpop.f32.mrb[0].mxu0
        %v7068 = vadd.f32 %v6955, %v7067
        %7069 = vdwg.mxu0
        %7070 = vmatprep.subr.bf16.mxu0 %v5397
        %7071 = vmatpush1.bf16.msra.mxu0 %v5396
        %7072 = vmatprep.subr.bf16.mxu0 %v5399
        %7073 = vmatpush1.bf16.msra.mxu0 %v5398
        %7074 = vmatprep.subr.bf16.mxu0 %v5401
        %7075 = vmatpush1.bf16.msra.mxu0 %v5400
        %7076 = vmatprep.subr.bf16.mxu0 %v5403
        %7077 = vmatpush1.bf16.msra.mxu0 %v5402
        %7078 = vmatprep.subr.bf16.mxu0 %v5405
        %7079 = vmatpush1.bf16.msra.mxu0 %v5404
        %7080 = vmatprep.subr.bf16.mxu0 %v5407
        %7081 = vmatpush1.bf16.msra.mxu0 %v5406
        %7082 = vmatprep.subr.bf16.mxu0 %v5409
        %7083 = vmatpush1.bf16.msra.mxu0 %v5408
        %7084 = vmatprep.subr.bf16.mxu0 %v5411
        %7085 = vmatpush1.bf16.msra.mxu0 %v5410
        %7086 = vmatprep.subr.bf16.mxu0 %v5413
        %7087 = vmatpush1.bf16.msra.mxu0 %v5412
        %7088 = vmatprep.subr.bf16.mxu0 %v5415
        %7089 = vmatpush1.bf16.msra.mxu0 %v5414
        %7090 = vmatprep.subr.bf16.mxu0 %v5417
        %7091 = vmatpush1.bf16.msra.mxu0 %v5416
        %7092 = vmatprep.subr.bf16.mxu0 %v5419
        %7093 = vmatpush1.bf16.msra.mxu0 %v5418
        %7094 = vmatprep.subr.bf16.mxu0 %v5421
        %7095 = vmatpush1.bf16.msra.mxu0 %v5420
        %7096 = vmatprep.subr.bf16.mxu0 %v5423
        %7097 = vmatpush1.bf16.msra.mxu0 %v5422
        %7098 = vmatprep.subr.bf16.mxu0 %v5425
        %7099 = vmatpush1.bf16.msra.mxu0 %v5424
        %7100 = vmatprep.subr.bf16.mxu0 %v5427
        %7101 = vmatpush1.bf16.msra.mxu0 %v5426
        %7102 = vmatprep.mubr.bf16.mxu0 %v3369
        %7103 = vmatmul.mubr.bf16.gmra.mrb[0].mxu0 %v3368
        %v7104 = vpop.f32.mrb[0].mxu0
        %v7105 = vadd.f32 %v6992, %v7104
        %v7106 = vpop.f32.mrb[0].mxu0
        %v7107 = vadd.f32 %v6994, %v7106
        %v7108 = vpop.f32.mrb[0].mxu0
        %v7109 = vadd.f32 %v6996, %v7108
        %v7110 = vpop.f32.mrb[0].mxu0
        %v7111 = vadd.f32 %v6998, %v7110
        %7112 = vmatprep.mubr.bf16.mxu0 %v3396
        %7113 = vmatmul.mubr.bf16.gmra.mrb[0].mxu0 %v3395
        %v7114 = vpop.f32.mrb[0].mxu0
        %v7115 = vadd.f32 %v7002, %v7114
        %v7116 = vpop.f32.mrb[0].mxu0
        %v7117 = vadd.f32 %v7004, %v7116
        %v7118 = vpop.f32.mrb[0].mxu0
        %v7119 = vadd.f32 %v7006, %v7118
        %v7120 = vpop.f32.mrb[0].mxu0
        %v7121 = vadd.f32 %v7008, %v7120
        %7122 = vmatprep.mubr.bf16.mxu0 %v3423
        %7123 = vmatmul.mubr.bf16.gmra.mrb[0].mxu0 %v3422
        %v7124 = vpop.f32.mrb[0].mxu0
        %v7125 = vadd.f32 %v7012, %v7124
        %v7126 = vpop.f32.mrb[0].mxu0
        %v7127 = vadd.f32 %v7014, %v7126
        %v7128 = vpop.f32.mrb[0].mxu0
        %v7129 = vadd.f32 %v7016, %v7128
        %v7130 = vpop.f32.mrb[0].mxu0
        %v7131 = vadd.f32 %v7018, %v7130
        %7132 = vmatprep.mubr.bf16.mxu0 %v3450
        %7133 = vmatmul.mubr.bf16.gmra.mrb[0].mxu0 %v3449
        %v7134 = vpop.f32.mrb[0].mxu0
        %v7135 = vadd.f32 %v7022, %v7134
        %v7136 = vpop.f32.mrb[0].mxu0
        %v7137 = vadd.f32 %v7024, %v7136
        %v7138 = vpop.f32.mrb[0].mxu0
        %v7139 = vadd.f32 %v7026, %v7138
        %v7140 = vpop.f32.mrb[0].mxu0
        %v7141 = vadd.f32 %v7028, %v7140
        %7142 = vmatprep.mubr.bf16.mxu0 %v3477
        %7143 = vmatmul.mubr.bf16.gmra.mrb[0].mxu0 %v3476
        %v7144 = vpop.f32.mrb[0].mxu0
        %v7145 = vadd.f32 %v7032, %v7144
        %v7146 = vpop.f32.mrb[0].mxu0
        %v7147 = vadd.f32 %v7034, %v7146
        %v7148 = vpop.f32.mrb[0].mxu0
        %v7149 = vadd.f32 %v7036, %v7148
        %v7150 = vpop.f32.mrb[0].mxu0
        %v7151 = vadd.f32 %v7038, %v7150
        %7152 = vmatprep.mubr.bf16.mxu0 %v3504
        %7153 = vmatmul.mubr.bf16.gmra.mrb[0].mxu0 %v3503
        %v7154 = vpop.f32.mrb[0].mxu0
        %v7155 = vadd.f32 %v7042, %v7154
        %v7156 = vpop.f32.mrb[0].mxu0
        %v7157 = vadd.f32 %v7044, %v7156
        %v7158 = vpop.f32.mrb[0].mxu0
        %v7159 = vadd.f32 %v7046, %v7158
        %v7160 = vpop.f32.mrb[0].mxu0
        %v7161 = vadd.f32 %v7048, %v7160
        %7162 = vmatprep.mubr.bf16.mxu0 %v3531
        %7163 = vmatmul.mubr.bf16.gmra.mrb[0].mxu0 %v3530
        %v7164 = vpop.f32.mrb[0].mxu0
        %v7165 = vadd.f32 %v7052, %v7164
        %v7166 = vpop.f32.mrb[0].mxu0
        %v7167 = vadd.f32 %v7054, %v7166
        %v7168 = vpop.f32.mrb[0].mxu0
        %v7169 = vadd.f32 %v7056, %v7168
        %v7170 = vpop.f32.mrb[0].mxu0
        %v7171 = vadd.f32 %v7058, %v7170
        %7172 = vmatprep.mubr.bf16.mxu0 %v3558
        %7173 = vmatmul.mubr.bf16.gmra.mrb[0].mxu0 %v3557
        %v7174 = vpop.f32.mrb[0].mxu0
        %v7175 = vadd.f32 %v7062, %v7174
        %v7176 = vpop.f32.mrb[0].mxu0
        %v7177 = vadd.f32 %v7064, %v7176
        %v7178 = vpop.f32.mrb[0].mxu0
        %v7179 = vadd.f32 %v7066, %v7178
        %v7180 = vpop.f32.mrb[0].mxu0
        %v7181 = vadd.f32 %v7068, %v7180
        %7182 = vdwg.mxu0
        %7183 = vmatprep.subr.bf16.mxu0 %v5429
        %7184 = vmatpush1.bf16.msra.mxu0 %v5428
        %7185 = vmatprep.subr.bf16.mxu0 %v5431
        %7186 = vmatpush1.bf16.msra.mxu0 %v5430
        %7187 = vmatprep.subr.bf16.mxu0 %v5433
        %7188 = vmatpush1.bf16.msra.mxu0 %v5432
        %7189 = vmatprep.subr.bf16.mxu0 %v5435
        %7190 = vmatpush1.bf16.msra.mxu0 %v5434
        %7191 = vmatprep.subr.bf16.mxu0 %v5437
        %7192 = vmatpush1.bf16.msra.mxu0 %v5436
        %7193 = vmatprep.subr.bf16.mxu0 %v5439
        %7194 = vmatpush1.bf16.msra.mxu0 %v5438
        %7195 = vmatprep.subr.bf16.mxu0 %v5441
        %7196 = vmatpush1.bf16.msra.mxu0 %v5440
        %7197 = vmatprep.subr.bf16.mxu0 %v5443
        %7198 = vmatpush1.bf16.msra.mxu0 %v5442
        %7199 = vmatprep.subr.bf16.mxu0 %v5445
        %7200 = vmatpush1.bf16.msra.mxu0 %v5444
        %7201 = vmatprep.subr.bf16.mxu0 %v5447
        %7202 = vmatpush1.bf16.msra.mxu0 %v5446
        %7203 = vmatprep.subr.bf16.mxu0 %v5449
        %7204 = vmatpush1.bf16.msra.mxu0 %v5448
        %7205 = vmatprep.subr.bf16.mxu0 %v5451
        %7206 = vmatpush1.bf16.msra.mxu0 %v5450
        %7207 = vmatprep.subr.bf16.mxu0 %v5453
        %7208 = vmatpush1.bf16.msra.mxu0 %v5452
        %7209 = vmatprep.subr.bf16.mxu0 %v5455
        %7210 = vmatpush1.bf16.msra.mxu0 %v5454
        %7211 = vmatprep.subr.bf16.mxu0 %v5457
        %7212 = vmatpush1.bf16.msra.mxu0 %v5456
        %7213 = vmatprep.subr.bf16.mxu0 %v5459
        %7214 = vmatpush1.bf16.msra.mxu0 %v5458
        %7215 = vmatprep.mubr.bf16.mxu0 %v3371
        %7216 = vmatmul.mubr.bf16.gmra.mrb[0].mxu0 %v3370
        %v7217 = vpop.f32.mrb[0].mxu0
        %v7218 = vadd.f32 %v7105, %v7217
        %v7219 = vpop.f32.mrb[0].mxu0
        %v7220 = vadd.f32 %v7107, %v7219
        %v7221 = vpop.f32.mrb[0].mxu0
        %v7222 = vadd.f32 %v7109, %v7221
        %v7223 = vpop.f32.mrb[0].mxu0
        %v7224 = vadd.f32 %v7111, %v7223
        %7225 = vmatprep.mubr.bf16.mxu0 %v3398
        %7226 = vmatmul.mubr.bf16.gmra.mrb[0].mxu0 %v3397
        %v7227 = vpop.f32.mrb[0].mxu0
        %v7228 = vadd.f32 %v7115, %v7227
        %v7229 = vpop.f32.mrb[0].mxu0
        %v7230 = vadd.f32 %v7117, %v7229
        %v7231 = vpop.f32.mrb[0].mxu0
        %v7232 = vadd.f32 %v7119, %v7231
        %v7233 = vpop.f32.mrb[0].mxu0
        %v7234 = vadd.f32 %v7121, %v7233
        %7235 = vmatprep.mubr.bf16.mxu0 %v3425
        %7236 = vmatmul.mubr.bf16.gmra.mrb[0].mxu0 %v3424
        %v7237 = vpop.f32.mrb[0].mxu0
        %v7238 = vadd.f32 %v7125, %v7237
        %v7239 = vpop.f32.mrb[0].mxu0
        %v7240 = vadd.f32 %v7127, %v7239
        %v7241 = vpop.f32.mrb[0].mxu0
        %v7242 = vadd.f32 %v7129, %v7241
        %v7243 = vpop.f32.mrb[0].mxu0
        %v7244 = vadd.f32 %v7131, %v7243
        %7245 = vmatprep.mubr.bf16.mxu0 %v3452
        %7246 = vmatmul.mubr.bf16.gmra.mrb[0].mxu0 %v3451
        %v7247 = vpop.f32.mrb[0].mxu0
        %v7248 = vadd.f32 %v7135, %v7247
        %v7249 = vpop.f32.mrb[0].mxu0
        %v7250 = vadd.f32 %v7137, %v7249
        %v7251 = vpop.f32.mrb[0].mxu0
        %v7252 = vadd.f32 %v7139, %v7251
        %v7253 = vpop.f32.mrb[0].mxu0
        %v7254 = vadd.f32 %v7141, %v7253
        %7255 = vmatprep.mubr.bf16.mxu0 %v3479
        %7256 = vmatmul.mubr.bf16.gmra.mrb[0].mxu0 %v3478
        %v7257 = vpop.f32.mrb[0].mxu0
        %v7258 = vadd.f32 %v7145, %v7257
        %v7259 = vpop.f32.mrb[0].mxu0
        %v7260 = vadd.f32 %v7147, %v7259
        %v7261 = vpop.f32.mrb[0].mxu0
        %v7262 = vadd.f32 %v7149, %v7261
        %v7263 = vpop.f32.mrb[0].mxu0
        %v7264 = vadd.f32 %v7151, %v7263
        %7265 = vmatprep.mubr.bf16.mxu0 %v3506
        %7266 = vmatmul.mubr.bf16.gmra.mrb[0].mxu0 %v3505
        %v7267 = vpop.f32.mrb[0].mxu0
        %v7268 = vadd.f32 %v7155, %v7267
        %v7269 = vpop.f32.mrb[0].mxu0
        %v7270 = vadd.f32 %v7157, %v7269
        %v7271 = vpop.f32.mrb[0].mxu0
        %v7272 = vadd.f32 %v7159, %v7271
        %v7273 = vpop.f32.mrb[0].mxu0
        %v7274 = vadd.f32 %v7161, %v7273
        %7275 = vmatprep.mubr.bf16.mxu0 %v3533
        %7276 = vmatmul.mubr.bf16.gmra.mrb[0].mxu0 %v3532
        %v7277 = vpop.f32.mrb[0].mxu0
        %v7278 = vadd.f32 %v7165, %v7277
        %v7279 = vpop.f32.mrb[0].mxu0
        %v7280 = vadd.f32 %v7167, %v7279
        %v7281 = vpop.f32.mrb[0].mxu0
        %v7282 = vadd.f32 %v7169, %v7281
        %v7283 = vpop.f32.mrb[0].mxu0
        %v7284 = vadd.f32 %v7171, %v7283
        %7285 = vmatprep.mubr.bf16.mxu0 %v3560
        %7286 = vmatmul.mubr.bf16.gmra.mrb[0].mxu0 %v3559
        %v7287 = vpop.f32.mrb[0].mxu0
        %v7288 = vadd.f32 %v7175, %v7287
        %v7289 = vpop.f32.mrb[0].mxu0
        %v7290 = vadd.f32 %v7177, %v7289
        %v7291 = vpop.f32.mrb[0].mxu0
        %v7292 = vadd.f32 %v7179, %v7291
        %v7293 = vpop.f32.mrb[0].mxu0
        %v7294 = vadd.f32 %v7181, %v7293
        %7295 = vdwg.mxu0
        %7296 = vmatprep.subr.bf16.mxu0 %v5461
        %7297 = vmatpush1.bf16.msra.mxu0 %v5460
        %7298 = vmatprep.subr.bf16.mxu0 %v5463
        %7299 = vmatpush1.bf16.msra.mxu0 %v5462
        %7300 = vmatprep.subr.bf16.mxu0 %v5465
        %7301 = vmatpush1.bf16.msra.mxu0 %v5464
        %7302 = vmatprep.subr.bf16.mxu0 %v5467
        %7303 = vmatpush1.bf16.msra.mxu0 %v5466
        %7304 = vmatprep.subr.bf16.mxu0 %v5469
        %7305 = vmatpush1.bf16.msra.mxu0 %v5468
        %7306 = vmatprep.subr.bf16.mxu0 %v5471
        %7307 = vmatpush1.bf16.msra.mxu0 %v5470
        %7308 = vmatprep.subr.bf16.mxu0 %v5473
        %7309 = vmatpush1.bf16.msra.mxu0 %v5472
        %7310 = vmatprep.subr.bf16.mxu0 %v5475
        %7311 = vmatpush1.bf16.msra.mxu0 %v5474
        %7312 = vmatprep.subr.bf16.mxu0 %v5477
        %7313 = vmatpush1.bf16.msra.mxu0 %v5476
        %7314 = vmatprep.subr.bf16.mxu0 %v5479
        %7315 = vmatpush1.bf16.msra.mxu0 %v5478
        %7316 = vmatprep.subr.bf16.mxu0 %v5481
        %7317 = vmatpush1.bf16.msra.mxu0 %v5480
        %7318 = vmatprep.subr.bf16.mxu0 %v5483
        %7319 = vmatpush1.bf16.msra.mxu0 %v5482
        %7320 = vmatprep.subr.bf16.mxu0 %v5485
        %7321 = vmatpush1.bf16.msra.mxu0 %v5484
        %7322 = vmatprep.subr.bf16.mxu0 %v5487
        %7323 = vmatpush1.bf16.msra.mxu0 %v5486
        %7324 = vmatprep.subr.bf16.mxu0 %v5489
        %7325 = vmatpush1.bf16.msra.mxu0 %v5488
        %7326 = vmatprep.subr.bf16.mxu0 %v5491
        %7327 = vmatpush1.bf16.msra.mxu0 %v5490
        %7328 = vmatprep.mubr.bf16.mxu0 %v3373
        %7329 = vmatmul.mubr.bf16.gmra.mrb[0].mxu0 %v3372
        %v7330 = vpop.f32.mrb[0].mxu0
        %v7331 = vadd.f32 %v7218, %v7330
        %v7332 = vpop.f32.mrb[0].mxu0
        %v7333 = vadd.f32 %v7220, %v7332
        %v7334 = vpop.f32.mrb[0].mxu0
        %v7335 = vadd.f32 %v7222, %v7334
        %v7336 = vpop.f32.mrb[0].mxu0
        %v7337 = vadd.f32 %v7224, %v7336
        %7338 = vmatprep.mubr.bf16.mxu0 %v3400
        %7339 = vmatmul.mubr.bf16.gmra.mrb[0].mxu0 %v3399
        %v7340 = vpop.f32.mrb[0].mxu0
        %v7341 = vadd.f32 %v7228, %v7340
        %v7342 = vpop.f32.mrb[0].mxu0
        %v7343 = vadd.f32 %v7230, %v7342
        %v7344 = vpop.f32.mrb[0].mxu0
        %v7345 = vadd.f32 %v7232, %v7344
        %v7346 = vpop.f32.mrb[0].mxu0
        %v7347 = vadd.f32 %v7234, %v7346
        %7348 = vmatprep.mubr.bf16.mxu0 %v3427
        %7349 = vmatmul.mubr.bf16.gmra.mrb[0].mxu0 %v3426
        %v7350 = vpop.f32.mrb[0].mxu0
        %v7351 = vadd.f32 %v7238, %v7350
        %v7352 = vpop.f32.mrb[0].mxu0
        %v7353 = vadd.f32 %v7240, %v7352
        %v7354 = vpop.f32.mrb[0].mxu0
        %v7355 = vadd.f32 %v7242, %v7354
        %v7356 = vpop.f32.mrb[0].mxu0
        %v7357 = vadd.f32 %v7244, %v7356
        %7358 = vmatprep.mubr.bf16.mxu0 %v3454
        %7359 = vmatmul.mubr.bf16.gmra.mrb[0].mxu0 %v3453
        %v7360 = vpop.f32.mrb[0].mxu0
        %v7361 = vadd.f32 %v7248, %v7360
        %v7362 = vpop.f32.mrb[0].mxu0
        %v7363 = vadd.f32 %v7250, %v7362
        %v7364 = vpop.f32.mrb[0].mxu0
        %v7365 = vadd.f32 %v7252, %v7364
        %v7366 = vpop.f32.mrb[0].mxu0
        %v7367 = vadd.f32 %v7254, %v7366
        %7368 = vmatprep.mubr.bf16.mxu0 %v3481
        %7369 = vmatmul.mubr.bf16.gmra.mrb[0].mxu0 %v3480
        %v7370 = vpop.f32.mrb[0].mxu0
        %v7371 = vadd.f32 %v7258, %v7370
        %v7372 = vpop.f32.mrb[0].mxu0
        %v7373 = vadd.f32 %v7260, %v7372
        %v7374 = vpop.f32.mrb[0].mxu0
        %v7375 = vadd.f32 %v7262, %v7374
        %v7376 = vpop.f32.mrb[0].mxu0
        %v7377 = vadd.f32 %v7264, %v7376
        %7378 = vmatprep.mubr.bf16.mxu0 %v3508
        %7379 = vmatmul.mubr.bf16.gmra.mrb[0].mxu0 %v3507
        %v7380 = vpop.f32.mrb[0].mxu0
        %v7381 = vadd.f32 %v7268, %v7380
        %v7382 = vpop.f32.mrb[0].mxu0
        %v7383 = vadd.f32 %v7270, %v7382
        %v7384 = vpop.f32.mrb[0].mxu0
        %v7385 = vadd.f32 %v7272, %v7384
        %v7386 = vpop.f32.mrb[0].mxu0
        %v7387 = vadd.f32 %v7274, %v7386
        %7388 = vmatprep.mubr.bf16.mxu0 %v3535
        %7389 = vmatmul.mubr.bf16.gmra.mrb[0].mxu0 %v3534
        %v7390 = vpop.f32.mrb[0].mxu0
        %v7391 = vadd.f32 %v7278, %v7390
        %v7392 = vpop.f32.mrb[0].mxu0
        %v7393 = vadd.f32 %v7280, %v7392
        %v7394 = vpop.f32.mrb[0].mxu0
        %v7395 = vadd.f32 %v7282, %v7394
        %v7396 = vpop.f32.mrb[0].mxu0
        %v7397 = vadd.f32 %v7284, %v7396
        %7398 = vmatprep.mubr.bf16.mxu0 %v3562
        %7399 = vmatmul.mubr.bf16.gmra.mrb[0].mxu0 %v3561
        %v7400 = vpop.f32.mrb[0].mxu0
        %v7401 = vadd.f32 %v7288, %v7400
        %v7402 = vpop.f32.mrb[0].mxu0
        %v7403 = vadd.f32 %v7290, %v7402
        %v7404 = vpop.f32.mrb[0].mxu0
        %v7405 = vadd.f32 %v7292, %v7404
        %v7406 = vpop.f32.mrb[0].mxu0
        %v7407 = vadd.f32 %v7294, %v7406
        %7408 = vdwg.mxu0
        %7409 = vmatprep.subr.bf16.mxu0 %v5493
        %7410 = vmatpush1.bf16.msra.mxu0 %v5492
        %7411 = vmatprep.subr.bf16.mxu0 %v5495
        %7412 = vmatpush1.bf16.msra.mxu0 %v5494
        %7413 = vmatprep.subr.bf16.mxu0 %v5497
        %7414 = vmatpush1.bf16.msra.mxu0 %v5496
        %7415 = vmatprep.subr.bf16.mxu0 %v5499
        %7416 = vmatpush1.bf16.msra.mxu0 %v5498
        %7417 = vmatprep.subr.bf16.mxu0 %v5501
        %7418 = vmatpush1.bf16.msra.mxu0 %v5500
        %7419 = vmatprep.subr.bf16.mxu0 %v5503
        %7420 = vmatpush1.bf16.msra.mxu0 %v5502
        %7421 = vmatprep.subr.bf16.mxu0 %v5505
        %7422 = vmatpush1.bf16.msra.mxu0 %v5504
        %7423 = vmatprep.subr.bf16.mxu0 %v5507
        %7424 = vmatpush1.bf16.msra.mxu0 %v5506
        %7425 = vmatprep.subr.bf16.mxu0 0
        %7426 = vmatpush1.bf16.msra.mxu0 0
        %7427 = vmatprep.subr.bf16.mxu0 0
        %7428 = vmatpush1.bf16.msra.mxu0 0
        %7429 = vmatprep.subr.bf16.mxu0 0
        %7430 = vmatpush1.bf16.msra.mxu0 0
        %7431 = vmatprep.subr.bf16.mxu0 0
        %7432 = vmatpush1.bf16.msra.mxu0 0
        %7433 = vmatprep.subr.bf16.mxu0 0
        %7434 = vmatpush1.bf16.msra.mxu0 0
        %7435 = vmatprep.subr.bf16.mxu0 0
        %7436 = vmatpush1.bf16.msra.mxu0 0
        %7437 = vmatprep.subr.bf16.mxu0 0
        %7438 = vmatpush1.bf16.msra.mxu0 0
        %7439 = vmatprep.subr.bf16.mxu0 0
        %7440 = vmatpush1.bf16.msra.mxu0 0
        %7441 = vmatprep.mubr.bf16.mxu0 0
        %7442 = vmatmul.mubr.bf16.gmra.mrb[0].mxu0 %v3374
        %v7443 = vpop.f32.mrb[0].mxu0
        %v7444 = vadd.f32 %v7331, %v7443
        %v7445 = vpop.f32.mrb[0].mxu0
        %v7446 = vadd.f32 %v7333, %v7445
        %v7447 = vpop.f32.mrb[0].mxu0
        %v7448 = vadd.f32 %v7335, %v7447
        %v7449 = vpop.f32.mrb[0].mxu0
        %v7450 = vadd.f32 %v7337, %v7449
        %7451 = vmatprep.mubr.bf16.mxu0 0
        %7452 = vmatmul.mubr.bf16.gmra.mrb[0].mxu0 %v3401
        %v7453 = vpop.f32.mrb[0].mxu0
        %v7454 = vadd.f32 %v7341, %v7453
        %v7455 = vpop.f32.mrb[0].mxu0
        %v7456 = vadd.f32 %v7343, %v7455
        %v7457 = vpop.f32.mrb[0].mxu0
        %v7458 = vadd.f32 %v7345, %v7457
        %v7459 = vpop.f32.mrb[0].mxu0
        %v7460 = vadd.f32 %v7347, %v7459
        %7461 = vmatprep.mubr.bf16.mxu0 0
        %7462 = vmatmul.mubr.bf16.gmra.mrb[0].mxu0 %v3428
        %v7463 = vpop.f32.mrb[0].mxu0
        %v7464 = vadd.f32 %v7351, %v7463
        %v7465 = vpop.f32.mrb[0].mxu0
        %v7466 = vadd.f32 %v7353, %v7465
        %v7467 = vpop.f32.mrb[0].mxu0
        %v7468 = vadd.f32 %v7355, %v7467
        %v7469 = vpop.f32.mrb[0].mxu0
        %v7470 = vadd.f32 %v7357, %v7469
        %7471 = vmatprep.mubr.bf16.mxu0 0
        %7472 = vmatmul.mubr.bf16.gmra.mrb[0].mxu0 %v3455
        %v7473 = vpop.f32.mrb[0].mxu0
        %v7474 = vadd.f32 %v7361, %v7473
        %v7475 = vpop.f32.mrb[0].mxu0
        %v7476 = vadd.f32 %v7363, %v7475
        %v7477 = vpop.f32.mrb[0].mxu0
        %v7478 = vadd.f32 %v7365, %v7477
        %v7479 = vpop.f32.mrb[0].mxu0
        %v7480 = vadd.f32 %v7367, %v7479
        %7481 = vmatprep.mubr.bf16.mxu0 0
        %7482 = vmatmul.mubr.bf16.gmra.mrb[0].mxu0 %v3482
        %v7483 = vpop.f32.mrb[0].mxu0
        %v7484 = vadd.f32 %v7371, %v7483
        %v7485 = vpop.f32.mrb[0].mxu0
        %v7486 = vadd.f32 %v7373, %v7485
        %v7487 = vpop.f32.mrb[0].mxu0
        %v7488 = vadd.f32 %v7375, %v7487
        %v7489 = vpop.f32.mrb[0].mxu0
        %v7490 = vadd.f32 %v7377, %v7489
        %7491 = vmatprep.mubr.bf16.mxu0 0
        %7492 = vmatmul.mubr.bf16.gmra.mrb[0].mxu0 %v3509
        %v7493 = vpop.f32.mrb[0].mxu0
        %v7494 = vadd.f32 %v7381, %v7493
        %v7495 = vpop.f32.mrb[0].mxu0
        %v7496 = vadd.f32 %v7383, %v7495
        %v7497 = vpop.f32.mrb[0].mxu0
        %v7498 = vadd.f32 %v7385, %v7497
        %v7499 = vpop.f32.mrb[0].mxu0
        %v7500 = vadd.f32 %v7387, %v7499
        %7501 = vmatprep.mubr.bf16.mxu0 0
        %7502 = vmatmul.mubr.bf16.gmra.mrb[0].mxu0 %v3536
        %v7503 = vpop.f32.mrb[0].mxu0
        %v7504 = vadd.f32 %v7391, %v7503
        %v7505 = vpop.f32.mrb[0].mxu0
        %v7506 = vadd.f32 %v7393, %v7505
        %v7507 = vpop.f32.mrb[0].mxu0
        %v7508 = vadd.f32 %v7395, %v7507
        %v7509 = vpop.f32.mrb[0].mxu0
        %v7510 = vadd.f32 %v7397, %v7509
        %7511 = vmatprep.mubr.bf16.mxu0 0
        %7512 = vmatmul.mubr.bf16.gmra.mrb[0].mxu0 %v3563
        %v7513 = vpop.f32.mrb[0].mxu0
        %v7514 = vadd.f32 %v7401, %v7513
        %v7515 = vpop.f32.mrb[0].mxu0
        %v7516 = vadd.f32 %v7403, %v7515
        %v7517 = vpop.f32.mrb[0].mxu0
        %v7518 = vadd.f32 %v7405, %v7517
        %v7519 = vpop.f32.mrb[0].mxu0
        %v7520 = vadd.f32 %v7407, %v7519
        %7521 = vdwg.mxu0
        %v7522 = vmax.f32 %v7444, 0.0
        %v7523 = vmax.f32 %v7446, 0.0
        %v7524 = vmax.f32 %v7448, 0.0
        %v7525 = vmax.f32 %v7450, 0.0
        %v7526 = vmax.f32 %v7454, 0.0
        %v7527 = vmax.f32 %v7456, 0.0
        %v7528 = vmax.f32 %v7458, 0.0
        %v7529 = vmax.f32 %v7460, 0.0
        %v7530 = vmax.f32 %v7464, 0.0
        %v7531 = vmax.f32 %v7466, 0.0
        %v7532 = vmax.f32 %v7468, 0.0
        %v7533 = vmax.f32 %v7470, 0.0
        %v7534 = vmax.f32 %v7474, 0.0
        %v7535 = vmax.f32 %v7476, 0.0
        %v7536 = vmax.f32 %v7478, 0.0
        %v7537 = vmax.f32 %v7480, 0.0
        %v7538 = vmax.f32 %v7484, 0.0
        %v7539 = vmax.f32 %v7486, 0.0
        %v7540 = vmax.f32 %v7488, 0.0
        %v7541 = vmax.f32 %v7490, 0.0
        %v7542 = vmax.f32 %v7494, 0.0
        %v7543 = vmax.f32 %v7496, 0.0
        %v7544 = vmax.f32 %v7498, 0.0
        %v7545 = vmax.f32 %v7500, 0.0
        %v7546 = vmax.f32 %v7504, 0.0
        %v7547 = vmax.f32 %v7506, 0.0
        %v7548 = vmax.f32 %v7508, 0.0
        %v7549 = vmax.f32 %v7510, 0.0
        %v7550 = vmax.f32 %v7514, 0.0
        %v7551 = vmax.f32 %v7516, 0.0
        %v7552 = vmax.f32 %v7518, 0.0
        %v7553 = vmax.f32 %v7520, 0.0
        %v7554 = vadd.f32 %v7522, %v7524
        %v7555 = vadd.f32 %v7554, %v7526
        %v7556 = vadd.f32 %v7555, %v7528
        %v7557 = vadd.f32 %v7556, %v7530
        %v7558 = vadd.f32 %v7557, %v7532
        %v7559 = vadd.f32 %v7558, %v7534
        %v7560 = vadd.f32 %v7559, %v7536
        %v7561 = vadd.f32 %v7560, %v7538
        %v7562 = vadd.f32 %v7561, %v7540
        %v7563 = vadd.f32 %v7562, %v7542
        %v7564 = vadd.f32 %v7563, %v7544
        %v7565 = vadd.f32 %v7564, %v7546
        %v7566 = vadd.f32 %v7565, %v7548
        %v7567 = vadd.f32 %v7566, %v7550
        %v7568 = vadd.f32 %v7567, %v7552
        %v7569 = vrot.slane %v7568, 4
        %v7570 = vadd.f32 %v7568, %v7569
        %v7571 = vrot.slane %v7570, 2
        %v7572 = vadd.f32 %v7570, %v7571
        %v7573 = vrot.slane %v7572, 1
        %v7574 = vadd.f32 %v7572, %v7573
        %v7575 = vadd.f32 %v7523, %v7525
        %v7576 = vadd.f32 %v7575, %v7527
        %v7577 = vadd.f32 %v7576, %v7529
        %v7578 = vadd.f32 %v7577, %v7531
        %v7579 = vadd.f32 %v7578, %v7533
        %v7580 = vadd.f32 %v7579, %v7535
        %v7581 = vadd.f32 %v7580, %v7537
        %v7582 = vadd.f32 %v7581, %v7539
        %v7583 = vadd.f32 %v7582, %v7541
        %v7584 = vadd.f32 %v7583, %v7543
        %v7585 = vadd.f32 %v7584, %v7545
        %v7586 = vadd.f32 %v7585, %v7547
        %v7587 = vadd.f32 %v7586, %v7549
        %v7588 = vadd.f32 %v7587, %v7551
        %v7589 = vadd.f32 %v7588, %v7553
        %v7590 = vrot.slane %v7589, 4
        %v7591 = vadd.f32 %v7589, %v7590
        %v7592 = vrot.slane %v7591, 2
        %v7593 = vadd.f32 %v7591, %v7592
        %v7594 = vrot.slane %v7593, 1
        %v7595 = vadd.f32 %v7593, %v7594
        %v7596 = vmul.f32 %v7522, %v7522
        %v7597 = vmul.f32 %v7523, %v7523
        %v7598 = vmul.f32 %v7524, %v7524
        %v7599 = vmul.f32 %v7525, %v7525
        %v7600 = vmul.f32 %v7526, %v7526
        %v7601 = vmul.f32 %v7527, %v7527
        %v7602 = vmul.f32 %v7528, %v7528
        %v7603 = vmul.f32 %v7529, %v7529
        %v7604 = vmul.f32 %v7530, %v7530
        %v7605 = vmul.f32 %v7531, %v7531
        %v7606 = vmul.f32 %v7532, %v7532
        %v7607 = vmul.f32 %v7533, %v7533
        %v7608 = vmul.f32 %v7534, %v7534
        %v7609 = vmul.f32 %v7535, %v7535
        %v7610 = vmul.f32 %v7536, %v7536
        %v7611 = vmul.f32 %v7537, %v7537
        %v7612 = vmul.f32 %v7538, %v7538
        %v7613 = vmul.f32 %v7539, %v7539
        %v7614 = vmul.f32 %v7540, %v7540
        %v7615 = vmul.f32 %v7541, %v7541
        %v7616 = vmul.f32 %v7542, %v7542
        %v7617 = vmul.f32 %v7543, %v7543
        %v7618 = vmul.f32 %v7544, %v7544
        %v7619 = vmul.f32 %v7545, %v7545
        %v7620 = vmul.f32 %v7546, %v7546
        %v7621 = vmul.f32 %v7547, %v7547
        %v7622 = vmul.f32 %v7548, %v7548
        %v7623 = vmul.f32 %v7549, %v7549
        %v7624 = vmul.f32 %v7550, %v7550
        %v7625 = vmul.f32 %v7551, %v7551
        %v7626 = vmul.f32 %v7552, %v7552
        %v7627 = vmul.f32 %v7553, %v7553
        %v7628 = vadd.f32 %v7596, %v7598
        %v7629 = vadd.f32 %v7628, %v7600
        %v7630 = vadd.f32 %v7629, %v7602
        %v7631 = vadd.f32 %v7630, %v7604
        %v7632 = vadd.f32 %v7631, %v7606
        %v7633 = vadd.f32 %v7632, %v7608
        %v7634 = vadd.f32 %v7633, %v7610
        %v7635 = vadd.f32 %v7634, %v7612
        %v7636 = vadd.f32 %v7635, %v7614
        %v7637 = vadd.f32 %v7636, %v7616
        %v7638 = vadd.f32 %v7637, %v7618
        %v7639 = vadd.f32 %v7638, %v7620
        %v7640 = vadd.f32 %v7639, %v7622
        %v7641 = vadd.f32 %v7640, %v7624
        %v7642 = vadd.f32 %v7641, %v7626
        %v7643 = vrot.slane %v7642, 4
        %v7644 = vadd.f32 %v7642, %v7643
        %v7645 = vrot.slane %v7644, 2
        %v7646 = vadd.f32 %v7644, %v7645
        %v7647 = vrot.slane %v7646, 1
        %v7648 = vadd.f32 %v7646, %v7647
        %v7649 = vadd.f32 %v7597, %v7599
        %v7650 = vadd.f32 %v7649, %v7601
        %v7651 = vadd.f32 %v7650, %v7603
        %v7652 = vadd.f32 %v7651, %v7605
        %v7653 = vadd.f32 %v7652, %v7607
        %v7654 = vadd.f32 %v7653, %v7609
        %v7655 = vadd.f32 %v7654, %v7611
        %v7656 = vadd.f32 %v7655, %v7613
        %v7657 = vadd.f32 %v7656, %v7615
        %v7658 = vadd.f32 %v7657, %v7617
        %v7659 = vadd.f32 %v7658, %v7619
        %v7660 = vadd.f32 %v7659, %v7621
        %v7661 = vadd.f32 %v7660, %v7623
        %v7662 = vadd.f32 %v7661, %v7625
        %v7663 = vadd.f32 %v7662, %v7627
        %v7664 = vrot.slane %v7663, 4
        %v7665 = vadd.f32 %v7663, %v7664
        %v7666 = vrot.slane %v7665, 2
        %v7667 = vadd.f32 %v7665, %v7666
        %v7668 = vrot.slane %v7667, 1
        %v7669 = vadd.f32 %v7667, %v7668
        %v7670 = vrcp.pop 128.0
        %v7671 = vmul.f32 %v7574, %v7670
        %v7672 = vmul.f32 %v7595, %v7670
        %v7673 = vmul.f32 %v7648, %v7670
        %v7674 = vmul.f32 %v7669, %v7670
        %v7675 = vmul.f32 %v7671, %v7671
        %v7676 = vmul.f32 %v7672, %v7672
        %v7677 = vsub.f32 %v7673, %v7675
        %v7678 = vsub.f32 %v7674, %v7676
        %v7679 = vmax.f32 %v7677, 0.0
        %v7680 = vmax.f32 %v7678, 0.0
        %v7681 = vadd.f32 %v7679, 1e-05
        %v7682 = vadd.f32 %v7680, 1e-05
        %v7683 = vrsqrt.pop %v7681
        %v7684 = vrsqrt.pop %v7682
        %v7685 = vsub.f32 %v7522, %v7671
        %v7686 = vsub.f32 %v7523, %v7672
        %v7687 = vsub.f32 %v7524, %v7671
        %v7688 = vsub.f32 %v7525, %v7672
        %v7689 = vsub.f32 %v7526, %v7671
        %v7690 = vsub.f32 %v7527, %v7672
        %v7691 = vsub.f32 %v7528, %v7671
        %v7692 = vsub.f32 %v7529, %v7672
        %v7693 = vsub.f32 %v7530, %v7671
        %v7694 = vsub.f32 %v7531, %v7672
        %v7695 = vsub.f32 %v7532, %v7671
        %v7696 = vsub.f32 %v7533, %v7672
        %v7697 = vsub.f32 %v7534, %v7671
        %v7698 = vsub.f32 %v7535, %v7672
        %v7699 = vsub.f32 %v7536, %v7671
        %v7700 = vsub.f32 %v7537, %v7672
        %v7701 = vsub.f32 %v7538, %v7671
        %v7702 = vsub.f32 %v7539, %v7672
        %v7703 = vsub.f32 %v7540, %v7671
        %v7704 = vsub.f32 %v7541, %v7672
        %v7705 = vsub.f32 %v7542, %v7671
        %v7706 = vsub.f32 %v7543, %v7672
        %v7707 = vsub.f32 %v7544, %v7671
        %v7708 = vsub.f32 %v7545, %v7672
        %v7709 = vsub.f32 %v7546, %v7671
        %v7710 = vsub.f32 %v7547, %v7672
        %v7711 = vsub.f32 %v7548, %v7671
        %v7712 = vsub.f32 %v7549, %v7672
        %v7713 = vsub.f32 %v7550, %v7671
        %v7714 = vsub.f32 %v7551, %v7672
        %v7715 = vsub.f32 %v7552, %v7671
        %v7716 = vsub.f32 %v7553, %v7672
        %v7717 = vmul.f32 %v7685, %v7683
        %v7718 = vmul.f32 %v7686, %v7684
        %v7719 = vmul.f32 %v7687, %v7683
        %v7720 = vmul.f32 %v7688, %v7684
        %v7721 = vmul.f32 %v7689, %v7683
        %v7722 = vmul.f32 %v7690, %v7684
        %v7723 = vmul.f32 %v7691, %v7683
        %v7724 = vmul.f32 %v7692, %v7684
        %v7725 = vmul.f32 %v7693, %v7683
        %v7726 = vmul.f32 %v7694, %v7684
        %v7727 = vmul.f32 %v7695, %v7683
        %v7728 = vmul.f32 %v7696, %v7684
        %v7729 = vmul.f32 %v7697, %v7683
        %v7730 = vmul.f32 %v7698, %v7684
        %v7731 = vmul.f32 %v7699, %v7683
        %v7732 = vmul.f32 %v7700, %v7684
        %v7733 = vmul.f32 %v7701, %v7683
        %v7734 = vmul.f32 %v7702, %v7684
        %v7735 = vmul.f32 %v7703, %v7683
        %v7736 = vmul.f32 %v7704, %v7684
        %v7737 = vmul.f32 %v7705, %v7683
        %v7738 = vmul.f32 %v7706, %v7684
        %v7739 = vmul.f32 %v7707, %v7683
        %v7740 = vmul.f32 %v7708, %v7684
        %v7741 = vmul.f32 %v7709, %v7683
        %v7742 = vmul.f32 %v7710, %v7684
        %v7743 = vmul.f32 %v7711, %v7683
        %v7744 = vmul.f32 %v7712, %v7684
        %v7745 = vmul.f32 %v7713, %v7683
        %v7746 = vmul.f32 %v7714, %v7684
        %v7747 = vmul.f32 %v7715, %v7683
        %v7748 = vmul.f32 %v7716, %v7684
        %v7749 = vld [vmem:[%s2026] sm:$0x3]
        %v7751 = vlaneseq
        %v7752 = vshrl.u32 %v7751, 7
        %v7753 = vsub.s32 0, %v7752
        %v7754 = vrot.slane %v7749, %v7753
        %v7755 = vlaneseq
        %v7756 = vshrl.u32 %v7755, 7
        %v7757 = vsub.s32 1, %v7756
        %v7758 = vrot.slane %v7749, %v7757
        %v7761 = vmul.f32 %v7717, %v7754
        %v7762 = vmul.f32 %v7718, %v7758
        %v7763 = vmul.f32 %v7719, %v7754
        %v7764 = vmul.f32 %v7720, %v7758
        %v7765 = vmul.f32 %v7721, %v7754
        %v7766 = vmul.f32 %v7722, %v7758
        %v7767 = vmul.f32 %v7723, %v7754
        %v7768 = vmul.f32 %v7724, %v7758
        %v7769 = vmul.f32 %v7725, %v7754
        %v7770 = vmul.f32 %v7726, %v7758
        %v7771 = vmul.f32 %v7727, %v7754
        %v7772 = vmul.f32 %v7728, %v7758
        %v7773 = vmul.f32 %v7729, %v7754
        %v7774 = vmul.f32 %v7730, %v7758
        %v7775 = vmul.f32 %v7731, %v7754
        %v7776 = vmul.f32 %v7732, %v7758
        %v7777 = vmul.f32 %v7733, %v7754
        %v7778 = vmul.f32 %v7734, %v7758
        %v7779 = vmul.f32 %v7735, %v7754
        %v7780 = vmul.f32 %v7736, %v7758
        %v7781 = vmul.f32 %v7737, %v7754
        %v7782 = vmul.f32 %v7738, %v7758
        %v7783 = vmul.f32 %v7739, %v7754
        %v7784 = vmul.f32 %v7740, %v7758
        %v7785 = vmul.f32 %v7741, %v7754
        %v7786 = vmul.f32 %v7742, %v7758
        %v7787 = vmul.f32 %v7743, %v7754
        %v7788 = vmul.f32 %v7744, %v7758
        %v7789 = vmul.f32 %v7745, %v7754
        %v7790 = vmul.f32 %v7746, %v7758
        %v7791 = vmul.f32 %v7747, %v7754
        %v7792 = vmul.f32 %v7748, %v7758
        %v7793 = vld [vmem:[%s2031] sm:$0x3]
        %v7795 = vlaneseq
        %v7796 = vshrl.u32 %v7795, 7
        %v7797 = vsub.s32 0, %v7796
        %v7798 = vrot.slane %v7793, %v7797
        %v7799 = vlaneseq
        %v7800 = vshrl.u32 %v7799, 7
        %v7801 = vsub.s32 1, %v7800
        %v7802 = vrot.slane %v7793, %v7801
        %v7805 = vadd.f32 %v7761, %v7798
        %v7806 = vadd.f32 %v7762, %v7802
        %v7807 = vadd.f32 %v7763, %v7798
        %v7808 = vadd.f32 %v7764, %v7802
        %v7809 = vadd.f32 %v7765, %v7798
        %v7810 = vadd.f32 %v7766, %v7802
        %v7811 = vadd.f32 %v7767, %v7798
        %v7812 = vadd.f32 %v7768, %v7802
        %v7813 = vadd.f32 %v7769, %v7798
        %v7814 = vadd.f32 %v7770, %v7802
        %v7815 = vadd.f32 %v7771, %v7798
        %v7816 = vadd.f32 %v7772, %v7802
        %v7817 = vadd.f32 %v7773, %v7798
        %v7818 = vadd.f32 %v7774, %v7802
        %v7819 = vadd.f32 %v7775, %v7798
        %v7820 = vadd.f32 %v7776, %v7802
        %v7821 = vadd.f32 %v7777, %v7798
        %v7822 = vadd.f32 %v7778, %v7802
        %v7823 = vadd.f32 %v7779, %v7798
        %v7824 = vadd.f32 %v7780, %v7802
        %v7825 = vadd.f32 %v7781, %v7798
        %v7826 = vadd.f32 %v7782, %v7802
        %v7827 = vadd.f32 %v7783, %v7798
        %v7828 = vadd.f32 %v7784, %v7802
        %v7829 = vadd.f32 %v7785, %v7798
        %v7830 = vadd.f32 %v7786, %v7802
        %v7831 = vadd.f32 %v7787, %v7798
        %v7832 = vadd.f32 %v7788, %v7802
        %v7833 = vadd.f32 %v7789, %v7798
        %v7834 = vadd.f32 %v7790, %v7802
        %v7835 = vadd.f32 %v7791, %v7798
        %v7836 = vadd.f32 %v7792, %v7802
        %v7837 = vpack.c.bf16 %v7807, %v7805
        %v7838 = vpack.c.bf16 %v7808, %v7806
        %v7839 = vpack.c.bf16 %v7811, %v7809
        %v7840 = vpack.c.bf16 %v7812, %v7810
        %v7841 = vpack.c.bf16 %v7815, %v7813
        %v7842 = vpack.c.bf16 %v7816, %v7814
        %v7843 = vpack.c.bf16 %v7819, %v7817
        %v7844 = vpack.c.bf16 %v7820, %v7818
        %v7845 = vpack.c.bf16 %v7823, %v7821
        %v7846 = vpack.c.bf16 %v7824, %v7822
        %v7847 = vpack.c.bf16 %v7827, %v7825
        %v7848 = vpack.c.bf16 %v7828, %v7826
        %v7849 = vpack.c.bf16 %v7831, %v7829
        %v7850 = vpack.c.bf16 %v7832, %v7830
        %v7851 = vpack.c.bf16 %v7835, %v7833
        %v7852 = vpack.c.bf16 %v7836, %v7834
        %v7869 = vunpack.c.l.b16 %v7837
        %v7870 = vunpack.c.l.b16 %v7838
        %v7871 = vunpack.c.h.b16 %v7837
        %v7872 = vunpack.c.h.b16 %v7838
        %v7873 = vunpack.c.l.b16 %v7839
        %v7874 = vunpack.c.l.b16 %v7840
        %v7875 = vunpack.c.h.b16 %v7839
        %v7876 = vunpack.c.h.b16 %v7840
        %v7877 = vunpack.c.l.b16 %v7841
        %v7878 = vunpack.c.l.b16 %v7842
        %v7879 = vunpack.c.h.b16 %v7841
        %v7880 = vunpack.c.h.b16 %v7842
        %v7881 = vunpack.c.l.b16 %v7843
        %v7882 = vunpack.c.l.b16 %v7844
        %v7883 = vunpack.c.h.b16 %v7843
        %v7884 = vunpack.c.h.b16 %v7844
        %v7885 = vunpack.c.l.b16 %v7845
        %v7886 = vunpack.c.l.b16 %v7846
        %v7887 = vunpack.c.h.b16 %v7845
        %v7888 = vunpack.c.h.b16 %v7846
        %v7889 = vunpack.c.l.b16 %v7847
        %v7890 = vunpack.c.l.b16 %v7848
        %v7891 = vunpack.c.h.b16 %v7847
        %v7892 = vunpack.c.h.b16 %v7848
        %v7893 = vunpack.c.l.b16 %v7849
        %v7894 = vunpack.c.l.b16 %v7850
        %v7895 = vunpack.c.h.b16 %v7849
        %v7896 = vunpack.c.h.b16 %v7850
        %v7897 = vunpack.c.l.b16 %v7851
        %v7898 = vunpack.c.l.b16 %v7852
        %v7899 = vunpack.c.h.b16 %v7851
        %v7900 = vunpack.c.h.b16 %v7852
        %v7901 = vpack.c.b16 %v7870, %v7869
        %v7902 = vpack.c.b16 %v7872, %v7871
        %v7903 = vpack.c.b16 %v7874, %v7873
        %v7904 = vpack.c.b16 %v7876, %v7875
        %v7905 = vpack.c.b16 %v7878, %v7877
        %v7906 = vpack.c.b16 %v7880, %v7879
        %v7907 = vpack.c.b16 %v7882, %v7881
        %v7908 = vpack.c.b16 %v7884, %v7883
        %v7909 = vpack.c.b16 %v7886, %v7885
        %v7910 = vpack.c.b16 %v7888, %v7887
        %v7911 = vpack.c.b16 %v7890, %v7889
        %v7912 = vpack.c.b16 %v7892, %v7891
        %v7913 = vpack.c.b16 %v7894, %v7893
        %v7914 = vpack.c.b16 %v7896, %v7895
        %v7915 = vpack.c.b16 %v7898, %v7897
        %v7916 = vpack.c.b16 %v7900, %v7899
        %7933 = vst [vmem:[%s2014] sm:$0xff] %v7901
        %7934 = vst [vmem:[%s2014 + $0x8] sm:$0xff] %v7902
        %7935 = vst [vmem:[%s2014 + $0x10] sm:$0xff] %v7903
        %7936 = vst [vmem:[%s2014 + $0x18] sm:$0xff] %v7904
        %7937 = vst [vmem:[%s2014 + $0x20] sm:$0xff] %v7905
        %7938 = vst [vmem:[%s2014 + $0x28] sm:$0xff] %v7906
        %7939 = vst [vmem:[%s2014 + $0x30] sm:$0xff] %v7907
        %7940 = vst [vmem:[%s2014 + $0x38] sm:$0xff] %v7908
        %7941 = vst [vmem:[%s2014 + $0x40] sm:$0xff] %v7909
        %7942 = vst [vmem:[%s2014 + $0x48] sm:$0xff] %v7910
        %7943 = vst [vmem:[%s2014 + $0x50] sm:$0xff] %v7911
        %7944 = vst [vmem:[%s2014 + $0x58] sm:$0xff] %v7912
        %7945 = vst [vmem:[%s2014 + $0x60] sm:$0xff] %v7913
        %7946 = vst [vmem:[%s2014 + $0x68] sm:$0xff] %v7914
        %7947 = vst [vmem:[%s2014 + $0x70] sm:$0xff] %v7915
        %7948 = vst [vmem:[%s2014 + $0x78] sm:$0xff] %v7916
        %s7949 = sand.u32 %s144, 1
        %s7950 = scalar_lea.sflag [#allocation4], %s7949
        %s7951 = sand.u32 %s144, 1
        %s7952 = smul.addr %s7951, 128
        %s7953 = scalar_lea.vmem [#allocation3], %s7952
        // Predicated region
        $region75: #{layer12_forward.1} parent=69 // pred_check
          %p7954 = pneg %p154
        $region76: #{layer12_forward.1} parent=69 // pred_check_branch
          %7956 = sbr.rel (%p7954) target = $region78
        $region77: #{layer12_forward.1} parent=69 // pred_region
          %s7957 = smul.u32 16, %s22
          %s7958 = smul.u32 2, %s23
          %s7960 = ssub.s32 2048, 2048
          %7961 = vsyncadd %s7950, %s7960
          %s7962 = smul.addr %s7957, 8
          %s7963 = sadd.s32 %s7958, %s7962
          %s7964 = smul.addr %s7963, 64
          %s7965 = scalar_lea.hbm %s4, %s7964
          %s7966 = sshll.u32 %s7953, 4
          %s7967 = int_to_ptr.vmem [resolvable:$true] %s7966
          %7972 = dma.vmem_to_hbm [thread:$0]  %s7967, 2048, %s7965, %s7950, 128, 512, 8
        $region78: #{layer12_forward.1} parent=69 // pred_fallthru
          _
      $region70: #{layer12_forward.1} parent=5 // pred_fallthru
        _
      %p7973 = scmp.le.s32.totalorder 2, %s13
      // Predicated region
      $region79: #{layer12_forward.1} parent=5 // pred_check
        %p7974 = pneg %p7973
      $region80: #{layer12_forward.1} parent=5 // pred_check_branch
        %7976 = sbr.rel (%p7974) target = $region82
      $region81: #{layer12_forward.1} parent=5 // pred_region
        %s7977 = ssub.s32 %s13, 2
        // Predicated region
        $region83: #{layer12_forward.1} parent=81 // pred_check
          %p7978 = pneg %p160
        $region84: #{layer12_forward.1} parent=81 // pred_check_branch
          %7980 = sbr.rel (%p7978) target = $region86
        $region85: #{layer12_forward.1} parent=81 // pred_region
          %s7981 = sand.u32 %s145, 1
          %s7982 = scalar_lea.sflag [#allocation4], %s7981
          %s7983 = sand.u32 %s145, 1
          %s7984 = smul.addr %s7983, 128
          %s7985 = scalar_lea.vmem [#allocation3], %s7984
          %7986 = dma.done %s7982, 2048
        $region86: #{layer12_forward.1} parent=81 // pred_fallthru
          _
      $region82: #{layer12_forward.1} parent=5 // pred_fallthru
        _
    $region6: #{layer12_forward.1} parent=1 // loop_footer
      %s17 = sadd.s32 1, %s13
    $region7: #{layer12_forward.1} parent=1 // loop_footer_branch
      %12 = sbr.rel target = $region3
    $region8: #{layer12_forward.1} parent=1 // loop_exit
      _
    %7987 = vsyncpa [#allocation4], 1
    %s7988 = scalar_lea.sflag [#allocation4], 1
    %7989 = vsyncpa %s7988, 1

</llo_original>
